<compile_context>
chip_gen: v7x
topology: tpu7x:2x2x1
jax: 0.10.0
libtpu: 0.0.40
codegen_flags: <defaults>
</compile_context>

<pallas_src>
import jax
import jax.numpy as jnp
import numpy as np
from jax import lax
from jax.experimental import pallas as pl
from jax.experimental.pallas import tpu as pltpu


# ----------------------------------------------------------------------------
# Kernel
# ----------------------------------------------------------------------------
def _make_kernel(H, W, Cin, Cout, groups, identity_res, compute_dtype, approx_silu):
    Wp, Hp = W + 2, H + 2
    Np = Hp * Wp                    # rows of the flattened zero-padded grid
    G1 = Wp + 1                     # max |row shift| of a 3x3 tap in flat coords
    Nv = (H - 1) * Wp + W           # contiguous span covering all valid pixels
    Cg = Cout // groups
    inv_n = 1.0 / float(H * W * Cg)
    eps = 1e-5
    deltas = [(ky - 1) * Wp + (kx - 1) for ky in range(3) for kx in range(3)]

    def silu(v):
        # divide on the EUP slot; exact when approx_silu=False
        return v * pl.reciprocal(1.0 + jnp.exp(-v), approx=approx_silu)

    def dotf32(a, b):
        return jnp.dot(a, b, preferred_element_type=jnp.float32)

    def body(xe_ref, t_ref, m_ref, mg_ref, mgt_ref,
             w1_ref, b1_ref, g1_ref, be1_ref,
             wl_ref, bl_ref,
             w2_ref, b2_ref, g2_ref, be2_ref, *rest):
        if identity_res:
            (out_ref,) = rest
        else:
            wres_ref, bres_ref, out_ref = rest

        xe = xe_ref[0]                    # (Ne, Cin), compute_dtype
        mask = m_ref[...]                 # (Np, 1) f32, 1 at real pixels
        Mg = mg_ref[...]                  # (Cout, G) one-hot
        MgT = mgt_ref[...]                # (G, Cout)

        def groupnorm(y, m, gamma, beta):
            # y: (rows, Cout) f32; m: (rows, 1) 1/0 mask (stats over valid rows).
            ym = y * m
            s1 = jnp.sum(ym, axis=0, keepdims=True)            # (1, Cout)
            s2 = jnp.sum(ym * ym, axis=0, keepdims=True)       # (1, Cout)
            # Stack [s1; s2] as (2, Cout) without a concatenate (broadcast+select)
            ridx = lax.broadcasted_iota(jnp.int32, (2, Cout), 0)
            st = jnp.where(ridx == 0,
                           jnp.broadcast_to(s1, (2, Cout)),
                           jnp.broadcast_to(s2, (2, Cout)))
            gstats = dotf32(st, Mg) * inv_n                    # (2, G)  fused stats
            back = dotf32(gstats, MgT)                         # (2, Cout)
            mean_c, msq_c = back[0:1], back[1:2]
            var_c = msq_c - mean_c * mean_c                    # biased (PyTorch)
            a = lax.rsqrt(var_c + eps) * gamma
            return y * a + (beta - mean_c * a)

        # ---- block1: conv3x3 = 9 per-tap (Np, Cin) x (Cin, Cout) matmuls ----
        off0 = G1 + deltas[0]
        acc = dotf32(xe[off0:off0 + Np, :], w1_ref[0])
        for t in range(1, 9):
            off = G1 + deltas[t]
            acc = acc + dotf32(xe[off:off + Np, :], w1_ref[t])
        y1 = acc + b1_ref[...]                                 # (Np, Cout) f32
        h1 = silu(groupnorm(y1, mask, g1_ref[...], be1_ref[...]))

        # ---- time-embedding MLP (added after block1's activation) -----------
        temb = dotf32(silu(t_ref[0]), wl_ref[...]) + bl_ref[...]   # (1, Cout)
        # Mask -> exact zeros at pad positions == conv2's "SAME" zero padding.
        h = (h1 + temb) * mask
        hc = h.astype(compute_dtype)

        # ---- block2: conv3x3 on the valid span, taps fed straight from h ----
        off0 = G1 + deltas[0]
        acc2 = dotf32(hc[off0:off0 + Nv, :], w2_ref[0])
        for t in range(1, 9):
            off = G1 + deltas[t]
            acc2 = acc2 + dotf32(hc[off:off + Nv, :], w2_ref[t])
        y2 = acc2 + b2_ref[...]                                # (Nv, Cout) f32
        h2 = silu(groupnorm(y2, mask[G1:G1 + Nv, :], g2_ref[...], be2_ref[...]))

        # ---- residual --------------------------------------------------------
        xr = xe[2 * G1:2 * G1 + Nv, :]       # original x at the output span
        if identity_res:
            res = xr.astype(jnp.float32)
        else:
            res = dotf32(xr, wres_ref[...]) + bres_ref[...]
        out_ref[0] = (h2 + res).astype(out_ref.dtype)

    return body


# ----------------------------------------------------------------------------
# Wrapper (NCHW in / NCHW out, like the PyTorch module)
# ----------------------------------------------------------------------------
def resnet_block_forward(x_nchw, time_emb, params, *, groups=8,
                         compute_dtype=jnp.float32, approx_silu=False):
    B, Cin, H, W = x_nchw.shape
    Cout = params["b1"].shape[-1]
    T = time_emb.shape[-1]
    Wp, Hp = W + 2, H + 2
    Np, G1 = Hp * Wp, Wp + 1
    Nv = (H - 1) * Wp + W
    Ne = Np + 2 * G1
    identity_res = params.get("wres") is None
    f32 = jnp.float32

    # NCHW -> NHWC -> zero-pad spatial border -> flatten to (Np, Cin) ->
    # add G1 guard rows of zeros on each side so every tap window is in range.
    x_nhwc = jnp.transpose(x_nchw, (0, 2, 3, 1)).astype(f32)
    x_pad = jnp.pad(x_nhwc, ((0, 0), (1, 1), (1, 1), (0, 0)))
    x_flat = x_pad.reshape(B, Np, Cin)
    xe = jnp.pad(x_flat, ((0, 0), (G1, G1), (0, 0))).astype(compute_dtype)

    # 1/0 interior mask on the padded grid.
    mask = jnp.pad(jnp.ones((H, W), f32), ((1, 1), (1, 1))).reshape(Np, 1)

    # GroupNorm one-hot group matrices, built once on the host.
    Cg = Cout // groups
    Mg = (jnp.arange(Cout)[:, None] // Cg ==
          jnp.arange(groups)[None, :]).astype(f32)              # (Cout, G)
    MgT = Mg.T                                                  # (G, Cout)

    row = lambda v: v.reshape(1, Cout).astype(f32)
    w1t = params["w1"].astype(compute_dtype).reshape(9, Cin, Cout)
    w2t = params["w2"].astype(compute_dtype).reshape(9, Cout, Cout)

    args = [xe, time_emb.astype(f32).reshape(B, 1, T), mask, Mg, MgT,
            w1t, row(params["b1"]), row(params["g1"]), row(params["be1"]),
            params["wl"].astype(f32), row(params["bl"]),
            w2t, row(params["b2"]), row(params["g2"]), row(params["be2"])]

    def const_spec(a):
        nd = a.ndim
        return pl.BlockSpec(a.shape, lambda b, _n=nd: (0,) * _n)

    in_specs = [pl.BlockSpec((1, Ne, Cin), lambda b: (b, 0, 0)),
                pl.BlockSpec((1, 1, T), lambda b: (b, 0, 0))]
    in_specs += [const_spec(a) for a in args[2:]]

    if not identity_res:
        extra = [params["wres"].astype(compute_dtype), row(params["bres"])]
        args += extra
        in_specs += [const_spec(a) for a in extra]

    kern = _make_kernel(H, W, Cin, Cout, groups, identity_res,
                        compute_dtype, approx_silu)

    out_span = pl.pallas_call(
        kern,
        out_shape=jax.ShapeDtypeStruct((B, Nv, Cout), f32),
        grid_spec=pltpu.PrefetchScalarGridSpec(
            num_scalar_prefetch=0,
            grid=(B,),
            in_specs=in_specs,
            out_specs=pl.BlockSpec((1, Nv, Cout), lambda b: (b, 0, 0)),
        ),
        compiler_params=pltpu.CompilerParams(
            dimension_semantics=("parallel",),          # megacore on v7x
            vmem_limit_bytes=32 * 1024 * 1024),
    )(*args)

    # Re-embed the contiguous span into the padded grid; pick valid pixels.
    out_full = jnp.pad(out_span, ((0, 0), (G1, Np - G1 - Nv), (0, 0)))
    out_nhwc = out_full.reshape(B, Hp, Wp, Cout)[:, 1:H + 1, 1:W + 1, :]
    return jnp.transpose(out_nhwc, (0, 3, 1, 2))


# ----------------------------------------------------------------------------
# Params + pure-JAX reference (PyTorch semantics)
# ----------------------------------------------------------------------------
def init_params(key, dim, dim_out, time_emb_dim):
    ks = jax.random.split(key, 12)
    r = lambda k, s, sc=0.1: jax.random.normal(k, s, jnp.float32) * sc
    p = {
        "w1": r(ks[0], (3, 3, dim, dim_out)),       # HWIO
        "b1": r(ks[1], (dim_out,)),
        "g1": 1.0 + r(ks[2], (dim_out,)),
        "be1": r(ks[3], (dim_out,)),
        "wl": r(ks[4], (time_emb_dim, dim_out)),
        "bl": r(ks[5], (dim_out,)),
        "w2": r(ks[6], (3, 3, dim_out, dim_out)),
        "b2": r(ks[7], (dim_out,)),
        "g2": 1.0 + r(ks[8], (dim_out,)),
        "be2": r(ks[9], (dim_out,)),
    }
    if dim != dim_out:
        p["wres"] = r(ks[10], (dim, dim_out))
        p["bres"] = r(ks[11], (dim_out,))
    else:                                            # nn.Identity()
        p["wres"] = None
        p["bres"] = None
    return p


def resnet_block_ref(x_nchw, time_emb, params, *, groups=8):
    x = jnp.transpose(x_nchw, (0, 2, 3, 1)).astype(jnp.float32)
    B, H, W, Cin = x.shape
    Cout = params["b1"].shape[-1]

    def conv3x3(inp, w, b):
        y = lax.conv_general_dilated(inp, w, (1, 1), "SAME",
                                     dimension_numbers=("NHWC", "HWIO", "NHWC"))
        return y + b.reshape(1, 1, 1, -1)

    def gnorm(h, gamma, beta):
        cg = Cout // groups
        hr = h.reshape(B, H, W, groups, cg)
        mean = hr.mean(axis=(1, 2, 4), keepdims=True)
        var = ((hr - mean) ** 2).mean(axis=(1, 2, 4), keepdims=True)
        hn = ((hr - mean) / jnp.sqrt(var + 1e-5)).reshape(B, H, W, Cout)
        return hn * gamma.reshape(1, 1, 1, -1) + beta.reshape(1, 1, 1, -1)

    h = jax.nn.silu(gnorm(conv3x3(x, params["w1"], params["b1"]),
                          params["g1"], params["be1"]))
    temb = jax.nn.silu(time_emb) @ params["wl"] + params["bl"]
    h = h + temb.reshape(B, 1, 1, Cout)
    h = jax.nn.silu(gnorm(conv3x3(h, params["w2"], params["b2"]),
                          params["g2"], params["be2"]))
    if params.get("wres") is not None:
        res = x @ params["wres"] + params["bres"].reshape(1, 1, 1, -1)
    else:
        res = x
    return jnp.transpose(h + res, (0, 3, 1, 2))


if __name__ == "__main__":
    B, dim, dim_out, H, W = 2, 4, 16, 16, 16
    groups, time_emb_dim = 8, 32

    key = jax.random.PRNGKey(0)
    kx_, kt_, kp_ = jax.random.split(key, 3)
    x = jax.random.normal(kx_, (B, dim, H, W), jnp.float32)
    t = jax.random.normal(kt_, (B, time_emb_dim), jnp.float32)
    params = init_params(kp_, dim, dim_out, time_emb_dim)

    ref = resnet_block_ref(x, t, params, groups=groups)

    # f32 matmul-operand path: exact SiLU, tight tolerance.
    out = jax.block_until_ready(resnet_block_forward(x, t, params, groups=groups))
    np.testing.assert_allclose(np.asarray(out), np.asarray(ref),
                               atol=2e-4, rtol=2e-4)

    # bf16 matmul-operand path (fast MXU path on v5e/v6e/v7x) + approx SiLU;
    # GroupNorm stats / affine / residual add stay f32. Looser tolerance.
    out_bf16 = jax.block_until_ready(
        resnet_block_forward(x, t, params, groups=groups,
                             compute_dtype=jnp.bfloat16, approx_silu=True))
    np.testing.assert_allclose(np.asarray(out_bf16), np.asarray(ref),
                               atol=5e-2, rtol=5e-2)

    print("KERNEL_OK")
</pallas_src>

<mosaic_0001>
module attributes {stable_mosaic.version = 11 : i64} {
  func.func @body(%arg0: i32, %arg1: memref<1x362x4xf32, #tpu.memory_space<vmem>>, %arg2: memref<1x1x32xf32, #tpu.memory_space<vmem>>, %arg3: memref<324x1xf32, #tpu.memory_space<vmem>>, %arg4: memref<16x8xf32, #tpu.memory_space<vmem>>, %arg5: memref<8x16xf32, #tpu.memory_space<vmem>>, %arg6: memref<9x4x16xf32, #tpu.memory_space<vmem>>, %arg7: memref<1x16xf32, #tpu.memory_space<vmem>>, %arg8: memref<1x16xf32, #tpu.memory_space<vmem>>, %arg9: memref<1x16xf32, #tpu.memory_space<vmem>>, %arg10: memref<32x16xf32, #tpu.memory_space<vmem>>, %arg11: memref<1x16xf32, #tpu.memory_space<vmem>>, %arg12: memref<9x16x16xf32, #tpu.memory_space<vmem>>, %arg13: memref<1x16xf32, #tpu.memory_space<vmem>>, %arg14: memref<1x16xf32, #tpu.memory_space<vmem>>, %arg15: memref<1x16xf32, #tpu.memory_space<vmem>>, %arg16: memref<4x16xf32, #tpu.memory_space<vmem>>, %arg17: memref<1x16xf32, #tpu.memory_space<vmem>>, %arg18: memref<1x286x16xf32, #tpu.memory_space<vmem>>) attributes {dimension_semantics = [#tpu.dimension_semantics<parallel>], iteration_bounds = array<i64: 2>, scalar_prefetch = 0 : i64, scratch_operands = 0 : i64, tpu.core_type = #tpu.core_type<tc>, window_params = [{transform_indices = @transform_0, window_bounds = array<i64: 1, 362, 4>}, {transform_indices = @transform_1, window_bounds = array<i64: 1, 1, 32>}, {pipeline_mode = #tpu.pipeline_mode<synchronous>, transform_indices = @transform_2, window_bounds = array<i64: 324, 1>}, {pipeline_mode = #tpu.pipeline_mode<synchronous>, transform_indices = @transform_3, window_bounds = array<i64: 16, 8>}, {pipeline_mode = #tpu.pipeline_mode<synchronous>, transform_indices = @transform_4, window_bounds = array<i64: 8, 16>}, {pipeline_mode = #tpu.pipeline_mode<synchronous>, transform_indices = @transform_5, window_bounds = array<i64: 9, 4, 16>}, {pipeline_mode = #tpu.pipeline_mode<synchronous>, transform_indices = @transform_6, window_bounds = array<i64: 1, 16>}, {pipeline_mode = #tpu.pipeline_mode<synchronous>, transform_indices = @transform_7, window_bounds = array<i64: 1, 16>}, {pipeline_mode = #tpu.pipeline_mode<synchronous>, transform_indices = @transform_8, window_bounds = array<i64: 1, 16>}, {pipeline_mode = #tpu.pipeline_mode<synchronous>, transform_indices = @transform_9, window_bounds = array<i64: 32, 16>}, {pipeline_mode = #tpu.pipeline_mode<synchronous>, transform_indices = @transform_10, window_bounds = array<i64: 1, 16>}, {pipeline_mode = #tpu.pipeline_mode<synchronous>, transform_indices = @transform_11, window_bounds = array<i64: 9, 16, 16>}, {pipeline_mode = #tpu.pipeline_mode<synchronous>, transform_indices = @transform_12, window_bounds = array<i64: 1, 16>}, {pipeline_mode = #tpu.pipeline_mode<synchronous>, transform_indices = @transform_13, window_bounds = array<i64: 1, 16>}, {pipeline_mode = #tpu.pipeline_mode<synchronous>, transform_indices = @transform_14, window_bounds = array<i64: 1, 16>}, {pipeline_mode = #tpu.pipeline_mode<synchronous>, transform_indices = @transform_15, window_bounds = array<i64: 4, 16>}, {pipeline_mode = #tpu.pipeline_mode<synchronous>, transform_indices = @transform_16, window_bounds = array<i64: 1, 16>}, {transform_indices = @transform_17, window_bounds = array<i64: 1, 286, 16>}]} {
    %c0 = arith.constant 0 : index
    %c0_0 = arith.constant 0 : index
    %c0_1 = arith.constant 0 : index
    %0 = vector.load %arg1[%c0, %c0_0, %c0_1] : memref<1x362x4xf32, #tpu.memory_space<vmem>>, vector<1x362x4xf32>
    %1 = vector.shape_cast %0 : vector<1x362x4xf32> to vector<362x4xf32>
    %c0_2 = arith.constant 0 : index
    %c0_3 = arith.constant 0 : index
    %2 = vector.load %arg3[%c0_2, %c0_3] : memref<324x1xf32, #tpu.memory_space<vmem>>, vector<324x1xf32>
    %c0_4 = arith.constant 0 : index
    %c0_5 = arith.constant 0 : index
    %3 = vector.load %arg4[%c0_4, %c0_5] : memref<16x8xf32, #tpu.memory_space<vmem>>, vector<16x8xf32>
    %c0_6 = arith.constant 0 : index
    %c0_7 = arith.constant 0 : index
    %4 = vector.load %arg5[%c0_6, %c0_7] : memref<8x16xf32, #tpu.memory_space<vmem>>, vector<8x16xf32>
    %5 = vector.extract_strided_slice %1 {offsets = [0, 0], sizes = [324, 4], strides = [1, 1]} : vector<362x4xf32> to vector<324x4xf32>
    %c0_8 = arith.constant 0 : index
    %c0_9 = arith.constant 0 : index
    %c0_10 = arith.constant 0 : index
    %6 = vector.load %arg6[%c0_8, %c0_9, %c0_10] : memref<9x4x16xf32, #tpu.memory_space<vmem>>, vector<1x4x16xf32>
    %7 = vector.shape_cast %6 : vector<1x4x16xf32> to vector<4x16xf32>
    %cst = arith.constant dense<0.000000e+00> : vector<324x16xf32>
    %8 = tpu.matmul %5, %7, %cst {dimension_numbers = #tpu.dot_dimension_numbers<[1], [0], [0], [1], [0, 0, 1, 1], [], []>} : vector<324x4xf32>, vector<4x16xf32>, vector<324x16xf32> -> vector<324x16xf32>
    %9 = vector.extract_strided_slice %1 {offsets = [1, 0], sizes = [324, 4], strides = [1, 1]} : vector<362x4xf32> to vector<324x4xf32>
    %c1 = arith.constant 1 : index
    %c0_11 = arith.constant 0 : index
    %c0_12 = arith.constant 0 : index
    %10 = vector.load %arg6[%c1, %c0_11, %c0_12] : memref<9x4x16xf32, #tpu.memory_space<vmem>>, vector<1x4x16xf32>
    %11 = vector.shape_cast %10 : vector<1x4x16xf32> to vector<4x16xf32>
    %cst_13 = arith.constant dense<0.000000e+00> : vector<324x16xf32>
    %12 = tpu.matmul %9, %11, %cst_13 {dimension_numbers = #tpu.dot_dimension_numbers<[1], [0], [0], [1], [0, 0, 1, 1], [], []>} : vector<324x4xf32>, vector<4x16xf32>, vector<324x16xf32> -> vector<324x16xf32>
    %13 = arith.addf %8, %12 : vector<324x16xf32>
    %14 = vector.extract_strided_slice %1 {offsets = [2, 0], sizes = [324, 4], strides = [1, 1]} : vector<362x4xf32> to vector<324x4xf32>
    %c2 = arith.constant 2 : index
    %c0_14 = arith.constant 0 : index
    %c0_15 = arith.constant 0 : index
    %15 = vector.load %arg6[%c2, %c0_14, %c0_15] : memref<9x4x16xf32, #tpu.memory_space<vmem>>, vector<1x4x16xf32>
    %16 = vector.shape_cast %15 : vector<1x4x16xf32> to vector<4x16xf32>
    %cst_16 = arith.constant dense<0.000000e+00> : vector<324x16xf32>
    %17 = tpu.matmul %14, %16, %cst_16 {dimension_numbers = #tpu.dot_dimension_numbers<[1], [0], [0], [1], [0, 0, 1, 1], [], []>} : vector<324x4xf32>, vector<4x16xf32>, vector<324x16xf32> -> vector<324x16xf32>
    %18 = arith.addf %13, %17 : vector<324x16xf32>
    %19 = vector.extract_strided_slice %1 {offsets = [18, 0], sizes = [324, 4], strides = [1, 1]} : vector<362x4xf32> to vector<324x4xf32>
    %c3 = arith.constant 3 : index
    %c0_17 = arith.constant 0 : index
    %c0_18 = arith.constant 0 : index
    %20 = vector.load %arg6[%c3, %c0_17, %c0_18] : memref<9x4x16xf32, #tpu.memory_space<vmem>>, vector<1x4x16xf32>
    %21 = vector.shape_cast %20 : vector<1x4x16xf32> to vector<4x16xf32>
    %cst_19 = arith.constant dense<0.000000e+00> : vector<324x16xf32>
    %22 = tpu.matmul %19, %21, %cst_19 {dimension_numbers = #tpu.dot_dimension_numbers<[1], [0], [0], [1], [0, 0, 1, 1], [], []>} : vector<324x4xf32>, vector<4x16xf32>, vector<324x16xf32> -> vector<324x16xf32>
    %23 = arith.addf %18, %22 : vector<324x16xf32>
    %24 = vector.extract_strided_slice %1 {offsets = [19, 0], sizes = [324, 4], strides = [1, 1]} : vector<362x4xf32> to vector<324x4xf32>
    %c4 = arith.constant 4 : index
    %c0_20 = arith.constant 0 : index
    %c0_21 = arith.constant 0 : index
    %25 = vector.load %arg6[%c4, %c0_20, %c0_21] : memref<9x4x16xf32, #tpu.memory_space<vmem>>, vector<1x4x16xf32>
    %26 = vector.shape_cast %25 : vector<1x4x16xf32> to vector<4x16xf32>
    %cst_22 = arith.constant dense<0.000000e+00> : vector<324x16xf32>
    %27 = tpu.matmul %24, %26, %cst_22 {dimension_numbers = #tpu.dot_dimension_numbers<[1], [0], [0], [1], [0, 0, 1, 1], [], []>} : vector<324x4xf32>, vector<4x16xf32>, vector<324x16xf32> -> vector<324x16xf32>
    %28 = arith.addf %23, %27 : vector<324x16xf32>
    %29 = vector.extract_strided_slice %1 {offsets = [20, 0], sizes = [324, 4], strides = [1, 1]} : vector<362x4xf32> to vector<324x4xf32>
    %c5 = arith.constant 5 : index
    %c0_23 = arith.constant 0 : index
    %c0_24 = arith.constant 0 : index
    %30 = vector.load %arg6[%c5, %c0_23, %c0_24] : memref<9x4x16xf32, #tpu.memory_space<vmem>>, vector<1x4x16xf32>
    %31 = vector.shape_cast %30 : vector<1x4x16xf32> to vector<4x16xf32>
    %cst_25 = arith.constant dense<0.000000e+00> : vector<324x16xf32>
    %32 = tpu.matmul %29, %31, %cst_25 {dimension_numbers = #tpu.dot_dimension_numbers<[1], [0], [0], [1], [0, 0, 1, 1], [], []>} : vector<324x4xf32>, vector<4x16xf32>, vector<324x16xf32> -> vector<324x16xf32>
    %33 = arith.addf %28, %32 : vector<324x16xf32>
    %34 = vector.extract_strided_slice %1 {offsets = [36, 0], sizes = [324, 4], strides = [1, 1]} : vector<362x4xf32> to vector<324x4xf32>
    %c6 = arith.constant 6 : index
    %c0_26 = arith.constant 0 : index
    %c0_27 = arith.constant 0 : index
    %35 = vector.load %arg6[%c6, %c0_26, %c0_27] : memref<9x4x16xf32, #tpu.memory_space<vmem>>, vector<1x4x16xf32>
    %36 = vector.shape_cast %35 : vector<1x4x16xf32> to vector<4x16xf32>
    %cst_28 = arith.constant dense<0.000000e+00> : vector<324x16xf32>
    %37 = tpu.matmul %34, %36, %cst_28 {dimension_numbers = #tpu.dot_dimension_numbers<[1], [0], [0], [1], [0, 0, 1, 1], [], []>} : vector<324x4xf32>, vector<4x16xf32>, vector<324x16xf32> -> vector<324x16xf32>
    %38 = arith.addf %33, %37 : vector<324x16xf32>
    %39 = vector.extract_strided_slice %1 {offsets = [37, 0], sizes = [324, 4], strides = [1, 1]} : vector<362x4xf32> to vector<324x4xf32>
    %c7 = arith.constant 7 : index
    %c0_29 = arith.constant 0 : index
    %c0_30 = arith.constant 0 : index
    %40 = vector.load %arg6[%c7, %c0_29, %c0_30] : memref<9x4x16xf32, #tpu.memory_space<vmem>>, vector<1x4x16xf32>
    %41 = vector.shape_cast %40 : vector<1x4x16xf32> to vector<4x16xf32>
    %cst_31 = arith.constant dense<0.000000e+00> : vector<324x16xf32>
    %42 = tpu.matmul %39, %41, %cst_31 {dimension_numbers = #tpu.dot_dimension_numbers<[1], [0], [0], [1], [0, 0, 1, 1], [], []>} : vector<324x4xf32>, vector<4x16xf32>, vector<324x16xf32> -> vector<324x16xf32>
    %43 = arith.addf %38, %42 : vector<324x16xf32>
    %44 = vector.extract_strided_slice %1 {offsets = [38, 0], sizes = [324, 4], strides = [1, 1]} : vector<362x4xf32> to vector<324x4xf32>
    %c8 = arith.constant 8 : index
    %c0_32 = arith.constant 0 : index
    %c0_33 = arith.constant 0 : index
    %45 = vector.load %arg6[%c8, %c0_32, %c0_33] : memref<9x4x16xf32, #tpu.memory_space<vmem>>, vector<1x4x16xf32>
    %46 = vector.shape_cast %45 : vector<1x4x16xf32> to vector<4x16xf32>
    %cst_34 = arith.constant dense<0.000000e+00> : vector<324x16xf32>
    %47 = tpu.matmul %44, %46, %cst_34 {dimension_numbers = #tpu.dot_dimension_numbers<[1], [0], [0], [1], [0, 0, 1, 1], [], []>} : vector<324x4xf32>, vector<4x16xf32>, vector<324x16xf32> -> vector<324x16xf32>
    %48 = arith.addf %43, %47 : vector<324x16xf32>
    %c0_35 = arith.constant 0 : index
    %c0_36 = arith.constant 0 : index
    %49 = vector.load %arg7[%c0_35, %c0_36] : memref<1x16xf32, #tpu.memory_space<vmem>>, vector<1x16xf32>
    %50 = vector.broadcast %49 : vector<1x16xf32> to vector<324x16xf32>
    %51 = arith.addf %48, %50 : vector<324x16xf32>
    %c0_37 = arith.constant 0 : index
    %c0_38 = arith.constant 0 : index
    %52 = vector.load %arg8[%c0_37, %c0_38] : memref<1x16xf32, #tpu.memory_space<vmem>>, vector<1x16xf32>
    %c0_39 = arith.constant 0 : index
    %c0_40 = arith.constant 0 : index
    %53 = vector.load %arg9[%c0_39, %c0_40] : memref<1x16xf32, #tpu.memory_space<vmem>>, vector<1x16xf32>
    %54 = vector.broadcast %2 : vector<324x1xf32> to vector<324x16xf32>
    %55 = arith.mulf %51, %54 : vector<324x16xf32>
    %cst_41 = arith.constant dense<0.000000e+00> : vector<16xf32>
    %56 = vector.multi_reduction <add>, %55, %cst_41 [0] : vector<324x16xf32> to vector<16xf32>
    %57 = vector.shape_cast %56 : vector<16xf32> to vector<1x16xf32>
    %58 = arith.mulf %55, %55 : vector<324x16xf32>
    %cst_42 = arith.constant dense<0.000000e+00> : vector<16xf32>
    %59 = vector.multi_reduction <add>, %58, %cst_42 [0] : vector<324x16xf32> to vector<16xf32>
    %60 = vector.shape_cast %59 : vector<16xf32> to vector<1x16xf32>
    %61 = tpu.iota {dimensions = array<i32: 0>} : vector<2x16xi32>
    %c0_i32 = arith.constant 0 : i32
    %62 = vector.broadcast %c0_i32 : i32 to vector<2x16xi32>
    %63 = arith.cmpi eq, %61, %62 : vector<2x16xi32>
    %64 = vector.shape_cast %57 : vector<1x16xf32> to vector<1x16xf32>
    %65 = vector.broadcast %64 : vector<1x16xf32> to vector<2x16xf32>
    %66 = vector.shape_cast %60 : vector<1x16xf32> to vector<1x16xf32>
    %67 = vector.broadcast %66 : vector<1x16xf32> to vector<2x16xf32>
    %68 = arith.select %63, %65, %67 : vector<2x16xi1>, vector<2x16xf32>
    %cst_43 = arith.constant dense<0.000000e+00> : vector<2x8xf32>
    %69 = tpu.matmul %68, %3, %cst_43 {dimension_numbers = #tpu.dot_dimension_numbers<[1], [0], [0], [1], [0, 0, 1, 1], [], []>} : vector<2x16xf32>, vector<16x8xf32>, vector<2x8xf32> -> vector<2x8xf32>
    %cst_44 = arith.constant 0.001953125 : f32
    %70 = vector.broadcast %cst_44 : f32 to vector<2x8xf32>
    %71 = arith.mulf %69, %70 : vector<2x8xf32>
    %cst_45 = arith.constant dense<0.000000e+00> : vector<2x16xf32>
    %72 = tpu.matmul %71, %4, %cst_45 {dimension_numbers = #tpu.dot_dimension_numbers<[1], [0], [0], [1], [0, 0, 1, 1], [], []>} : vector<2x8xf32>, vector<8x16xf32>, vector<2x16xf32> -> vector<2x16xf32>
    %73 = vector.extract_strided_slice %72 {offsets = [0, 0], sizes = [1, 16], strides = [1, 1]} : vector<2x16xf32> to vector<1x16xf32>
    %74 = vector.extract_strided_slice %72 {offsets = [1, 0], sizes = [1, 16], strides = [1, 1]} : vector<2x16xf32> to vector<1x16xf32>
    %75 = arith.mulf %73, %73 : vector<1x16xf32>
    %76 = arith.subf %74, %75 : vector<1x16xf32>
    %cst_46 = arith.constant 9.99999974E-6 : f32
    %77 = vector.broadcast %cst_46 : f32 to vector<1x16xf32>
    %78 = arith.addf %76, %77 : vector<1x16xf32>
    %79 = math.rsqrt %78 : vector<1x16xf32>
    %80 = arith.mulf %79, %52 : vector<1x16xf32>
    %81 = vector.broadcast %80 : vector<1x16xf32> to vector<324x16xf32>
    %82 = arith.mulf %51, %81 : vector<324x16xf32>
    %83 = arith.mulf %73, %80 : vector<1x16xf32>
    %84 = arith.subf %53, %83 : vector<1x16xf32>
    %85 = vector.broadcast %84 : vector<1x16xf32> to vector<324x16xf32>
    %86 = arith.addf %82, %85 : vector<324x16xf32>
    %cst_47 = arith.constant 0.000000e+00 : f32
    %87 = vector.broadcast %cst_47 : f32 to vector<324x16xf32>
    %88 = arith.subf %87, %86 : vector<324x16xf32>
    %89 = math.exp %88 : vector<324x16xf32>
    %cst_48 = arith.constant 1.000000e+00 : f32
    %90 = vector.broadcast %cst_48 : f32 to vector<324x16xf32>
    %91 = arith.addf %90, %89 : vector<324x16xf32>
    %92 = tpu.reciprocal %91 : vector<324x16xf32> -> vector<324x16xf32>
    %93 = arith.mulf %86, %92 : vector<324x16xf32>
    %c0_49 = arith.constant 0 : index
    %c0_50 = arith.constant 0 : index
    %c0_51 = arith.constant 0 : index
    %94 = vector.load %arg2[%c0_49, %c0_50, %c0_51] : memref<1x1x32xf32, #tpu.memory_space<vmem>>, vector<1x1x32xf32>
    %95 = vector.shape_cast %94 : vector<1x1x32xf32> to vector<1x32xf32>
    %cst_52 = arith.constant 0.000000e+00 : f32
    %96 = vector.broadcast %cst_52 : f32 to vector<1x32xf32>
    %97 = arith.subf %96, %95 : vector<1x32xf32>
    %98 = math.exp %97 : vector<1x32xf32>
    %cst_53 = arith.constant 1.000000e+00 : f32
    %99 = vector.broadcast %cst_53 : f32 to vector<1x32xf32>
    %100 = arith.addf %99, %98 : vector<1x32xf32>
    %101 = tpu.reciprocal %100 : vector<1x32xf32> -> vector<1x32xf32>
    %102 = arith.mulf %95, %101 : vector<1x32xf32>
    %c0_54 = arith.constant 0 : index
    %c0_55 = arith.constant 0 : index
    %103 = vector.load %arg10[%c0_54, %c0_55] : memref<32x16xf32, #tpu.memory_space<vmem>>, vector<32x16xf32>
    %cst_56 = arith.constant dense<0.000000e+00> : vector<1x16xf32>
    %104 = tpu.matmul %102, %103, %cst_56 {dimension_numbers = #tpu.dot_dimension_numbers<[1], [0], [0], [1], [0, 0, 1, 1], [], []>} : vector<1x32xf32>, vector<32x16xf32>, vector<1x16xf32> -> vector<1x16xf32>
    %c0_57 = arith.constant 0 : index
    %c0_58 = arith.constant 0 : index
    %105 = vector.load %arg11[%c0_57, %c0_58] : memref<1x16xf32, #tpu.memory_space<vmem>>, vector<1x16xf32>
    %106 = arith.addf %104, %105 : vector<1x16xf32>
    %107 = vector.broadcast %106 : vector<1x16xf32> to vector<324x16xf32>
    %108 = arith.addf %93, %107 : vector<324x16xf32>
    %109 = vector.broadcast %2 : vector<324x1xf32> to vector<324x16xf32>
    %110 = arith.mulf %108, %109 : vector<324x16xf32>
    %111 = vector.extract_strided_slice %110 {offsets = [0, 0], sizes = [286, 16], strides = [1, 1]} : vector<324x16xf32> to vector<286x16xf32>
    %c0_59 = arith.constant 0 : index
    %c0_60 = arith.constant 0 : index
    %c0_61 = arith.constant 0 : index
    %112 = vector.load %arg12[%c0_59, %c0_60, %c0_61] : memref<9x16x16xf32, #tpu.memory_space<vmem>>, vector<1x16x16xf32>
    %113 = vector.shape_cast %112 : vector<1x16x16xf32> to vector<16x16xf32>
    %cst_62 = arith.constant dense<0.000000e+00> : vector<286x16xf32>
    %114 = tpu.matmul %111, %113, %cst_62 {dimension_numbers = #tpu.dot_dimension_numbers<[1], [0], [0], [1], [0, 0, 1, 1], [], []>} : vector<286x16xf32>, vector<16x16xf32>, vector<286x16xf32> -> vector<286x16xf32>
    %115 = vector.extract_strided_slice %110 {offsets = [1, 0], sizes = [286, 16], strides = [1, 1]} : vector<324x16xf32> to vector<286x16xf32>
    %c1_63 = arith.constant 1 : index
    %c0_64 = arith.constant 0 : index
    %c0_65 = arith.constant 0 : index
    %116 = vector.load %arg12[%c1_63, %c0_64, %c0_65] : memref<9x16x16xf32, #tpu.memory_space<vmem>>, vector<1x16x16xf32>
    %117 = vector.shape_cast %116 : vector<1x16x16xf32> to vector<16x16xf32>
    %cst_66 = arith.constant dense<0.000000e+00> : vector<286x16xf32>
    %118 = tpu.matmul %115, %117, %cst_66 {dimension_numbers = #tpu.dot_dimension_numbers<[1], [0], [0], [1], [0, 0, 1, 1], [], []>} : vector<286x16xf32>, vector<16x16xf32>, vector<286x16xf32> -> vector<286x16xf32>
    %119 = arith.addf %114, %118 : vector<286x16xf32>
    %120 = vector.extract_strided_slice %110 {offsets = [2, 0], sizes = [286, 16], strides = [1, 1]} : vector<324x16xf32> to vector<286x16xf32>
    %c2_67 = arith.constant 2 : index
    %c0_68 = arith.constant 0 : index
    %c0_69 = arith.constant 0 : index
    %121 = vector.load %arg12[%c2_67, %c0_68, %c0_69] : memref<9x16x16xf32, #tpu.memory_space<vmem>>, vector<1x16x16xf32>
    %122 = vector.shape_cast %121 : vector<1x16x16xf32> to vector<16x16xf32>
    %cst_70 = arith.constant dense<0.000000e+00> : vector<286x16xf32>
    %123 = tpu.matmul %120, %122, %cst_70 {dimension_numbers = #tpu.dot_dimension_numbers<[1], [0], [0], [1], [0, 0, 1, 1], [], []>} : vector<286x16xf32>, vector<16x16xf32>, vector<286x16xf32> -> vector<286x16xf32>
    %124 = arith.addf %119, %123 : vector<286x16xf32>
    %125 = vector.extract_strided_slice %110 {offsets = [18, 0], sizes = [286, 16], strides = [1, 1]} : vector<324x16xf32> to vector<286x16xf32>
    %c3_71 = arith.constant 3 : index
    %c0_72 = arith.constant 0 : index
    %c0_73 = arith.constant 0 : index
    %126 = vector.load %arg12[%c3_71, %c0_72, %c0_73] : memref<9x16x16xf32, #tpu.memory_space<vmem>>, vector<1x16x16xf32>
    %127 = vector.shape_cast %126 : vector<1x16x16xf32> to vector<16x16xf32>
    %cst_74 = arith.constant dense<0.000000e+00> : vector<286x16xf32>
    %128 = tpu.matmul %125, %127, %cst_74 {dimension_numbers = #tpu.dot_dimension_numbers<[1], [0], [0], [1], [0, 0, 1, 1], [], []>} : vector<286x16xf32>, vector<16x16xf32>, vector<286x16xf32> -> vector<286x16xf32>
    %129 = arith.addf %124, %128 : vector<286x16xf32>
    %130 = vector.extract_strided_slice %110 {offsets = [19, 0], sizes = [286, 16], strides = [1, 1]} : vector<324x16xf32> to vector<286x16xf32>
    %c4_75 = arith.constant 4 : index
    %c0_76 = arith.constant 0 : index
    %c0_77 = arith.constant 0 : index
    %131 = vector.load %arg12[%c4_75, %c0_76, %c0_77] : memref<9x16x16xf32, #tpu.memory_space<vmem>>, vector<1x16x16xf32>
    %132 = vector.shape_cast %131 : vector<1x16x16xf32> to vector<16x16xf32>
    %cst_78 = arith.constant dense<0.000000e+00> : vector<286x16xf32>
    %133 = tpu.matmul %130, %132, %cst_78 {dimension_numbers = #tpu.dot_dimension_numbers<[1], [0], [0], [1], [0, 0, 1, 1], [], []>} : vector<286x16xf32>, vector<16x16xf32>, vector<286x16xf32> -> vector<286x16xf32>
    %134 = arith.addf %129, %133 : vector<286x16xf32>
    %135 = vector.extract_strided_slice %110 {offsets = [20, 0], sizes = [286, 16], strides = [1, 1]} : vector<324x16xf32> to vector<286x16xf32>
    %c5_79 = arith.constant 5 : index
    %c0_80 = arith.constant 0 : index
    %c0_81 = arith.constant 0 : index
    %136 = vector.load %arg12[%c5_79, %c0_80, %c0_81] : memref<9x16x16xf32, #tpu.memory_space<vmem>>, vector<1x16x16xf32>
    %137 = vector.shape_cast %136 : vector<1x16x16xf32> to vector<16x16xf32>
    %cst_82 = arith.constant dense<0.000000e+00> : vector<286x16xf32>
    %138 = tpu.matmul %135, %137, %cst_82 {dimension_numbers = #tpu.dot_dimension_numbers<[1], [0], [0], [1], [0, 0, 1, 1], [], []>} : vector<286x16xf32>, vector<16x16xf32>, vector<286x16xf32> -> vector<286x16xf32>
    %139 = arith.addf %134, %138 : vector<286x16xf32>
    %140 = vector.extract_strided_slice %110 {offsets = [36, 0], sizes = [286, 16], strides = [1, 1]} : vector<324x16xf32> to vector<286x16xf32>
    %c6_83 = arith.constant 6 : index
    %c0_84 = arith.constant 0 : index
    %c0_85 = arith.constant 0 : index
    %141 = vector.load %arg12[%c6_83, %c0_84, %c0_85] : memref<9x16x16xf32, #tpu.memory_space<vmem>>, vector<1x16x16xf32>
    %142 = vector.shape_cast %141 : vector<1x16x16xf32> to vector<16x16xf32>
    %cst_86 = arith.constant dense<0.000000e+00> : vector<286x16xf32>
    %143 = tpu.matmul %140, %142, %cst_86 {dimension_numbers = #tpu.dot_dimension_numbers<[1], [0], [0], [1], [0, 0, 1, 1], [], []>} : vector<286x16xf32>, vector<16x16xf32>, vector<286x16xf32> -> vector<286x16xf32>
    %144 = arith.addf %139, %143 : vector<286x16xf32>
    %145 = vector.extract_strided_slice %110 {offsets = [37, 0], sizes = [286, 16], strides = [1, 1]} : vector<324x16xf32> to vector<286x16xf32>
    %c7_87 = arith.constant 7 : index
    %c0_88 = arith.constant 0 : index
    %c0_89 = arith.constant 0 : index
    %146 = vector.load %arg12[%c7_87, %c0_88, %c0_89] : memref<9x16x16xf32, #tpu.memory_space<vmem>>, vector<1x16x16xf32>
    %147 = vector.shape_cast %146 : vector<1x16x16xf32> to vector<16x16xf32>
    %cst_90 = arith.constant dense<0.000000e+00> : vector<286x16xf32>
    %148 = tpu.matmul %145, %147, %cst_90 {dimension_numbers = #tpu.dot_dimension_numbers<[1], [0], [0], [1], [0, 0, 1, 1], [], []>} : vector<286x16xf32>, vector<16x16xf32>, vector<286x16xf32> -> vector<286x16xf32>
    %149 = arith.addf %144, %148 : vector<286x16xf32>
    %150 = vector.extract_strided_slice %110 {offsets = [38, 0], sizes = [286, 16], strides = [1, 1]} : vector<324x16xf32> to vector<286x16xf32>
    %c8_91 = arith.constant 8 : index
    %c0_92 = arith.constant 0 : index
    %c0_93 = arith.constant 0 : index
    %151 = vector.load %arg12[%c8_91, %c0_92, %c0_93] : memref<9x16x16xf32, #tpu.memory_space<vmem>>, vector<1x16x16xf32>
    %152 = vector.shape_cast %151 : vector<1x16x16xf32> to vector<16x16xf32>
    %cst_94 = arith.constant dense<0.000000e+00> : vector<286x16xf32>
    %153 = tpu.matmul %150, %152, %cst_94 {dimension_numbers = #tpu.dot_dimension_numbers<[1], [0], [0], [1], [0, 0, 1, 1], [], []>} : vector<286x16xf32>, vector<16x16xf32>, vector<286x16xf32> -> vector<286x16xf32>
    %154 = arith.addf %149, %153 : vector<286x16xf32>
    %c0_95 = arith.constant 0 : index
    %c0_96 = arith.constant 0 : index
    %155 = vector.load %arg13[%c0_95, %c0_96] : memref<1x16xf32, #tpu.memory_space<vmem>>, vector<1x16xf32>
    %156 = vector.broadcast %155 : vector<1x16xf32> to vector<286x16xf32>
    %157 = arith.addf %154, %156 : vector<286x16xf32>
    %158 = vector.extract_strided_slice %2 {offsets = [19, 0], sizes = [286, 1], strides = [1, 1]} : vector<324x1xf32> to vector<286x1xf32>
    %c0_97 = arith.constant 0 : index
    %c0_98 = arith.constant 0 : index
    %159 = vector.load %arg14[%c0_97, %c0_98] : memref<1x16xf32, #tpu.memory_space<vmem>>, vector<1x16xf32>
    %c0_99 = arith.constant 0 : index
    %c0_100 = arith.constant 0 : index
    %160 = vector.load %arg15[%c0_99, %c0_100] : memref<1x16xf32, #tpu.memory_space<vmem>>, vector<1x16xf32>
    %161 = vector.broadcast %158 : vector<286x1xf32> to vector<286x16xf32>
    %162 = arith.mulf %157, %161 : vector<286x16xf32>
    %cst_101 = arith.constant dense<0.000000e+00> : vector<16xf32>
    %163 = vector.multi_reduction <add>, %162, %cst_101 [0] : vector<286x16xf32> to vector<16xf32>
    %164 = vector.shape_cast %163 : vector<16xf32> to vector<1x16xf32>
    %165 = arith.mulf %162, %162 : vector<286x16xf32>
    %cst_102 = arith.constant dense<0.000000e+00> : vector<16xf32>
    %166 = vector.multi_reduction <add>, %165, %cst_102 [0] : vector<286x16xf32> to vector<16xf32>
    %167 = vector.shape_cast %166 : vector<16xf32> to vector<1x16xf32>
    %168 = tpu.iota {dimensions = array<i32: 0>} : vector<2x16xi32>
    %c0_i32_103 = arith.constant 0 : i32
    %169 = vector.broadcast %c0_i32_103 : i32 to vector<2x16xi32>
    %170 = arith.cmpi eq, %168, %169 : vector<2x16xi32>
    %171 = vector.shape_cast %164 : vector<1x16xf32> to vector<1x16xf32>
    %172 = vector.broadcast %171 : vector<1x16xf32> to vector<2x16xf32>
    %173 = vector.shape_cast %167 : vector<1x16xf32> to vector<1x16xf32>
    %174 = vector.broadcast %173 : vector<1x16xf32> to vector<2x16xf32>
    %175 = arith.select %170, %172, %174 : vector<2x16xi1>, vector<2x16xf32>
    %cst_104 = arith.constant dense<0.000000e+00> : vector<2x8xf32>
    %176 = tpu.matmul %175, %3, %cst_104 {dimension_numbers = #tpu.dot_dimension_numbers<[1], [0], [0], [1], [0, 0, 1, 1], [], []>} : vector<2x16xf32>, vector<16x8xf32>, vector<2x8xf32> -> vector<2x8xf32>
    %cst_105 = arith.constant 0.001953125 : f32
    %177 = vector.broadcast %cst_105 : f32 to vector<2x8xf32>
    %178 = arith.mulf %176, %177 : vector<2x8xf32>
    %cst_106 = arith.constant dense<0.000000e+00> : vector<2x16xf32>
    %179 = tpu.matmul %178, %4, %cst_106 {dimension_numbers = #tpu.dot_dimension_numbers<[1], [0], [0], [1], [0, 0, 1, 1], [], []>} : vector<2x8xf32>, vector<8x16xf32>, vector<2x16xf32> -> vector<2x16xf32>
    %180 = vector.extract_strided_slice %179 {offsets = [0, 0], sizes = [1, 16], strides = [1, 1]} : vector<2x16xf32> to vector<1x16xf32>
    %181 = vector.extract_strided_slice %179 {offsets = [1, 0], sizes = [1, 16], strides = [1, 1]} : vector<2x16xf32> to vector<1x16xf32>
    %182 = arith.mulf %180, %180 : vector<1x16xf32>
    %183 = arith.subf %181, %182 : vector<1x16xf32>
    %cst_107 = arith.constant 9.99999974E-6 : f32
    %184 = vector.broadcast %cst_107 : f32 to vector<1x16xf32>
    %185 = arith.addf %183, %184 : vector<1x16xf32>
    %186 = math.rsqrt %185 : vector<1x16xf32>
    %187 = arith.mulf %186, %159 : vector<1x16xf32>
    %188 = vector.broadcast %187 : vector<1x16xf32> to vector<286x16xf32>
    %189 = arith.mulf %157, %188 : vector<286x16xf32>
    %190 = arith.mulf %180, %187 : vector<1x16xf32>
    %191 = arith.subf %160, %190 : vector<1x16xf32>
    %192 = vector.broadcast %191 : vector<1x16xf32> to vector<286x16xf32>
    %193 = arith.addf %189, %192 : vector<286x16xf32>
    %cst_108 = arith.constant 0.000000e+00 : f32
    %194 = vector.broadcast %cst_108 : f32 to vector<286x16xf32>
    %195 = arith.subf %194, %193 : vector<286x16xf32>
    %196 = math.exp %195 : vector<286x16xf32>
    %cst_109 = arith.constant 1.000000e+00 : f32
    %197 = vector.broadcast %cst_109 : f32 to vector<286x16xf32>
    %198 = arith.addf %197, %196 : vector<286x16xf32>
    %199 = tpu.reciprocal %198 : vector<286x16xf32> -> vector<286x16xf32>
    %200 = arith.mulf %193, %199 : vector<286x16xf32>
    %201 = vector.extract_strided_slice %1 {offsets = [38, 0], sizes = [286, 4], strides = [1, 1]} : vector<362x4xf32> to vector<286x4xf32>
    %c0_110 = arith.constant 0 : index
    %c0_111 = arith.constant 0 : index
    %202 = vector.load %arg16[%c0_110, %c0_111] : memref<4x16xf32, #tpu.memory_space<vmem>>, vector<4x16xf32>
    %cst_112 = arith.constant dense<0.000000e+00> : vector<286x16xf32>
    %203 = tpu.matmul %201, %202, %cst_112 {dimension_numbers = #tpu.dot_dimension_numbers<[1], [0], [0], [1], [0, 0, 1, 1], [], []>} : vector<286x4xf32>, vector<4x16xf32>, vector<286x16xf32> -> vector<286x16xf32>
    %c0_113 = arith.constant 0 : index
    %c0_114 = arith.constant 0 : index
    %204 = vector.load %arg17[%c0_113, %c0_114] : memref<1x16xf32, #tpu.memory_space<vmem>>, vector<1x16xf32>
    %205 = vector.broadcast %204 : vector<1x16xf32> to vector<286x16xf32>
    %206 = arith.addf %203, %205 : vector<286x16xf32>
    %207 = arith.addf %200, %206 : vector<286x16xf32>
    %c0_115 = arith.constant 0 : index
    %c0_116 = arith.constant 0 : index
    %c0_117 = arith.constant 0 : index
    %208 = vector.load %arg18[%c0_115, %c0_116, %c0_117] : memref<1x286x16xf32, #tpu.memory_space<vmem>>, vector<1x286x16xf32>
    %209 = vector.shape_cast %208 : vector<1x286x16xf32> to vector<286x16xf32>
    %210 = vector.shape_cast %207 : vector<286x16xf32> to vector<1x286x16xf32>
    tpu.vector_store %arg18[%c0_115, %c0_116, %c0_117], %210 {strides = array<i32>} : memref<1x286x16xf32, #tpu.memory_space<vmem>>, vector<1x286x16xf32>,
    return
  }
  func.func @transform_0(%arg0: i32) -> (i32, i32, i32) {
    %c0_i32 = arith.constant 0 : i32
    %c0_i32_0 = arith.constant 0 : i32
    %c0_i32_1 = arith.constant 0 : i32
    return %arg0, %c0_i32, %c0_i32_0 : i32, i32, i32
  }
  func.func @transform_1(%arg0: i32) -> (i32, i32, i32) {
    %c0_i32 = arith.constant 0 : i32
    %c0_i32_0 = arith.constant 0 : i32
    %c0_i32_1 = arith.constant 0 : i32
    return %arg0, %c0_i32, %c0_i32_0 : i32, i32, i32
  }
  func.func @transform_2(%arg0: i32) -> (i32, i32) {
    %c0_i32 = arith.constant 0 : i32
    %c0_i32_0 = arith.constant 0 : i32
    %c0_i32_1 = arith.constant 0 : i32
    return %c0_i32, %c0_i32_0 : i32, i32
  }
  func.func @transform_3(%arg0: i32) -> (i32, i32) {
    %c0_i32 = arith.constant 0 : i32
    %c0_i32_0 = arith.constant 0 : i32
    %c0_i32_1 = arith.constant 0 : i32
    return %c0_i32, %c0_i32_0 : i32, i32
  }
  func.func @transform_4(%arg0: i32) -> (i32, i32) {
    %c0_i32 = arith.constant 0 : i32
    %c0_i32_0 = arith.constant 0 : i32
    %c0_i32_1 = arith.constant 0 : i32
    return %c0_i32, %c0_i32_0 : i32, i32
  }
  func.func @transform_5(%arg0: i32) -> (i32, i32, i32) {
    %c0_i32 = arith.constant 0 : i32
    %c0_i32_0 = arith.constant 0 : i32
    %c0_i32_1 = arith.constant 0 : i32
    %c0_i32_2 = arith.constant 0 : i32
    return %c0_i32, %c0_i32_0, %c0_i32_1 : i32, i32, i32
  }
  func.func @transform_6(%arg0: i32) -> (i32, i32) {
    %c0_i32 = arith.constant 0 : i32
    %c0_i32_0 = arith.constant 0 : i32
    %c0_i32_1 = arith.constant 0 : i32
    return %c0_i32, %c0_i32_0 : i32, i32
  }
  func.func @transform_7(%arg0: i32) -> (i32, i32) {
    %c0_i32 = arith.constant 0 : i32
    %c0_i32_0 = arith.constant 0 : i32
    %c0_i32_1 = arith.constant 0 : i32
    return %c0_i32, %c0_i32_0 : i32, i32
  }
  func.func @transform_8(%arg0: i32) -> (i32, i32) {
    %c0_i32 = arith.constant 0 : i32
    %c0_i32_0 = arith.constant 0 : i32
    %c0_i32_1 = arith.constant 0 : i32
    return %c0_i32, %c0_i32_0 : i32, i32
  }
  func.func @transform_9(%arg0: i32) -> (i32, i32) {
    %c0_i32 = arith.constant 0 : i32
    %c0_i32_0 = arith.constant 0 : i32
    %c0_i32_1 = arith.constant 0 : i32
    return %c0_i32, %c0_i32_0 : i32, i32
  }
  func.func @transform_10(%arg0: i32) -> (i32, i32) {
    %c0_i32 = arith.constant 0 : i32
    %c0_i32_0 = arith.constant 0 : i32
    %c0_i32_1 = arith.constant 0 : i32
    return %c0_i32, %c0_i32_0 : i32, i32
  }
  func.func @transform_11(%arg0: i32) -> (i32, i32, i32) {
    %c0_i32 = arith.constant 0 : i32
    %c0_i32_0 = arith.constant 0 : i32
    %c0_i32_1 = arith.constant 0 : i32
    %c0_i32_2 = arith.constant 0 : i32
    return %c0_i32, %c0_i32_0, %c0_i32_1 : i32, i32, i32
  }
  func.func @transform_12(%arg0: i32) -> (i32, i32) {
    %c0_i32 = arith.constant 0 : i32
    %c0_i32_0 = arith.constant 0 : i32
    %c0_i32_1 = arith.constant 0 : i32
    return %c0_i32, %c0_i32_0 : i32, i32
  }
  func.func @transform_13(%arg0: i32) -> (i32, i32) {
    %c0_i32 = arith.constant 0 : i32
    %c0_i32_0 = arith.constant 0 : i32
    %c0_i32_1 = arith.constant 0 : i32
    return %c0_i32, %c0_i32_0 : i32, i32
  }
  func.func @transform_14(%arg0: i32) -> (i32, i32) {
    %c0_i32 = arith.constant 0 : i32
    %c0_i32_0 = arith.constant 0 : i32
    %c0_i32_1 = arith.constant 0 : i32
    return %c0_i32, %c0_i32_0 : i32, i32
  }
  func.func @transform_15(%arg0: i32) -> (i32, i32) {
    %c0_i32 = arith.constant 0 : i32
    %c0_i32_0 = arith.constant 0 : i32
    %c0_i32_1 = arith.constant 0 : i32
    return %c0_i32, %c0_i32_0 : i32, i32
  }
  func.func @transform_16(%arg0: i32) -> (i32, i32) {
    %c0_i32 = arith.constant 0 : i32
    %c0_i32_0 = arith.constant 0 : i32
    %c0_i32_1 = arith.constant 0 : i32
    return %c0_i32, %c0_i32_0 : i32, i32
  }
  func.func @transform_17(%arg0: i32) -> (i32, i32, i32) {
    %c0_i32 = arith.constant 0 : i32
    %c0_i32_0 = arith.constant 0 : i32
    %c0_i32_1 = arith.constant 0 : i32
    return %arg0, %c0_i32, %c0_i32_0 : i32, i32, i32
  }
}

</mosaic_0001>

<llo_original>
// kernel: tpu_custom_call.1
$region0: #{tpu_custom_call.1}
  #allocation0 [shape = 'u32[]', space=smem, size = 0x4, offset = 0x4, fixed_abs, tag = 'smem constant byte address 0x4 - core index']
  #allocation1 [shape = 'u32[144,128]{1,0:T(1,128)}', space=vmem, size = 0x12000, scoped, tag = 'internal scratch']
  %s0 = inlined_call_operand.vmem [shape: f32[2,362,4], index: 0, kind: input, shape index: {}]
  %s1 = inlined_call_operand.vmem [shape: f32[2,1,32], index: 1, kind: input, shape index: {}]
  %s2 = inlined_call_operand.vmem [shape: f32[324,1], index: 2, kind: input, shape index: {}]
  %s3 = inlined_call_operand.vmem [shape: f32[16,8], index: 3, kind: input, shape index: {}]
  %s4 = inlined_call_operand.vmem [shape: f32[8,16], index: 4, kind: input, shape index: {}]
  %s5 = inlined_call_operand.vmem [shape: f32[9,4,16], index: 5, kind: input, shape index: {}]
  %s6 = inlined_call_operand.vmem [shape: f32[1,16], index: 6, kind: input, shape index: {}]
  %s7 = inlined_call_operand.vmem [shape: f32[1,16], index: 7, kind: input, shape index: {}]
  %s8 = inlined_call_operand.vmem [shape: f32[1,16], index: 8, kind: input, shape index: {}]
  %s9 = inlined_call_operand.vmem [shape: f32[32,16], index: 9, kind: input, shape index: {}]
  %s10 = inlined_call_operand.vmem [shape: f32[1,16], index: 10, kind: input, shape index: {}]
  %s11 = inlined_call_operand.vmem [shape: f32[9,16,16], index: 11, kind: input, shape index: {}]
  %s12 = inlined_call_operand.vmem [shape: f32[1,16], index: 12, kind: input, shape index: {}]
  %s13 = inlined_call_operand.vmem [shape: f32[1,16], index: 13, kind: input, shape index: {}]
  %s14 = inlined_call_operand.vmem [shape: f32[1,16], index: 14, kind: input, shape index: {}]
  %s15 = inlined_call_operand.vmem [shape: f32[4,16], index: 15, kind: input, shape index: {}]
  %s16 = inlined_call_operand.vmem [shape: f32[1,16], index: 16, kind: input, shape index: {}]
  %s17 = inlined_call_operand.vmem [shape: f32[2,286,16], index: 17, kind: output, shape index: {}]
  %s18 = sld [smem:[#allocation0]]
  $region101: #{tpu_custom_call.1} parent=0
    _
  %s20 = ssub.s32 1, %s18
  %s21 = scalar_select 0, %s20, %s18
  loop: start=0, step=1, limit=4
  $region2: #{tpu_custom_call.1} parent=0 // loop_pre_header
    _
  $region3: #{tpu_custom_call.1} parent=0 // loop_header
    %s23 = sphi 0, %s27
    %p24 = scmp.ge.s32.totalorder %s23, 4
    %s33 = sphi 0, %s35
    %s36 = sphi 0, %s33
    %s37 = sphi 0, %s36
    %s53 = sphi 0, %s37
    %s59 = sphi 0, %s61
    %s62 = sphi 0, %s59
    %s63 = sphi 0, %s62
    %s79 = sphi 0, %s63
    %s83 = sphi 0, %s83
    %s85 = sphi 0, %s83
    %s86 = sphi 0, %s85
    %s100 = sphi 0, %s86
    %s104 = sphi 0, %s104
    %s106 = sphi 0, %s104
    %s107 = sphi 0, %s106
    %s121 = sphi 0, %s107
    %s125 = sphi 0, %s125
    %s127 = sphi 0, %s125
    %s128 = sphi 0, %s127
    %s142 = sphi 0, %s128
    %s146 = sphi 0, %s146
    %s148 = sphi 0, %s146
    %s149 = sphi 0, %s148
    %s163 = sphi 0, %s149
    %s167 = sphi 0, %s167
    %s169 = sphi 0, %s167
    %s170 = sphi 0, %s169
    %s184 = sphi 0, %s170
    %s188 = sphi 0, %s188
    %s190 = sphi 0, %s188
    %s191 = sphi 0, %s190
    %s205 = sphi 0, %s191
    %s209 = sphi 0, %s209
    %s211 = sphi 0, %s209
    %s212 = sphi 0, %s211
    %s226 = sphi 0, %s212
    %s230 = sphi 0, %s230
    %s232 = sphi 0, %s230
    %s233 = sphi 0, %s232
    %s247 = sphi 0, %s233
    %s251 = sphi 0, %s251
    %s253 = sphi 0, %s251
    %s254 = sphi 0, %s253
    %s268 = sphi 0, %s254
    %s272 = sphi 0, %s272
    %s274 = sphi 0, %s272
    %s275 = sphi 0, %s274
    %s289 = sphi 0, %s275
    %s293 = sphi 0, %s293
    %s295 = sphi 0, %s293
    %s296 = sphi 0, %s295
    %s310 = sphi 0, %s296
    %s314 = sphi 0, %s314
    %s316 = sphi 0, %s314
    %s317 = sphi 0, %s316
    %s331 = sphi 0, %s317
    %s335 = sphi 0, %s335
    %s337 = sphi 0, %s335
    %s338 = sphi 0, %s337
    %s352 = sphi 0, %s338
    %s356 = sphi 0, %s356
    %s358 = sphi 0, %s356
    %s359 = sphi 0, %s358
    %s373 = sphi 0, %s359
    %s377 = sphi 0, %s377
    %s379 = sphi 0, %s377
    %s380 = sphi 0, %s379
    %s394 = sphi 0, %s380
    %s400 = sphi 0, %s402
    %s403 = sphi 0, %s400
    %s404 = sphi 0, %s403
    %s420 = sphi 0, %s404
  $region4: #{tpu_custom_call.1} parent=0 // loop_header_branch
    %26 = sbr.rel (%p24) target = $region8
  $region5: #{tpu_custom_call.1} parent=0 // loop_body
    %s28 = ssub.s32 %s23, 1
    %s29 = ssub.s32 %s23, 2
    %s30 = sadd.s32 %s23, 1
    %s31 = ssub.s32 %s23, %s30
    %p32 = scmp.eq.s32.totalorder %s31, 0
    %s34 = sadd.s32 %s33, 1
    %s35 = scalar_select %p32, %s33, %s34
    %p38 = pneg %p32
    %p39 = scmp.eq.s32.totalorder %s23, 1
    %p40 = por %p38, %p39
    %p41 = scmp.ne.s32.totalorder %s33, %s36
    %p42 = scmp.eq.s32.totalorder %s23, 0
    %p43 = por %p41, %p42
    %p44 = scmp.ne.s32.totalorder %s33, %s36
    %p45 = scmp.eq.s32.totalorder %s28, 1
    %p46 = por %p44, %p45
    %p47 = scmp.ne.s32.totalorder %s36, %s37
    %p48 = scmp.eq.s32.totalorder %s28, 0
    %p49 = por %p47, %p48
    %p50 = scmp.ne.s32.totalorder %s36, %s37
    %p51 = scmp.eq.s32.totalorder %s29, 1
    %p52 = por %p50, %p51
    %p54 = scmp.ne.s32.totalorder %s37, %s53
    %p55 = scmp.eq.s32.totalorder %s29, 0
    %p56 = por %p54, %p55
    %s57 = ssub.s32 %s23, %s30
    %p58 = scmp.eq.s32.totalorder %s57, 0
    %s60 = sadd.s32 %s59, 1
    %s61 = scalar_select %p58, %s59, %s60
    %p64 = pneg %p58
    %p65 = scmp.eq.s32.totalorder %s23, 1
    %p66 = por %p64, %p65
    %p67 = scmp.ne.s32.totalorder %s59, %s62
    %p68 = scmp.eq.s32.totalorder %s23, 0
    %p69 = por %p67, %p68
    %p70 = scmp.ne.s32.totalorder %s59, %s62
    %p71 = scmp.eq.s32.totalorder %s28, 1
    %p72 = por %p70, %p71
    %p73 = scmp.ne.s32.totalorder %s62, %s63
    %p74 = scmp.eq.s32.totalorder %s28, 0
    %p75 = por %p73, %p74
    %p76 = scmp.ne.s32.totalorder %s62, %s63
    %p77 = scmp.eq.s32.totalorder %s29, 1
    %p78 = por %p76, %p77
    %p80 = scmp.ne.s32.totalorder %s63, %s79
    %p81 = scmp.eq.s32.totalorder %s29, 0
    %p82 = por %p80, %p81
    %s84 = sadd.s32 %s83, 1
    %p87 = scmp.eq.s32.totalorder %s23, 1
    %p88 = scmp.ne.s32.totalorder %s83, %s85
    %p89 = scmp.eq.s32.totalorder %s23, 0
    %p90 = por %p88, %p89
    %p91 = scmp.ne.s32.totalorder %s83, %s85
    %p92 = scmp.eq.s32.totalorder %s28, 1
    %p93 = por %p91, %p92
    %p94 = scmp.ne.s32.totalorder %s85, %s86
    %p95 = scmp.eq.s32.totalorder %s28, 0
    %p96 = por %p94, %p95
    %p97 = scmp.ne.s32.totalorder %s85, %s86
    %p98 = scmp.eq.s32.totalorder %s29, 1
    %p99 = por %p97, %p98
    %p101 = scmp.ne.s32.totalorder %s86, %s100
    %p102 = scmp.eq.s32.totalorder %s29, 0
    %p103 = por %p101, %p102
    %s105 = sadd.s32 %s104, 1
    %p108 = scmp.eq.s32.totalorder %s23, 1
    %p109 = scmp.ne.s32.totalorder %s104, %s106
    %p110 = scmp.eq.s32.totalorder %s23, 0
    %p111 = por %p109, %p110
    %p112 = scmp.ne.s32.totalorder %s104, %s106
    %p113 = scmp.eq.s32.totalorder %s28, 1
    %p114 = por %p112, %p113
    %p115 = scmp.ne.s32.totalorder %s106, %s107
    %p116 = scmp.eq.s32.totalorder %s28, 0
    %p117 = por %p115, %p116
    %p118 = scmp.ne.s32.totalorder %s106, %s107
    %p119 = scmp.eq.s32.totalorder %s29, 1
    %p120 = por %p118, %p119
    %p122 = scmp.ne.s32.totalorder %s107, %s121
    %p123 = scmp.eq.s32.totalorder %s29, 0
    %p124 = por %p122, %p123
    %s126 = sadd.s32 %s125, 1
    %p129 = scmp.eq.s32.totalorder %s23, 1
    %p130 = scmp.ne.s32.totalorder %s125, %s127
    %p131 = scmp.eq.s32.totalorder %s23, 0
    %p132 = por %p130, %p131
    %p133 = scmp.ne.s32.totalorder %s125, %s127
    %p134 = scmp.eq.s32.totalorder %s28, 1
    %p135 = por %p133, %p134
    %p136 = scmp.ne.s32.totalorder %s127, %s128
    %p137 = scmp.eq.s32.totalorder %s28, 0
    %p138 = por %p136, %p137
    %p139 = scmp.ne.s32.totalorder %s127, %s128
    %p140 = scmp.eq.s32.totalorder %s29, 1
    %p141 = por %p139, %p140
    %p143 = scmp.ne.s32.totalorder %s128, %s142
    %p144 = scmp.eq.s32.totalorder %s29, 0
    %p145 = por %p143, %p144
    %s147 = sadd.s32 %s146, 1
    %p150 = scmp.eq.s32.totalorder %s23, 1
    %p151 = scmp.ne.s32.totalorder %s146, %s148
    %p152 = scmp.eq.s32.totalorder %s23, 0
    %p153 = por %p151, %p152
    %p154 = scmp.ne.s32.totalorder %s146, %s148
    %p155 = scmp.eq.s32.totalorder %s28, 1
    %p156 = por %p154, %p155
    %p157 = scmp.ne.s32.totalorder %s148, %s149
    %p158 = scmp.eq.s32.totalorder %s28, 0
    %p159 = por %p157, %p158
    %p160 = scmp.ne.s32.totalorder %s148, %s149
    %p161 = scmp.eq.s32.totalorder %s29, 1
    %p162 = por %p160, %p161
    %p164 = scmp.ne.s32.totalorder %s149, %s163
    %p165 = scmp.eq.s32.totalorder %s29, 0
    %p166 = por %p164, %p165
    %s168 = sadd.s32 %s167, 1
    %p171 = scmp.eq.s32.totalorder %s23, 1
    %p172 = scmp.ne.s32.totalorder %s167, %s169
    %p173 = scmp.eq.s32.totalorder %s23, 0
    %p174 = por %p172, %p173
    %p175 = scmp.ne.s32.totalorder %s167, %s169
    %p176 = scmp.eq.s32.totalorder %s28, 1
    %p177 = por %p175, %p176
    %p178 = scmp.ne.s32.totalorder %s169, %s170
    %p179 = scmp.eq.s32.totalorder %s28, 0
    %p180 = por %p178, %p179
    %p181 = scmp.ne.s32.totalorder %s169, %s170
    %p182 = scmp.eq.s32.totalorder %s29, 1
    %p183 = por %p181, %p182
    %p185 = scmp.ne.s32.totalorder %s170, %s184
    %p186 = scmp.eq.s32.totalorder %s29, 0
    %p187 = por %p185, %p186
    %s189 = sadd.s32 %s188, 1
    %p192 = scmp.eq.s32.totalorder %s23, 1
    %p193 = scmp.ne.s32.totalorder %s188, %s190
    %p194 = scmp.eq.s32.totalorder %s23, 0
    %p195 = por %p193, %p194
    %p196 = scmp.ne.s32.totalorder %s188, %s190
    %p197 = scmp.eq.s32.totalorder %s28, 1
    %p198 = por %p196, %p197
    %p199 = scmp.ne.s32.totalorder %s190, %s191
    %p200 = scmp.eq.s32.totalorder %s28, 0
    %p201 = por %p199, %p200
    %p202 = scmp.ne.s32.totalorder %s190, %s191
    %p203 = scmp.eq.s32.totalorder %s29, 1
    %p204 = por %p202, %p203
    %p206 = scmp.ne.s32.totalorder %s191, %s205
    %p207 = scmp.eq.s32.totalorder %s29, 0
    %p208 = por %p206, %p207
    %s210 = sadd.s32 %s209, 1
    %p213 = scmp.eq.s32.totalorder %s23, 1
    %p214 = scmp.ne.s32.totalorder %s209, %s211
    %p215 = scmp.eq.s32.totalorder %s23, 0
    %p216 = por %p214, %p215
    %p217 = scmp.ne.s32.totalorder %s209, %s211
    %p218 = scmp.eq.s32.totalorder %s28, 1
    %p219 = por %p217, %p218
    %p220 = scmp.ne.s32.totalorder %s211, %s212
    %p221 = scmp.eq.s32.totalorder %s28, 0
    %p222 = por %p220, %p221
    %p223 = scmp.ne.s32.totalorder %s211, %s212
    %p224 = scmp.eq.s32.totalorder %s29, 1
    %p225 = por %p223, %p224
    %p227 = scmp.ne.s32.totalorder %s212, %s226
    %p228 = scmp.eq.s32.totalorder %s29, 0
    %p229 = por %p227, %p228
    %s231 = sadd.s32 %s230, 1
    %p234 = scmp.eq.s32.totalorder %s23, 1
    %p235 = scmp.ne.s32.totalorder %s230, %s232
    %p236 = scmp.eq.s32.totalorder %s23, 0
    %p237 = por %p235, %p236
    %p238 = scmp.ne.s32.totalorder %s230, %s232
    %p239 = scmp.eq.s32.totalorder %s28, 1
    %p240 = por %p238, %p239
    %p241 = scmp.ne.s32.totalorder %s232, %s233
    %p242 = scmp.eq.s32.totalorder %s28, 0
    %p243 = por %p241, %p242
    %p244 = scmp.ne.s32.totalorder %s232, %s233
    %p245 = scmp.eq.s32.totalorder %s29, 1
    %p246 = por %p244, %p245
    %p248 = scmp.ne.s32.totalorder %s233, %s247
    %p249 = scmp.eq.s32.totalorder %s29, 0
    %p250 = por %p248, %p249
    %s252 = sadd.s32 %s251, 1
    %p255 = scmp.eq.s32.totalorder %s23, 1
    %p256 = scmp.ne.s32.totalorder %s251, %s253
    %p257 = scmp.eq.s32.totalorder %s23, 0
    %p258 = por %p256, %p257
    %p259 = scmp.ne.s32.totalorder %s251, %s253
    %p260 = scmp.eq.s32.totalorder %s28, 1
    %p261 = por %p259, %p260
    %p262 = scmp.ne.s32.totalorder %s253, %s254
    %p263 = scmp.eq.s32.totalorder %s28, 0
    %p264 = por %p262, %p263
    %p265 = scmp.ne.s32.totalorder %s253, %s254
    %p266 = scmp.eq.s32.totalorder %s29, 1
    %p267 = por %p265, %p266
    %p269 = scmp.ne.s32.totalorder %s254, %s268
    %p270 = scmp.eq.s32.totalorder %s29, 0
    %p271 = por %p269, %p270
    %s273 = sadd.s32 %s272, 1
    %p276 = scmp.eq.s32.totalorder %s23, 1
    %p277 = scmp.ne.s32.totalorder %s272, %s274
    %p278 = scmp.eq.s32.totalorder %s23, 0
    %p279 = por %p277, %p278
    %p280 = scmp.ne.s32.totalorder %s272, %s274
    %p281 = scmp.eq.s32.totalorder %s28, 1
    %p282 = por %p280, %p281
    %p283 = scmp.ne.s32.totalorder %s274, %s275
    %p284 = scmp.eq.s32.totalorder %s28, 0
    %p285 = por %p283, %p284
    %p286 = scmp.ne.s32.totalorder %s274, %s275
    %p287 = scmp.eq.s32.totalorder %s29, 1
    %p288 = por %p286, %p287
    %p290 = scmp.ne.s32.totalorder %s275, %s289
    %p291 = scmp.eq.s32.totalorder %s29, 0
    %p292 = por %p290, %p291
    %s294 = sadd.s32 %s293, 1
    %p297 = scmp.eq.s32.totalorder %s23, 1
    %p298 = scmp.ne.s32.totalorder %s293, %s295
    %p299 = scmp.eq.s32.totalorder %s23, 0
    %p300 = por %p298, %p299
    %p301 = scmp.ne.s32.totalorder %s293, %s295
    %p302 = scmp.eq.s32.totalorder %s28, 1
    %p303 = por %p301, %p302
    %p304 = scmp.ne.s32.totalorder %s295, %s296
    %p305 = scmp.eq.s32.totalorder %s28, 0
    %p306 = por %p304, %p305
    %p307 = scmp.ne.s32.totalorder %s295, %s296
    %p308 = scmp.eq.s32.totalorder %s29, 1
    %p309 = por %p307, %p308
    %p311 = scmp.ne.s32.totalorder %s296, %s310
    %p312 = scmp.eq.s32.totalorder %s29, 0
    %p313 = por %p311, %p312
    %s315 = sadd.s32 %s314, 1
    %p318 = scmp.eq.s32.totalorder %s23, 1
    %p319 = scmp.ne.s32.totalorder %s314, %s316
    %p320 = scmp.eq.s32.totalorder %s23, 0
    %p321 = por %p319, %p320
    %p322 = scmp.ne.s32.totalorder %s314, %s316
    %p323 = scmp.eq.s32.totalorder %s28, 1
    %p324 = por %p322, %p323
    %p325 = scmp.ne.s32.totalorder %s316, %s317
    %p326 = scmp.eq.s32.totalorder %s28, 0
    %p327 = por %p325, %p326
    %p328 = scmp.ne.s32.totalorder %s316, %s317
    %p329 = scmp.eq.s32.totalorder %s29, 1
    %p330 = por %p328, %p329
    %p332 = scmp.ne.s32.totalorder %s317, %s331
    %p333 = scmp.eq.s32.totalorder %s29, 0
    %p334 = por %p332, %p333
    %s336 = sadd.s32 %s335, 1
    %p339 = scmp.eq.s32.totalorder %s23, 1
    %p340 = scmp.ne.s32.totalorder %s335, %s337
    %p341 = scmp.eq.s32.totalorder %s23, 0
    %p342 = por %p340, %p341
    %p343 = scmp.ne.s32.totalorder %s335, %s337
    %p344 = scmp.eq.s32.totalorder %s28, 1
    %p345 = por %p343, %p344
    %p346 = scmp.ne.s32.totalorder %s337, %s338
    %p347 = scmp.eq.s32.totalorder %s28, 0
    %p348 = por %p346, %p347
    %p349 = scmp.ne.s32.totalorder %s337, %s338
    %p350 = scmp.eq.s32.totalorder %s29, 1
    %p351 = por %p349, %p350
    %p353 = scmp.ne.s32.totalorder %s338, %s352
    %p354 = scmp.eq.s32.totalorder %s29, 0
    %p355 = por %p353, %p354
    %s357 = sadd.s32 %s356, 1
    %p360 = scmp.eq.s32.totalorder %s23, 1
    %p361 = scmp.ne.s32.totalorder %s356, %s358
    %p362 = scmp.eq.s32.totalorder %s23, 0
    %p363 = por %p361, %p362
    %p364 = scmp.ne.s32.totalorder %s356, %s358
    %p365 = scmp.eq.s32.totalorder %s28, 1
    %p366 = por %p364, %p365
    %p367 = scmp.ne.s32.totalorder %s358, %s359
    %p368 = scmp.eq.s32.totalorder %s28, 0
    %p369 = por %p367, %p368
    %p370 = scmp.ne.s32.totalorder %s358, %s359
    %p371 = scmp.eq.s32.totalorder %s29, 1
    %p372 = por %p370, %p371
    %p374 = scmp.ne.s32.totalorder %s359, %s373
    %p375 = scmp.eq.s32.totalorder %s29, 0
    %p376 = por %p374, %p375
    %s378 = sadd.s32 %s377, 1
    %p381 = scmp.eq.s32.totalorder %s23, 1
    %p382 = scmp.ne.s32.totalorder %s377, %s379
    %p383 = scmp.eq.s32.totalorder %s23, 0
    %p384 = por %p382, %p383
    %p385 = scmp.ne.s32.totalorder %s377, %s379
    %p386 = scmp.eq.s32.totalorder %s28, 1
    %p387 = por %p385, %p386
    %p388 = scmp.ne.s32.totalorder %s379, %s380
    %p389 = scmp.eq.s32.totalorder %s28, 0
    %p390 = por %p388, %p389
    %p391 = scmp.ne.s32.totalorder %s379, %s380
    %p392 = scmp.eq.s32.totalorder %s29, 1
    %p393 = por %p391, %p392
    %p395 = scmp.ne.s32.totalorder %s380, %s394
    %p396 = scmp.eq.s32.totalorder %s29, 0
    %p397 = por %p395, %p396
    %s398 = ssub.s32 %s23, %s30
    %p399 = scmp.eq.s32.totalorder %s398, 0
    %s401 = sadd.s32 %s400, 1
    %s402 = scalar_select %p399, %s400, %s401
    %p405 = pneg %p399
    %p406 = scmp.eq.s32.totalorder %s23, 1
    %p407 = por %p405, %p406
    %p408 = scmp.ne.s32.totalorder %s400, %s403
    %p409 = scmp.eq.s32.totalorder %s23, 0
    %p410 = por %p408, %p409
    %p411 = scmp.ne.s32.totalorder %s400, %s403
    %p412 = scmp.eq.s32.totalorder %s28, 1
    %p413 = por %p411, %p412
    %p414 = scmp.ne.s32.totalorder %s403, %s404
    %p415 = scmp.eq.s32.totalorder %s28, 0
    %p416 = por %p414, %p415
    %p417 = scmp.ne.s32.totalorder %s403, %s404
    %p418 = scmp.eq.s32.totalorder %s29, 1
    %p419 = por %p417, %p418
    %p421 = scmp.ne.s32.totalorder %s404, %s420
    %p422 = scmp.eq.s32.totalorder %s29, 0
    %p423 = por %p421, %p422
    %p424 = scmp.le.s32.totalorder 1, %s23
    %p425 = scmp.lt.s32.totalorder %s23, 3
    %p426 = pnand %p424, %p425
    %p427 = pneg %p426
    // Predicated region
    $region9: #{tpu_custom_call.1} parent=5 // pred_check
      _
    $region10: #{tpu_custom_call.1} parent=5 // pred_check_branch
      %429 = sbr.rel (%p426) target = $region12
    $region11: #{tpu_custom_call.1} parent=5 // pred_region
      %s430 = ssub.s32 %s23, 1
      // Predicated region
      $region13: #{tpu_custom_call.1} parent=11 // pred_check
        %p431 = pneg %p96
      $region14: #{tpu_custom_call.1} parent=11 // pred_check_branch
        %433 = sbr.rel (%p431) target = $region16
      $region15: #{tpu_custom_call.1} parent=11 // pred_region
        _
      $region16: #{tpu_custom_call.1} parent=11 // pred_fallthru
        _
      // Predicated region
      $region17: #{tpu_custom_call.1} parent=11 // pred_check
        %p434 = pneg %p117
      $region18: #{tpu_custom_call.1} parent=11 // pred_check_branch
        %436 = sbr.rel (%p434) target = $region20
      $region19: #{tpu_custom_call.1} parent=11 // pred_region
        _
      $region20: #{tpu_custom_call.1} parent=11 // pred_fallthru
        _
      // Predicated region
      $region21: #{tpu_custom_call.1} parent=11 // pred_check
        %p437 = pneg %p138
      $region22: #{tpu_custom_call.1} parent=11 // pred_check_branch
        %439 = sbr.rel (%p437) target = $region24
      $region23: #{tpu_custom_call.1} parent=11 // pred_region
        _
      $region24: #{tpu_custom_call.1} parent=11 // pred_fallthru
        _
      // Predicated region
      $region25: #{tpu_custom_call.1} parent=11 // pred_check
        %p440 = pneg %p159
      $region26: #{tpu_custom_call.1} parent=11 // pred_check_branch
        %442 = sbr.rel (%p440) target = $region28
      $region27: #{tpu_custom_call.1} parent=11 // pred_region
        _
      $region28: #{tpu_custom_call.1} parent=11 // pred_fallthru
        _
      // Predicated region
      $region29: #{tpu_custom_call.1} parent=11 // pred_check
        %p443 = pneg %p180
      $region30: #{tpu_custom_call.1} parent=11 // pred_check_branch
        %445 = sbr.rel (%p443) target = $region32
      $region31: #{tpu_custom_call.1} parent=11 // pred_region
        _
      $region32: #{tpu_custom_call.1} parent=11 // pred_fallthru
        _
      // Predicated region
      $region33: #{tpu_custom_call.1} parent=11 // pred_check
        %p446 = pneg %p201
      $region34: #{tpu_custom_call.1} parent=11 // pred_check_branch
        %448 = sbr.rel (%p446) target = $region36
      $region35: #{tpu_custom_call.1} parent=11 // pred_region
        _
      $region36: #{tpu_custom_call.1} parent=11 // pred_fallthru
        _
      // Predicated region
      $region37: #{tpu_custom_call.1} parent=11 // pred_check
        %p449 = pneg %p222
      $region38: #{tpu_custom_call.1} parent=11 // pred_check_branch
        %451 = sbr.rel (%p449) target = $region40
      $region39: #{tpu_custom_call.1} parent=11 // pred_region
        _
      $region40: #{tpu_custom_call.1} parent=11 // pred_fallthru
        _
      // Predicated region
      $region41: #{tpu_custom_call.1} parent=11 // pred_check
        %p452 = pneg %p243
      $region42: #{tpu_custom_call.1} parent=11 // pred_check_branch
        %454 = sbr.rel (%p452) target = $region44
      $region43: #{tpu_custom_call.1} parent=11 // pred_region
        _
      $region44: #{tpu_custom_call.1} parent=11 // pred_fallthru
        _
      // Predicated region
      $region45: #{tpu_custom_call.1} parent=11 // pred_check
        %p455 = pneg %p264
      $region46: #{tpu_custom_call.1} parent=11 // pred_check_branch
        %457 = sbr.rel (%p455) target = $region48
      $region47: #{tpu_custom_call.1} parent=11 // pred_region
        _
      $region48: #{tpu_custom_call.1} parent=11 // pred_fallthru
        _
      // Predicated region
      $region49: #{tpu_custom_call.1} parent=11 // pred_check
        %p458 = pneg %p285
      $region50: #{tpu_custom_call.1} parent=11 // pred_check_branch
        %460 = sbr.rel (%p458) target = $region52
      $region51: #{tpu_custom_call.1} parent=11 // pred_region
        _
      $region52: #{tpu_custom_call.1} parent=11 // pred_fallthru
        _
      // Predicated region
      $region53: #{tpu_custom_call.1} parent=11 // pred_check
        %p461 = pneg %p306
      $region54: #{tpu_custom_call.1} parent=11 // pred_check_branch
        %463 = sbr.rel (%p461) target = $region56
      $region55: #{tpu_custom_call.1} parent=11 // pred_region
        _
      $region56: #{tpu_custom_call.1} parent=11 // pred_fallthru
        _
      // Predicated region
      $region57: #{tpu_custom_call.1} parent=11 // pred_check
        %p464 = pneg %p327
      $region58: #{tpu_custom_call.1} parent=11 // pred_check_branch
        %466 = sbr.rel (%p464) target = $region60
      $region59: #{tpu_custom_call.1} parent=11 // pred_region
        _
      $region60: #{tpu_custom_call.1} parent=11 // pred_fallthru
        _
      // Predicated region
      $region61: #{tpu_custom_call.1} parent=11 // pred_check
        %p467 = pneg %p348
      $region62: #{tpu_custom_call.1} parent=11 // pred_check_branch
        %469 = sbr.rel (%p467) target = $region64
      $region63: #{tpu_custom_call.1} parent=11 // pred_region
        _
      $region64: #{tpu_custom_call.1} parent=11 // pred_fallthru
        _
      // Predicated region
      $region65: #{tpu_custom_call.1} parent=11 // pred_check
        %p470 = pneg %p369
      $region66: #{tpu_custom_call.1} parent=11 // pred_check_branch
        %472 = sbr.rel (%p470) target = $region68
      $region67: #{tpu_custom_call.1} parent=11 // pred_region
        _
      $region68: #{tpu_custom_call.1} parent=11 // pred_fallthru
        _
      // Predicated region
      $region69: #{tpu_custom_call.1} parent=11 // pred_check
        %p473 = pneg %p390
      $region70: #{tpu_custom_call.1} parent=11 // pred_check_branch
        %475 = sbr.rel (%p473) target = $region72
      $region71: #{tpu_custom_call.1} parent=11 // pred_region
        _
      $region72: #{tpu_custom_call.1} parent=11 // pred_fallthru
        _
    $region12: #{tpu_custom_call.1} parent=5 // pred_fallthru
      _
    %p476 = scmp.lt.s32.totalorder %s23, 2
    // Predicated region
    $region73: #{tpu_custom_call.1} parent=5 // pred_check
      %p477 = pneg %p476
    $region74: #{tpu_custom_call.1} parent=5 // pred_check_branch
      %479 = sbr.rel (%p477) target = $region76
    $region75: #{tpu_custom_call.1} parent=5 // pred_region
      // Predicated region
      $region77: #{tpu_custom_call.1} parent=75 // pred_check
        %p480 = pneg %p43
      $region78: #{tpu_custom_call.1} parent=75 // pred_check_branch
        %482 = sbr.rel (%p480) target = $region80
      $region79: #{tpu_custom_call.1} parent=75 // pred_region
        %p483 = scmp.lt.s32.totalorder %s23, 1
        %s484 = scalar_select %p483, %s23, 1
        %s485 = smul.addr %s484, 46
        %s486 = smul.addr %s485, 8
        %s487 = scalar_lea.vmem %s0, %s486
      $region80: #{tpu_custom_call.1} parent=75 // pred_fallthru
        _
      // Predicated region
      $region81: #{tpu_custom_call.1} parent=75 // pred_check
        %p488 = pneg %p69
      $region82: #{tpu_custom_call.1} parent=75 // pred_check_branch
        %490 = sbr.rel (%p488) target = $region84
      $region83: #{tpu_custom_call.1} parent=75 // pred_region
        %p491 = scmp.lt.s32.totalorder %s23, 1
        %s492 = scalar_select %p491, %s23, 1
        %s493 = scalar_lea.vmem %s1, %s492
      $region84: #{tpu_custom_call.1} parent=75 // pred_fallthru
        _
    $region76: #{tpu_custom_call.1} parent=5 // pred_fallthru
      _
    %p494 = scmp.le.s32.totalorder 1, %s23
    %p495 = scmp.lt.s32.totalorder %s23, 3
    %p496 = pnand %p494, %p495
    %p497 = pneg %p496
    // Predicated region
    $region85: #{tpu_custom_call.1} parent=5 // pred_check
      _
    $region86: #{tpu_custom_call.1} parent=5 // pred_check_branch
      %499 = sbr.rel (%p496) target = $region88
    $region87: #{tpu_custom_call.1} parent=5 // pred_region
      %s500 = ssub.s32 %s23, 1
      %p501 = scmp.lt.s32.totalorder %s28, 1
      %s502 = scalar_select %p501, %s28, 1
      %s503 = smul.addr %s502, 46
      %s504 = smul.addr %s503, 8
      %s505 = scalar_lea.vmem %s0, %s504
      %p506 = pneg %p49
      %p507 = pneg %p46
      %p508 = scmp.lt.s32.totalorder %s28, 1
      %s509 = scalar_select %p508, %s28, 1
      %s510 = scalar_lea.vmem %s1, %s509
      %p511 = pneg %p75
      %p512 = pneg %p72
      %p513 = pneg %p96
      %p514 = pneg %p93
      %p515 = pneg %p117
      %p516 = pneg %p114
      %p517 = pneg %p138
      %p518 = pneg %p135
      %p519 = pneg %p159
      %p520 = pneg %p156
      %p521 = pneg %p180
      %p522 = pneg %p177
      %p523 = pneg %p201
      %p524 = pneg %p198
      %p525 = pneg %p222
      %p526 = pneg %p219
      %p527 = pneg %p243
      %p528 = pneg %p240
      %p529 = pneg %p264
      %p530 = pneg %p261
      %p531 = pneg %p285
      %p532 = pneg %p282
      %p533 = pneg %p306
      %p534 = pneg %p303
      %p535 = pneg %p327
      %p536 = pneg %p324
      %p537 = pneg %p348
      %p538 = pneg %p345
      %p539 = pneg %p369
      %p540 = pneg %p366
      %p541 = pneg %p390
      %p542 = pneg %p387
      %p543 = pneg %p416
      %p544 = pneg %p413
      %p545 = scmp.lt.s32.totalorder %s28, 1
      %s546 = scalar_select %p545, %s28, 1
      %s547 = smul.addr %s546, 36
      %s548 = smul.addr %s547, 8
      %s549 = scalar_lea.vmem %s17, %s548
      %p550 = scmp.lt.s32.totalorder %s28, 1
      %s551 = scalar_select %p550, %s28, 1
      %s552 = smul.addr %s551, 46
      %s553 = smul.addr %s552, 8
      %s554 = scalar_lea.vmem %s0, %s553
      %p555 = scmp.lt.s32.totalorder %s28, 1
      %s556 = scalar_select %p555, %s28, 1
      %s557 = scalar_lea.vmem %s1, %s556
      %p558 = scmp.lt.s32.totalorder %s28, 1
      %s559 = scalar_select %p558, %s28, 1
      %s560 = smul.addr %s559, 36
      %s561 = smul.addr %s560, 8
      %s562 = scalar_lea.vmem %s17, %s561
      %v563 = vld [vmem:[%s554] sm:$0xff]
      %v564 = vld [vmem:[%s554 + $0x8] sm:$0xff]
      %v565 = vld [vmem:[%s554 + $0x10] sm:$0xff]
      %v566 = vld [vmem:[%s554 + $0x18] sm:$0xff]
      %v567 = vld [vmem:[%s554 + $0x20] sm:$0xff]
      %v568 = vld [vmem:[%s554 + $0x28] sm:$0xff]
      %v569 = vld [vmem:[%s554 + $0x30] sm:$0xff]
      %v570 = vld [vmem:[%s554 + $0x38] sm:$0xff]
      %v571 = vld [vmem:[%s554 + $0x40] sm:$0xff]
      %v572 = vld [vmem:[%s554 + $0x48] sm:$0xff]
      %v573 = vld [vmem:[%s554 + $0x50] sm:$0xff]
      %v574 = vld [vmem:[%s554 + $0x58] sm:$0xff]
      %v575 = vld [vmem:[%s554 + $0x60] sm:$0xff]
      %v576 = vld [vmem:[%s554 + $0x68] sm:$0xff]
      %v577 = vld [vmem:[%s554 + $0x70] sm:$0xff]
      %v578 = vld [vmem:[%s554 + $0x78] sm:$0xff]
      %v579 = vld [vmem:[%s554 + $0x80] sm:$0xff]
      %v580 = vld [vmem:[%s554 + $0x88] sm:$0xff]
      %v581 = vld [vmem:[%s554 + $0x90] sm:$0xff]
      %v582 = vld [vmem:[%s554 + $0x98] sm:$0xff]
      %v583 = vld [vmem:[%s554 + $0xa0] sm:$0xff]
      %v584 = vld [vmem:[%s554 + $0xa8] sm:$0xff]
      %v585 = vld [vmem:[%s554 + $0xb0] sm:$0xff]
      %v586 = vld [vmem:[%s554 + $0xb8] sm:$0xff]
      %v587 = vld [vmem:[%s554 + $0xc0] sm:$0xff]
      %v588 = vld [vmem:[%s554 + $0xc8] sm:$0xff]
      %v589 = vld [vmem:[%s554 + $0xd0] sm:$0xff]
      %v590 = vld [vmem:[%s554 + $0xd8] sm:$0xff]
      %v591 = vld [vmem:[%s554 + $0xe0] sm:$0xff]
      %v592 = vld [vmem:[%s554 + $0xe8] sm:$0xff]
      %v593 = vld [vmem:[%s554 + $0xf0] sm:$0xff]
      %v594 = vld [vmem:[%s554 + $0xf8] sm:$0xff]
      %v595 = vld [vmem:[%s554 + $0x100] sm:$0xff]
      %v596 = vld [vmem:[%s554 + $0x108] sm:$0xff]
      %v597 = vld [vmem:[%s554 + $0x110] sm:$0xff]
      %v598 = vld [vmem:[%s554 + $0x118] sm:$0xff]
      %v599 = vld [vmem:[%s554 + $0x120] sm:$0xff]
      %v600 = vld [vmem:[%s554 + $0x128] sm:$0xff]
      %v601 = vld [vmem:[%s554 + $0x130] sm:$0xff]
      %v602 = vld [vmem:[%s554 + $0x138] sm:$0xff]
      %v603 = vld [vmem:[%s554 + $0x140] sm:$0xff]
      %v604 = vld [vmem:[%s554 + $0x148] sm:$0xff]
      %v605 = vld [vmem:[%s554 + $0x150] sm:$0xff]
      %v606 = vld [vmem:[%s554 + $0x158] sm:$0xff]
      %v607 = vld [vmem:[%s554 + $0x160] sm:$0xff]
      %v608 = vld [vmem:[%s554 + $0x168] sm:$0x3]
      %v609 = vld [vmem:[%s2] sm:$0xff]
      %v610 = vld [vmem:[%s2 + $0x8] sm:$0xff]
      %v611 = vld [vmem:[%s2 + $0x10] sm:$0xff]
      %v612 = vld [vmem:[%s2 + $0x18] sm:$0xff]
      %v613 = vld [vmem:[%s2 + $0x20] sm:$0xff]
      %v614 = vld [vmem:[%s2 + $0x28] sm:$0xff]
      %v615 = vld [vmem:[%s2 + $0x30] sm:$0xff]
      %v616 = vld [vmem:[%s2 + $0x38] sm:$0xff]
      %v617 = vld [vmem:[%s2 + $0x40] sm:$0xff]
      %v618 = vld [vmem:[%s2 + $0x48] sm:$0xff]
      %v619 = vld [vmem:[%s2 + $0x50] sm:$0xff]
      %v620 = vld [vmem:[%s2 + $0x58] sm:$0xff]
      %v621 = vld [vmem:[%s2 + $0x60] sm:$0xff]
      %v622 = vld [vmem:[%s2 + $0x68] sm:$0xff]
      %v623 = vld [vmem:[%s2 + $0x70] sm:$0xff]
      %v624 = vld [vmem:[%s2 + $0x78] sm:$0xff]
      %v625 = vld [vmem:[%s2 + $0x80] sm:$0xff]
      %v626 = vld [vmem:[%s2 + $0x88] sm:$0xff]
      %v627 = vld [vmem:[%s2 + $0x90] sm:$0xff]
      %v628 = vld [vmem:[%s2 + $0x98] sm:$0xff]
      %v629 = vld [vmem:[%s2 + $0xa0] sm:$0xff]
      %v630 = vld [vmem:[%s2 + $0xa8] sm:$0xff]
      %v631 = vld [vmem:[%s2 + $0xb0] sm:$0xff]
      %v632 = vld [vmem:[%s2 + $0xb8] sm:$0xff]
      %v633 = vld [vmem:[%s2 + $0xc0] sm:$0xff]
      %v634 = vld [vmem:[%s2 + $0xc8] sm:$0xff]
      %v635 = vld [vmem:[%s2 + $0xd0] sm:$0xff]
      %v636 = vld [vmem:[%s2 + $0xd8] sm:$0xff]
      %v637 = vld [vmem:[%s2 + $0xe0] sm:$0xff]
      %v638 = vld [vmem:[%s2 + $0xe8] sm:$0xff]
      %v639 = vld [vmem:[%s2 + $0xf0] sm:$0xff]
      %v640 = vld [vmem:[%s2 + $0xf8] sm:$0xff]
      %v641 = vld [vmem:[%s2 + $0x100] sm:$0xff]
      %v642 = vld [vmem:[%s2 + $0x108] sm:$0xff]
      %v643 = vld [vmem:[%s2 + $0x110] sm:$0xff]
      %v644 = vld [vmem:[%s2 + $0x118] sm:$0xff]
      %v645 = vld [vmem:[%s2 + $0x120] sm:$0xff]
      %v646 = vld [vmem:[%s2 + $0x128] sm:$0xff]
      %v647 = vld [vmem:[%s2 + $0x130] sm:$0xff]
      %v648 = vld [vmem:[%s2 + $0x138] sm:$0xff]
      %v649 = vld [vmem:[%s2 + $0x140] sm:$0xf]
      %v650 = vld [vmem:[%s3] sm:$0xff]
      %v651 = vld [vmem:[%s3 + $0x8] sm:$0xff]
      %v652 = vld [vmem:[%s4] sm:$0xff]
      %v653 = vld [vmem:[%s5] sm:$0xf]
      %s654 = scalar_lea.vmem %s5, 4
      %v655 = vld [vmem:[%s654] sm:$0xf]
      %vm697 = vcmask 1046528
      %v698 = vrot.slane %v563, 1
      %v699 = vrot.slane %v564, 1
      %v700 = vsel %vm697, %v698, %v699
      %v701 = vrot.slane %v565, 1
      %v702 = vsel %vm697, %v699, %v701
      %v703 = vrot.slane %v566, 1
      %v704 = vsel %vm697, %v701, %v703
      %v705 = vrot.slane %v567, 1
      %v706 = vsel %vm697, %v703, %v705
      %v707 = vrot.slane %v568, 1
      %v708 = vsel %vm697, %v705, %v707
      %v709 = vrot.slane %v569, 1
      %v710 = vsel %vm697, %v707, %v709
      %v711 = vrot.slane %v570, 1
      %v712 = vsel %vm697, %v709, %v711
      %v713 = vrot.slane %v571, 1
      %v714 = vsel %vm697, %v711, %v713
      %v715 = vrot.slane %v572, 1
      %v716 = vsel %vm697, %v713, %v715
      %v717 = vrot.slane %v573, 1
      %v718 = vsel %vm697, %v715, %v717
      %v719 = vrot.slane %v574, 1
      %v720 = vsel %vm697, %v717, %v719
      %v721 = vrot.slane %v575, 1
      %v722 = vsel %vm697, %v719, %v721
      %v723 = vrot.slane %v576, 1
      %v724 = vsel %vm697, %v721, %v723
      %v725 = vrot.slane %v577, 1
      %v726 = vsel %vm697, %v723, %v725
      %v727 = vrot.slane %v578, 1
      %v728 = vsel %vm697, %v725, %v727
      %v729 = vrot.slane %v579, 1
      %v730 = vsel %vm697, %v727, %v729
      %v731 = vrot.slane %v580, 1
      %v732 = vsel %vm697, %v729, %v731
      %v733 = vrot.slane %v581, 1
      %v734 = vsel %vm697, %v731, %v733
      %v735 = vrot.slane %v582, 1
      %v736 = vsel %vm697, %v733, %v735
      %v737 = vrot.slane %v583, 1
      %v738 = vsel %vm697, %v735, %v737
      %v739 = vrot.slane %v584, 1
      %v740 = vsel %vm697, %v737, %v739
      %v741 = vrot.slane %v585, 1
      %v742 = vsel %vm697, %v739, %v741
      %v743 = vrot.slane %v586, 1
      %v744 = vsel %vm697, %v741, %v743
      %v745 = vrot.slane %v587, 1
      %v746 = vsel %vm697, %v743, %v745
      %v747 = vrot.slane %v588, 1
      %v748 = vsel %vm697, %v745, %v747
      %v749 = vrot.slane %v589, 1
      %v750 = vsel %vm697, %v747, %v749
      %v751 = vrot.slane %v590, 1
      %v752 = vsel %vm697, %v749, %v751
      %v753 = vrot.slane %v591, 1
      %v754 = vsel %vm697, %v751, %v753
      %v755 = vrot.slane %v592, 1
      %v756 = vsel %vm697, %v753, %v755
      %v757 = vrot.slane %v593, 1
      %v758 = vsel %vm697, %v755, %v757
      %v759 = vrot.slane %v594, 1
      %v760 = vsel %vm697, %v757, %v759
      %v761 = vrot.slane %v595, 1
      %v762 = vsel %vm697, %v759, %v761
      %v763 = vrot.slane %v596, 1
      %v764 = vsel %vm697, %v761, %v763
      %v765 = vrot.slane %v597, 1
      %v766 = vsel %vm697, %v763, %v765
      %v767 = vrot.slane %v598, 1
      %v768 = vsel %vm697, %v765, %v767
      %v769 = vrot.slane %v599, 1
      %v770 = vsel %vm697, %v767, %v769
      %v771 = vrot.slane %v600, 1
      %v772 = vsel %vm697, %v769, %v771
      %v773 = vrot.slane %v601, 1
      %v774 = vsel %vm697, %v771, %v773
      %v775 = vrot.slane %v602, 1
      %v776 = vsel %vm697, %v773, %v775
      %v777 = vrot.slane %v603, 1
      %v778 = vsel %vm697, %v775, %v777
      %vm779 = vcmask 31744
      %v780 = vsel %vm779, %v700, 0
      %v782 = vsel %vm779, %v702, 0
      %v784 = vsel %vm779, %v704, 0
      %v786 = vsel %vm779, %v706, 0
      %v788 = vsel %vm779, %v708, 0
      %v790 = vsel %vm779, %v710, 0
      %v792 = vsel %vm779, %v712, 0
      %v794 = vsel %vm779, %v714, 0
      %v796 = vsel %vm779, %v716, 0
      %v798 = vsel %vm779, %v718, 0
      %v800 = vsel %vm779, %v720, 0
      %v802 = vsel %vm779, %v722, 0
      %v804 = vsel %vm779, %v724, 0
      %v806 = vsel %vm779, %v726, 0
      %v808 = vsel %vm779, %v728, 0
      %v810 = vsel %vm779, %v730, 0
      %v812 = vsel %vm779, %v732, 0
      %v814 = vsel %vm779, %v734, 0
      %v816 = vsel %vm779, %v736, 0
      %v818 = vsel %vm779, %v738, 0
      %v820 = vsel %vm779, %v740, 0
      %v822 = vsel %vm779, %v742, 0
      %v824 = vsel %vm779, %v744, 0
      %v826 = vsel %vm779, %v746, 0
      %v828 = vsel %vm779, %v748, 0
      %v830 = vsel %vm779, %v750, 0
      %v832 = vsel %vm779, %v752, 0
      %v834 = vsel %vm779, %v754, 0
      %v836 = vsel %vm779, %v756, 0
      %v838 = vsel %vm779, %v758, 0
      %v840 = vsel %vm779, %v760, 0
      %v842 = vsel %vm779, %v762, 0
      %v844 = vsel %vm779, %v764, 0
      %v846 = vsel %vm779, %v766, 0
      %v848 = vsel %vm779, %v768, 0
      %v850 = vsel %vm779, %v770, 0
      %v852 = vsel %vm779, %v772, 0
      %v854 = vsel %vm779, %v774, 0
      %v856 = vsel %vm779, %v776, 0
      %v858 = vsel %vm779, %v778, 0
      %v860 = vsel %vm779, %v777, 0
      %vm862 = vcmask 1043456
      %v864 = vsel %vm862, %v655, 0
      %866 = vmatprep.subr.mxu0 0.0
      %867 = vmatpush1.msra.mxu0 %v864
      %868 = vmatprep.subr.mxu0 0.0
      %869 = vmatpush1.msra.mxu0 0.0
      %870 = vmatprep.subr.mxu0 0.0
      %871 = vmatpush1.msra.mxu0 0.0
      %872 = vmatprep.subr.mxu0 0.0
      %873 = vmatpush1.msra.mxu0 0.0
      %874 = vmatprep.subr.mxu0 0.0
      %875 = vmatpush1.msra.mxu0 0.0
      %876 = vmatprep.subr.mxu0 0.0
      %877 = vmatpush1.msra.mxu0 0.0
      %878 = vmatprep.subr.mxu0 0.0
      %879 = vmatpush1.msra.mxu0 0.0
      %880 = vmatprep.subr.mxu0 0.0
      %881 = vmatpush1.msra.mxu0 0.0
      %882 = vmatprep.subr.mxu0 0.0
      %883 = vmatpush1.msra.mxu0 0.0
      %884 = vmatprep.subr.mxu0 0.0
      %885 = vmatpush1.msra.mxu0 0.0
      %886 = vmatprep.subr.mxu0 0.0
      %887 = vmatpush1.msra.mxu0 0.0
      %888 = vmatprep.subr.mxu0 0.0
      %889 = vmatpush1.msra.mxu0 0.0
      %890 = vmatprep.subr.mxu0 0.0
      %891 = vmatpush1.msra.mxu0 0.0
      %892 = vmatprep.subr.mxu0 0.0
      %893 = vmatpush1.msra.mxu0 0.0
      %894 = vmatprep.subr.mxu0 0.0
      %895 = vmatpush1.msra.mxu0 0.0
      %896 = vmatprep.subr.mxu0 0.0
      %897 = vmatpush1.msra.mxu0 0.0
      %898 = vmatprep.subr.mxu0 0.0
      %899 = vmatpush1.msra.mxu0 0.0
      %900 = vmatprep.subr.mxu0 0.0
      %901 = vmatpush1.msra.mxu0 0.0
      %902 = vmatprep.subr.mxu0 0.0
      %903 = vmatpush1.msra.mxu0 0.0
      %904 = vmatprep.subr.mxu0 0.0
      %905 = vmatpush1.msra.mxu0 0.0
      %906 = vmatprep.subr.mxu0 0.0
      %907 = vmatpush1.msra.mxu0 0.0
      %908 = vmatprep.subr.mxu0 0.0
      %909 = vmatpush1.msra.mxu0 0.0
      %910 = vmatprep.subr.mxu0 0.0
      %911 = vmatpush1.msra.mxu0 0.0
      %912 = vmatprep.subr.mxu0 0.0
      %913 = vmatpush1.msra.mxu0 0.0
      %914 = vmatprep.subr.mxu0 0.0
      %915 = vmatpush1.msra.mxu0 0.0
      %916 = vmatprep.subr.mxu0 0.0
      %917 = vmatpush1.msra.mxu0 0.0
      %918 = vmatprep.subr.mxu0 0.0
      %919 = vmatpush1.msra.mxu0 0.0
      %920 = vmatprep.subr.mxu0 0.0
      %921 = vmatpush1.msra.mxu0 0.0
      %922 = vmatprep.subr.mxu0 0.0
      %923 = vmatpush1.msra.mxu0 0.0
      %924 = vmatprep.subr.mxu0 0.0
      %925 = vmatpush1.msra.mxu0 0.0
      %926 = vmatprep.subr.mxu0 0.0
      %927 = vmatpush1.msra.mxu0 0.0
      %928 = vmatprep.subr.mxu0 0.0
      %929 = vmatpush1.msra.mxu0 0.0
      %930 = vmatprep.mubr.f32.mxu0 0.0
      %931 = vmatmul.mubr.f32.gmra.mrb[0].mxu0 %v780
      %v932 = vpop.f32.mrb[0].mxu0
      %v933 = vadd.f32 0.0, %v932
      %v934 = vpop.f32.mrb[0].mxu0
      %935 = vmatprep.mubr.f32.mxu0 0.0
      %936 = vmatmul.mubr.f32.gmra.mrb[0].mxu0 %v782
      %v937 = vpop.f32.mrb[0].mxu0
      %v938 = vadd.f32 0.0, %v937
      %v939 = vpop.f32.mrb[0].mxu0
      %940 = vmatprep.mubr.f32.mxu0 0.0
      %941 = vmatmul.mubr.f32.gmra.mrb[0].mxu0 %v784
      %v942 = vpop.f32.mrb[0].mxu0
      %v943 = vadd.f32 0.0, %v942
      %v944 = vpop.f32.mrb[0].mxu0
      %945 = vmatprep.mubr.f32.mxu0 0.0
      %946 = vmatmul.mubr.f32.gmra.mrb[0].mxu0 %v786
      %v947 = vpop.f32.mrb[0].mxu0
      %v948 = vadd.f32 0.0, %v947
      %v949 = vpop.f32.mrb[0].mxu0
      %950 = vmatprep.mubr.f32.mxu0 0.0
      %951 = vmatmul.mubr.f32.gmra.mrb[0].mxu0 %v788
      %v952 = vpop.f32.mrb[0].mxu0
      %v953 = vadd.f32 0.0, %v952
      %v954 = vpop.f32.mrb[0].mxu0
      %955 = vmatprep.mubr.f32.mxu0 0.0
      %956 = vmatmul.mubr.f32.gmra.mrb[0].mxu0 %v790
      %v957 = vpop.f32.mrb[0].mxu0
      %v958 = vadd.f32 0.0, %v957
      %v959 = vpop.f32.mrb[0].mxu0
      %960 = vmatprep.mubr.f32.mxu0 0.0
      %961 = vmatmul.mubr.f32.gmra.mrb[0].mxu0 %v792
      %v962 = vpop.f32.mrb[0].mxu0
      %v963 = vadd.f32 0.0, %v962
      %v964 = vpop.f32.mrb[0].mxu0
      %965 = vmatprep.mubr.f32.mxu0 0.0
      %966 = vmatmul.mubr.f32.gmra.mrb[0].mxu0 %v794
      %v967 = vpop.f32.mrb[0].mxu0
      %v968 = vadd.f32 0.0, %v967
      %v969 = vpop.f32.mrb[0].mxu0
      %970 = vmatprep.mubr.f32.mxu0 0.0
      %971 = vmatmul.mubr.f32.gmra.mrb[0].mxu0 %v796
      %v972 = vpop.f32.mrb[0].mxu0
      %v973 = vadd.f32 0.0, %v972
      %v974 = vpop.f32.mrb[0].mxu0
      %975 = vmatprep.mubr.f32.mxu0 0.0
      %976 = vmatmul.mubr.f32.gmra.mrb[0].mxu0 %v798
      %v977 = vpop.f32.mrb[0].mxu0
      %v978 = vadd.f32 0.0, %v977
      %v979 = vpop.f32.mrb[0].mxu0
      %980 = vmatprep.mubr.f32.mxu0 0.0
      %981 = vmatmul.mubr.f32.gmra.mrb[0].mxu0 %v800
      %v982 = vpop.f32.mrb[0].mxu0
      %v983 = vadd.f32 0.0, %v982
      %v984 = vpop.f32.mrb[0].mxu0
      %985 = vmatprep.mubr.f32.mxu0 0.0
      %986 = vmatmul.mubr.f32.gmra.mrb[0].mxu0 %v802
      %v987 = vpop.f32.mrb[0].mxu0
      %v988 = vadd.f32 0.0, %v987
      %v989 = vpop.f32.mrb[0].mxu0
      %990 = vmatprep.mubr.f32.mxu0 0.0
      %991 = vmatmul.mubr.f32.gmra.mrb[0].mxu0 %v804
      %v992 = vpop.f32.mrb[0].mxu0
      %v993 = vadd.f32 0.0, %v992
      %v994 = vpop.f32.mrb[0].mxu0
      %995 = vmatprep.mubr.f32.mxu0 0.0
      %996 = vmatmul.mubr.f32.gmra.mrb[0].mxu0 %v806
      %v997 = vpop.f32.mrb[0].mxu0
      %v998 = vadd.f32 0.0, %v997
      %v999 = vpop.f32.mrb[0].mxu0
      %1000 = vmatprep.mubr.f32.mxu0 0.0
      %1001 = vmatmul.mubr.f32.gmra.mrb[0].mxu0 %v808
      %v1002 = vpop.f32.mrb[0].mxu0
      %v1003 = vadd.f32 0.0, %v1002
      %v1004 = vpop.f32.mrb[0].mxu0
      %1005 = vmatprep.mubr.f32.mxu0 0.0
      %1006 = vmatmul.mubr.f32.gmra.mrb[0].mxu0 %v810
      %v1007 = vpop.f32.mrb[0].mxu0
      %v1008 = vadd.f32 0.0, %v1007
      %v1009 = vpop.f32.mrb[0].mxu0
      %1010 = vmatprep.mubr.f32.mxu0 0.0
      %1011 = vmatmul.mubr.f32.gmra.mrb[0].mxu0 %v812
      %v1012 = vpop.f32.mrb[0].mxu0
      %v1013 = vadd.f32 0.0, %v1012
      %v1014 = vpop.f32.mrb[0].mxu0
      %1015 = vmatprep.mubr.f32.mxu0 0.0
      %1016 = vmatmul.mubr.f32.gmra.mrb[0].mxu0 %v814
      %v1017 = vpop.f32.mrb[0].mxu0
      %v1018 = vadd.f32 0.0, %v1017
      %v1019 = vpop.f32.mrb[0].mxu0
      %1020 = vmatprep.mubr.f32.mxu0 0.0
      %1021 = vmatmul.mubr.f32.gmra.mrb[0].mxu0 %v816
      %v1022 = vpop.f32.mrb[0].mxu0
      %v1023 = vadd.f32 0.0, %v1022
      %v1024 = vpop.f32.mrb[0].mxu0
      %1025 = vmatprep.mubr.f32.mxu0 0.0
      %1026 = vmatmul.mubr.f32.gmra.mrb[0].mxu0 %v818
      %v1027 = vpop.f32.mrb[0].mxu0
      %v1028 = vadd.f32 0.0, %v1027
      %v1029 = vpop.f32.mrb[0].mxu0
      %1030 = vmatprep.mubr.f32.mxu0 0.0
      %1031 = vmatmul.mubr.f32.gmra.mrb[0].mxu0 %v820
      %v1032 = vpop.f32.mrb[0].mxu0
      %v1033 = vadd.f32 0.0, %v1032
      %v1034 = vpop.f32.mrb[0].mxu0
      %1035 = vmatprep.mubr.f32.mxu0 0.0
      %1036 = vmatmul.mubr.f32.gmra.mrb[0].mxu0 %v822
      %v1037 = vpop.f32.mrb[0].mxu0
      %v1038 = vadd.f32 0.0, %v1037
      %v1039 = vpop.f32.mrb[0].mxu0
      %1040 = vmatprep.mubr.f32.mxu0 0.0
      %1041 = vmatmul.mubr.f32.gmra.mrb[0].mxu0 %v824
      %v1042 = vpop.f32.mrb[0].mxu0
      %v1043 = vadd.f32 0.0, %v1042
      %v1044 = vpop.f32.mrb[0].mxu0
      %1045 = vmatprep.mubr.f32.mxu0 0.0
      %1046 = vmatmul.mubr.f32.gmra.mrb[0].mxu0 %v826
      %v1047 = vpop.f32.mrb[0].mxu0
      %v1048 = vadd.f32 0.0, %v1047
      %v1049 = vpop.f32.mrb[0].mxu0
      %1050 = vmatprep.mubr.f32.mxu0 0.0
      %1051 = vmatmul.mubr.f32.gmra.mrb[0].mxu0 %v828
      %v1052 = vpop.f32.mrb[0].mxu0
      %v1053 = vadd.f32 0.0, %v1052
      %v1054 = vpop.f32.mrb[0].mxu0
      %1055 = vmatprep.mubr.f32.mxu0 0.0
      %1056 = vmatmul.mubr.f32.gmra.mrb[0].mxu0 %v830
      %v1057 = vpop.f32.mrb[0].mxu0
      %v1058 = vadd.f32 0.0, %v1057
      %v1059 = vpop.f32.mrb[0].mxu0
      %1060 = vmatprep.mubr.f32.mxu0 0.0
      %1061 = vmatmul.mubr.f32.gmra.mrb[0].mxu0 %v832
      %v1062 = vpop.f32.mrb[0].mxu0
      %v1063 = vadd.f32 0.0, %v1062
      %v1064 = vpop.f32.mrb[0].mxu0
      %1065 = vmatprep.mubr.f32.mxu0 0.0
      %1066 = vmatmul.mubr.f32.gmra.mrb[0].mxu0 %v834
      %v1067 = vpop.f32.mrb[0].mxu0
      %v1068 = vadd.f32 0.0, %v1067
      %v1069 = vpop.f32.mrb[0].mxu0
      %1070 = vmatprep.mubr.f32.mxu0 0.0
      %1071 = vmatmul.mubr.f32.gmra.mrb[0].mxu0 %v836
      %v1072 = vpop.f32.mrb[0].mxu0
      %v1073 = vadd.f32 0.0, %v1072
      %v1074 = vpop.f32.mrb[0].mxu0
      %1075 = vmatprep.mubr.f32.mxu0 0.0
      %1076 = vmatmul.mubr.f32.gmra.mrb[0].mxu0 %v838
      %v1077 = vpop.f32.mrb[0].mxu0
      %v1078 = vadd.f32 0.0, %v1077
      %v1079 = vpop.f32.mrb[0].mxu0
      %1080 = vmatprep.mubr.f32.mxu0 0.0
      %1081 = vmatmul.mubr.f32.gmra.mrb[0].mxu0 %v840
      %v1082 = vpop.f32.mrb[0].mxu0
      %v1083 = vadd.f32 0.0, %v1082
      %v1084 = vpop.f32.mrb[0].mxu0
      %1085 = vmatprep.mubr.f32.mxu0 0.0
      %1086 = vmatmul.mubr.f32.gmra.mrb[0].mxu0 %v842
      %v1087 = vpop.f32.mrb[0].mxu0
      %v1088 = vadd.f32 0.0, %v1087
      %v1089 = vpop.f32.mrb[0].mxu0
      %1090 = vmatprep.mubr.f32.mxu0 0.0
      %1091 = vmatmul.mubr.f32.gmra.mrb[0].mxu0 %v844
      %v1092 = vpop.f32.mrb[0].mxu0
      %v1093 = vadd.f32 0.0, %v1092
      %v1094 = vpop.f32.mrb[0].mxu0
      %1095 = vmatprep.mubr.f32.mxu0 0.0
      %1096 = vmatmul.mubr.f32.gmra.mrb[0].mxu0 %v846
      %v1097 = vpop.f32.mrb[0].mxu0
      %v1098 = vadd.f32 0.0, %v1097
      %v1099 = vpop.f32.mrb[0].mxu0
      %1100 = vmatprep.mubr.f32.mxu0 0.0
      %1101 = vmatmul.mubr.f32.gmra.mrb[0].mxu0 %v848
      %v1102 = vpop.f32.mrb[0].mxu0
      %v1103 = vadd.f32 0.0, %v1102
      %v1104 = vpop.f32.mrb[0].mxu0
      %1105 = vmatprep.mubr.f32.mxu0 0.0
      %1106 = vmatmul.mubr.f32.gmra.mrb[0].mxu0 %v850
      %v1107 = vpop.f32.mrb[0].mxu0
      %v1108 = vadd.f32 0.0, %v1107
      %v1109 = vpop.f32.mrb[0].mxu0
      %1110 = vmatprep.mubr.f32.mxu0 0.0
      %1111 = vmatmul.mubr.f32.gmra.mrb[0].mxu0 %v852
      %v1112 = vpop.f32.mrb[0].mxu0
      %v1113 = vadd.f32 0.0, %v1112
      %v1114 = vpop.f32.mrb[0].mxu0
      %1115 = vmatprep.mubr.f32.mxu0 0.0
      %1116 = vmatmul.mubr.f32.gmra.mrb[0].mxu0 %v854
      %v1117 = vpop.f32.mrb[0].mxu0
      %v1118 = vadd.f32 0.0, %v1117
      %v1119 = vpop.f32.mrb[0].mxu0
      %1120 = vmatprep.mubr.f32.mxu0 0.0
      %1121 = vmatmul.mubr.f32.gmra.mrb[0].mxu0 %v856
      %v1122 = vpop.f32.mrb[0].mxu0
      %v1123 = vadd.f32 0.0, %v1122
      %v1124 = vpop.f32.mrb[0].mxu0
      %1125 = vmatprep.mubr.f32.mxu0 0.0
      %1126 = vmatmul.mubr.f32.gmra.mrb[0].mxu0 %v858
      %v1127 = vpop.f32.mrb[0].mxu0
      %v1128 = vadd.f32 0.0, %v1127
      %v1129 = vpop.f32.mrb[0].mxu0
      %1130 = vmatprep.mubr.f32.mxu0 0.0
      %1131 = vmatmul.mubr.f32.gmra.mrb[0].mxu0 %v860
      %v1132 = vpop.f32.mrb[0].mxu0
      %v1133 = vadd.f32 0.0, %v1132
      %v1134 = vpop.f32.mrb[0].mxu0
      %1135 = vdwg.mxu0
      %v1136 = vsel %vm779, %v563, 0
      %v1138 = vsel %vm779, %v564, 0
      %v1140 = vsel %vm779, %v565, 0
      %v1142 = vsel %vm779, %v566, 0
      %v1144 = vsel %vm779, %v567, 0
      %v1146 = vsel %vm779, %v568, 0
      %v1148 = vsel %vm779, %v569, 0
      %v1150 = vsel %vm779, %v570, 0
      %v1152 = vsel %vm779, %v571, 0
      %v1154 = vsel %vm779, %v572, 0
      %v1156 = vsel %vm779, %v573, 0
      %v1158 = vsel %vm779, %v574, 0
      %v1160 = vsel %vm779, %v575, 0
      %v1162 = vsel %vm779, %v576, 0
      %v1164 = vsel %vm779, %v577, 0
      %v1166 = vsel %vm779, %v578, 0
      %v1168 = vsel %vm779, %v579, 0
      %v1170 = vsel %vm779, %v580, 0
      %v1172 = vsel %vm779, %v581, 0
      %v1174 = vsel %vm779, %v582, 0
      %v1176 = vsel %vm779, %v583, 0
      %v1178 = vsel %vm779, %v584, 0
      %v1180 = vsel %vm779, %v585, 0
      %v1182 = vsel %vm779, %v586, 0
      %v1184 = vsel %vm779, %v587, 0
      %v1186 = vsel %vm779, %v588, 0
      %v1188 = vsel %vm779, %v589, 0
      %v1190 = vsel %vm779, %v590, 0
      %v1192 = vsel %vm779, %v591, 0
      %v1194 = vsel %vm779, %v592, 0
      %v1196 = vsel %vm779, %v593, 0
      %v1198 = vsel %vm779, %v594, 0
      %v1200 = vsel %vm779, %v595, 0
      %v1202 = vsel %vm779, %v596, 0
      %v1204 = vsel %vm779, %v597, 0
      %v1206 = vsel %vm779, %v598, 0
      %v1208 = vsel %vm779, %v599, 0
      %v1210 = vsel %vm779, %v600, 0
      %v1212 = vsel %vm779, %v601, 0
      %v1214 = vsel %vm779, %v602, 0
      %v1216 = vsel %vm779, %v603, 0
      %v1219 = vsel %vm862, %v653, 0
      %1221 = vmatprep.subr.mxu0 0.0
      %1222 = vmatpush1.msra.mxu0 %v1219
      %1223 = vmatprep.subr.mxu0 0.0
      %1224 = vmatpush1.msra.mxu0 0.0
      %1225 = vmatprep.subr.mxu0 0.0
      %1226 = vmatpush1.msra.mxu0 0.0
      %1227 = vmatprep.subr.mxu0 0.0
      %1228 = vmatpush1.msra.mxu0 0.0
      %1229 = vmatprep.subr.mxu0 0.0
      %1230 = vmatpush1.msra.mxu0 0.0
      %1231 = vmatprep.subr.mxu0 0.0
      %1232 = vmatpush1.msra.mxu0 0.0
      %1233 = vmatprep.subr.mxu0 0.0
      %1234 = vmatpush1.msra.mxu0 0.0
      %1235 = vmatprep.subr.mxu0 0.0
      %1236 = vmatpush1.msra.mxu0 0.0
      %1237 = vmatprep.subr.mxu0 0.0
      %1238 = vmatpush1.msra.mxu0 0.0
      %1239 = vmatprep.subr.mxu0 0.0
      %1240 = vmatpush1.msra.mxu0 0.0
      %1241 = vmatprep.subr.mxu0 0.0
      %1242 = vmatpush1.msra.mxu0 0.0
      %1243 = vmatprep.subr.mxu0 0.0
      %1244 = vmatpush1.msra.mxu0 0.0
      %1245 = vmatprep.subr.mxu0 0.0
      %1246 = vmatpush1.msra.mxu0 0.0
      %1247 = vmatprep.subr.mxu0 0.0
      %1248 = vmatpush1.msra.mxu0 0.0
      %1249 = vmatprep.subr.mxu0 0.0
      %1250 = vmatpush1.msra.mxu0 0.0
      %1251 = vmatprep.subr.mxu0 0.0
      %1252 = vmatpush1.msra.mxu0 0.0
      %1253 = vmatprep.subr.mxu0 0.0
      %1254 = vmatpush1.msra.mxu0 0.0
      %1255 = vmatprep.subr.mxu0 0.0
      %1256 = vmatpush1.msra.mxu0 0.0
      %1257 = vmatprep.subr.mxu0 0.0
      %1258 = vmatpush1.msra.mxu0 0.0
      %1259 = vmatprep.subr.mxu0 0.0
      %1260 = vmatpush1.msra.mxu0 0.0
      %1261 = vmatprep.subr.mxu0 0.0
      %1262 = vmatpush1.msra.mxu0 0.0
      %1263 = vmatprep.subr.mxu0 0.0
      %1264 = vmatpush1.msra.mxu0 0.0
      %1265 = vmatprep.subr.mxu0 0.0
      %1266 = vmatpush1.msra.mxu0 0.0
      %1267 = vmatprep.subr.mxu0 0.0
      %1268 = vmatpush1.msra.mxu0 0.0
      %1269 = vmatprep.subr.mxu0 0.0
      %1270 = vmatpush1.msra.mxu0 0.0
      %1271 = vmatprep.subr.mxu0 0.0
      %1272 = vmatpush1.msra.mxu0 0.0
      %1273 = vmatprep.subr.mxu0 0.0
      %1274 = vmatpush1.msra.mxu0 0.0
      %1275 = vmatprep.subr.mxu0 0.0
      %1276 = vmatpush1.msra.mxu0 0.0
      %1277 = vmatprep.subr.mxu0 0.0
      %1278 = vmatpush1.msra.mxu0 0.0
      %1279 = vmatprep.subr.mxu0 0.0
      %1280 = vmatpush1.msra.mxu0 0.0
      %1281 = vmatprep.subr.mxu0 0.0
      %1282 = vmatpush1.msra.mxu0 0.0
      %1283 = vmatprep.subr.mxu0 0.0
      %1284 = vmatpush1.msra.mxu0 0.0
      %1285 = vmatprep.mubr.f32.mxu0 0.0
      %1286 = vmatmul.mubr.f32.gmra.mrb[0].mxu0 %v1136
      %v1287 = vpop.f32.mrb[0].mxu0
      %v1288 = vadd.f32 %v933, %v1287
      %v1289 = vpop.f32.mrb[0].mxu0
      %1290 = vmatprep.mubr.f32.mxu0 0.0
      %1291 = vmatmul.mubr.f32.gmra.mrb[0].mxu0 %v1138
      %v1292 = vpop.f32.mrb[0].mxu0
      %v1293 = vadd.f32 %v938, %v1292
      %v1294 = vpop.f32.mrb[0].mxu0
      %1295 = vmatprep.mubr.f32.mxu0 0.0
      %1296 = vmatmul.mubr.f32.gmra.mrb[0].mxu0 %v1140
      %v1297 = vpop.f32.mrb[0].mxu0
      %v1298 = vadd.f32 %v943, %v1297
      %v1299 = vpop.f32.mrb[0].mxu0
      %1300 = vmatprep.mubr.f32.mxu0 0.0
      %1301 = vmatmul.mubr.f32.gmra.mrb[0].mxu0 %v1142
      %v1302 = vpop.f32.mrb[0].mxu0
      %v1303 = vadd.f32 %v948, %v1302
      %v1304 = vpop.f32.mrb[0].mxu0
      %1305 = vmatprep.mubr.f32.mxu0 0.0
      %1306 = vmatmul.mubr.f32.gmra.mrb[0].mxu0 %v1144
      %v1307 = vpop.f32.mrb[0].mxu0
      %v1308 = vadd.f32 %v953, %v1307
      %v1309 = vpop.f32.mrb[0].mxu0
      %1310 = vmatprep.mubr.f32.mxu0 0.0
      %1311 = vmatmul.mubr.f32.gmra.mrb[0].mxu0 %v1146
      %v1312 = vpop.f32.mrb[0].mxu0
      %v1313 = vadd.f32 %v958, %v1312
      %v1314 = vpop.f32.mrb[0].mxu0
      %1315 = vmatprep.mubr.f32.mxu0 0.0
      %1316 = vmatmul.mubr.f32.gmra.mrb[0].mxu0 %v1148
      %v1317 = vpop.f32.mrb[0].mxu0
      %v1318 = vadd.f32 %v963, %v1317
      %v1319 = vpop.f32.mrb[0].mxu0
      %1320 = vmatprep.mubr.f32.mxu0 0.0
      %1321 = vmatmul.mubr.f32.gmra.mrb[0].mxu0 %v1150
      %v1322 = vpop.f32.mrb[0].mxu0
      %v1323 = vadd.f32 %v968, %v1322
      %v1324 = vpop.f32.mrb[0].mxu0
      %1325 = vmatprep.mubr.f32.mxu0 0.0
      %1326 = vmatmul.mubr.f32.gmra.mrb[0].mxu0 %v1152
      %v1327 = vpop.f32.mrb[0].mxu0
      %v1328 = vadd.f32 %v973, %v1327
      %v1329 = vpop.f32.mrb[0].mxu0
      %1330 = vmatprep.mubr.f32.mxu0 0.0
      %1331 = vmatmul.mubr.f32.gmra.mrb[0].mxu0 %v1154
      %v1332 = vpop.f32.mrb[0].mxu0
      %v1333 = vadd.f32 %v978, %v1332
      %v1334 = vpop.f32.mrb[0].mxu0
      %1335 = vmatprep.mubr.f32.mxu0 0.0
      %1336 = vmatmul.mubr.f32.gmra.mrb[0].mxu0 %v1156
      %v1337 = vpop.f32.mrb[0].mxu0
      %v1338 = vadd.f32 %v983, %v1337
      %v1339 = vpop.f32.mrb[0].mxu0
      %1340 = vmatprep.mubr.f32.mxu0 0.0
      %1341 = vmatmul.mubr.f32.gmra.mrb[0].mxu0 %v1158
      %v1342 = vpop.f32.mrb[0].mxu0
      %v1343 = vadd.f32 %v988, %v1342
      %v1344 = vpop.f32.mrb[0].mxu0
      %1345 = vmatprep.mubr.f32.mxu0 0.0
      %1346 = vmatmul.mubr.f32.gmra.mrb[0].mxu0 %v1160
      %v1347 = vpop.f32.mrb[0].mxu0
      %v1348 = vadd.f32 %v993, %v1347
      %v1349 = vpop.f32.mrb[0].mxu0
      %1350 = vmatprep.mubr.f32.mxu0 0.0
      %1351 = vmatmul.mubr.f32.gmra.mrb[0].mxu0 %v1162
      %v1352 = vpop.f32.mrb[0].mxu0
      %v1353 = vadd.f32 %v998, %v1352
      %v1354 = vpop.f32.mrb[0].mxu0
      %1355 = vmatprep.mubr.f32.mxu0 0.0
      %1356 = vmatmul.mubr.f32.gmra.mrb[0].mxu0 %v1164
      %v1357 = vpop.f32.mrb[0].mxu0
      %v1358 = vadd.f32 %v1003, %v1357
      %v1359 = vpop.f32.mrb[0].mxu0
      %1360 = vmatprep.mubr.f32.mxu0 0.0
      %1361 = vmatmul.mubr.f32.gmra.mrb[0].mxu0 %v1166
      %v1362 = vpop.f32.mrb[0].mxu0
      %v1363 = vadd.f32 %v1008, %v1362
      %v1364 = vpop.f32.mrb[0].mxu0
      %1365 = vmatprep.mubr.f32.mxu0 0.0
      %1366 = vmatmul.mubr.f32.gmra.mrb[0].mxu0 %v1168
      %v1367 = vpop.f32.mrb[0].mxu0
      %v1368 = vadd.f32 %v1013, %v1367
      %v1369 = vpop.f32.mrb[0].mxu0
      %1370 = vmatprep.mubr.f32.mxu0 0.0
      %1371 = vmatmul.mubr.f32.gmra.mrb[0].mxu0 %v1170
      %v1372 = vpop.f32.mrb[0].mxu0
      %v1373 = vadd.f32 %v1018, %v1372
      %v1374 = vpop.f32.mrb[0].mxu0
      %1375 = vmatprep.mubr.f32.mxu0 0.0
      %1376 = vmatmul.mubr.f32.gmra.mrb[0].mxu0 %v1172
      %v1377 = vpop.f32.mrb[0].mxu0
      %v1378 = vadd.f32 %v1023, %v1377
      %v1379 = vpop.f32.mrb[0].mxu0
      %1380 = vmatprep.mubr.f32.mxu0 0.0
      %1381 = vmatmul.mubr.f32.gmra.mrb[0].mxu0 %v1174
      %v1382 = vpop.f32.mrb[0].mxu0
      %v1383 = vadd.f32 %v1028, %v1382
      %v1384 = vpop.f32.mrb[0].mxu0
      %1385 = vmatprep.mubr.f32.mxu0 0.0
      %1386 = vmatmul.mubr.f32.gmra.mrb[0].mxu0 %v1176
      %v1387 = vpop.f32.mrb[0].mxu0
      %v1388 = vadd.f32 %v1033, %v1387
      %v1389 = vpop.f32.mrb[0].mxu0
      %1390 = vmatprep.mubr.f32.mxu0 0.0
      %1391 = vmatmul.mubr.f32.gmra.mrb[0].mxu0 %v1178
      %v1392 = vpop.f32.mrb[0].mxu0
      %v1393 = vadd.f32 %v1038, %v1392
      %v1394 = vpop.f32.mrb[0].mxu0
      %1395 = vmatprep.mubr.f32.mxu0 0.0
      %1396 = vmatmul.mubr.f32.gmra.mrb[0].mxu0 %v1180
      %v1397 = vpop.f32.mrb[0].mxu0
      %v1398 = vadd.f32 %v1043, %v1397
      %v1399 = vpop.f32.mrb[0].mxu0
      %1400 = vmatprep.mubr.f32.mxu0 0.0
      %1401 = vmatmul.mubr.f32.gmra.mrb[0].mxu0 %v1182
      %v1402 = vpop.f32.mrb[0].mxu0
      %v1403 = vadd.f32 %v1048, %v1402
      %v1404 = vpop.f32.mrb[0].mxu0
      %1405 = vmatprep.mubr.f32.mxu0 0.0
      %1406 = vmatmul.mubr.f32.gmra.mrb[0].mxu0 %v1184
      %v1407 = vpop.f32.mrb[0].mxu0
      %v1408 = vadd.f32 %v1053, %v1407
      %v1409 = vpop.f32.mrb[0].mxu0
      %1410 = vmatprep.mubr.f32.mxu0 0.0
      %1411 = vmatmul.mubr.f32.gmra.mrb[0].mxu0 %v1186
      %v1412 = vpop.f32.mrb[0].mxu0
      %v1413 = vadd.f32 %v1058, %v1412
      %v1414 = vpop.f32.mrb[0].mxu0
      %1415 = vmatprep.mubr.f32.mxu0 0.0
      %1416 = vmatmul.mubr.f32.gmra.mrb[0].mxu0 %v1188
      %v1417 = vpop.f32.mrb[0].mxu0
      %v1418 = vadd.f32 %v1063, %v1417
      %v1419 = vpop.f32.mrb[0].mxu0
      %1420 = vmatprep.mubr.f32.mxu0 0.0
      %1421 = vmatmul.mubr.f32.gmra.mrb[0].mxu0 %v1190
      %v1422 = vpop.f32.mrb[0].mxu0
      %v1423 = vadd.f32 %v1068, %v1422
      %v1424 = vpop.f32.mrb[0].mxu0
      %1425 = vmatprep.mubr.f32.mxu0 0.0
      %1426 = vmatmul.mubr.f32.gmra.mrb[0].mxu0 %v1192
      %v1427 = vpop.f32.mrb[0].mxu0
      %v1428 = vadd.f32 %v1073, %v1427
      %v1429 = vpop.f32.mrb[0].mxu0
      %1430 = vmatprep.mubr.f32.mxu0 0.0
      %1431 = vmatmul.mubr.f32.gmra.mrb[0].mxu0 %v1194
      %v1432 = vpop.f32.mrb[0].mxu0
      %v1433 = vadd.f32 %v1078, %v1432
      %v1434 = vpop.f32.mrb[0].mxu0
      %1435 = vmatprep.mubr.f32.mxu0 0.0
      %1436 = vmatmul.mubr.f32.gmra.mrb[0].mxu0 %v1196
      %v1437 = vpop.f32.mrb[0].mxu0
      %v1438 = vadd.f32 %v1083, %v1437
      %v1439 = vpop.f32.mrb[0].mxu0
      %1440 = vmatprep.mubr.f32.mxu0 0.0
      %1441 = vmatmul.mubr.f32.gmra.mrb[0].mxu0 %v1198
      %v1442 = vpop.f32.mrb[0].mxu0
      %v1443 = vadd.f32 %v1088, %v1442
      %v1444 = vpop.f32.mrb[0].mxu0
      %1445 = vmatprep.mubr.f32.mxu0 0.0
      %1446 = vmatmul.mubr.f32.gmra.mrb[0].mxu0 %v1200
      %v1447 = vpop.f32.mrb[0].mxu0
      %v1448 = vadd.f32 %v1093, %v1447
      %v1449 = vpop.f32.mrb[0].mxu0
      %1450 = vmatprep.mubr.f32.mxu0 0.0
      %1451 = vmatmul.mubr.f32.gmra.mrb[0].mxu0 %v1202
      %v1452 = vpop.f32.mrb[0].mxu0
      %v1453 = vadd.f32 %v1098, %v1452
      %v1454 = vpop.f32.mrb[0].mxu0
      %1455 = vmatprep.mubr.f32.mxu0 0.0
      %1456 = vmatmul.mubr.f32.gmra.mrb[0].mxu0 %v1204
      %v1457 = vpop.f32.mrb[0].mxu0
      %v1458 = vadd.f32 %v1103, %v1457
      %v1459 = vpop.f32.mrb[0].mxu0
      %1460 = vmatprep.mubr.f32.mxu0 0.0
      %1461 = vmatmul.mubr.f32.gmra.mrb[0].mxu0 %v1206
      %v1462 = vpop.f32.mrb[0].mxu0
      %v1463 = vadd.f32 %v1108, %v1462
      %v1464 = vpop.f32.mrb[0].mxu0
      %1465 = vmatprep.mubr.f32.mxu0 0.0
      %1466 = vmatmul.mubr.f32.gmra.mrb[0].mxu0 %v1208
      %v1467 = vpop.f32.mrb[0].mxu0
      %v1468 = vadd.f32 %v1113, %v1467
      %v1469 = vpop.f32.mrb[0].mxu0
      %1470 = vmatprep.mubr.f32.mxu0 0.0
      %1471 = vmatmul.mubr.f32.gmra.mrb[0].mxu0 %v1210
      %v1472 = vpop.f32.mrb[0].mxu0
      %v1473 = vadd.f32 %v1118, %v1472
      %v1474 = vpop.f32.mrb[0].mxu0
      %1475 = vmatprep.mubr.f32.mxu0 0.0
      %1476 = vmatmul.mubr.f32.gmra.mrb[0].mxu0 %v1212
      %v1477 = vpop.f32.mrb[0].mxu0
      %v1478 = vadd.f32 %v1123, %v1477
      %v1479 = vpop.f32.mrb[0].mxu0
      %1480 = vmatprep.mubr.f32.mxu0 0.0
      %1481 = vmatmul.mubr.f32.gmra.mrb[0].mxu0 %v1214
      %v1482 = vpop.f32.mrb[0].mxu0
      %v1483 = vadd.f32 %v1128, %v1482
      %v1484 = vpop.f32.mrb[0].mxu0
      %1485 = vmatprep.mubr.f32.mxu0 0.0
      %1486 = vmatmul.mubr.f32.gmra.mrb[0].mxu0 %v1216
      %v1487 = vpop.f32.mrb[0].mxu0
      %v1488 = vadd.f32 %v1133, %v1487
      %v1489 = vpop.f32.mrb[0].mxu0
      %1490 = vdwg.mxu0
      %s1491 = scalar_lea.vmem %s5, 8
      %v1492 = vld [vmem:[%s1491] sm:$0xf]
      %vm1493 = vcmask 1045504
      %v1494 = vrot.slane %v563, 2
      %v1495 = vrot.slane %v564, 2
      %v1496 = vsel %vm1493, %v1494, %v1495
      %v1497 = vrot.slane %v565, 2
      %v1498 = vsel %vm1493, %v1495, %v1497
      %v1499 = vrot.slane %v566, 2
      %v1500 = vsel %vm1493, %v1497, %v1499
      %v1501 = vrot.slane %v567, 2
      %v1502 = vsel %vm1493, %v1499, %v1501
      %v1503 = vrot.slane %v568, 2
      %v1504 = vsel %vm1493, %v1501, %v1503
      %v1505 = vrot.slane %v569, 2
      %v1506 = vsel %vm1493, %v1503, %v1505
      %v1507 = vrot.slane %v570, 2
      %v1508 = vsel %vm1493, %v1505, %v1507
      %v1509 = vrot.slane %v571, 2
      %v1510 = vsel %vm1493, %v1507, %v1509
      %v1511 = vrot.slane %v572, 2
      %v1512 = vsel %vm1493, %v1509, %v1511
      %v1513 = vrot.slane %v573, 2
      %v1514 = vsel %vm1493, %v1511, %v1513
      %v1515 = vrot.slane %v574, 2
      %v1516 = vsel %vm1493, %v1513, %v1515
      %v1517 = vrot.slane %v575, 2
      %v1518 = vsel %vm1493, %v1515, %v1517
      %v1519 = vrot.slane %v576, 2
      %v1520 = vsel %vm1493, %v1517, %v1519
      %v1521 = vrot.slane %v577, 2
      %v1522 = vsel %vm1493, %v1519, %v1521
      %v1523 = vrot.slane %v578, 2
      %v1524 = vsel %vm1493, %v1521, %v1523
      %v1525 = vrot.slane %v579, 2
      %v1526 = vsel %vm1493, %v1523, %v1525
      %v1527 = vrot.slane %v580, 2
      %v1528 = vsel %vm1493, %v1525, %v1527
      %v1529 = vrot.slane %v581, 2
      %v1530 = vsel %vm1493, %v1527, %v1529
      %v1531 = vrot.slane %v582, 2
      %v1532 = vsel %vm1493, %v1529, %v1531
      %v1533 = vrot.slane %v583, 2
      %v1534 = vsel %vm1493, %v1531, %v1533
      %v1535 = vrot.slane %v584, 2
      %v1536 = vsel %vm1493, %v1533, %v1535
      %v1537 = vrot.slane %v585, 2
      %v1538 = vsel %vm1493, %v1535, %v1537
      %v1539 = vrot.slane %v586, 2
      %v1540 = vsel %vm1493, %v1537, %v1539
      %v1541 = vrot.slane %v587, 2
      %v1542 = vsel %vm1493, %v1539, %v1541
      %v1543 = vrot.slane %v588, 2
      %v1544 = vsel %vm1493, %v1541, %v1543
      %v1545 = vrot.slane %v589, 2
      %v1546 = vsel %vm1493, %v1543, %v1545
      %v1547 = vrot.slane %v590, 2
      %v1548 = vsel %vm1493, %v1545, %v1547
      %v1549 = vrot.slane %v591, 2
      %v1550 = vsel %vm1493, %v1547, %v1549
      %v1551 = vrot.slane %v592, 2
      %v1552 = vsel %vm1493, %v1549, %v1551
      %v1553 = vrot.slane %v593, 2
      %v1554 = vsel %vm1493, %v1551, %v1553
      %v1555 = vrot.slane %v594, 2
      %v1556 = vsel %vm1493, %v1553, %v1555
      %v1557 = vrot.slane %v595, 2
      %v1558 = vsel %vm1493, %v1555, %v1557
      %v1559 = vrot.slane %v596, 2
      %v1560 = vsel %vm1493, %v1557, %v1559
      %v1561 = vrot.slane %v597, 2
      %v1562 = vsel %vm1493, %v1559, %v1561
      %v1563 = vrot.slane %v598, 2
      %v1564 = vsel %vm1493, %v1561, %v1563
      %v1565 = vrot.slane %v599, 2
      %v1566 = vsel %vm1493, %v1563, %v1565
      %v1567 = vrot.slane %v600, 2
      %v1568 = vsel %vm1493, %v1565, %v1567
      %v1569 = vrot.slane %v601, 2
      %v1570 = vsel %vm1493, %v1567, %v1569
      %v1571 = vrot.slane %v602, 2
      %v1572 = vsel %vm1493, %v1569, %v1571
      %v1573 = vrot.slane %v603, 2
      %v1574 = vsel %vm1493, %v1571, %v1573
      %v1575 = vsel %vm779, %v1496, 0
      %v1577 = vsel %vm779, %v1498, 0
      %v1579 = vsel %vm779, %v1500, 0
      %v1581 = vsel %vm779, %v1502, 0
      %v1583 = vsel %vm779, %v1504, 0
      %v1585 = vsel %vm779, %v1506, 0
      %v1587 = vsel %vm779, %v1508, 0
      %v1589 = vsel %vm779, %v1510, 0
      %v1591 = vsel %vm779, %v1512, 0
      %v1593 = vsel %vm779, %v1514, 0
      %v1595 = vsel %vm779, %v1516, 0
      %v1597 = vsel %vm779, %v1518, 0
      %v1599 = vsel %vm779, %v1520, 0
      %v1601 = vsel %vm779, %v1522, 0
      %v1603 = vsel %vm779, %v1524, 0
      %v1605 = vsel %vm779, %v1526, 0
      %v1607 = vsel %vm779, %v1528, 0
      %v1609 = vsel %vm779, %v1530, 0
      %v1611 = vsel %vm779, %v1532, 0
      %v1613 = vsel %vm779, %v1534, 0
      %v1615 = vsel %vm779, %v1536, 0
      %v1617 = vsel %vm779, %v1538, 0
      %v1619 = vsel %vm779, %v1540, 0
      %v1621 = vsel %vm779, %v1542, 0
      %v1623 = vsel %vm779, %v1544, 0
      %v1625 = vsel %vm779, %v1546, 0
      %v1627 = vsel %vm779, %v1548, 0
      %v1629 = vsel %vm779, %v1550, 0
      %v1631 = vsel %vm779, %v1552, 0
      %v1633 = vsel %vm779, %v1554, 0
      %v1635 = vsel %vm779, %v1556, 0
      %v1637 = vsel %vm779, %v1558, 0
      %v1639 = vsel %vm779, %v1560, 0
      %v1641 = vsel %vm779, %v1562, 0
      %v1643 = vsel %vm779, %v1564, 0
      %v1645 = vsel %vm779, %v1566, 0
      %v1647 = vsel %vm779, %v1568, 0
      %v1649 = vsel %vm779, %v1570, 0
      %v1651 = vsel %vm779, %v1572, 0
      %v1653 = vsel %vm779, %v1574, 0
      %v1655 = vsel %vm779, %v1573, 0
      %v1658 = vsel %vm862, %v1492, 0
      %1660 = vmatprep.subr.mxu0 0.0
      %1661 = vmatpush1.msra.mxu0 %v1658
      %1662 = vmatprep.subr.mxu0 0.0
      %1663 = vmatpush1.msra.mxu0 0.0
      %1664 = vmatprep.subr.mxu0 0.0
      %1665 = vmatpush1.msra.mxu0 0.0
      %1666 = vmatprep.subr.mxu0 0.0
      %1667 = vmatpush1.msra.mxu0 0.0
      %1668 = vmatprep.subr.mxu0 0.0
      %1669 = vmatpush1.msra.mxu0 0.0
      %1670 = vmatprep.subr.mxu0 0.0
      %1671 = vmatpush1.msra.mxu0 0.0
      %1672 = vmatprep.subr.mxu0 0.0
      %1673 = vmatpush1.msra.mxu0 0.0
      %1674 = vmatprep.subr.mxu0 0.0
      %1675 = vmatpush1.msra.mxu0 0.0
      %1676 = vmatprep.subr.mxu0 0.0
      %1677 = vmatpush1.msra.mxu0 0.0
      %1678 = vmatprep.subr.mxu0 0.0
      %1679 = vmatpush1.msra.mxu0 0.0
      %1680 = vmatprep.subr.mxu0 0.0
      %1681 = vmatpush1.msra.mxu0 0.0
      %1682 = vmatprep.subr.mxu0 0.0
      %1683 = vmatpush1.msra.mxu0 0.0
      %1684 = vmatprep.subr.mxu0 0.0
      %1685 = vmatpush1.msra.mxu0 0.0
      %1686 = vmatprep.subr.mxu0 0.0
      %1687 = vmatpush1.msra.mxu0 0.0
      %1688 = vmatprep.subr.mxu0 0.0
      %1689 = vmatpush1.msra.mxu0 0.0
      %1690 = vmatprep.subr.mxu0 0.0
      %1691 = vmatpush1.msra.mxu0 0.0
      %1692 = vmatprep.subr.mxu0 0.0
      %1693 = vmatpush1.msra.mxu0 0.0
      %1694 = vmatprep.subr.mxu0 0.0
      %1695 = vmatpush1.msra.mxu0 0.0
      %1696 = vmatprep.subr.mxu0 0.0
      %1697 = vmatpush1.msra.mxu0 0.0
      %1698 = vmatprep.subr.mxu0 0.0
      %1699 = vmatpush1.msra.mxu0 0.0
      %1700 = vmatprep.subr.mxu0 0.0
      %1701 = vmatpush1.msra.mxu0 0.0
      %1702 = vmatprep.subr.mxu0 0.0
      %1703 = vmatpush1.msra.mxu0 0.0
      %1704 = vmatprep.subr.mxu0 0.0
      %1705 = vmatpush1.msra.mxu0 0.0
      %1706 = vmatprep.subr.mxu0 0.0
      %1707 = vmatpush1.msra.mxu0 0.0
      %1708 = vmatprep.subr.mxu0 0.0
      %1709 = vmatpush1.msra.mxu0 0.0
      %1710 = vmatprep.subr.mxu0 0.0
      %1711 = vmatpush1.msra.mxu0 0.0
      %1712 = vmatprep.subr.mxu0 0.0
      %1713 = vmatpush1.msra.mxu0 0.0
      %1714 = vmatprep.subr.mxu0 0.0
      %1715 = vmatpush1.msra.mxu0 0.0
      %1716 = vmatprep.subr.mxu0 0.0
      %1717 = vmatpush1.msra.mxu0 0.0
      %1718 = vmatprep.subr.mxu0 0.0
      %1719 = vmatpush1.msra.mxu0 0.0
      %1720 = vmatprep.subr.mxu0 0.0
      %1721 = vmatpush1.msra.mxu0 0.0
      %1722 = vmatprep.subr.mxu0 0.0
      %1723 = vmatpush1.msra.mxu0 0.0
      %1724 = vmatprep.mubr.f32.mxu0 0.0
      %1725 = vmatmul.mubr.f32.gmra.mrb[0].mxu0 %v1575
      %v1726 = vpop.f32.mrb[0].mxu0
      %v1727 = vadd.f32 0.0, %v1726
      %v1728 = vpop.f32.mrb[0].mxu0
      %1729 = vmatprep.mubr.f32.mxu0 0.0
      %1730 = vmatmul.mubr.f32.gmra.mrb[0].mxu0 %v1577
      %v1731 = vpop.f32.mrb[0].mxu0
      %v1732 = vadd.f32 0.0, %v1731
      %v1733 = vpop.f32.mrb[0].mxu0
      %1734 = vmatprep.mubr.f32.mxu0 0.0
      %1735 = vmatmul.mubr.f32.gmra.mrb[0].mxu0 %v1579
      %v1736 = vpop.f32.mrb[0].mxu0
      %v1737 = vadd.f32 0.0, %v1736
      %v1738 = vpop.f32.mrb[0].mxu0
      %1739 = vmatprep.mubr.f32.mxu0 0.0
      %1740 = vmatmul.mubr.f32.gmra.mrb[0].mxu0 %v1581
      %v1741 = vpop.f32.mrb[0].mxu0
      %v1742 = vadd.f32 0.0, %v1741
      %v1743 = vpop.f32.mrb[0].mxu0
      %1744 = vmatprep.mubr.f32.mxu0 0.0
      %1745 = vmatmul.mubr.f32.gmra.mrb[0].mxu0 %v1583
      %v1746 = vpop.f32.mrb[0].mxu0
      %v1747 = vadd.f32 0.0, %v1746
      %v1748 = vpop.f32.mrb[0].mxu0
      %1749 = vmatprep.mubr.f32.mxu0 0.0
      %1750 = vmatmul.mubr.f32.gmra.mrb[0].mxu0 %v1585
      %v1751 = vpop.f32.mrb[0].mxu0
      %v1752 = vadd.f32 0.0, %v1751
      %v1753 = vpop.f32.mrb[0].mxu0
      %1754 = vmatprep.mubr.f32.mxu0 0.0
      %1755 = vmatmul.mubr.f32.gmra.mrb[0].mxu0 %v1587
      %v1756 = vpop.f32.mrb[0].mxu0
      %v1757 = vadd.f32 0.0, %v1756
      %v1758 = vpop.f32.mrb[0].mxu0
      %1759 = vmatprep.mubr.f32.mxu0 0.0
      %1760 = vmatmul.mubr.f32.gmra.mrb[0].mxu0 %v1589
      %v1761 = vpop.f32.mrb[0].mxu0
      %v1762 = vadd.f32 0.0, %v1761
      %v1763 = vpop.f32.mrb[0].mxu0
      %1764 = vmatprep.mubr.f32.mxu0 0.0
      %1765 = vmatmul.mubr.f32.gmra.mrb[0].mxu0 %v1591
      %v1766 = vpop.f32.mrb[0].mxu0
      %v1767 = vadd.f32 0.0, %v1766
      %v1768 = vpop.f32.mrb[0].mxu0
      %1769 = vmatprep.mubr.f32.mxu0 0.0
      %1770 = vmatmul.mubr.f32.gmra.mrb[0].mxu0 %v1593
      %v1771 = vpop.f32.mrb[0].mxu0
      %v1772 = vadd.f32 0.0, %v1771
      %v1773 = vpop.f32.mrb[0].mxu0
      %1774 = vmatprep.mubr.f32.mxu0 0.0
      %1775 = vmatmul.mubr.f32.gmra.mrb[0].mxu0 %v1595
      %v1776 = vpop.f32.mrb[0].mxu0
      %v1777 = vadd.f32 0.0, %v1776
      %v1778 = vpop.f32.mrb[0].mxu0
      %1779 = vmatprep.mubr.f32.mxu0 0.0
      %1780 = vmatmul.mubr.f32.gmra.mrb[0].mxu0 %v1597
      %v1781 = vpop.f32.mrb[0].mxu0
      %v1782 = vadd.f32 0.0, %v1781
      %v1783 = vpop.f32.mrb[0].mxu0
      %1784 = vmatprep.mubr.f32.mxu0 0.0
      %1785 = vmatmul.mubr.f32.gmra.mrb[0].mxu0 %v1599
      %v1786 = vpop.f32.mrb[0].mxu0
      %v1787 = vadd.f32 0.0, %v1786
      %v1788 = vpop.f32.mrb[0].mxu0
      %1789 = vmatprep.mubr.f32.mxu0 0.0
      %1790 = vmatmul.mubr.f32.gmra.mrb[0].mxu0 %v1601
      %v1791 = vpop.f32.mrb[0].mxu0
      %v1792 = vadd.f32 0.0, %v1791
      %v1793 = vpop.f32.mrb[0].mxu0
      %1794 = vmatprep.mubr.f32.mxu0 0.0
      %1795 = vmatmul.mubr.f32.gmra.mrb[0].mxu0 %v1603
      %v1796 = vpop.f32.mrb[0].mxu0
      %v1797 = vadd.f32 0.0, %v1796
      %v1798 = vpop.f32.mrb[0].mxu0
      %1799 = vmatprep.mubr.f32.mxu0 0.0
      %1800 = vmatmul.mubr.f32.gmra.mrb[0].mxu0 %v1605
      %v1801 = vpop.f32.mrb[0].mxu0
      %v1802 = vadd.f32 0.0, %v1801
      %v1803 = vpop.f32.mrb[0].mxu0
      %1804 = vmatprep.mubr.f32.mxu0 0.0
      %1805 = vmatmul.mubr.f32.gmra.mrb[0].mxu0 %v1607
      %v1806 = vpop.f32.mrb[0].mxu0
      %v1807 = vadd.f32 0.0, %v1806
      %v1808 = vpop.f32.mrb[0].mxu0
      %1809 = vmatprep.mubr.f32.mxu0 0.0
      %1810 = vmatmul.mubr.f32.gmra.mrb[0].mxu0 %v1609
      %v1811 = vpop.f32.mrb[0].mxu0
      %v1812 = vadd.f32 0.0, %v1811
      %v1813 = vpop.f32.mrb[0].mxu0
      %1814 = vmatprep.mubr.f32.mxu0 0.0
      %1815 = vmatmul.mubr.f32.gmra.mrb[0].mxu0 %v1611
      %v1816 = vpop.f32.mrb[0].mxu0
      %v1817 = vadd.f32 0.0, %v1816
      %v1818 = vpop.f32.mrb[0].mxu0
      %1819 = vmatprep.mubr.f32.mxu0 0.0
      %1820 = vmatmul.mubr.f32.gmra.mrb[0].mxu0 %v1613
      %v1821 = vpop.f32.mrb[0].mxu0
      %v1822 = vadd.f32 0.0, %v1821
      %v1823 = vpop.f32.mrb[0].mxu0
      %1824 = vmatprep.mubr.f32.mxu0 0.0
      %1825 = vmatmul.mubr.f32.gmra.mrb[0].mxu0 %v1615
      %v1826 = vpop.f32.mrb[0].mxu0
      %v1827 = vadd.f32 0.0, %v1826
      %v1828 = vpop.f32.mrb[0].mxu0
      %1829 = vmatprep.mubr.f32.mxu0 0.0
      %1830 = vmatmul.mubr.f32.gmra.mrb[0].mxu0 %v1617
      %v1831 = vpop.f32.mrb[0].mxu0
      %v1832 = vadd.f32 0.0, %v1831
      %v1833 = vpop.f32.mrb[0].mxu0
      %1834 = vmatprep.mubr.f32.mxu0 0.0
      %1835 = vmatmul.mubr.f32.gmra.mrb[0].mxu0 %v1619
      %v1836 = vpop.f32.mrb[0].mxu0
      %v1837 = vadd.f32 0.0, %v1836
      %v1838 = vpop.f32.mrb[0].mxu0
      %1839 = vmatprep.mubr.f32.mxu0 0.0
      %1840 = vmatmul.mubr.f32.gmra.mrb[0].mxu0 %v1621
      %v1841 = vpop.f32.mrb[0].mxu0
      %v1842 = vadd.f32 0.0, %v1841
      %v1843 = vpop.f32.mrb[0].mxu0
      %1844 = vmatprep.mubr.f32.mxu0 0.0
      %1845 = vmatmul.mubr.f32.gmra.mrb[0].mxu0 %v1623
      %v1846 = vpop.f32.mrb[0].mxu0
      %v1847 = vadd.f32 0.0, %v1846
      %v1848 = vpop.f32.mrb[0].mxu0
      %1849 = vmatprep.mubr.f32.mxu0 0.0
      %1850 = vmatmul.mubr.f32.gmra.mrb[0].mxu0 %v1625
      %v1851 = vpop.f32.mrb[0].mxu0
      %v1852 = vadd.f32 0.0, %v1851
      %v1853 = vpop.f32.mrb[0].mxu0
      %1854 = vmatprep.mubr.f32.mxu0 0.0
      %1855 = vmatmul.mubr.f32.gmra.mrb[0].mxu0 %v1627
      %v1856 = vpop.f32.mrb[0].mxu0
      %v1857 = vadd.f32 0.0, %v1856
      %v1858 = vpop.f32.mrb[0].mxu0
      %1859 = vmatprep.mubr.f32.mxu0 0.0
      %1860 = vmatmul.mubr.f32.gmra.mrb[0].mxu0 %v1629
      %v1861 = vpop.f32.mrb[0].mxu0
      %v1862 = vadd.f32 0.0, %v1861
      %v1863 = vpop.f32.mrb[0].mxu0
      %1864 = vmatprep.mubr.f32.mxu0 0.0
      %1865 = vmatmul.mubr.f32.gmra.mrb[0].mxu0 %v1631
      %v1866 = vpop.f32.mrb[0].mxu0
      %v1867 = vadd.f32 0.0, %v1866
      %v1868 = vpop.f32.mrb[0].mxu0
      %1869 = vmatprep.mubr.f32.mxu0 0.0
      %1870 = vmatmul.mubr.f32.gmra.mrb[0].mxu0 %v1633
      %v1871 = vpop.f32.mrb[0].mxu0
      %v1872 = vadd.f32 0.0, %v1871
      %v1873 = vpop.f32.mrb[0].mxu0
      %1874 = vmatprep.mubr.f32.mxu0 0.0
      %1875 = vmatmul.mubr.f32.gmra.mrb[0].mxu0 %v1635
      %v1876 = vpop.f32.mrb[0].mxu0
      %v1877 = vadd.f32 0.0, %v1876
      %v1878 = vpop.f32.mrb[0].mxu0
      %1879 = vmatprep.mubr.f32.mxu0 0.0
      %1880 = vmatmul.mubr.f32.gmra.mrb[0].mxu0 %v1637
      %v1881 = vpop.f32.mrb[0].mxu0
      %v1882 = vadd.f32 0.0, %v1881
      %v1883 = vpop.f32.mrb[0].mxu0
      %1884 = vmatprep.mubr.f32.mxu0 0.0
      %1885 = vmatmul.mubr.f32.gmra.mrb[0].mxu0 %v1639
      %v1886 = vpop.f32.mrb[0].mxu0
      %v1887 = vadd.f32 0.0, %v1886
      %v1888 = vpop.f32.mrb[0].mxu0
      %1889 = vmatprep.mubr.f32.mxu0 0.0
      %1890 = vmatmul.mubr.f32.gmra.mrb[0].mxu0 %v1641
      %v1891 = vpop.f32.mrb[0].mxu0
      %v1892 = vadd.f32 0.0, %v1891
      %v1893 = vpop.f32.mrb[0].mxu0
      %1894 = vmatprep.mubr.f32.mxu0 0.0
      %1895 = vmatmul.mubr.f32.gmra.mrb[0].mxu0 %v1643
      %v1896 = vpop.f32.mrb[0].mxu0
      %v1897 = vadd.f32 0.0, %v1896
      %v1898 = vpop.f32.mrb[0].mxu0
      %1899 = vmatprep.mubr.f32.mxu0 0.0
      %1900 = vmatmul.mubr.f32.gmra.mrb[0].mxu0 %v1645
      %v1901 = vpop.f32.mrb[0].mxu0
      %v1902 = vadd.f32 0.0, %v1901
      %v1903 = vpop.f32.mrb[0].mxu0
      %1904 = vmatprep.mubr.f32.mxu0 0.0
      %1905 = vmatmul.mubr.f32.gmra.mrb[0].mxu0 %v1647
      %v1906 = vpop.f32.mrb[0].mxu0
      %v1907 = vadd.f32 0.0, %v1906
      %v1908 = vpop.f32.mrb[0].mxu0
      %1909 = vmatprep.mubr.f32.mxu0 0.0
      %1910 = vmatmul.mubr.f32.gmra.mrb[0].mxu0 %v1649
      %v1911 = vpop.f32.mrb[0].mxu0
      %v1912 = vadd.f32 0.0, %v1911
      %v1913 = vpop.f32.mrb[0].mxu0
      %1914 = vmatprep.mubr.f32.mxu0 0.0
      %1915 = vmatmul.mubr.f32.gmra.mrb[0].mxu0 %v1651
      %v1916 = vpop.f32.mrb[0].mxu0
      %v1917 = vadd.f32 0.0, %v1916
      %v1918 = vpop.f32.mrb[0].mxu0
      %1919 = vmatprep.mubr.f32.mxu0 0.0
      %1920 = vmatmul.mubr.f32.gmra.mrb[0].mxu0 %v1653
      %v1921 = vpop.f32.mrb[0].mxu0
      %v1922 = vadd.f32 0.0, %v1921
      %v1923 = vpop.f32.mrb[0].mxu0
      %1924 = vmatprep.mubr.f32.mxu0 0.0
      %1925 = vmatmul.mubr.f32.gmra.mrb[0].mxu0 %v1655
      %v1926 = vpop.f32.mrb[0].mxu0
      %v1927 = vadd.f32 0.0, %v1926
      %v1928 = vpop.f32.mrb[0].mxu0
      %1929 = vdwg.mxu0
      %v1930 = vadd.f32 %v1288, %v1727
      %v1931 = vadd.f32 %v1293, %v1732
      %v1932 = vadd.f32 %v1298, %v1737
      %v1933 = vadd.f32 %v1303, %v1742
      %v1934 = vadd.f32 %v1308, %v1747
      %v1935 = vadd.f32 %v1313, %v1752
      %v1936 = vadd.f32 %v1318, %v1757
      %v1937 = vadd.f32 %v1323, %v1762
      %v1938 = vadd.f32 %v1328, %v1767
      %v1939 = vadd.f32 %v1333, %v1772
      %v1940 = vadd.f32 %v1338, %v1777
      %v1941 = vadd.f32 %v1343, %v1782
      %v1942 = vadd.f32 %v1348, %v1787
      %v1943 = vadd.f32 %v1353, %v1792
      %v1944 = vadd.f32 %v1358, %v1797
      %v1945 = vadd.f32 %v1363, %v1802
      %v1946 = vadd.f32 %v1368, %v1807
      %v1947 = vadd.f32 %v1373, %v1812
      %v1948 = vadd.f32 %v1378, %v1817
      %v1949 = vadd.f32 %v1383, %v1822
      %v1950 = vadd.f32 %v1388, %v1827
      %v1951 = vadd.f32 %v1393, %v1832
      %v1952 = vadd.f32 %v1398, %v1837
      %v1953 = vadd.f32 %v1403, %v1842
      %v1954 = vadd.f32 %v1408, %v1847
      %v1955 = vadd.f32 %v1413, %v1852
      %v1956 = vadd.f32 %v1418, %v1857
      %v1957 = vadd.f32 %v1423, %v1862
      %v1958 = vadd.f32 %v1428, %v1867
      %v1959 = vadd.f32 %v1433, %v1872
      %v1960 = vadd.f32 %v1438, %v1877
      %v1961 = vadd.f32 %v1443, %v1882
      %v1962 = vadd.f32 %v1448, %v1887
      %v1963 = vadd.f32 %v1453, %v1892
      %v1964 = vadd.f32 %v1458, %v1897
      %v1965 = vadd.f32 %v1463, %v1902
      %v1966 = vadd.f32 %v1468, %v1907
      %v1967 = vadd.f32 %v1473, %v1912
      %v1968 = vadd.f32 %v1478, %v1917
      %v1969 = vadd.f32 %v1483, %v1922
      %v1970 = vadd.f32 %v1488, %v1927
      %s1971 = scalar_lea.vmem %s5, 12
      %v1972 = vld [vmem:[%s1971] sm:$0xf]
      %v1975 = vrot.slane %v604, 2
      %v1976 = vsel %vm1493, %v1573, %v1975
      %v1977 = vrot.slane %v605, 2
      %v1978 = vsel %vm1493, %v1975, %v1977
      %v1979 = vsel %vm779, %v1976, 0
      %v1981 = vsel %vm779, %v1978, 0
      %v1983 = vsel %vm779, %v1977, 0
      %v1986 = vsel %vm862, %v1972, 0
      %1988 = vmatprep.subr.mxu0 0.0
      %1989 = vmatpush1.msra.mxu0 %v1986
      %1990 = vmatprep.subr.mxu0 0.0
      %1991 = vmatpush1.msra.mxu0 0.0
      %1992 = vmatprep.subr.mxu0 0.0
      %1993 = vmatpush1.msra.mxu0 0.0
      %1994 = vmatprep.subr.mxu0 0.0
      %1995 = vmatpush1.msra.mxu0 0.0
      %1996 = vmatprep.subr.mxu0 0.0
      %1997 = vmatpush1.msra.mxu0 0.0
      %1998 = vmatprep.subr.mxu0 0.0
      %1999 = vmatpush1.msra.mxu0 0.0
      %2000 = vmatprep.subr.mxu0 0.0
      %2001 = vmatpush1.msra.mxu0 0.0
      %2002 = vmatprep.subr.mxu0 0.0
      %2003 = vmatpush1.msra.mxu0 0.0
      %2004 = vmatprep.subr.mxu0 0.0
      %2005 = vmatpush1.msra.mxu0 0.0
      %2006 = vmatprep.subr.mxu0 0.0
      %2007 = vmatpush1.msra.mxu0 0.0
      %2008 = vmatprep.subr.mxu0 0.0
      %2009 = vmatpush1.msra.mxu0 0.0
      %2010 = vmatprep.subr.mxu0 0.0
      %2011 = vmatpush1.msra.mxu0 0.0
      %2012 = vmatprep.subr.mxu0 0.0
      %2013 = vmatpush1.msra.mxu0 0.0
      %2014 = vmatprep.subr.mxu0 0.0
      %2015 = vmatpush1.msra.mxu0 0.0
      %2016 = vmatprep.subr.mxu0 0.0
      %2017 = vmatpush1.msra.mxu0 0.0
      %2018 = vmatprep.subr.mxu0 0.0
      %2019 = vmatpush1.msra.mxu0 0.0
      %2020 = vmatprep.subr.mxu0 0.0
      %2021 = vmatpush1.msra.mxu0 0.0
      %2022 = vmatprep.subr.mxu0 0.0
      %2023 = vmatpush1.msra.mxu0 0.0
      %2024 = vmatprep.subr.mxu0 0.0
      %2025 = vmatpush1.msra.mxu0 0.0
      %2026 = vmatprep.subr.mxu0 0.0
      %2027 = vmatpush1.msra.mxu0 0.0
      %2028 = vmatprep.subr.mxu0 0.0
      %2029 = vmatpush1.msra.mxu0 0.0
      %2030 = vmatprep.subr.mxu0 0.0
      %2031 = vmatpush1.msra.mxu0 0.0
      %2032 = vmatprep.subr.mxu0 0.0
      %2033 = vmatpush1.msra.mxu0 0.0
      %2034 = vmatprep.subr.mxu0 0.0
      %2035 = vmatpush1.msra.mxu0 0.0
      %2036 = vmatprep.subr.mxu0 0.0
      %2037 = vmatpush1.msra.mxu0 0.0
      %2038 = vmatprep.subr.mxu0 0.0
      %2039 = vmatpush1.msra.mxu0 0.0
      %2040 = vmatprep.subr.mxu0 0.0
      %2041 = vmatpush1.msra.mxu0 0.0
      %2042 = vmatprep.subr.mxu0 0.0
      %2043 = vmatpush1.msra.mxu0 0.0
      %2044 = vmatprep.subr.mxu0 0.0
      %2045 = vmatpush1.msra.mxu0 0.0
      %2046 = vmatprep.subr.mxu0 0.0
      %2047 = vmatpush1.msra.mxu0 0.0
      %2048 = vmatprep.subr.mxu0 0.0
      %2049 = vmatpush1.msra.mxu0 0.0
      %2050 = vmatprep.subr.mxu0 0.0
      %2051 = vmatpush1.msra.mxu0 0.0
      %2052 = vmatprep.mubr.f32.mxu0 0.0
      %2053 = vmatmul.mubr.f32.gmra.mrb[0].mxu0 %v1579
      %v2054 = vpop.f32.mrb[0].mxu0
      %v2055 = vadd.f32 0.0, %v2054
      %v2056 = vpop.f32.mrb[0].mxu0
      %2057 = vmatprep.mubr.f32.mxu0 0.0
      %2058 = vmatmul.mubr.f32.gmra.mrb[0].mxu0 %v1581
      %v2059 = vpop.f32.mrb[0].mxu0
      %v2060 = vadd.f32 0.0, %v2059
      %v2061 = vpop.f32.mrb[0].mxu0
      %2062 = vmatprep.mubr.f32.mxu0 0.0
      %2063 = vmatmul.mubr.f32.gmra.mrb[0].mxu0 %v1583
      %v2064 = vpop.f32.mrb[0].mxu0
      %v2065 = vadd.f32 0.0, %v2064
      %v2066 = vpop.f32.mrb[0].mxu0
      %2067 = vmatprep.mubr.f32.mxu0 0.0
      %2068 = vmatmul.mubr.f32.gmra.mrb[0].mxu0 %v1585
      %v2069 = vpop.f32.mrb[0].mxu0
      %v2070 = vadd.f32 0.0, %v2069
      %v2071 = vpop.f32.mrb[0].mxu0
      %2072 = vmatprep.mubr.f32.mxu0 0.0
      %2073 = vmatmul.mubr.f32.gmra.mrb[0].mxu0 %v1587
      %v2074 = vpop.f32.mrb[0].mxu0
      %v2075 = vadd.f32 0.0, %v2074
      %v2076 = vpop.f32.mrb[0].mxu0
      %2077 = vmatprep.mubr.f32.mxu0 0.0
      %2078 = vmatmul.mubr.f32.gmra.mrb[0].mxu0 %v1589
      %v2079 = vpop.f32.mrb[0].mxu0
      %v2080 = vadd.f32 0.0, %v2079
      %v2081 = vpop.f32.mrb[0].mxu0
      %2082 = vmatprep.mubr.f32.mxu0 0.0
      %2083 = vmatmul.mubr.f32.gmra.mrb[0].mxu0 %v1591
      %v2084 = vpop.f32.mrb[0].mxu0
      %v2085 = vadd.f32 0.0, %v2084
      %v2086 = vpop.f32.mrb[0].mxu0
      %2087 = vmatprep.mubr.f32.mxu0 0.0
      %2088 = vmatmul.mubr.f32.gmra.mrb[0].mxu0 %v1593
      %v2089 = vpop.f32.mrb[0].mxu0
      %v2090 = vadd.f32 0.0, %v2089
      %v2091 = vpop.f32.mrb[0].mxu0
      %2092 = vmatprep.mubr.f32.mxu0 0.0
      %2093 = vmatmul.mubr.f32.gmra.mrb[0].mxu0 %v1595
      %v2094 = vpop.f32.mrb[0].mxu0
      %v2095 = vadd.f32 0.0, %v2094
      %v2096 = vpop.f32.mrb[0].mxu0
      %2097 = vmatprep.mubr.f32.mxu0 0.0
      %2098 = vmatmul.mubr.f32.gmra.mrb[0].mxu0 %v1597
      %v2099 = vpop.f32.mrb[0].mxu0
      %v2100 = vadd.f32 0.0, %v2099
      %v2101 = vpop.f32.mrb[0].mxu0
      %2102 = vmatprep.mubr.f32.mxu0 0.0
      %2103 = vmatmul.mubr.f32.gmra.mrb[0].mxu0 %v1599
      %v2104 = vpop.f32.mrb[0].mxu0
      %v2105 = vadd.f32 0.0, %v2104
      %v2106 = vpop.f32.mrb[0].mxu0
      %2107 = vmatprep.mubr.f32.mxu0 0.0
      %2108 = vmatmul.mubr.f32.gmra.mrb[0].mxu0 %v1601
      %v2109 = vpop.f32.mrb[0].mxu0
      %v2110 = vadd.f32 0.0, %v2109
      %v2111 = vpop.f32.mrb[0].mxu0
      %2112 = vmatprep.mubr.f32.mxu0 0.0
      %2113 = vmatmul.mubr.f32.gmra.mrb[0].mxu0 %v1603
      %v2114 = vpop.f32.mrb[0].mxu0
      %v2115 = vadd.f32 0.0, %v2114
      %v2116 = vpop.f32.mrb[0].mxu0
      %2117 = vmatprep.mubr.f32.mxu0 0.0
      %2118 = vmatmul.mubr.f32.gmra.mrb[0].mxu0 %v1605
      %v2119 = vpop.f32.mrb[0].mxu0
      %v2120 = vadd.f32 0.0, %v2119
      %v2121 = vpop.f32.mrb[0].mxu0
      %2122 = vmatprep.mubr.f32.mxu0 0.0
      %2123 = vmatmul.mubr.f32.gmra.mrb[0].mxu0 %v1607
      %v2124 = vpop.f32.mrb[0].mxu0
      %v2125 = vadd.f32 0.0, %v2124
      %v2126 = vpop.f32.mrb[0].mxu0
      %2127 = vmatprep.mubr.f32.mxu0 0.0
      %2128 = vmatmul.mubr.f32.gmra.mrb[0].mxu0 %v1609
      %v2129 = vpop.f32.mrb[0].mxu0
      %v2130 = vadd.f32 0.0, %v2129
      %v2131 = vpop.f32.mrb[0].mxu0
      %2132 = vmatprep.mubr.f32.mxu0 0.0
      %2133 = vmatmul.mubr.f32.gmra.mrb[0].mxu0 %v1611
      %v2134 = vpop.f32.mrb[0].mxu0
      %v2135 = vadd.f32 0.0, %v2134
      %v2136 = vpop.f32.mrb[0].mxu0
      %2137 = vmatprep.mubr.f32.mxu0 0.0
      %2138 = vmatmul.mubr.f32.gmra.mrb[0].mxu0 %v1613
      %v2139 = vpop.f32.mrb[0].mxu0
      %v2140 = vadd.f32 0.0, %v2139
      %v2141 = vpop.f32.mrb[0].mxu0
      %2142 = vmatprep.mubr.f32.mxu0 0.0
      %2143 = vmatmul.mubr.f32.gmra.mrb[0].mxu0 %v1615
      %v2144 = vpop.f32.mrb[0].mxu0
      %v2145 = vadd.f32 0.0, %v2144
      %v2146 = vpop.f32.mrb[0].mxu0
      %2147 = vmatprep.mubr.f32.mxu0 0.0
      %2148 = vmatmul.mubr.f32.gmra.mrb[0].mxu0 %v1617
      %v2149 = vpop.f32.mrb[0].mxu0
      %v2150 = vadd.f32 0.0, %v2149
      %v2151 = vpop.f32.mrb[0].mxu0
      %2152 = vmatprep.mubr.f32.mxu0 0.0
      %2153 = vmatmul.mubr.f32.gmra.mrb[0].mxu0 %v1619
      %v2154 = vpop.f32.mrb[0].mxu0
      %v2155 = vadd.f32 0.0, %v2154
      %v2156 = vpop.f32.mrb[0].mxu0
      %2157 = vmatprep.mubr.f32.mxu0 0.0
      %2158 = vmatmul.mubr.f32.gmra.mrb[0].mxu0 %v1621
      %v2159 = vpop.f32.mrb[0].mxu0
      %v2160 = vadd.f32 0.0, %v2159
      %v2161 = vpop.f32.mrb[0].mxu0
      %2162 = vmatprep.mubr.f32.mxu0 0.0
      %2163 = vmatmul.mubr.f32.gmra.mrb[0].mxu0 %v1623
      %v2164 = vpop.f32.mrb[0].mxu0
      %v2165 = vadd.f32 0.0, %v2164
      %v2166 = vpop.f32.mrb[0].mxu0
      %2167 = vmatprep.mubr.f32.mxu0 0.0
      %2168 = vmatmul.mubr.f32.gmra.mrb[0].mxu0 %v1625
      %v2169 = vpop.f32.mrb[0].mxu0
      %v2170 = vadd.f32 0.0, %v2169
      %v2171 = vpop.f32.mrb[0].mxu0
      %2172 = vmatprep.mubr.f32.mxu0 0.0
      %2173 = vmatmul.mubr.f32.gmra.mrb[0].mxu0 %v1627
      %v2174 = vpop.f32.mrb[0].mxu0
      %v2175 = vadd.f32 0.0, %v2174
      %v2176 = vpop.f32.mrb[0].mxu0
      %2177 = vmatprep.mubr.f32.mxu0 0.0
      %2178 = vmatmul.mubr.f32.gmra.mrb[0].mxu0 %v1629
      %v2179 = vpop.f32.mrb[0].mxu0
      %v2180 = vadd.f32 0.0, %v2179
      %v2181 = vpop.f32.mrb[0].mxu0
      %2182 = vmatprep.mubr.f32.mxu0 0.0
      %2183 = vmatmul.mubr.f32.gmra.mrb[0].mxu0 %v1631
      %v2184 = vpop.f32.mrb[0].mxu0
      %v2185 = vadd.f32 0.0, %v2184
      %v2186 = vpop.f32.mrb[0].mxu0
      %2187 = vmatprep.mubr.f32.mxu0 0.0
      %2188 = vmatmul.mubr.f32.gmra.mrb[0].mxu0 %v1633
      %v2189 = vpop.f32.mrb[0].mxu0
      %v2190 = vadd.f32 0.0, %v2189
      %v2191 = vpop.f32.mrb[0].mxu0
      %2192 = vmatprep.mubr.f32.mxu0 0.0
      %2193 = vmatmul.mubr.f32.gmra.mrb[0].mxu0 %v1635
      %v2194 = vpop.f32.mrb[0].mxu0
      %v2195 = vadd.f32 0.0, %v2194
      %v2196 = vpop.f32.mrb[0].mxu0
      %2197 = vmatprep.mubr.f32.mxu0 0.0
      %2198 = vmatmul.mubr.f32.gmra.mrb[0].mxu0 %v1637
      %v2199 = vpop.f32.mrb[0].mxu0
      %v2200 = vadd.f32 0.0, %v2199
      %v2201 = vpop.f32.mrb[0].mxu0
      %2202 = vmatprep.mubr.f32.mxu0 0.0
      %2203 = vmatmul.mubr.f32.gmra.mrb[0].mxu0 %v1639
      %v2204 = vpop.f32.mrb[0].mxu0
      %v2205 = vadd.f32 0.0, %v2204
      %v2206 = vpop.f32.mrb[0].mxu0
      %2207 = vmatprep.mubr.f32.mxu0 0.0
      %2208 = vmatmul.mubr.f32.gmra.mrb[0].mxu0 %v1641
      %v2209 = vpop.f32.mrb[0].mxu0
      %v2210 = vadd.f32 0.0, %v2209
      %v2211 = vpop.f32.mrb[0].mxu0
      %2212 = vmatprep.mubr.f32.mxu0 0.0
      %2213 = vmatmul.mubr.f32.gmra.mrb[0].mxu0 %v1643
      %v2214 = vpop.f32.mrb[0].mxu0
      %v2215 = vadd.f32 0.0, %v2214
      %v2216 = vpop.f32.mrb[0].mxu0
      %2217 = vmatprep.mubr.f32.mxu0 0.0
      %2218 = vmatmul.mubr.f32.gmra.mrb[0].mxu0 %v1645
      %v2219 = vpop.f32.mrb[0].mxu0
      %v2220 = vadd.f32 0.0, %v2219
      %v2221 = vpop.f32.mrb[0].mxu0
      %2222 = vmatprep.mubr.f32.mxu0 0.0
      %2223 = vmatmul.mubr.f32.gmra.mrb[0].mxu0 %v1647
      %v2224 = vpop.f32.mrb[0].mxu0
      %v2225 = vadd.f32 0.0, %v2224
      %v2226 = vpop.f32.mrb[0].mxu0
      %2227 = vmatprep.mubr.f32.mxu0 0.0
      %2228 = vmatmul.mubr.f32.gmra.mrb[0].mxu0 %v1649
      %v2229 = vpop.f32.mrb[0].mxu0
      %v2230 = vadd.f32 0.0, %v2229
      %v2231 = vpop.f32.mrb[0].mxu0
      %2232 = vmatprep.mubr.f32.mxu0 0.0
      %2233 = vmatmul.mubr.f32.gmra.mrb[0].mxu0 %v1651
      %v2234 = vpop.f32.mrb[0].mxu0
      %v2235 = vadd.f32 0.0, %v2234
      %v2236 = vpop.f32.mrb[0].mxu0
      %2237 = vmatprep.mubr.f32.mxu0 0.0
      %2238 = vmatmul.mubr.f32.gmra.mrb[0].mxu0 %v1653
      %v2239 = vpop.f32.mrb[0].mxu0
      %v2240 = vadd.f32 0.0, %v2239
      %v2241 = vpop.f32.mrb[0].mxu0
      %2242 = vmatprep.mubr.f32.mxu0 0.0
      %2243 = vmatmul.mubr.f32.gmra.mrb[0].mxu0 %v1979
      %v2244 = vpop.f32.mrb[0].mxu0
      %v2245 = vadd.f32 0.0, %v2244
      %v2246 = vpop.f32.mrb[0].mxu0
      %2247 = vmatprep.mubr.f32.mxu0 0.0
      %2248 = vmatmul.mubr.f32.gmra.mrb[0].mxu0 %v1981
      %v2249 = vpop.f32.mrb[0].mxu0
      %v2250 = vadd.f32 0.0, %v2249
      %v2251 = vpop.f32.mrb[0].mxu0
      %2252 = vmatprep.mubr.f32.mxu0 0.0
      %2253 = vmatmul.mubr.f32.gmra.mrb[0].mxu0 %v1983
      %v2254 = vpop.f32.mrb[0].mxu0
      %v2255 = vadd.f32 0.0, %v2254
      %v2256 = vpop.f32.mrb[0].mxu0
      %2257 = vdwg.mxu0
      %v2258 = vadd.f32 %v1930, %v2055
      %v2259 = vadd.f32 %v1931, %v2060
      %v2260 = vadd.f32 %v1932, %v2065
      %v2261 = vadd.f32 %v1933, %v2070
      %v2262 = vadd.f32 %v1934, %v2075
      %v2263 = vadd.f32 %v1935, %v2080
      %v2264 = vadd.f32 %v1936, %v2085
      %v2265 = vadd.f32 %v1937, %v2090
      %v2266 = vadd.f32 %v1938, %v2095
      %v2267 = vadd.f32 %v1939, %v2100
      %v2268 = vadd.f32 %v1940, %v2105
      %v2269 = vadd.f32 %v1941, %v2110
      %v2270 = vadd.f32 %v1942, %v2115
      %v2271 = vadd.f32 %v1943, %v2120
      %v2272 = vadd.f32 %v1944, %v2125
      %v2273 = vadd.f32 %v1945, %v2130
      %v2274 = vadd.f32 %v1946, %v2135
      %v2275 = vadd.f32 %v1947, %v2140
      %v2276 = vadd.f32 %v1948, %v2145
      %v2277 = vadd.f32 %v1949, %v2150
      %v2278 = vadd.f32 %v1950, %v2155
      %v2279 = vadd.f32 %v1951, %v2160
      %v2280 = vadd.f32 %v1952, %v2165
      %v2281 = vadd.f32 %v1953, %v2170
      %v2282 = vadd.f32 %v1954, %v2175
      %v2283 = vadd.f32 %v1955, %v2180
      %v2284 = vadd.f32 %v1956, %v2185
      %v2285 = vadd.f32 %v1957, %v2190
      %v2286 = vadd.f32 %v1958, %v2195
      %v2287 = vadd.f32 %v1959, %v2200
      %v2288 = vadd.f32 %v1960, %v2205
      %v2289 = vadd.f32 %v1961, %v2210
      %v2290 = vadd.f32 %v1962, %v2215
      %v2291 = vadd.f32 %v1963, %v2220
      %v2292 = vadd.f32 %v1964, %v2225
      %v2293 = vadd.f32 %v1965, %v2230
      %v2294 = vadd.f32 %v1966, %v2235
      %v2295 = vadd.f32 %v1967, %v2240
      %v2296 = vadd.f32 %v1968, %v2245
      %v2297 = vadd.f32 %v1969, %v2250
      %v2298 = vadd.f32 %v1970, %v2255
      %s2299 = scalar_lea.vmem %s5, 16
      %v2300 = vld [vmem:[%s2299] sm:$0xf]
      %vm2301 = vcmask 1044480
      %v2302 = vrot.slane %v565, 3
      %v2303 = vrot.slane %v566, 3
      %v2304 = vsel %vm2301, %v2302, %v2303
      %v2305 = vrot.slane %v567, 3
      %v2306 = vsel %vm2301, %v2303, %v2305
      %v2307 = vrot.slane %v568, 3
      %v2308 = vsel %vm2301, %v2305, %v2307
      %v2309 = vrot.slane %v569, 3
      %v2310 = vsel %vm2301, %v2307, %v2309
      %v2311 = vrot.slane %v570, 3
      %v2312 = vsel %vm2301, %v2309, %v2311
      %v2313 = vrot.slane %v571, 3
      %v2314 = vsel %vm2301, %v2311, %v2313
      %v2315 = vrot.slane %v572, 3
      %v2316 = vsel %vm2301, %v2313, %v2315
      %v2317 = vrot.slane %v573, 3
      %v2318 = vsel %vm2301, %v2315, %v2317
      %v2319 = vrot.slane %v574, 3
      %v2320 = vsel %vm2301, %v2317, %v2319
      %v2321 = vrot.slane %v575, 3
      %v2322 = vsel %vm2301, %v2319, %v2321
      %v2323 = vrot.slane %v576, 3
      %v2324 = vsel %vm2301, %v2321, %v2323
      %v2325 = vrot.slane %v577, 3
      %v2326 = vsel %vm2301, %v2323, %v2325
      %v2327 = vrot.slane %v578, 3
      %v2328 = vsel %vm2301, %v2325, %v2327
      %v2329 = vrot.slane %v579, 3
      %v2330 = vsel %vm2301, %v2327, %v2329
      %v2331 = vrot.slane %v580, 3
      %v2332 = vsel %vm2301, %v2329, %v2331
      %v2333 = vrot.slane %v581, 3
      %v2334 = vsel %vm2301, %v2331, %v2333
      %v2335 = vrot.slane %v582, 3
      %v2336 = vsel %vm2301, %v2333, %v2335
      %v2337 = vrot.slane %v583, 3
      %v2338 = vsel %vm2301, %v2335, %v2337
      %v2339 = vrot.slane %v584, 3
      %v2340 = vsel %vm2301, %v2337, %v2339
      %v2341 = vrot.slane %v585, 3
      %v2342 = vsel %vm2301, %v2339, %v2341
      %v2343 = vrot.slane %v586, 3
      %v2344 = vsel %vm2301, %v2341, %v2343
      %v2345 = vrot.slane %v587, 3
      %v2346 = vsel %vm2301, %v2343, %v2345
      %v2347 = vrot.slane %v588, 3
      %v2348 = vsel %vm2301, %v2345, %v2347
      %v2349 = vrot.slane %v589, 3
      %v2350 = vsel %vm2301, %v2347, %v2349
      %v2351 = vrot.slane %v590, 3
      %v2352 = vsel %vm2301, %v2349, %v2351
      %v2353 = vrot.slane %v591, 3
      %v2354 = vsel %vm2301, %v2351, %v2353
      %v2355 = vrot.slane %v592, 3
      %v2356 = vsel %vm2301, %v2353, %v2355
      %v2357 = vrot.slane %v593, 3
      %v2358 = vsel %vm2301, %v2355, %v2357
      %v2359 = vrot.slane %v594, 3
      %v2360 = vsel %vm2301, %v2357, %v2359
      %v2361 = vrot.slane %v595, 3
      %v2362 = vsel %vm2301, %v2359, %v2361
      %v2363 = vrot.slane %v596, 3
      %v2364 = vsel %vm2301, %v2361, %v2363
      %v2365 = vrot.slane %v597, 3
      %v2366 = vsel %vm2301, %v2363, %v2365
      %v2367 = vrot.slane %v598, 3
      %v2368 = vsel %vm2301, %v2365, %v2367
      %v2369 = vrot.slane %v599, 3
      %v2370 = vsel %vm2301, %v2367, %v2369
      %v2371 = vrot.slane %v600, 3
      %v2372 = vsel %vm2301, %v2369, %v2371
      %v2373 = vrot.slane %v601, 3
      %v2374 = vsel %vm2301, %v2371, %v2373
      %v2375 = vrot.slane %v602, 3
      %v2376 = vsel %vm2301, %v2373, %v2375
      %v2377 = vrot.slane %v603, 3
      %v2378 = vsel %vm2301, %v2375, %v2377
      %v2379 = vrot.slane %v604, 3
      %v2380 = vsel %vm2301, %v2377, %v2379
      %v2381 = vrot.slane %v605, 3
      %v2382 = vsel %vm2301, %v2379, %v2381
      %v2383 = vsel %vm779, %v2304, 0
      %v2385 = vsel %vm779, %v2306, 0
      %v2387 = vsel %vm779, %v2308, 0
      %v2389 = vsel %vm779, %v2310, 0
      %v2391 = vsel %vm779, %v2312, 0
      %v2393 = vsel %vm779, %v2314, 0
      %v2395 = vsel %vm779, %v2316, 0
      %v2397 = vsel %vm779, %v2318, 0
      %v2399 = vsel %vm779, %v2320, 0
      %v2401 = vsel %vm779, %v2322, 0
      %v2403 = vsel %vm779, %v2324, 0
      %v2405 = vsel %vm779, %v2326, 0
      %v2407 = vsel %vm779, %v2328, 0
      %v2409 = vsel %vm779, %v2330, 0
      %v2411 = vsel %vm779, %v2332, 0
      %v2413 = vsel %vm779, %v2334, 0
      %v2415 = vsel %vm779, %v2336, 0
      %v2417 = vsel %vm779, %v2338, 0
      %v2419 = vsel %vm779, %v2340, 0
      %v2421 = vsel %vm779, %v2342, 0
      %v2423 = vsel %vm779, %v2344, 0
      %v2425 = vsel %vm779, %v2346, 0
      %v2427 = vsel %vm779, %v2348, 0
      %v2429 = vsel %vm779, %v2350, 0
      %v2431 = vsel %vm779, %v2352, 0
      %v2433 = vsel %vm779, %v2354, 0
      %v2435 = vsel %vm779, %v2356, 0
      %v2437 = vsel %vm779, %v2358, 0
      %v2439 = vsel %vm779, %v2360, 0
      %v2441 = vsel %vm779, %v2362, 0
      %v2443 = vsel %vm779, %v2364, 0
      %v2445 = vsel %vm779, %v2366, 0
      %v2447 = vsel %vm779, %v2368, 0
      %v2449 = vsel %vm779, %v2370, 0
      %v2451 = vsel %vm779, %v2372, 0
      %v2453 = vsel %vm779, %v2374, 0
      %v2455 = vsel %vm779, %v2376, 0
      %v2457 = vsel %vm779, %v2378, 0
      %v2459 = vsel %vm779, %v2380, 0
      %v2461 = vsel %vm779, %v2382, 0
      %v2463 = vsel %vm779, %v2381, 0
      %v2466 = vsel %vm862, %v2300, 0
      %2468 = vmatprep.subr.mxu0 0.0
      %2469 = vmatpush1.msra.mxu0 %v2466
      %2470 = vmatprep.subr.mxu0 0.0
      %2471 = vmatpush1.msra.mxu0 0.0
      %2472 = vmatprep.subr.mxu0 0.0
      %2473 = vmatpush1.msra.mxu0 0.0
      %2474 = vmatprep.subr.mxu0 0.0
      %2475 = vmatpush1.msra.mxu0 0.0
      %2476 = vmatprep.subr.mxu0 0.0
      %2477 = vmatpush1.msra.mxu0 0.0
      %2478 = vmatprep.subr.mxu0 0.0
      %2479 = vmatpush1.msra.mxu0 0.0
      %2480 = vmatprep.subr.mxu0 0.0
      %2481 = vmatpush1.msra.mxu0 0.0
      %2482 = vmatprep.subr.mxu0 0.0
      %2483 = vmatpush1.msra.mxu0 0.0
      %2484 = vmatprep.subr.mxu0 0.0
      %2485 = vmatpush1.msra.mxu0 0.0
      %2486 = vmatprep.subr.mxu0 0.0
      %2487 = vmatpush1.msra.mxu0 0.0
      %2488 = vmatprep.subr.mxu0 0.0
      %2489 = vmatpush1.msra.mxu0 0.0
      %2490 = vmatprep.subr.mxu0 0.0
      %2491 = vmatpush1.msra.mxu0 0.0
      %2492 = vmatprep.subr.mxu0 0.0
      %2493 = vmatpush1.msra.mxu0 0.0
      %2494 = vmatprep.subr.mxu0 0.0
      %2495 = vmatpush1.msra.mxu0 0.0
      %2496 = vmatprep.subr.mxu0 0.0
      %2497 = vmatpush1.msra.mxu0 0.0
      %2498 = vmatprep.subr.mxu0 0.0
      %2499 = vmatpush1.msra.mxu0 0.0
      %2500 = vmatprep.subr.mxu0 0.0
      %2501 = vmatpush1.msra.mxu0 0.0
      %2502 = vmatprep.subr.mxu0 0.0
      %2503 = vmatpush1.msra.mxu0 0.0
      %2504 = vmatprep.subr.mxu0 0.0
      %2505 = vmatpush1.msra.mxu0 0.0
      %2506 = vmatprep.subr.mxu0 0.0
      %2507 = vmatpush1.msra.mxu0 0.0
      %2508 = vmatprep.subr.mxu0 0.0
      %2509 = vmatpush1.msra.mxu0 0.0
      %2510 = vmatprep.subr.mxu0 0.0
      %2511 = vmatpush1.msra.mxu0 0.0
      %2512 = vmatprep.subr.mxu0 0.0
      %2513 = vmatpush1.msra.mxu0 0.0
      %2514 = vmatprep.subr.mxu0 0.0
      %2515 = vmatpush1.msra.mxu0 0.0
      %2516 = vmatprep.subr.mxu0 0.0
      %2517 = vmatpush1.msra.mxu0 0.0
      %2518 = vmatprep.subr.mxu0 0.0
      %2519 = vmatpush1.msra.mxu0 0.0
      %2520 = vmatprep.subr.mxu0 0.0
      %2521 = vmatpush1.msra.mxu0 0.0
      %2522 = vmatprep.subr.mxu0 0.0
      %2523 = vmatpush1.msra.mxu0 0.0
      %2524 = vmatprep.subr.mxu0 0.0
      %2525 = vmatpush1.msra.mxu0 0.0
      %2526 = vmatprep.subr.mxu0 0.0
      %2527 = vmatpush1.msra.mxu0 0.0
      %2528 = vmatprep.subr.mxu0 0.0
      %2529 = vmatpush1.msra.mxu0 0.0
      %2530 = vmatprep.subr.mxu0 0.0
      %2531 = vmatpush1.msra.mxu0 0.0
      %2532 = vmatprep.mubr.f32.mxu0 0.0
      %2533 = vmatmul.mubr.f32.gmra.mrb[0].mxu0 %v2383
      %v2534 = vpop.f32.mrb[0].mxu0
      %v2535 = vadd.f32 0.0, %v2534
      %v2536 = vpop.f32.mrb[0].mxu0
      %2537 = vmatprep.mubr.f32.mxu0 0.0
      %2538 = vmatmul.mubr.f32.gmra.mrb[0].mxu0 %v2385
      %v2539 = vpop.f32.mrb[0].mxu0
      %v2540 = vadd.f32 0.0, %v2539
      %v2541 = vpop.f32.mrb[0].mxu0
      %2542 = vmatprep.mubr.f32.mxu0 0.0
      %2543 = vmatmul.mubr.f32.gmra.mrb[0].mxu0 %v2387
      %v2544 = vpop.f32.mrb[0].mxu0
      %v2545 = vadd.f32 0.0, %v2544
      %v2546 = vpop.f32.mrb[0].mxu0
      %2547 = vmatprep.mubr.f32.mxu0 0.0
      %2548 = vmatmul.mubr.f32.gmra.mrb[0].mxu0 %v2389
      %v2549 = vpop.f32.mrb[0].mxu0
      %v2550 = vadd.f32 0.0, %v2549
      %v2551 = vpop.f32.mrb[0].mxu0
      %2552 = vmatprep.mubr.f32.mxu0 0.0
      %2553 = vmatmul.mubr.f32.gmra.mrb[0].mxu0 %v2391
      %v2554 = vpop.f32.mrb[0].mxu0
      %v2555 = vadd.f32 0.0, %v2554
      %v2556 = vpop.f32.mrb[0].mxu0
      %2557 = vmatprep.mubr.f32.mxu0 0.0
      %2558 = vmatmul.mubr.f32.gmra.mrb[0].mxu0 %v2393
      %v2559 = vpop.f32.mrb[0].mxu0
      %v2560 = vadd.f32 0.0, %v2559
      %v2561 = vpop.f32.mrb[0].mxu0
      %2562 = vmatprep.mubr.f32.mxu0 0.0
      %2563 = vmatmul.mubr.f32.gmra.mrb[0].mxu0 %v2395
      %v2564 = vpop.f32.mrb[0].mxu0
      %v2565 = vadd.f32 0.0, %v2564
      %v2566 = vpop.f32.mrb[0].mxu0
      %2567 = vmatprep.mubr.f32.mxu0 0.0
      %2568 = vmatmul.mubr.f32.gmra.mrb[0].mxu0 %v2397
      %v2569 = vpop.f32.mrb[0].mxu0
      %v2570 = vadd.f32 0.0, %v2569
      %v2571 = vpop.f32.mrb[0].mxu0
      %2572 = vmatprep.mubr.f32.mxu0 0.0
      %2573 = vmatmul.mubr.f32.gmra.mrb[0].mxu0 %v2399
      %v2574 = vpop.f32.mrb[0].mxu0
      %v2575 = vadd.f32 0.0, %v2574
      %v2576 = vpop.f32.mrb[0].mxu0
      %2577 = vmatprep.mubr.f32.mxu0 0.0
      %2578 = vmatmul.mubr.f32.gmra.mrb[0].mxu0 %v2401
      %v2579 = vpop.f32.mrb[0].mxu0
      %v2580 = vadd.f32 0.0, %v2579
      %v2581 = vpop.f32.mrb[0].mxu0
      %2582 = vmatprep.mubr.f32.mxu0 0.0
      %2583 = vmatmul.mubr.f32.gmra.mrb[0].mxu0 %v2403
      %v2584 = vpop.f32.mrb[0].mxu0
      %v2585 = vadd.f32 0.0, %v2584
      %v2586 = vpop.f32.mrb[0].mxu0
      %2587 = vmatprep.mubr.f32.mxu0 0.0
      %2588 = vmatmul.mubr.f32.gmra.mrb[0].mxu0 %v2405
      %v2589 = vpop.f32.mrb[0].mxu0
      %v2590 = vadd.f32 0.0, %v2589
      %v2591 = vpop.f32.mrb[0].mxu0
      %2592 = vmatprep.mubr.f32.mxu0 0.0
      %2593 = vmatmul.mubr.f32.gmra.mrb[0].mxu0 %v2407
      %v2594 = vpop.f32.mrb[0].mxu0
      %v2595 = vadd.f32 0.0, %v2594
      %v2596 = vpop.f32.mrb[0].mxu0
      %2597 = vmatprep.mubr.f32.mxu0 0.0
      %2598 = vmatmul.mubr.f32.gmra.mrb[0].mxu0 %v2409
      %v2599 = vpop.f32.mrb[0].mxu0
      %v2600 = vadd.f32 0.0, %v2599
      %v2601 = vpop.f32.mrb[0].mxu0
      %2602 = vmatprep.mubr.f32.mxu0 0.0
      %2603 = vmatmul.mubr.f32.gmra.mrb[0].mxu0 %v2411
      %v2604 = vpop.f32.mrb[0].mxu0
      %v2605 = vadd.f32 0.0, %v2604
      %v2606 = vpop.f32.mrb[0].mxu0
      %2607 = vmatprep.mubr.f32.mxu0 0.0
      %2608 = vmatmul.mubr.f32.gmra.mrb[0].mxu0 %v2413
      %v2609 = vpop.f32.mrb[0].mxu0
      %v2610 = vadd.f32 0.0, %v2609
      %v2611 = vpop.f32.mrb[0].mxu0
      %2612 = vmatprep.mubr.f32.mxu0 0.0
      %2613 = vmatmul.mubr.f32.gmra.mrb[0].mxu0 %v2415
      %v2614 = vpop.f32.mrb[0].mxu0
      %v2615 = vadd.f32 0.0, %v2614
      %v2616 = vpop.f32.mrb[0].mxu0
      %2617 = vmatprep.mubr.f32.mxu0 0.0
      %2618 = vmatmul.mubr.f32.gmra.mrb[0].mxu0 %v2417
      %v2619 = vpop.f32.mrb[0].mxu0
      %v2620 = vadd.f32 0.0, %v2619
      %v2621 = vpop.f32.mrb[0].mxu0
      %2622 = vmatprep.mubr.f32.mxu0 0.0
      %2623 = vmatmul.mubr.f32.gmra.mrb[0].mxu0 %v2419
      %v2624 = vpop.f32.mrb[0].mxu0
      %v2625 = vadd.f32 0.0, %v2624
      %v2626 = vpop.f32.mrb[0].mxu0
      %2627 = vmatprep.mubr.f32.mxu0 0.0
      %2628 = vmatmul.mubr.f32.gmra.mrb[0].mxu0 %v2421
      %v2629 = vpop.f32.mrb[0].mxu0
      %v2630 = vadd.f32 0.0, %v2629
      %v2631 = vpop.f32.mrb[0].mxu0
      %2632 = vmatprep.mubr.f32.mxu0 0.0
      %2633 = vmatmul.mubr.f32.gmra.mrb[0].mxu0 %v2423
      %v2634 = vpop.f32.mrb[0].mxu0
      %v2635 = vadd.f32 0.0, %v2634
      %v2636 = vpop.f32.mrb[0].mxu0
      %2637 = vmatprep.mubr.f32.mxu0 0.0
      %2638 = vmatmul.mubr.f32.gmra.mrb[0].mxu0 %v2425
      %v2639 = vpop.f32.mrb[0].mxu0
      %v2640 = vadd.f32 0.0, %v2639
      %v2641 = vpop.f32.mrb[0].mxu0
      %2642 = vmatprep.mubr.f32.mxu0 0.0
      %2643 = vmatmul.mubr.f32.gmra.mrb[0].mxu0 %v2427
      %v2644 = vpop.f32.mrb[0].mxu0
      %v2645 = vadd.f32 0.0, %v2644
      %v2646 = vpop.f32.mrb[0].mxu0
      %2647 = vmatprep.mubr.f32.mxu0 0.0
      %2648 = vmatmul.mubr.f32.gmra.mrb[0].mxu0 %v2429
      %v2649 = vpop.f32.mrb[0].mxu0
      %v2650 = vadd.f32 0.0, %v2649
      %v2651 = vpop.f32.mrb[0].mxu0
      %2652 = vmatprep.mubr.f32.mxu0 0.0
      %2653 = vmatmul.mubr.f32.gmra.mrb[0].mxu0 %v2431
      %v2654 = vpop.f32.mrb[0].mxu0
      %v2655 = vadd.f32 0.0, %v2654
      %v2656 = vpop.f32.mrb[0].mxu0
      %2657 = vmatprep.mubr.f32.mxu0 0.0
      %2658 = vmatmul.mubr.f32.gmra.mrb[0].mxu0 %v2433
      %v2659 = vpop.f32.mrb[0].mxu0
      %v2660 = vadd.f32 0.0, %v2659
      %v2661 = vpop.f32.mrb[0].mxu0
      %2662 = vmatprep.mubr.f32.mxu0 0.0
      %2663 = vmatmul.mubr.f32.gmra.mrb[0].mxu0 %v2435
      %v2664 = vpop.f32.mrb[0].mxu0
      %v2665 = vadd.f32 0.0, %v2664
      %v2666 = vpop.f32.mrb[0].mxu0
      %2667 = vmatprep.mubr.f32.mxu0 0.0
      %2668 = vmatmul.mubr.f32.gmra.mrb[0].mxu0 %v2437
      %v2669 = vpop.f32.mrb[0].mxu0
      %v2670 = vadd.f32 0.0, %v2669
      %v2671 = vpop.f32.mrb[0].mxu0
      %2672 = vmatprep.mubr.f32.mxu0 0.0
      %2673 = vmatmul.mubr.f32.gmra.mrb[0].mxu0 %v2439
      %v2674 = vpop.f32.mrb[0].mxu0
      %v2675 = vadd.f32 0.0, %v2674
      %v2676 = vpop.f32.mrb[0].mxu0
      %2677 = vmatprep.mubr.f32.mxu0 0.0
      %2678 = vmatmul.mubr.f32.gmra.mrb[0].mxu0 %v2441
      %v2679 = vpop.f32.mrb[0].mxu0
      %v2680 = vadd.f32 0.0, %v2679
      %v2681 = vpop.f32.mrb[0].mxu0
      %2682 = vmatprep.mubr.f32.mxu0 0.0
      %2683 = vmatmul.mubr.f32.gmra.mrb[0].mxu0 %v2443
      %v2684 = vpop.f32.mrb[0].mxu0
      %v2685 = vadd.f32 0.0, %v2684
      %v2686 = vpop.f32.mrb[0].mxu0
      %2687 = vmatprep.mubr.f32.mxu0 0.0
      %2688 = vmatmul.mubr.f32.gmra.mrb[0].mxu0 %v2445
      %v2689 = vpop.f32.mrb[0].mxu0
      %v2690 = vadd.f32 0.0, %v2689
      %v2691 = vpop.f32.mrb[0].mxu0
      %2692 = vmatprep.mubr.f32.mxu0 0.0
      %2693 = vmatmul.mubr.f32.gmra.mrb[0].mxu0 %v2447
      %v2694 = vpop.f32.mrb[0].mxu0
      %v2695 = vadd.f32 0.0, %v2694
      %v2696 = vpop.f32.mrb[0].mxu0
      %2697 = vmatprep.mubr.f32.mxu0 0.0
      %2698 = vmatmul.mubr.f32.gmra.mrb[0].mxu0 %v2449
      %v2699 = vpop.f32.mrb[0].mxu0
      %v2700 = vadd.f32 0.0, %v2699
      %v2701 = vpop.f32.mrb[0].mxu0
      %2702 = vmatprep.mubr.f32.mxu0 0.0
      %2703 = vmatmul.mubr.f32.gmra.mrb[0].mxu0 %v2451
      %v2704 = vpop.f32.mrb[0].mxu0
      %v2705 = vadd.f32 0.0, %v2704
      %v2706 = vpop.f32.mrb[0].mxu0
      %2707 = vmatprep.mubr.f32.mxu0 0.0
      %2708 = vmatmul.mubr.f32.gmra.mrb[0].mxu0 %v2453
      %v2709 = vpop.f32.mrb[0].mxu0
      %v2710 = vadd.f32 0.0, %v2709
      %v2711 = vpop.f32.mrb[0].mxu0
      %2712 = vmatprep.mubr.f32.mxu0 0.0
      %2713 = vmatmul.mubr.f32.gmra.mrb[0].mxu0 %v2455
      %v2714 = vpop.f32.mrb[0].mxu0
      %v2715 = vadd.f32 0.0, %v2714
      %v2716 = vpop.f32.mrb[0].mxu0
      %2717 = vmatprep.mubr.f32.mxu0 0.0
      %2718 = vmatmul.mubr.f32.gmra.mrb[0].mxu0 %v2457
      %v2719 = vpop.f32.mrb[0].mxu0
      %v2720 = vadd.f32 0.0, %v2719
      %v2721 = vpop.f32.mrb[0].mxu0
      %2722 = vmatprep.mubr.f32.mxu0 0.0
      %2723 = vmatmul.mubr.f32.gmra.mrb[0].mxu0 %v2459
      %v2724 = vpop.f32.mrb[0].mxu0
      %v2725 = vadd.f32 0.0, %v2724
      %v2726 = vpop.f32.mrb[0].mxu0
      %2727 = vmatprep.mubr.f32.mxu0 0.0
      %2728 = vmatmul.mubr.f32.gmra.mrb[0].mxu0 %v2461
      %v2729 = vpop.f32.mrb[0].mxu0
      %v2730 = vadd.f32 0.0, %v2729
      %v2731 = vpop.f32.mrb[0].mxu0
      %2732 = vmatprep.mubr.f32.mxu0 0.0
      %2733 = vmatmul.mubr.f32.gmra.mrb[0].mxu0 %v2463
      %v2734 = vpop.f32.mrb[0].mxu0
      %v2735 = vadd.f32 0.0, %v2734
      %v2736 = vpop.f32.mrb[0].mxu0
      %2737 = vdwg.mxu0
      %v2738 = vadd.f32 %v2258, %v2535
      %v2739 = vadd.f32 %v2259, %v2540
      %v2740 = vadd.f32 %v2260, %v2545
      %v2741 = vadd.f32 %v2261, %v2550
      %v2742 = vadd.f32 %v2262, %v2555
      %v2743 = vadd.f32 %v2263, %v2560
      %v2744 = vadd.f32 %v2264, %v2565
      %v2745 = vadd.f32 %v2265, %v2570
      %v2746 = vadd.f32 %v2266, %v2575
      %v2747 = vadd.f32 %v2267, %v2580
      %v2748 = vadd.f32 %v2268, %v2585
      %v2749 = vadd.f32 %v2269, %v2590
      %v2750 = vadd.f32 %v2270, %v2595
      %v2751 = vadd.f32 %v2271, %v2600
      %v2752 = vadd.f32 %v2272, %v2605
      %v2753 = vadd.f32 %v2273, %v2610
      %v2754 = vadd.f32 %v2274, %v2615
      %v2755 = vadd.f32 %v2275, %v2620
      %v2756 = vadd.f32 %v2276, %v2625
      %v2757 = vadd.f32 %v2277, %v2630
      %v2758 = vadd.f32 %v2278, %v2635
      %v2759 = vadd.f32 %v2279, %v2640
      %v2760 = vadd.f32 %v2280, %v2645
      %v2761 = vadd.f32 %v2281, %v2650
      %v2762 = vadd.f32 %v2282, %v2655
      %v2763 = vadd.f32 %v2283, %v2660
      %v2764 = vadd.f32 %v2284, %v2665
      %v2765 = vadd.f32 %v2285, %v2670
      %v2766 = vadd.f32 %v2286, %v2675
      %v2767 = vadd.f32 %v2287, %v2680
      %v2768 = vadd.f32 %v2288, %v2685
      %v2769 = vadd.f32 %v2289, %v2690
      %v2770 = vadd.f32 %v2290, %v2695
      %v2771 = vadd.f32 %v2291, %v2700
      %v2772 = vadd.f32 %v2292, %v2705
      %v2773 = vadd.f32 %v2293, %v2710
      %v2774 = vadd.f32 %v2294, %v2715
      %v2775 = vadd.f32 %v2295, %v2720
      %v2776 = vadd.f32 %v2296, %v2725
      %v2777 = vadd.f32 %v2297, %v2730
      %v2778 = vadd.f32 %v2298, %v2735
      %s2779 = scalar_lea.vmem %s5, 20
      %v2780 = vld [vmem:[%s2779] sm:$0xf]
      %v2781 = vrot.slane %v565, 4
      %v2782 = vrot.slane %v566, 4
      %v2783 = vsel %vm862, %v2781, %v2782
      %v2784 = vrot.slane %v567, 4
      %v2785 = vsel %vm862, %v2782, %v2784
      %v2786 = vrot.slane %v568, 4
      %v2787 = vsel %vm862, %v2784, %v2786
      %v2788 = vrot.slane %v569, 4
      %v2789 = vsel %vm862, %v2786, %v2788
      %v2790 = vrot.slane %v570, 4
      %v2791 = vsel %vm862, %v2788, %v2790
      %v2792 = vrot.slane %v571, 4
      %v2793 = vsel %vm862, %v2790, %v2792
      %v2794 = vrot.slane %v572, 4
      %v2795 = vsel %vm862, %v2792, %v2794
      %v2796 = vrot.slane %v573, 4
      %v2797 = vsel %vm862, %v2794, %v2796
      %v2798 = vrot.slane %v574, 4
      %v2799 = vsel %vm862, %v2796, %v2798
      %v2800 = vrot.slane %v575, 4
      %v2801 = vsel %vm862, %v2798, %v2800
      %v2802 = vrot.slane %v576, 4
      %v2803 = vsel %vm862, %v2800, %v2802
      %v2804 = vrot.slane %v577, 4
      %v2805 = vsel %vm862, %v2802, %v2804
      %v2806 = vrot.slane %v578, 4
      %v2807 = vsel %vm862, %v2804, %v2806
      %v2808 = vrot.slane %v579, 4
      %v2809 = vsel %vm862, %v2806, %v2808
      %v2810 = vrot.slane %v580, 4
      %v2811 = vsel %vm862, %v2808, %v2810
      %v2812 = vrot.slane %v581, 4
      %v2813 = vsel %vm862, %v2810, %v2812
      %v2814 = vrot.slane %v582, 4
      %v2815 = vsel %vm862, %v2812, %v2814
      %v2816 = vrot.slane %v583, 4
      %v2817 = vsel %vm862, %v2814, %v2816
      %v2818 = vrot.slane %v584, 4
      %v2819 = vsel %vm862, %v2816, %v2818
      %v2820 = vrot.slane %v585, 4
      %v2821 = vsel %vm862, %v2818, %v2820
      %v2822 = vrot.slane %v586, 4
      %v2823 = vsel %vm862, %v2820, %v2822
      %v2824 = vrot.slane %v587, 4
      %v2825 = vsel %vm862, %v2822, %v2824
      %v2826 = vrot.slane %v588, 4
      %v2827 = vsel %vm862, %v2824, %v2826
      %v2828 = vrot.slane %v589, 4
      %v2829 = vsel %vm862, %v2826, %v2828
      %v2830 = vrot.slane %v590, 4
      %v2831 = vsel %vm862, %v2828, %v2830
      %v2832 = vrot.slane %v591, 4
      %v2833 = vsel %vm862, %v2830, %v2832
      %v2834 = vrot.slane %v592, 4
      %v2835 = vsel %vm862, %v2832, %v2834
      %v2836 = vrot.slane %v593, 4
      %v2837 = vsel %vm862, %v2834, %v2836
      %v2838 = vrot.slane %v594, 4
      %v2839 = vsel %vm862, %v2836, %v2838
      %v2840 = vrot.slane %v595, 4
      %v2841 = vsel %vm862, %v2838, %v2840
      %v2842 = vrot.slane %v596, 4
      %v2843 = vsel %vm862, %v2840, %v2842
      %v2844 = vrot.slane %v597, 4
      %v2845 = vsel %vm862, %v2842, %v2844
      %v2846 = vrot.slane %v598, 4
      %v2847 = vsel %vm862, %v2844, %v2846
      %v2848 = vrot.slane %v599, 4
      %v2849 = vsel %vm862, %v2846, %v2848
      %v2850 = vrot.slane %v600, 4
      %v2851 = vsel %vm862, %v2848, %v2850
      %v2852 = vrot.slane %v601, 4
      %v2853 = vsel %vm862, %v2850, %v2852
      %v2854 = vrot.slane %v602, 4
      %v2855 = vsel %vm862, %v2852, %v2854
      %v2856 = vrot.slane %v603, 4
      %v2857 = vsel %vm862, %v2854, %v2856
      %v2858 = vrot.slane %v604, 4
      %v2859 = vsel %vm862, %v2856, %v2858
      %v2860 = vrot.slane %v605, 4
      %v2861 = vsel %vm862, %v2858, %v2860
      %v2862 = vsel %vm779, %v2783, 0
      %v2864 = vsel %vm779, %v2785, 0
      %v2866 = vsel %vm779, %v2787, 0
      %v2868 = vsel %vm779, %v2789, 0
      %v2870 = vsel %vm779, %v2791, 0
      %v2872 = vsel %vm779, %v2793, 0
      %v2874 = vsel %vm779, %v2795, 0
      %v2876 = vsel %vm779, %v2797, 0
      %v2878 = vsel %vm779, %v2799, 0
      %v2880 = vsel %vm779, %v2801, 0
      %v2882 = vsel %vm779, %v2803, 0
      %v2884 = vsel %vm779, %v2805, 0
      %v2886 = vsel %vm779, %v2807, 0
      %v2888 = vsel %vm779, %v2809, 0
      %v2890 = vsel %vm779, %v2811, 0
      %v2892 = vsel %vm779, %v2813, 0
      %v2894 = vsel %vm779, %v2815, 0
      %v2896 = vsel %vm779, %v2817, 0
      %v2898 = vsel %vm779, %v2819, 0
      %v2900 = vsel %vm779, %v2821, 0
      %v2902 = vsel %vm779, %v2823, 0
      %v2904 = vsel %vm779, %v2825, 0
      %v2906 = vsel %vm779, %v2827, 0
      %v2908 = vsel %vm779, %v2829, 0
      %v2910 = vsel %vm779, %v2831, 0
      %v2912 = vsel %vm779, %v2833, 0
      %v2914 = vsel %vm779, %v2835, 0
      %v2916 = vsel %vm779, %v2837, 0
      %v2918 = vsel %vm779, %v2839, 0
      %v2920 = vsel %vm779, %v2841, 0
      %v2922 = vsel %vm779, %v2843, 0
      %v2924 = vsel %vm779, %v2845, 0
      %v2926 = vsel %vm779, %v2847, 0
      %v2928 = vsel %vm779, %v2849, 0
      %v2930 = vsel %vm779, %v2851, 0
      %v2932 = vsel %vm779, %v2853, 0
      %v2934 = vsel %vm779, %v2855, 0
      %v2936 = vsel %vm779, %v2857, 0
      %v2938 = vsel %vm779, %v2859, 0
      %v2940 = vsel %vm779, %v2861, 0
      %v2942 = vsel %vm779, %v2860, 0
      %v2945 = vsel %vm862, %v2780, 0
      %2947 = vmatprep.subr.mxu0 0.0
      %2948 = vmatpush1.msra.mxu0 %v2945
      %2949 = vmatprep.subr.mxu0 0.0
      %2950 = vmatpush1.msra.mxu0 0.0
      %2951 = vmatprep.subr.mxu0 0.0
      %2952 = vmatpush1.msra.mxu0 0.0
      %2953 = vmatprep.subr.mxu0 0.0
      %2954 = vmatpush1.msra.mxu0 0.0
      %2955 = vmatprep.subr.mxu0 0.0
      %2956 = vmatpush1.msra.mxu0 0.0
      %2957 = vmatprep.subr.mxu0 0.0
      %2958 = vmatpush1.msra.mxu0 0.0
      %2959 = vmatprep.subr.mxu0 0.0
      %2960 = vmatpush1.msra.mxu0 0.0
      %2961 = vmatprep.subr.mxu0 0.0
      %2962 = vmatpush1.msra.mxu0 0.0
      %2963 = vmatprep.subr.mxu0 0.0
      %2964 = vmatpush1.msra.mxu0 0.0
      %2965 = vmatprep.subr.mxu0 0.0
      %2966 = vmatpush1.msra.mxu0 0.0
      %2967 = vmatprep.subr.mxu0 0.0
      %2968 = vmatpush1.msra.mxu0 0.0
      %2969 = vmatprep.subr.mxu0 0.0
      %2970 = vmatpush1.msra.mxu0 0.0
      %2971 = vmatprep.subr.mxu0 0.0
      %2972 = vmatpush1.msra.mxu0 0.0
      %2973 = vmatprep.subr.mxu0 0.0
      %2974 = vmatpush1.msra.mxu0 0.0
      %2975 = vmatprep.subr.mxu0 0.0
      %2976 = vmatpush1.msra.mxu0 0.0
      %2977 = vmatprep.subr.mxu0 0.0
      %2978 = vmatpush1.msra.mxu0 0.0
      %2979 = vmatprep.subr.mxu0 0.0
      %2980 = vmatpush1.msra.mxu0 0.0
      %2981 = vmatprep.subr.mxu0 0.0
      %2982 = vmatpush1.msra.mxu0 0.0
      %2983 = vmatprep.subr.mxu0 0.0
      %2984 = vmatpush1.msra.mxu0 0.0
      %2985 = vmatprep.subr.mxu0 0.0
      %2986 = vmatpush1.msra.mxu0 0.0
      %2987 = vmatprep.subr.mxu0 0.0
      %2988 = vmatpush1.msra.mxu0 0.0
      %2989 = vmatprep.subr.mxu0 0.0
      %2990 = vmatpush1.msra.mxu0 0.0
      %2991 = vmatprep.subr.mxu0 0.0
      %2992 = vmatpush1.msra.mxu0 0.0
      %2993 = vmatprep.subr.mxu0 0.0
      %2994 = vmatpush1.msra.mxu0 0.0
      %2995 = vmatprep.subr.mxu0 0.0
      %2996 = vmatpush1.msra.mxu0 0.0
      %2997 = vmatprep.subr.mxu0 0.0
      %2998 = vmatpush1.msra.mxu0 0.0
      %2999 = vmatprep.subr.mxu0 0.0
      %3000 = vmatpush1.msra.mxu0 0.0
      %3001 = vmatprep.subr.mxu0 0.0
      %3002 = vmatpush1.msra.mxu0 0.0
      %3003 = vmatprep.subr.mxu0 0.0
      %3004 = vmatpush1.msra.mxu0 0.0
      %3005 = vmatprep.subr.mxu0 0.0
      %3006 = vmatpush1.msra.mxu0 0.0
      %3007 = vmatprep.subr.mxu0 0.0
      %3008 = vmatpush1.msra.mxu0 0.0
      %3009 = vmatprep.subr.mxu0 0.0
      %3010 = vmatpush1.msra.mxu0 0.0
      %3011 = vmatprep.mubr.f32.mxu0 0.0
      %3012 = vmatmul.mubr.f32.gmra.mrb[0].mxu0 %v2862
      %v3013 = vpop.f32.mrb[0].mxu0
      %v3014 = vadd.f32 0.0, %v3013
      %v3015 = vpop.f32.mrb[0].mxu0
      %3016 = vmatprep.mubr.f32.mxu0 0.0
      %3017 = vmatmul.mubr.f32.gmra.mrb[0].mxu0 %v2864
      %v3018 = vpop.f32.mrb[0].mxu0
      %v3019 = vadd.f32 0.0, %v3018
      %v3020 = vpop.f32.mrb[0].mxu0
      %3021 = vmatprep.mubr.f32.mxu0 0.0
      %3022 = vmatmul.mubr.f32.gmra.mrb[0].mxu0 %v2866
      %v3023 = vpop.f32.mrb[0].mxu0
      %v3024 = vadd.f32 0.0, %v3023
      %v3025 = vpop.f32.mrb[0].mxu0
      %3026 = vmatprep.mubr.f32.mxu0 0.0
      %3027 = vmatmul.mubr.f32.gmra.mrb[0].mxu0 %v2868
      %v3028 = vpop.f32.mrb[0].mxu0
      %v3029 = vadd.f32 0.0, %v3028
      %v3030 = vpop.f32.mrb[0].mxu0
      %3031 = vmatprep.mubr.f32.mxu0 0.0
      %3032 = vmatmul.mubr.f32.gmra.mrb[0].mxu0 %v2870
      %v3033 = vpop.f32.mrb[0].mxu0
      %v3034 = vadd.f32 0.0, %v3033
      %v3035 = vpop.f32.mrb[0].mxu0
      %3036 = vmatprep.mubr.f32.mxu0 0.0
      %3037 = vmatmul.mubr.f32.gmra.mrb[0].mxu0 %v2872
      %v3038 = vpop.f32.mrb[0].mxu0
      %v3039 = vadd.f32 0.0, %v3038
      %v3040 = vpop.f32.mrb[0].mxu0
      %3041 = vmatprep.mubr.f32.mxu0 0.0
      %3042 = vmatmul.mubr.f32.gmra.mrb[0].mxu0 %v2874
      %v3043 = vpop.f32.mrb[0].mxu0
      %v3044 = vadd.f32 0.0, %v3043
      %v3045 = vpop.f32.mrb[0].mxu0
      %3046 = vmatprep.mubr.f32.mxu0 0.0
      %3047 = vmatmul.mubr.f32.gmra.mrb[0].mxu0 %v2876
      %v3048 = vpop.f32.mrb[0].mxu0
      %v3049 = vadd.f32 0.0, %v3048
      %v3050 = vpop.f32.mrb[0].mxu0
      %3051 = vmatprep.mubr.f32.mxu0 0.0
      %3052 = vmatmul.mubr.f32.gmra.mrb[0].mxu0 %v2878
      %v3053 = vpop.f32.mrb[0].mxu0
      %v3054 = vadd.f32 0.0, %v3053
      %v3055 = vpop.f32.mrb[0].mxu0
      %3056 = vmatprep.mubr.f32.mxu0 0.0
      %3057 = vmatmul.mubr.f32.gmra.mrb[0].mxu0 %v2880
      %v3058 = vpop.f32.mrb[0].mxu0
      %v3059 = vadd.f32 0.0, %v3058
      %v3060 = vpop.f32.mrb[0].mxu0
      %3061 = vmatprep.mubr.f32.mxu0 0.0
      %3062 = vmatmul.mubr.f32.gmra.mrb[0].mxu0 %v2882
      %v3063 = vpop.f32.mrb[0].mxu0
      %v3064 = vadd.f32 0.0, %v3063
      %v3065 = vpop.f32.mrb[0].mxu0
      %3066 = vmatprep.mubr.f32.mxu0 0.0
      %3067 = vmatmul.mubr.f32.gmra.mrb[0].mxu0 %v2884
      %v3068 = vpop.f32.mrb[0].mxu0
      %v3069 = vadd.f32 0.0, %v3068
      %v3070 = vpop.f32.mrb[0].mxu0
      %3071 = vmatprep.mubr.f32.mxu0 0.0
      %3072 = vmatmul.mubr.f32.gmra.mrb[0].mxu0 %v2886
      %v3073 = vpop.f32.mrb[0].mxu0
      %v3074 = vadd.f32 0.0, %v3073
      %v3075 = vpop.f32.mrb[0].mxu0
      %3076 = vmatprep.mubr.f32.mxu0 0.0
      %3077 = vmatmul.mubr.f32.gmra.mrb[0].mxu0 %v2888
      %v3078 = vpop.f32.mrb[0].mxu0
      %v3079 = vadd.f32 0.0, %v3078
      %v3080 = vpop.f32.mrb[0].mxu0
      %3081 = vmatprep.mubr.f32.mxu0 0.0
      %3082 = vmatmul.mubr.f32.gmra.mrb[0].mxu0 %v2890
      %v3083 = vpop.f32.mrb[0].mxu0
      %v3084 = vadd.f32 0.0, %v3083
      %v3085 = vpop.f32.mrb[0].mxu0
      %3086 = vmatprep.mubr.f32.mxu0 0.0
      %3087 = vmatmul.mubr.f32.gmra.mrb[0].mxu0 %v2892
      %v3088 = vpop.f32.mrb[0].mxu0
      %v3089 = vadd.f32 0.0, %v3088
      %v3090 = vpop.f32.mrb[0].mxu0
      %3091 = vmatprep.mubr.f32.mxu0 0.0
      %3092 = vmatmul.mubr.f32.gmra.mrb[0].mxu0 %v2894
      %v3093 = vpop.f32.mrb[0].mxu0
      %v3094 = vadd.f32 0.0, %v3093
      %v3095 = vpop.f32.mrb[0].mxu0
      %3096 = vmatprep.mubr.f32.mxu0 0.0
      %3097 = vmatmul.mubr.f32.gmra.mrb[0].mxu0 %v2896
      %v3098 = vpop.f32.mrb[0].mxu0
      %v3099 = vadd.f32 0.0, %v3098
      %v3100 = vpop.f32.mrb[0].mxu0
      %3101 = vmatprep.mubr.f32.mxu0 0.0
      %3102 = vmatmul.mubr.f32.gmra.mrb[0].mxu0 %v2898
      %v3103 = vpop.f32.mrb[0].mxu0
      %v3104 = vadd.f32 0.0, %v3103
      %v3105 = vpop.f32.mrb[0].mxu0
      %3106 = vmatprep.mubr.f32.mxu0 0.0
      %3107 = vmatmul.mubr.f32.gmra.mrb[0].mxu0 %v2900
      %v3108 = vpop.f32.mrb[0].mxu0
      %v3109 = vadd.f32 0.0, %v3108
      %v3110 = vpop.f32.mrb[0].mxu0
      %3111 = vmatprep.mubr.f32.mxu0 0.0
      %3112 = vmatmul.mubr.f32.gmra.mrb[0].mxu0 %v2902
      %v3113 = vpop.f32.mrb[0].mxu0
      %v3114 = vadd.f32 0.0, %v3113
      %v3115 = vpop.f32.mrb[0].mxu0
      %3116 = vmatprep.mubr.f32.mxu0 0.0
      %3117 = vmatmul.mubr.f32.gmra.mrb[0].mxu0 %v2904
      %v3118 = vpop.f32.mrb[0].mxu0
      %v3119 = vadd.f32 0.0, %v3118
      %v3120 = vpop.f32.mrb[0].mxu0
      %3121 = vmatprep.mubr.f32.mxu0 0.0
      %3122 = vmatmul.mubr.f32.gmra.mrb[0].mxu0 %v2906
      %v3123 = vpop.f32.mrb[0].mxu0
      %v3124 = vadd.f32 0.0, %v3123
      %v3125 = vpop.f32.mrb[0].mxu0
      %3126 = vmatprep.mubr.f32.mxu0 0.0
      %3127 = vmatmul.mubr.f32.gmra.mrb[0].mxu0 %v2908
      %v3128 = vpop.f32.mrb[0].mxu0
      %v3129 = vadd.f32 0.0, %v3128
      %v3130 = vpop.f32.mrb[0].mxu0
      %3131 = vmatprep.mubr.f32.mxu0 0.0
      %3132 = vmatmul.mubr.f32.gmra.mrb[0].mxu0 %v2910
      %v3133 = vpop.f32.mrb[0].mxu0
      %v3134 = vadd.f32 0.0, %v3133
      %v3135 = vpop.f32.mrb[0].mxu0
      %3136 = vmatprep.mubr.f32.mxu0 0.0
      %3137 = vmatmul.mubr.f32.gmra.mrb[0].mxu0 %v2912
      %v3138 = vpop.f32.mrb[0].mxu0
      %v3139 = vadd.f32 0.0, %v3138
      %v3140 = vpop.f32.mrb[0].mxu0
      %3141 = vmatprep.mubr.f32.mxu0 0.0
      %3142 = vmatmul.mubr.f32.gmra.mrb[0].mxu0 %v2914
      %v3143 = vpop.f32.mrb[0].mxu0
      %v3144 = vadd.f32 0.0, %v3143
      %v3145 = vpop.f32.mrb[0].mxu0
      %3146 = vmatprep.mubr.f32.mxu0 0.0
      %3147 = vmatmul.mubr.f32.gmra.mrb[0].mxu0 %v2916
      %v3148 = vpop.f32.mrb[0].mxu0
      %v3149 = vadd.f32 0.0, %v3148
      %v3150 = vpop.f32.mrb[0].mxu0
      %3151 = vmatprep.mubr.f32.mxu0 0.0
      %3152 = vmatmul.mubr.f32.gmra.mrb[0].mxu0 %v2918
      %v3153 = vpop.f32.mrb[0].mxu0
      %v3154 = vadd.f32 0.0, %v3153
      %v3155 = vpop.f32.mrb[0].mxu0
      %3156 = vmatprep.mubr.f32.mxu0 0.0
      %3157 = vmatmul.mubr.f32.gmra.mrb[0].mxu0 %v2920
      %v3158 = vpop.f32.mrb[0].mxu0
      %v3159 = vadd.f32 0.0, %v3158
      %v3160 = vpop.f32.mrb[0].mxu0
      %3161 = vmatprep.mubr.f32.mxu0 0.0
      %3162 = vmatmul.mubr.f32.gmra.mrb[0].mxu0 %v2922
      %v3163 = vpop.f32.mrb[0].mxu0
      %v3164 = vadd.f32 0.0, %v3163
      %v3165 = vpop.f32.mrb[0].mxu0
      %3166 = vmatprep.mubr.f32.mxu0 0.0
      %3167 = vmatmul.mubr.f32.gmra.mrb[0].mxu0 %v2924
      %v3168 = vpop.f32.mrb[0].mxu0
      %v3169 = vadd.f32 0.0, %v3168
      %v3170 = vpop.f32.mrb[0].mxu0
      %3171 = vmatprep.mubr.f32.mxu0 0.0
      %3172 = vmatmul.mubr.f32.gmra.mrb[0].mxu0 %v2926
      %v3173 = vpop.f32.mrb[0].mxu0
      %v3174 = vadd.f32 0.0, %v3173
      %v3175 = vpop.f32.mrb[0].mxu0
      %3176 = vmatprep.mubr.f32.mxu0 0.0
      %3177 = vmatmul.mubr.f32.gmra.mrb[0].mxu0 %v2928
      %v3178 = vpop.f32.mrb[0].mxu0
      %v3179 = vadd.f32 0.0, %v3178
      %v3180 = vpop.f32.mrb[0].mxu0
      %3181 = vmatprep.mubr.f32.mxu0 0.0
      %3182 = vmatmul.mubr.f32.gmra.mrb[0].mxu0 %v2930
      %v3183 = vpop.f32.mrb[0].mxu0
      %v3184 = vadd.f32 0.0, %v3183
      %v3185 = vpop.f32.mrb[0].mxu0
      %3186 = vmatprep.mubr.f32.mxu0 0.0
      %3187 = vmatmul.mubr.f32.gmra.mrb[0].mxu0 %v2932
      %v3188 = vpop.f32.mrb[0].mxu0
      %v3189 = vadd.f32 0.0, %v3188
      %v3190 = vpop.f32.mrb[0].mxu0
      %3191 = vmatprep.mubr.f32.mxu0 0.0
      %3192 = vmatmul.mubr.f32.gmra.mrb[0].mxu0 %v2934
      %v3193 = vpop.f32.mrb[0].mxu0
      %v3194 = vadd.f32 0.0, %v3193
      %v3195 = vpop.f32.mrb[0].mxu0
      %3196 = vmatprep.mubr.f32.mxu0 0.0
      %3197 = vmatmul.mubr.f32.gmra.mrb[0].mxu0 %v2936
      %v3198 = vpop.f32.mrb[0].mxu0
      %v3199 = vadd.f32 0.0, %v3198
      %v3200 = vpop.f32.mrb[0].mxu0
      %3201 = vmatprep.mubr.f32.mxu0 0.0
      %3202 = vmatmul.mubr.f32.gmra.mrb[0].mxu0 %v2938
      %v3203 = vpop.f32.mrb[0].mxu0
      %v3204 = vadd.f32 0.0, %v3203
      %v3205 = vpop.f32.mrb[0].mxu0
      %3206 = vmatprep.mubr.f32.mxu0 0.0
      %3207 = vmatmul.mubr.f32.gmra.mrb[0].mxu0 %v2940
      %v3208 = vpop.f32.mrb[0].mxu0
      %v3209 = vadd.f32 0.0, %v3208
      %v3210 = vpop.f32.mrb[0].mxu0
      %3211 = vmatprep.mubr.f32.mxu0 0.0
      %3212 = vmatmul.mubr.f32.gmra.mrb[0].mxu0 %v2942
      %v3213 = vpop.f32.mrb[0].mxu0
      %v3214 = vadd.f32 0.0, %v3213
      %v3215 = vpop.f32.mrb[0].mxu0
      %3216 = vdwg.mxu0
      %v3217 = vadd.f32 %v2738, %v3014
      %v3218 = vadd.f32 %v2739, %v3019
      %v3219 = vadd.f32 %v2740, %v3024
      %v3220 = vadd.f32 %v2741, %v3029
      %v3221 = vadd.f32 %v2742, %v3034
      %v3222 = vadd.f32 %v2743, %v3039
      %v3223 = vadd.f32 %v2744, %v3044
      %v3224 = vadd.f32 %v2745, %v3049
      %v3225 = vadd.f32 %v2746, %v3054
      %v3226 = vadd.f32 %v2747, %v3059
      %v3227 = vadd.f32 %v2748, %v3064
      %v3228 = vadd.f32 %v2749, %v3069
      %v3229 = vadd.f32 %v2750, %v3074
      %v3230 = vadd.f32 %v2751, %v3079
      %v3231 = vadd.f32 %v2752, %v3084
      %v3232 = vadd.f32 %v2753, %v3089
      %v3233 = vadd.f32 %v2754, %v3094
      %v3234 = vadd.f32 %v2755, %v3099
      %v3235 = vadd.f32 %v2756, %v3104
      %v3236 = vadd.f32 %v2757, %v3109
      %v3237 = vadd.f32 %v2758, %v3114
      %v3238 = vadd.f32 %v2759, %v3119
      %v3239 = vadd.f32 %v2760, %v3124
      %v3240 = vadd.f32 %v2761, %v3129
      %v3241 = vadd.f32 %v2762, %v3134
      %v3242 = vadd.f32 %v2763, %v3139
      %v3243 = vadd.f32 %v2764, %v3144
      %v3244 = vadd.f32 %v2765, %v3149
      %v3245 = vadd.f32 %v2766, %v3154
      %v3246 = vadd.f32 %v2767, %v3159
      %v3247 = vadd.f32 %v2768, %v3164
      %v3248 = vadd.f32 %v2769, %v3169
      %v3249 = vadd.f32 %v2770, %v3174
      %v3250 = vadd.f32 %v2771, %v3179
      %v3251 = vadd.f32 %v2772, %v3184
      %v3252 = vadd.f32 %v2773, %v3189
      %v3253 = vadd.f32 %v2774, %v3194
      %v3254 = vadd.f32 %v2775, %v3199
      %v3255 = vadd.f32 %v2776, %v3204
      %v3256 = vadd.f32 %v2777, %v3209
      %v3257 = vadd.f32 %v2778, %v3214
      %s3258 = scalar_lea.vmem %s5, 24
      %v3259 = vld [vmem:[%s3258] sm:$0xf]
      %v3262 = vrot.slane %v606, 4
      %v3263 = vsel %vm862, %v2860, %v3262
      %v3264 = vrot.slane %v607, 4
      %v3265 = vsel %vm862, %v3262, %v3264
      %v3266 = vsel %vm779, %v3263, 0
      %v3268 = vsel %vm779, %v3265, 0
      %v3270 = vsel %vm779, %v3264, 0
      %v3273 = vsel %vm862, %v3259, 0
      %3275 = vmatprep.subr.mxu0 0.0
      %3276 = vmatpush1.msra.mxu0 %v3273
      %3277 = vmatprep.subr.mxu0 0.0
      %3278 = vmatpush1.msra.mxu0 0.0
      %3279 = vmatprep.subr.mxu0 0.0
      %3280 = vmatpush1.msra.mxu0 0.0
      %3281 = vmatprep.subr.mxu0 0.0
      %3282 = vmatpush1.msra.mxu0 0.0
      %3283 = vmatprep.subr.mxu0 0.0
      %3284 = vmatpush1.msra.mxu0 0.0
      %3285 = vmatprep.subr.mxu0 0.0
      %3286 = vmatpush1.msra.mxu0 0.0
      %3287 = vmatprep.subr.mxu0 0.0
      %3288 = vmatpush1.msra.mxu0 0.0
      %3289 = vmatprep.subr.mxu0 0.0
      %3290 = vmatpush1.msra.mxu0 0.0
      %3291 = vmatprep.subr.mxu0 0.0
      %3292 = vmatpush1.msra.mxu0 0.0
      %3293 = vmatprep.subr.mxu0 0.0
      %3294 = vmatpush1.msra.mxu0 0.0
      %3295 = vmatprep.subr.mxu0 0.0
      %3296 = vmatpush1.msra.mxu0 0.0
      %3297 = vmatprep.subr.mxu0 0.0
      %3298 = vmatpush1.msra.mxu0 0.0
      %3299 = vmatprep.subr.mxu0 0.0
      %3300 = vmatpush1.msra.mxu0 0.0
      %3301 = vmatprep.subr.mxu0 0.0
      %3302 = vmatpush1.msra.mxu0 0.0
      %3303 = vmatprep.subr.mxu0 0.0
      %3304 = vmatpush1.msra.mxu0 0.0
      %3305 = vmatprep.subr.mxu0 0.0
      %3306 = vmatpush1.msra.mxu0 0.0
      %3307 = vmatprep.subr.mxu0 0.0
      %3308 = vmatpush1.msra.mxu0 0.0
      %3309 = vmatprep.subr.mxu0 0.0
      %3310 = vmatpush1.msra.mxu0 0.0
      %3311 = vmatprep.subr.mxu0 0.0
      %3312 = vmatpush1.msra.mxu0 0.0
      %3313 = vmatprep.subr.mxu0 0.0
      %3314 = vmatpush1.msra.mxu0 0.0
      %3315 = vmatprep.subr.mxu0 0.0
      %3316 = vmatpush1.msra.mxu0 0.0
      %3317 = vmatprep.subr.mxu0 0.0
      %3318 = vmatpush1.msra.mxu0 0.0
      %3319 = vmatprep.subr.mxu0 0.0
      %3320 = vmatpush1.msra.mxu0 0.0
      %3321 = vmatprep.subr.mxu0 0.0
      %3322 = vmatpush1.msra.mxu0 0.0
      %3323 = vmatprep.subr.mxu0 0.0
      %3324 = vmatpush1.msra.mxu0 0.0
      %3325 = vmatprep.subr.mxu0 0.0
      %3326 = vmatpush1.msra.mxu0 0.0
      %3327 = vmatprep.subr.mxu0 0.0
      %3328 = vmatpush1.msra.mxu0 0.0
      %3329 = vmatprep.subr.mxu0 0.0
      %3330 = vmatpush1.msra.mxu0 0.0
      %3331 = vmatprep.subr.mxu0 0.0
      %3332 = vmatpush1.msra.mxu0 0.0
      %3333 = vmatprep.subr.mxu0 0.0
      %3334 = vmatpush1.msra.mxu0 0.0
      %3335 = vmatprep.subr.mxu0 0.0
      %3336 = vmatpush1.msra.mxu0 0.0
      %3337 = vmatprep.subr.mxu0 0.0
      %3338 = vmatpush1.msra.mxu0 0.0
      %3339 = vmatprep.mubr.f32.mxu0 0.0
      %3340 = vmatmul.mubr.f32.gmra.mrb[0].mxu0 %v2866
      %v3341 = vpop.f32.mrb[0].mxu0
      %v3342 = vadd.f32 0.0, %v3341
      %v3343 = vpop.f32.mrb[0].mxu0
      %3344 = vmatprep.mubr.f32.mxu0 0.0
      %3345 = vmatmul.mubr.f32.gmra.mrb[0].mxu0 %v2868
      %v3346 = vpop.f32.mrb[0].mxu0
      %v3347 = vadd.f32 0.0, %v3346
      %v3348 = vpop.f32.mrb[0].mxu0
      %3349 = vmatprep.mubr.f32.mxu0 0.0
      %3350 = vmatmul.mubr.f32.gmra.mrb[0].mxu0 %v2870
      %v3351 = vpop.f32.mrb[0].mxu0
      %v3352 = vadd.f32 0.0, %v3351
      %v3353 = vpop.f32.mrb[0].mxu0
      %3354 = vmatprep.mubr.f32.mxu0 0.0
      %3355 = vmatmul.mubr.f32.gmra.mrb[0].mxu0 %v2872
      %v3356 = vpop.f32.mrb[0].mxu0
      %v3357 = vadd.f32 0.0, %v3356
      %v3358 = vpop.f32.mrb[0].mxu0
      %3359 = vmatprep.mubr.f32.mxu0 0.0
      %3360 = vmatmul.mubr.f32.gmra.mrb[0].mxu0 %v2874
      %v3361 = vpop.f32.mrb[0].mxu0
      %v3362 = vadd.f32 0.0, %v3361
      %v3363 = vpop.f32.mrb[0].mxu0
      %3364 = vmatprep.mubr.f32.mxu0 0.0
      %3365 = vmatmul.mubr.f32.gmra.mrb[0].mxu0 %v2876
      %v3366 = vpop.f32.mrb[0].mxu0
      %v3367 = vadd.f32 0.0, %v3366
      %v3368 = vpop.f32.mrb[0].mxu0
      %3369 = vmatprep.mubr.f32.mxu0 0.0
      %3370 = vmatmul.mubr.f32.gmra.mrb[0].mxu0 %v2878
      %v3371 = vpop.f32.mrb[0].mxu0
      %v3372 = vadd.f32 0.0, %v3371
      %v3373 = vpop.f32.mrb[0].mxu0
      %3374 = vmatprep.mubr.f32.mxu0 0.0
      %3375 = vmatmul.mubr.f32.gmra.mrb[0].mxu0 %v2880
      %v3376 = vpop.f32.mrb[0].mxu0
      %v3377 = vadd.f32 0.0, %v3376
      %v3378 = vpop.f32.mrb[0].mxu0
      %3379 = vmatprep.mubr.f32.mxu0 0.0
      %3380 = vmatmul.mubr.f32.gmra.mrb[0].mxu0 %v2882
      %v3381 = vpop.f32.mrb[0].mxu0
      %v3382 = vadd.f32 0.0, %v3381
      %v3383 = vpop.f32.mrb[0].mxu0
      %3384 = vmatprep.mubr.f32.mxu0 0.0
      %3385 = vmatmul.mubr.f32.gmra.mrb[0].mxu0 %v2884
      %v3386 = vpop.f32.mrb[0].mxu0
      %v3387 = vadd.f32 0.0, %v3386
      %v3388 = vpop.f32.mrb[0].mxu0
      %3389 = vmatprep.mubr.f32.mxu0 0.0
      %3390 = vmatmul.mubr.f32.gmra.mrb[0].mxu0 %v2886
      %v3391 = vpop.f32.mrb[0].mxu0
      %v3392 = vadd.f32 0.0, %v3391
      %v3393 = vpop.f32.mrb[0].mxu0
      %3394 = vmatprep.mubr.f32.mxu0 0.0
      %3395 = vmatmul.mubr.f32.gmra.mrb[0].mxu0 %v2888
      %v3396 = vpop.f32.mrb[0].mxu0
      %v3397 = vadd.f32 0.0, %v3396
      %v3398 = vpop.f32.mrb[0].mxu0
      %3399 = vmatprep.mubr.f32.mxu0 0.0
      %3400 = vmatmul.mubr.f32.gmra.mrb[0].mxu0 %v2890
      %v3401 = vpop.f32.mrb[0].mxu0
      %v3402 = vadd.f32 0.0, %v3401
      %v3403 = vpop.f32.mrb[0].mxu0
      %3404 = vmatprep.mubr.f32.mxu0 0.0
      %3405 = vmatmul.mubr.f32.gmra.mrb[0].mxu0 %v2892
      %v3406 = vpop.f32.mrb[0].mxu0
      %v3407 = vadd.f32 0.0, %v3406
      %v3408 = vpop.f32.mrb[0].mxu0
      %3409 = vmatprep.mubr.f32.mxu0 0.0
      %3410 = vmatmul.mubr.f32.gmra.mrb[0].mxu0 %v2894
      %v3411 = vpop.f32.mrb[0].mxu0
      %v3412 = vadd.f32 0.0, %v3411
      %v3413 = vpop.f32.mrb[0].mxu0
      %3414 = vmatprep.mubr.f32.mxu0 0.0
      %3415 = vmatmul.mubr.f32.gmra.mrb[0].mxu0 %v2896
      %v3416 = vpop.f32.mrb[0].mxu0
      %v3417 = vadd.f32 0.0, %v3416
      %v3418 = vpop.f32.mrb[0].mxu0
      %3419 = vmatprep.mubr.f32.mxu0 0.0
      %3420 = vmatmul.mubr.f32.gmra.mrb[0].mxu0 %v2898
      %v3421 = vpop.f32.mrb[0].mxu0
      %v3422 = vadd.f32 0.0, %v3421
      %v3423 = vpop.f32.mrb[0].mxu0
      %3424 = vmatprep.mubr.f32.mxu0 0.0
      %3425 = vmatmul.mubr.f32.gmra.mrb[0].mxu0 %v2900
      %v3426 = vpop.f32.mrb[0].mxu0
      %v3427 = vadd.f32 0.0, %v3426
      %v3428 = vpop.f32.mrb[0].mxu0
      %3429 = vmatprep.mubr.f32.mxu0 0.0
      %3430 = vmatmul.mubr.f32.gmra.mrb[0].mxu0 %v2902
      %v3431 = vpop.f32.mrb[0].mxu0
      %v3432 = vadd.f32 0.0, %v3431
      %v3433 = vpop.f32.mrb[0].mxu0
      %3434 = vmatprep.mubr.f32.mxu0 0.0
      %3435 = vmatmul.mubr.f32.gmra.mrb[0].mxu0 %v2904
      %v3436 = vpop.f32.mrb[0].mxu0
      %v3437 = vadd.f32 0.0, %v3436
      %v3438 = vpop.f32.mrb[0].mxu0
      %3439 = vmatprep.mubr.f32.mxu0 0.0
      %3440 = vmatmul.mubr.f32.gmra.mrb[0].mxu0 %v2906
      %v3441 = vpop.f32.mrb[0].mxu0
      %v3442 = vadd.f32 0.0, %v3441
      %v3443 = vpop.f32.mrb[0].mxu0
      %3444 = vmatprep.mubr.f32.mxu0 0.0
      %3445 = vmatmul.mubr.f32.gmra.mrb[0].mxu0 %v2908
      %v3446 = vpop.f32.mrb[0].mxu0
      %v3447 = vadd.f32 0.0, %v3446
      %v3448 = vpop.f32.mrb[0].mxu0
      %3449 = vmatprep.mubr.f32.mxu0 0.0
      %3450 = vmatmul.mubr.f32.gmra.mrb[0].mxu0 %v2910
      %v3451 = vpop.f32.mrb[0].mxu0
      %v3452 = vadd.f32 0.0, %v3451
      %v3453 = vpop.f32.mrb[0].mxu0
      %3454 = vmatprep.mubr.f32.mxu0 0.0
      %3455 = vmatmul.mubr.f32.gmra.mrb[0].mxu0 %v2912
      %v3456 = vpop.f32.mrb[0].mxu0
      %v3457 = vadd.f32 0.0, %v3456
      %v3458 = vpop.f32.mrb[0].mxu0
      %3459 = vmatprep.mubr.f32.mxu0 0.0
      %3460 = vmatmul.mubr.f32.gmra.mrb[0].mxu0 %v2914
      %v3461 = vpop.f32.mrb[0].mxu0
      %v3462 = vadd.f32 0.0, %v3461
      %v3463 = vpop.f32.mrb[0].mxu0
      %3464 = vmatprep.mubr.f32.mxu0 0.0
      %3465 = vmatmul.mubr.f32.gmra.mrb[0].mxu0 %v2916
      %v3466 = vpop.f32.mrb[0].mxu0
      %v3467 = vadd.f32 0.0, %v3466
      %v3468 = vpop.f32.mrb[0].mxu0
      %3469 = vmatprep.mubr.f32.mxu0 0.0
      %3470 = vmatmul.mubr.f32.gmra.mrb[0].mxu0 %v2918
      %v3471 = vpop.f32.mrb[0].mxu0
      %v3472 = vadd.f32 0.0, %v3471
      %v3473 = vpop.f32.mrb[0].mxu0
      %3474 = vmatprep.mubr.f32.mxu0 0.0
      %3475 = vmatmul.mubr.f32.gmra.mrb[0].mxu0 %v2920
      %v3476 = vpop.f32.mrb[0].mxu0
      %v3477 = vadd.f32 0.0, %v3476
      %v3478 = vpop.f32.mrb[0].mxu0
      %3479 = vmatprep.mubr.f32.mxu0 0.0
      %3480 = vmatmul.mubr.f32.gmra.mrb[0].mxu0 %v2922
      %v3481 = vpop.f32.mrb[0].mxu0
      %v3482 = vadd.f32 0.0, %v3481
      %v3483 = vpop.f32.mrb[0].mxu0
      %3484 = vmatprep.mubr.f32.mxu0 0.0
      %3485 = vmatmul.mubr.f32.gmra.mrb[0].mxu0 %v2924
      %v3486 = vpop.f32.mrb[0].mxu0
      %v3487 = vadd.f32 0.0, %v3486
      %v3488 = vpop.f32.mrb[0].mxu0
      %3489 = vmatprep.mubr.f32.mxu0 0.0
      %3490 = vmatmul.mubr.f32.gmra.mrb[0].mxu0 %v2926
      %v3491 = vpop.f32.mrb[0].mxu0
      %v3492 = vadd.f32 0.0, %v3491
      %v3493 = vpop.f32.mrb[0].mxu0
      %3494 = vmatprep.mubr.f32.mxu0 0.0
      %3495 = vmatmul.mubr.f32.gmra.mrb[0].mxu0 %v2928
      %v3496 = vpop.f32.mrb[0].mxu0
      %v3497 = vadd.f32 0.0, %v3496
      %v3498 = vpop.f32.mrb[0].mxu0
      %3499 = vmatprep.mubr.f32.mxu0 0.0
      %3500 = vmatmul.mubr.f32.gmra.mrb[0].mxu0 %v2930
      %v3501 = vpop.f32.mrb[0].mxu0
      %v3502 = vadd.f32 0.0, %v3501
      %v3503 = vpop.f32.mrb[0].mxu0
      %3504 = vmatprep.mubr.f32.mxu0 0.0
      %3505 = vmatmul.mubr.f32.gmra.mrb[0].mxu0 %v2932
      %v3506 = vpop.f32.mrb[0].mxu0
      %v3507 = vadd.f32 0.0, %v3506
      %v3508 = vpop.f32.mrb[0].mxu0
      %3509 = vmatprep.mubr.f32.mxu0 0.0
      %3510 = vmatmul.mubr.f32.gmra.mrb[0].mxu0 %v2934
      %v3511 = vpop.f32.mrb[0].mxu0
      %v3512 = vadd.f32 0.0, %v3511
      %v3513 = vpop.f32.mrb[0].mxu0
      %3514 = vmatprep.mubr.f32.mxu0 0.0
      %3515 = vmatmul.mubr.f32.gmra.mrb[0].mxu0 %v2936
      %v3516 = vpop.f32.mrb[0].mxu0
      %v3517 = vadd.f32 0.0, %v3516
      %v3518 = vpop.f32.mrb[0].mxu0
      %3519 = vmatprep.mubr.f32.mxu0 0.0
      %3520 = vmatmul.mubr.f32.gmra.mrb[0].mxu0 %v2938
      %v3521 = vpop.f32.mrb[0].mxu0
      %v3522 = vadd.f32 0.0, %v3521
      %v3523 = vpop.f32.mrb[0].mxu0
      %3524 = vmatprep.mubr.f32.mxu0 0.0
      %3525 = vmatmul.mubr.f32.gmra.mrb[0].mxu0 %v2940
      %v3526 = vpop.f32.mrb[0].mxu0
      %v3527 = vadd.f32 0.0, %v3526
      %v3528 = vpop.f32.mrb[0].mxu0
      %3529 = vmatprep.mubr.f32.mxu0 0.0
      %3530 = vmatmul.mubr.f32.gmra.mrb[0].mxu0 %v3266
      %v3531 = vpop.f32.mrb[0].mxu0
      %v3532 = vadd.f32 0.0, %v3531
      %v3533 = vpop.f32.mrb[0].mxu0
      %3534 = vmatprep.mubr.f32.mxu0 0.0
      %3535 = vmatmul.mubr.f32.gmra.mrb[0].mxu0 %v3268
      %v3536 = vpop.f32.mrb[0].mxu0
      %v3537 = vadd.f32 0.0, %v3536
      %v3538 = vpop.f32.mrb[0].mxu0
      %3539 = vmatprep.mubr.f32.mxu0 0.0
      %3540 = vmatmul.mubr.f32.gmra.mrb[0].mxu0 %v3270
      %v3541 = vpop.f32.mrb[0].mxu0
      %v3542 = vadd.f32 0.0, %v3541
      %v3543 = vpop.f32.mrb[0].mxu0
      %3544 = vdwg.mxu0
      %v3545 = vadd.f32 %v3217, %v3342
      %v3546 = vadd.f32 %v3218, %v3347
      %v3547 = vadd.f32 %v3219, %v3352
      %v3548 = vadd.f32 %v3220, %v3357
      %v3549 = vadd.f32 %v3221, %v3362
      %v3550 = vadd.f32 %v3222, %v3367
      %v3551 = vadd.f32 %v3223, %v3372
      %v3552 = vadd.f32 %v3224, %v3377
      %v3553 = vadd.f32 %v3225, %v3382
      %v3554 = vadd.f32 %v3226, %v3387
      %v3555 = vadd.f32 %v3227, %v3392
      %v3556 = vadd.f32 %v3228, %v3397
      %v3557 = vadd.f32 %v3229, %v3402
      %v3558 = vadd.f32 %v3230, %v3407
      %v3559 = vadd.f32 %v3231, %v3412
      %v3560 = vadd.f32 %v3232, %v3417
      %v3561 = vadd.f32 %v3233, %v3422
      %v3562 = vadd.f32 %v3234, %v3427
      %v3563 = vadd.f32 %v3235, %v3432
      %v3564 = vadd.f32 %v3236, %v3437
      %v3565 = vadd.f32 %v3237, %v3442
      %v3566 = vadd.f32 %v3238, %v3447
      %v3567 = vadd.f32 %v3239, %v3452
      %v3568 = vadd.f32 %v3240, %v3457
      %v3569 = vadd.f32 %v3241, %v3462
      %v3570 = vadd.f32 %v3242, %v3467
      %v3571 = vadd.f32 %v3243, %v3472
      %v3572 = vadd.f32 %v3244, %v3477
      %v3573 = vadd.f32 %v3245, %v3482
      %v3574 = vadd.f32 %v3246, %v3487
      %v3575 = vadd.f32 %v3247, %v3492
      %v3576 = vadd.f32 %v3248, %v3497
      %v3577 = vadd.f32 %v3249, %v3502
      %v3578 = vadd.f32 %v3250, %v3507
      %v3579 = vadd.f32 %v3251, %v3512
      %v3580 = vadd.f32 %v3252, %v3517
      %v3581 = vadd.f32 %v3253, %v3522
      %v3582 = vadd.f32 %v3254, %v3527
      %v3583 = vadd.f32 %v3255, %v3532
      %v3584 = vadd.f32 %v3256, %v3537
      %v3585 = vadd.f32 %v3257, %v3542
      %s3586 = scalar_lea.vmem %s5, 28
      %v3587 = vld [vmem:[%s3586] sm:$0xf]
      %vm3589 = vcmask 1042432
      %v3590 = vrot.slane %v567, 5
      %v3591 = vrot.slane %v568, 5
      %v3592 = vsel %vm3589, %v3590, %v3591
      %v3593 = vrot.slane %v569, 5
      %v3594 = vsel %vm3589, %v3591, %v3593
      %v3595 = vrot.slane %v570, 5
      %v3596 = vsel %vm3589, %v3593, %v3595
      %v3597 = vrot.slane %v571, 5
      %v3598 = vsel %vm3589, %v3595, %v3597
      %v3599 = vrot.slane %v572, 5
      %v3600 = vsel %vm3589, %v3597, %v3599
      %v3601 = vrot.slane %v573, 5
      %v3602 = vsel %vm3589, %v3599, %v3601
      %v3603 = vrot.slane %v574, 5
      %v3604 = vsel %vm3589, %v3601, %v3603
      %v3605 = vrot.slane %v575, 5
      %v3606 = vsel %vm3589, %v3603, %v3605
      %v3607 = vrot.slane %v576, 5
      %v3608 = vsel %vm3589, %v3605, %v3607
      %v3609 = vrot.slane %v577, 5
      %v3610 = vsel %vm3589, %v3607, %v3609
      %v3611 = vrot.slane %v578, 5
      %v3612 = vsel %vm3589, %v3609, %v3611
      %v3613 = vrot.slane %v579, 5
      %v3614 = vsel %vm3589, %v3611, %v3613
      %v3615 = vrot.slane %v580, 5
      %v3616 = vsel %vm3589, %v3613, %v3615
      %v3617 = vrot.slane %v581, 5
      %v3618 = vsel %vm3589, %v3615, %v3617
      %v3619 = vrot.slane %v582, 5
      %v3620 = vsel %vm3589, %v3617, %v3619
      %v3621 = vrot.slane %v583, 5
      %v3622 = vsel %vm3589, %v3619, %v3621
      %v3623 = vrot.slane %v584, 5
      %v3624 = vsel %vm3589, %v3621, %v3623
      %v3625 = vrot.slane %v585, 5
      %v3626 = vsel %vm3589, %v3623, %v3625
      %v3627 = vrot.slane %v586, 5
      %v3628 = vsel %vm3589, %v3625, %v3627
      %v3629 = vrot.slane %v587, 5
      %v3630 = vsel %vm3589, %v3627, %v3629
      %v3631 = vrot.slane %v588, 5
      %v3632 = vsel %vm3589, %v3629, %v3631
      %v3633 = vrot.slane %v589, 5
      %v3634 = vsel %vm3589, %v3631, %v3633
      %v3635 = vrot.slane %v590, 5
      %v3636 = vsel %vm3589, %v3633, %v3635
      %v3637 = vrot.slane %v591, 5
      %v3638 = vsel %vm3589, %v3635, %v3637
      %v3639 = vrot.slane %v592, 5
      %v3640 = vsel %vm3589, %v3637, %v3639
      %v3641 = vrot.slane %v593, 5
      %v3642 = vsel %vm3589, %v3639, %v3641
      %v3643 = vrot.slane %v594, 5
      %v3644 = vsel %vm3589, %v3641, %v3643
      %v3645 = vrot.slane %v595, 5
      %v3646 = vsel %vm3589, %v3643, %v3645
      %v3647 = vrot.slane %v596, 5
      %v3648 = vsel %vm3589, %v3645, %v3647
      %v3649 = vrot.slane %v597, 5
      %v3650 = vsel %vm3589, %v3647, %v3649
      %v3651 = vrot.slane %v598, 5
      %v3652 = vsel %vm3589, %v3649, %v3651
      %v3653 = vrot.slane %v599, 5
      %v3654 = vsel %vm3589, %v3651, %v3653
      %v3655 = vrot.slane %v600, 5
      %v3656 = vsel %vm3589, %v3653, %v3655
      %v3657 = vrot.slane %v601, 5
      %v3658 = vsel %vm3589, %v3655, %v3657
      %v3659 = vrot.slane %v602, 5
      %v3660 = vsel %vm3589, %v3657, %v3659
      %v3661 = vrot.slane %v603, 5
      %v3662 = vsel %vm3589, %v3659, %v3661
      %v3663 = vrot.slane %v604, 5
      %v3664 = vsel %vm3589, %v3661, %v3663
      %v3665 = vrot.slane %v605, 5
      %v3666 = vsel %vm3589, %v3663, %v3665
      %v3667 = vrot.slane %v606, 5
      %v3668 = vsel %vm3589, %v3665, %v3667
      %v3669 = vrot.slane %v607, 5
      %v3670 = vsel %vm3589, %v3667, %v3669
      %v3671 = vrot.slane %v608, 5
      %v3672 = vsel %vm3589, %v3669, %v3671
      %v3673 = vsel %vm779, %v3592, 0
      %v3675 = vsel %vm779, %v3594, 0
      %v3677 = vsel %vm779, %v3596, 0
      %v3679 = vsel %vm779, %v3598, 0
      %v3681 = vsel %vm779, %v3600, 0
      %v3683 = vsel %vm779, %v3602, 0
      %v3685 = vsel %vm779, %v3604, 0
      %v3687 = vsel %vm779, %v3606, 0
      %v3689 = vsel %vm779, %v3608, 0
      %v3691 = vsel %vm779, %v3610, 0
      %v3693 = vsel %vm779, %v3612, 0
      %v3695 = vsel %vm779, %v3614, 0
      %v3697 = vsel %vm779, %v3616, 0
      %v3699 = vsel %vm779, %v3618, 0
      %v3701 = vsel %vm779, %v3620, 0
      %v3703 = vsel %vm779, %v3622, 0
      %v3705 = vsel %vm779, %v3624, 0
      %v3707 = vsel %vm779, %v3626, 0
      %v3709 = vsel %vm779, %v3628, 0
      %v3711 = vsel %vm779, %v3630, 0
      %v3713 = vsel %vm779, %v3632, 0
      %v3715 = vsel %vm779, %v3634, 0
      %v3717 = vsel %vm779, %v3636, 0
      %v3719 = vsel %vm779, %v3638, 0
      %v3721 = vsel %vm779, %v3640, 0
      %v3723 = vsel %vm779, %v3642, 0
      %v3725 = vsel %vm779, %v3644, 0
      %v3727 = vsel %vm779, %v3646, 0
      %v3729 = vsel %vm779, %v3648, 0
      %v3731 = vsel %vm779, %v3650, 0
      %v3733 = vsel %vm779, %v3652, 0
      %v3735 = vsel %vm779, %v3654, 0
      %v3737 = vsel %vm779, %v3656, 0
      %v3739 = vsel %vm779, %v3658, 0
      %v3741 = vsel %vm779, %v3660, 0
      %v3743 = vsel %vm779, %v3662, 0
      %v3745 = vsel %vm779, %v3664, 0
      %v3747 = vsel %vm779, %v3666, 0
      %v3749 = vsel %vm779, %v3668, 0
      %v3751 = vsel %vm779, %v3670, 0
      %v3753 = vsel %vm779, %v3672, 0
      %v3756 = vsel %vm862, %v3587, 0
      %3758 = vmatprep.subr.mxu0 0.0
      %3759 = vmatpush1.msra.mxu0 %v3756
      %3760 = vmatprep.subr.mxu0 0.0
      %3761 = vmatpush1.msra.mxu0 0.0
      %3762 = vmatprep.subr.mxu0 0.0
      %3763 = vmatpush1.msra.mxu0 0.0
      %3764 = vmatprep.subr.mxu0 0.0
      %3765 = vmatpush1.msra.mxu0 0.0
      %3766 = vmatprep.subr.mxu0 0.0
      %3767 = vmatpush1.msra.mxu0 0.0
      %3768 = vmatprep.subr.mxu0 0.0
      %3769 = vmatpush1.msra.mxu0 0.0
      %3770 = vmatprep.subr.mxu0 0.0
      %3771 = vmatpush1.msra.mxu0 0.0
      %3772 = vmatprep.subr.mxu0 0.0
      %3773 = vmatpush1.msra.mxu0 0.0
      %3774 = vmatprep.subr.mxu0 0.0
      %3775 = vmatpush1.msra.mxu0 0.0
      %3776 = vmatprep.subr.mxu0 0.0
      %3777 = vmatpush1.msra.mxu0 0.0
      %3778 = vmatprep.subr.mxu0 0.0
      %3779 = vmatpush1.msra.mxu0 0.0
      %3780 = vmatprep.subr.mxu0 0.0
      %3781 = vmatpush1.msra.mxu0 0.0
      %3782 = vmatprep.subr.mxu0 0.0
      %3783 = vmatpush1.msra.mxu0 0.0
      %3784 = vmatprep.subr.mxu0 0.0
      %3785 = vmatpush1.msra.mxu0 0.0
      %3786 = vmatprep.subr.mxu0 0.0
      %3787 = vmatpush1.msra.mxu0 0.0
      %3788 = vmatprep.subr.mxu0 0.0
      %3789 = vmatpush1.msra.mxu0 0.0
      %3790 = vmatprep.subr.mxu0 0.0
      %3791 = vmatpush1.msra.mxu0 0.0
      %3792 = vmatprep.subr.mxu0 0.0
      %3793 = vmatpush1.msra.mxu0 0.0
      %3794 = vmatprep.subr.mxu0 0.0
      %3795 = vmatpush1.msra.mxu0 0.0
      %3796 = vmatprep.subr.mxu0 0.0
      %3797 = vmatpush1.msra.mxu0 0.0
      %3798 = vmatprep.subr.mxu0 0.0
      %3799 = vmatpush1.msra.mxu0 0.0
      %3800 = vmatprep.subr.mxu0 0.0
      %3801 = vmatpush1.msra.mxu0 0.0
      %3802 = vmatprep.subr.mxu0 0.0
      %3803 = vmatpush1.msra.mxu0 0.0
      %3804 = vmatprep.subr.mxu0 0.0
      %3805 = vmatpush1.msra.mxu0 0.0
      %3806 = vmatprep.subr.mxu0 0.0
      %3807 = vmatpush1.msra.mxu0 0.0
      %3808 = vmatprep.subr.mxu0 0.0
      %3809 = vmatpush1.msra.mxu0 0.0
      %3810 = vmatprep.subr.mxu0 0.0
      %3811 = vmatpush1.msra.mxu0 0.0
      %3812 = vmatprep.subr.mxu0 0.0
      %3813 = vmatpush1.msra.mxu0 0.0
      %3814 = vmatprep.subr.mxu0 0.0
      %3815 = vmatpush1.msra.mxu0 0.0
      %3816 = vmatprep.subr.mxu0 0.0
      %3817 = vmatpush1.msra.mxu0 0.0
      %3818 = vmatprep.subr.mxu0 0.0
      %3819 = vmatpush1.msra.mxu0 0.0
      %3820 = vmatprep.subr.mxu0 0.0
      %3821 = vmatpush1.msra.mxu0 0.0
      %3822 = vmatprep.mubr.f32.mxu0 0.0
      %3823 = vmatmul.mubr.f32.gmra.mrb[0].mxu0 %v3673
      %v3824 = vpop.f32.mrb[0].mxu0
      %v3825 = vadd.f32 0.0, %v3824
      %v3826 = vpop.f32.mrb[0].mxu0
      %3827 = vmatprep.mubr.f32.mxu0 0.0
      %3828 = vmatmul.mubr.f32.gmra.mrb[0].mxu0 %v3675
      %v3829 = vpop.f32.mrb[0].mxu0
      %v3830 = vadd.f32 0.0, %v3829
      %v3831 = vpop.f32.mrb[0].mxu0
      %3832 = vmatprep.mubr.f32.mxu0 0.0
      %3833 = vmatmul.mubr.f32.gmra.mrb[0].mxu0 %v3677
      %v3834 = vpop.f32.mrb[0].mxu0
      %v3835 = vadd.f32 0.0, %v3834
      %v3836 = vpop.f32.mrb[0].mxu0
      %3837 = vmatprep.mubr.f32.mxu0 0.0
      %3838 = vmatmul.mubr.f32.gmra.mrb[0].mxu0 %v3679
      %v3839 = vpop.f32.mrb[0].mxu0
      %v3840 = vadd.f32 0.0, %v3839
      %v3841 = vpop.f32.mrb[0].mxu0
      %3842 = vmatprep.mubr.f32.mxu0 0.0
      %3843 = vmatmul.mubr.f32.gmra.mrb[0].mxu0 %v3681
      %v3844 = vpop.f32.mrb[0].mxu0
      %v3845 = vadd.f32 0.0, %v3844
      %v3846 = vpop.f32.mrb[0].mxu0
      %3847 = vmatprep.mubr.f32.mxu0 0.0
      %3848 = vmatmul.mubr.f32.gmra.mrb[0].mxu0 %v3683
      %v3849 = vpop.f32.mrb[0].mxu0
      %v3850 = vadd.f32 0.0, %v3849
      %v3851 = vpop.f32.mrb[0].mxu0
      %3852 = vmatprep.mubr.f32.mxu0 0.0
      %3853 = vmatmul.mubr.f32.gmra.mrb[0].mxu0 %v3685
      %v3854 = vpop.f32.mrb[0].mxu0
      %v3855 = vadd.f32 0.0, %v3854
      %v3856 = vpop.f32.mrb[0].mxu0
      %3857 = vmatprep.mubr.f32.mxu0 0.0
      %3858 = vmatmul.mubr.f32.gmra.mrb[0].mxu0 %v3687
      %v3859 = vpop.f32.mrb[0].mxu0
      %v3860 = vadd.f32 0.0, %v3859
      %v3861 = vpop.f32.mrb[0].mxu0
      %3862 = vmatprep.mubr.f32.mxu0 0.0
      %3863 = vmatmul.mubr.f32.gmra.mrb[0].mxu0 %v3689
      %v3864 = vpop.f32.mrb[0].mxu0
      %v3865 = vadd.f32 0.0, %v3864
      %v3866 = vpop.f32.mrb[0].mxu0
      %3867 = vmatprep.mubr.f32.mxu0 0.0
      %3868 = vmatmul.mubr.f32.gmra.mrb[0].mxu0 %v3691
      %v3869 = vpop.f32.mrb[0].mxu0
      %v3870 = vadd.f32 0.0, %v3869
      %v3871 = vpop.f32.mrb[0].mxu0
      %3872 = vmatprep.mubr.f32.mxu0 0.0
      %3873 = vmatmul.mubr.f32.gmra.mrb[0].mxu0 %v3693
      %v3874 = vpop.f32.mrb[0].mxu0
      %v3875 = vadd.f32 0.0, %v3874
      %v3876 = vpop.f32.mrb[0].mxu0
      %3877 = vmatprep.mubr.f32.mxu0 0.0
      %3878 = vmatmul.mubr.f32.gmra.mrb[0].mxu0 %v3695
      %v3879 = vpop.f32.mrb[0].mxu0
      %v3880 = vadd.f32 0.0, %v3879
      %v3881 = vpop.f32.mrb[0].mxu0
      %3882 = vmatprep.mubr.f32.mxu0 0.0
      %3883 = vmatmul.mubr.f32.gmra.mrb[0].mxu0 %v3697
      %v3884 = vpop.f32.mrb[0].mxu0
      %v3885 = vadd.f32 0.0, %v3884
      %v3886 = vpop.f32.mrb[0].mxu0
      %3887 = vmatprep.mubr.f32.mxu0 0.0
      %3888 = vmatmul.mubr.f32.gmra.mrb[0].mxu0 %v3699
      %v3889 = vpop.f32.mrb[0].mxu0
      %v3890 = vadd.f32 0.0, %v3889
      %v3891 = vpop.f32.mrb[0].mxu0
      %3892 = vmatprep.mubr.f32.mxu0 0.0
      %3893 = vmatmul.mubr.f32.gmra.mrb[0].mxu0 %v3701
      %v3894 = vpop.f32.mrb[0].mxu0
      %v3895 = vadd.f32 0.0, %v3894
      %v3896 = vpop.f32.mrb[0].mxu0
      %3897 = vmatprep.mubr.f32.mxu0 0.0
      %3898 = vmatmul.mubr.f32.gmra.mrb[0].mxu0 %v3703
      %v3899 = vpop.f32.mrb[0].mxu0
      %v3900 = vadd.f32 0.0, %v3899
      %v3901 = vpop.f32.mrb[0].mxu0
      %3902 = vmatprep.mubr.f32.mxu0 0.0
      %3903 = vmatmul.mubr.f32.gmra.mrb[0].mxu0 %v3705
      %v3904 = vpop.f32.mrb[0].mxu0
      %v3905 = vadd.f32 0.0, %v3904
      %v3906 = vpop.f32.mrb[0].mxu0
      %3907 = vmatprep.mubr.f32.mxu0 0.0
      %3908 = vmatmul.mubr.f32.gmra.mrb[0].mxu0 %v3707
      %v3909 = vpop.f32.mrb[0].mxu0
      %v3910 = vadd.f32 0.0, %v3909
      %v3911 = vpop.f32.mrb[0].mxu0
      %3912 = vmatprep.mubr.f32.mxu0 0.0
      %3913 = vmatmul.mubr.f32.gmra.mrb[0].mxu0 %v3709
      %v3914 = vpop.f32.mrb[0].mxu0
      %v3915 = vadd.f32 0.0, %v3914
      %v3916 = vpop.f32.mrb[0].mxu0
      %3917 = vmatprep.mubr.f32.mxu0 0.0
      %3918 = vmatmul.mubr.f32.gmra.mrb[0].mxu0 %v3711
      %v3919 = vpop.f32.mrb[0].mxu0
      %v3920 = vadd.f32 0.0, %v3919
      %v3921 = vpop.f32.mrb[0].mxu0
      %3922 = vmatprep.mubr.f32.mxu0 0.0
      %3923 = vmatmul.mubr.f32.gmra.mrb[0].mxu0 %v3713
      %v3924 = vpop.f32.mrb[0].mxu0
      %v3925 = vadd.f32 0.0, %v3924
      %v3926 = vpop.f32.mrb[0].mxu0
      %3927 = vmatprep.mubr.f32.mxu0 0.0
      %3928 = vmatmul.mubr.f32.gmra.mrb[0].mxu0 %v3715
      %v3929 = vpop.f32.mrb[0].mxu0
      %v3930 = vadd.f32 0.0, %v3929
      %v3931 = vpop.f32.mrb[0].mxu0
      %3932 = vmatprep.mubr.f32.mxu0 0.0
      %3933 = vmatmul.mubr.f32.gmra.mrb[0].mxu0 %v3717
      %v3934 = vpop.f32.mrb[0].mxu0
      %v3935 = vadd.f32 0.0, %v3934
      %v3936 = vpop.f32.mrb[0].mxu0
      %3937 = vmatprep.mubr.f32.mxu0 0.0
      %3938 = vmatmul.mubr.f32.gmra.mrb[0].mxu0 %v3719
      %v3939 = vpop.f32.mrb[0].mxu0
      %v3940 = vadd.f32 0.0, %v3939
      %v3941 = vpop.f32.mrb[0].mxu0
      %3942 = vmatprep.mubr.f32.mxu0 0.0
      %3943 = vmatmul.mubr.f32.gmra.mrb[0].mxu0 %v3721
      %v3944 = vpop.f32.mrb[0].mxu0
      %v3945 = vadd.f32 0.0, %v3944
      %v3946 = vpop.f32.mrb[0].mxu0
      %3947 = vmatprep.mubr.f32.mxu0 0.0
      %3948 = vmatmul.mubr.f32.gmra.mrb[0].mxu0 %v3723
      %v3949 = vpop.f32.mrb[0].mxu0
      %v3950 = vadd.f32 0.0, %v3949
      %v3951 = vpop.f32.mrb[0].mxu0
      %3952 = vmatprep.mubr.f32.mxu0 0.0
      %3953 = vmatmul.mubr.f32.gmra.mrb[0].mxu0 %v3725
      %v3954 = vpop.f32.mrb[0].mxu0
      %v3955 = vadd.f32 0.0, %v3954
      %v3956 = vpop.f32.mrb[0].mxu0
      %3957 = vmatprep.mubr.f32.mxu0 0.0
      %3958 = vmatmul.mubr.f32.gmra.mrb[0].mxu0 %v3727
      %v3959 = vpop.f32.mrb[0].mxu0
      %v3960 = vadd.f32 0.0, %v3959
      %v3961 = vpop.f32.mrb[0].mxu0
      %3962 = vmatprep.mubr.f32.mxu0 0.0
      %3963 = vmatmul.mubr.f32.gmra.mrb[0].mxu0 %v3729
      %v3964 = vpop.f32.mrb[0].mxu0
      %v3965 = vadd.f32 0.0, %v3964
      %v3966 = vpop.f32.mrb[0].mxu0
      %3967 = vmatprep.mubr.f32.mxu0 0.0
      %3968 = vmatmul.mubr.f32.gmra.mrb[0].mxu0 %v3731
      %v3969 = vpop.f32.mrb[0].mxu0
      %v3970 = vadd.f32 0.0, %v3969
      %v3971 = vpop.f32.mrb[0].mxu0
      %3972 = vmatprep.mubr.f32.mxu0 0.0
      %3973 = vmatmul.mubr.f32.gmra.mrb[0].mxu0 %v3733
      %v3974 = vpop.f32.mrb[0].mxu0
      %v3975 = vadd.f32 0.0, %v3974
      %v3976 = vpop.f32.mrb[0].mxu0
      %3977 = vmatprep.mubr.f32.mxu0 0.0
      %3978 = vmatmul.mubr.f32.gmra.mrb[0].mxu0 %v3735
      %v3979 = vpop.f32.mrb[0].mxu0
      %v3980 = vadd.f32 0.0, %v3979
      %v3981 = vpop.f32.mrb[0].mxu0
      %3982 = vmatprep.mubr.f32.mxu0 0.0
      %3983 = vmatmul.mubr.f32.gmra.mrb[0].mxu0 %v3737
      %v3984 = vpop.f32.mrb[0].mxu0
      %v3985 = vadd.f32 0.0, %v3984
      %v3986 = vpop.f32.mrb[0].mxu0
      %3987 = vmatprep.mubr.f32.mxu0 0.0
      %3988 = vmatmul.mubr.f32.gmra.mrb[0].mxu0 %v3739
      %v3989 = vpop.f32.mrb[0].mxu0
      %v3990 = vadd.f32 0.0, %v3989
      %v3991 = vpop.f32.mrb[0].mxu0
      %3992 = vmatprep.mubr.f32.mxu0 0.0
      %3993 = vmatmul.mubr.f32.gmra.mrb[0].mxu0 %v3741
      %v3994 = vpop.f32.mrb[0].mxu0
      %v3995 = vadd.f32 0.0, %v3994
      %v3996 = vpop.f32.mrb[0].mxu0
      %3997 = vmatprep.mubr.f32.mxu0 0.0
      %3998 = vmatmul.mubr.f32.gmra.mrb[0].mxu0 %v3743
      %v3999 = vpop.f32.mrb[0].mxu0
      %v4000 = vadd.f32 0.0, %v3999
      %v4001 = vpop.f32.mrb[0].mxu0
      %4002 = vmatprep.mubr.f32.mxu0 0.0
      %4003 = vmatmul.mubr.f32.gmra.mrb[0].mxu0 %v3745
      %v4004 = vpop.f32.mrb[0].mxu0
      %v4005 = vadd.f32 0.0, %v4004
      %v4006 = vpop.f32.mrb[0].mxu0
      %4007 = vmatprep.mubr.f32.mxu0 0.0
      %4008 = vmatmul.mubr.f32.gmra.mrb[0].mxu0 %v3747
      %v4009 = vpop.f32.mrb[0].mxu0
      %v4010 = vadd.f32 0.0, %v4009
      %v4011 = vpop.f32.mrb[0].mxu0
      %4012 = vmatprep.mubr.f32.mxu0 0.0
      %4013 = vmatmul.mubr.f32.gmra.mrb[0].mxu0 %v3749
      %v4014 = vpop.f32.mrb[0].mxu0
      %v4015 = vadd.f32 0.0, %v4014
      %v4016 = vpop.f32.mrb[0].mxu0
      %4017 = vmatprep.mubr.f32.mxu0 0.0
      %4018 = vmatmul.mubr.f32.gmra.mrb[0].mxu0 %v3751
      %v4019 = vpop.f32.mrb[0].mxu0
      %v4020 = vadd.f32 0.0, %v4019
      %v4021 = vpop.f32.mrb[0].mxu0
      %4022 = vmatprep.mubr.f32.mxu0 0.0
      %4023 = vmatmul.mubr.f32.gmra.mrb[0].mxu0 %v3753
      %v4024 = vpop.f32.mrb[0].mxu0
      %v4025 = vadd.f32 0.0, %v4024
      %v4026 = vpop.f32.mrb[0].mxu0
      %4027 = vdwg.mxu0
      %v4028 = vadd.f32 %v3545, %v3825
      %v4029 = vadd.f32 %v3546, %v3830
      %v4030 = vadd.f32 %v3547, %v3835
      %v4031 = vadd.f32 %v3548, %v3840
      %v4032 = vadd.f32 %v3549, %v3845
      %v4033 = vadd.f32 %v3550, %v3850
      %v4034 = vadd.f32 %v3551, %v3855
      %v4035 = vadd.f32 %v3552, %v3860
      %v4036 = vadd.f32 %v3553, %v3865
      %v4037 = vadd.f32 %v3554, %v3870
      %v4038 = vadd.f32 %v3555, %v3875
      %v4039 = vadd.f32 %v3556, %v3880
      %v4040 = vadd.f32 %v3557, %v3885
      %v4041 = vadd.f32 %v3558, %v3890
      %v4042 = vadd.f32 %v3559, %v3895
      %v4043 = vadd.f32 %v3560, %v3900
      %v4044 = vadd.f32 %v3561, %v3905
      %v4045 = vadd.f32 %v3562, %v3910
      %v4046 = vadd.f32 %v3563, %v3915
      %v4047 = vadd.f32 %v3564, %v3920
      %v4048 = vadd.f32 %v3565, %v3925
      %v4049 = vadd.f32 %v3566, %v3930
      %v4050 = vadd.f32 %v3567, %v3935
      %v4051 = vadd.f32 %v3568, %v3940
      %v4052 = vadd.f32 %v3569, %v3945
      %v4053 = vadd.f32 %v3570, %v3950
      %v4054 = vadd.f32 %v3571, %v3955
      %v4055 = vadd.f32 %v3572, %v3960
      %v4056 = vadd.f32 %v3573, %v3965
      %v4057 = vadd.f32 %v3574, %v3970
      %v4058 = vadd.f32 %v3575, %v3975
      %v4059 = vadd.f32 %v3576, %v3980
      %v4060 = vadd.f32 %v3577, %v3985
      %v4061 = vadd.f32 %v3578, %v3990
      %v4062 = vadd.f32 %v3579, %v3995
      %v4063 = vadd.f32 %v3580, %v4000
      %v4064 = vadd.f32 %v3581, %v4005
      %v4065 = vadd.f32 %v3582, %v4010
      %v4066 = vadd.f32 %v3583, %v4015
      %v4067 = vadd.f32 %v3584, %v4020
      %v4068 = vadd.f32 %v3585, %v4025
      %s4069 = scalar_lea.vmem %s5, 32
      %v4070 = vld [vmem:[%s4069] sm:$0xf]
      %vm4071 = vcmask 1041408
      %v4072 = vrot.slane %v567, 6
      %v4073 = vrot.slane %v568, 6
      %v4074 = vsel %vm4071, %v4072, %v4073
      %v4075 = vrot.slane %v569, 6
      %v4076 = vsel %vm4071, %v4073, %v4075
      %v4077 = vrot.slane %v570, 6
      %v4078 = vsel %vm4071, %v4075, %v4077
      %v4079 = vrot.slane %v571, 6
      %v4080 = vsel %vm4071, %v4077, %v4079
      %v4081 = vrot.slane %v572, 6
      %v4082 = vsel %vm4071, %v4079, %v4081
      %v4083 = vrot.slane %v573, 6
      %v4084 = vsel %vm4071, %v4081, %v4083
      %v4085 = vrot.slane %v574, 6
      %v4086 = vsel %vm4071, %v4083, %v4085
      %v4087 = vrot.slane %v575, 6
      %v4088 = vsel %vm4071, %v4085, %v4087
      %v4089 = vrot.slane %v576, 6
      %v4090 = vsel %vm4071, %v4087, %v4089
      %v4091 = vrot.slane %v577, 6
      %v4092 = vsel %vm4071, %v4089, %v4091
      %v4093 = vrot.slane %v578, 6
      %v4094 = vsel %vm4071, %v4091, %v4093
      %v4095 = vrot.slane %v579, 6
      %v4096 = vsel %vm4071, %v4093, %v4095
      %v4097 = vrot.slane %v580, 6
      %v4098 = vsel %vm4071, %v4095, %v4097
      %v4099 = vrot.slane %v581, 6
      %v4100 = vsel %vm4071, %v4097, %v4099
      %v4101 = vrot.slane %v582, 6
      %v4102 = vsel %vm4071, %v4099, %v4101
      %v4103 = vrot.slane %v583, 6
      %v4104 = vsel %vm4071, %v4101, %v4103
      %v4105 = vrot.slane %v584, 6
      %v4106 = vsel %vm4071, %v4103, %v4105
      %v4107 = vrot.slane %v585, 6
      %v4108 = vsel %vm4071, %v4105, %v4107
      %v4109 = vrot.slane %v586, 6
      %v4110 = vsel %vm4071, %v4107, %v4109
      %v4111 = vrot.slane %v587, 6
      %v4112 = vsel %vm4071, %v4109, %v4111
      %v4113 = vrot.slane %v588, 6
      %v4114 = vsel %vm4071, %v4111, %v4113
      %v4115 = vrot.slane %v589, 6
      %v4116 = vsel %vm4071, %v4113, %v4115
      %v4117 = vrot.slane %v590, 6
      %v4118 = vsel %vm4071, %v4115, %v4117
      %v4119 = vrot.slane %v591, 6
      %v4120 = vsel %vm4071, %v4117, %v4119
      %v4121 = vrot.slane %v592, 6
      %v4122 = vsel %vm4071, %v4119, %v4121
      %v4123 = vrot.slane %v593, 6
      %v4124 = vsel %vm4071, %v4121, %v4123
      %v4125 = vrot.slane %v594, 6
      %v4126 = vsel %vm4071, %v4123, %v4125
      %v4127 = vrot.slane %v595, 6
      %v4128 = vsel %vm4071, %v4125, %v4127
      %v4129 = vrot.slane %v596, 6
      %v4130 = vsel %vm4071, %v4127, %v4129
      %v4131 = vrot.slane %v597, 6
      %v4132 = vsel %vm4071, %v4129, %v4131
      %v4133 = vrot.slane %v598, 6
      %v4134 = vsel %vm4071, %v4131, %v4133
      %v4135 = vrot.slane %v599, 6
      %v4136 = vsel %vm4071, %v4133, %v4135
      %v4137 = vrot.slane %v600, 6
      %v4138 = vsel %vm4071, %v4135, %v4137
      %v4139 = vrot.slane %v601, 6
      %v4140 = vsel %vm4071, %v4137, %v4139
      %v4141 = vrot.slane %v602, 6
      %v4142 = vsel %vm4071, %v4139, %v4141
      %v4143 = vrot.slane %v603, 6
      %v4144 = vsel %vm4071, %v4141, %v4143
      %v4145 = vrot.slane %v604, 6
      %v4146 = vsel %vm4071, %v4143, %v4145
      %v4147 = vrot.slane %v605, 6
      %v4148 = vsel %vm4071, %v4145, %v4147
      %v4149 = vrot.slane %v606, 6
      %v4150 = vsel %vm4071, %v4147, %v4149
      %v4151 = vrot.slane %v607, 6
      %v4152 = vsel %vm4071, %v4149, %v4151
      %v4153 = vrot.slane %v608, 6
      %v4154 = vsel %vm4071, %v4151, %v4153
      %v4155 = vsel %vm779, %v4074, 0
      %v4157 = vsel %vm779, %v4076, 0
      %v4159 = vsel %vm779, %v4078, 0
      %v4161 = vsel %vm779, %v4080, 0
      %v4163 = vsel %vm779, %v4082, 0
      %v4165 = vsel %vm779, %v4084, 0
      %v4167 = vsel %vm779, %v4086, 0
      %v4169 = vsel %vm779, %v4088, 0
      %v4171 = vsel %vm779, %v4090, 0
      %v4173 = vsel %vm779, %v4092, 0
      %v4175 = vsel %vm779, %v4094, 0
      %v4177 = vsel %vm779, %v4096, 0
      %v4179 = vsel %vm779, %v4098, 0
      %v4181 = vsel %vm779, %v4100, 0
      %v4183 = vsel %vm779, %v4102, 0
      %v4185 = vsel %vm779, %v4104, 0
      %v4187 = vsel %vm779, %v4106, 0
      %v4189 = vsel %vm779, %v4108, 0
      %v4191 = vsel %vm779, %v4110, 0
      %v4193 = vsel %vm779, %v4112, 0
      %v4195 = vsel %vm779, %v4114, 0
      %v4197 = vsel %vm779, %v4116, 0
      %v4199 = vsel %vm779, %v4118, 0
      %v4201 = vsel %vm779, %v4120, 0
      %v4203 = vsel %vm779, %v4122, 0
      %v4205 = vsel %vm779, %v4124, 0
      %v4207 = vsel %vm779, %v4126, 0
      %v4209 = vsel %vm779, %v4128, 0
      %v4211 = vsel %vm779, %v4130, 0
      %v4213 = vsel %vm779, %v4132, 0
      %v4215 = vsel %vm779, %v4134, 0
      %v4217 = vsel %vm779, %v4136, 0
      %v4219 = vsel %vm779, %v4138, 0
      %v4221 = vsel %vm779, %v4140, 0
      %v4223 = vsel %vm779, %v4142, 0
      %v4225 = vsel %vm779, %v4144, 0
      %v4227 = vsel %vm779, %v4146, 0
      %v4229 = vsel %vm779, %v4148, 0
      %v4231 = vsel %vm779, %v4150, 0
      %v4233 = vsel %vm779, %v4152, 0
      %v4235 = vsel %vm779, %v4154, 0
      %v4238 = vsel %vm862, %v4070, 0
      %4240 = vmatprep.subr.mxu0 0.0
      %4241 = vmatpush1.msra.mxu0 %v4238
      %4242 = vmatprep.subr.mxu0 0.0
      %4243 = vmatpush1.msra.mxu0 0.0
      %4244 = vmatprep.subr.mxu0 0.0
      %4245 = vmatpush1.msra.mxu0 0.0
      %4246 = vmatprep.subr.mxu0 0.0
      %4247 = vmatpush1.msra.mxu0 0.0
      %4248 = vmatprep.subr.mxu0 0.0
      %4249 = vmatpush1.msra.mxu0 0.0
      %4250 = vmatprep.subr.mxu0 0.0
      %4251 = vmatpush1.msra.mxu0 0.0
      %4252 = vmatprep.subr.mxu0 0.0
      %4253 = vmatpush1.msra.mxu0 0.0
      %4254 = vmatprep.subr.mxu0 0.0
      %4255 = vmatpush1.msra.mxu0 0.0
      %4256 = vmatprep.subr.mxu0 0.0
      %4257 = vmatpush1.msra.mxu0 0.0
      %4258 = vmatprep.subr.mxu0 0.0
      %4259 = vmatpush1.msra.mxu0 0.0
      %4260 = vmatprep.subr.mxu0 0.0
      %4261 = vmatpush1.msra.mxu0 0.0
      %4262 = vmatprep.subr.mxu0 0.0
      %4263 = vmatpush1.msra.mxu0 0.0
      %4264 = vmatprep.subr.mxu0 0.0
      %4265 = vmatpush1.msra.mxu0 0.0
      %4266 = vmatprep.subr.mxu0 0.0
      %4267 = vmatpush1.msra.mxu0 0.0
      %4268 = vmatprep.subr.mxu0 0.0
      %4269 = vmatpush1.msra.mxu0 0.0
      %4270 = vmatprep.subr.mxu0 0.0
      %4271 = vmatpush1.msra.mxu0 0.0
      %4272 = vmatprep.subr.mxu0 0.0
      %4273 = vmatpush1.msra.mxu0 0.0
      %4274 = vmatprep.subr.mxu0 0.0
      %4275 = vmatpush1.msra.mxu0 0.0
      %4276 = vmatprep.subr.mxu0 0.0
      %4277 = vmatpush1.msra.mxu0 0.0
      %4278 = vmatprep.subr.mxu0 0.0
      %4279 = vmatpush1.msra.mxu0 0.0
      %4280 = vmatprep.subr.mxu0 0.0
      %4281 = vmatpush1.msra.mxu0 0.0
      %4282 = vmatprep.subr.mxu0 0.0
      %4283 = vmatpush1.msra.mxu0 0.0
      %4284 = vmatprep.subr.mxu0 0.0
      %4285 = vmatpush1.msra.mxu0 0.0
      %4286 = vmatprep.subr.mxu0 0.0
      %4287 = vmatpush1.msra.mxu0 0.0
      %4288 = vmatprep.subr.mxu0 0.0
      %4289 = vmatpush1.msra.mxu0 0.0
      %4290 = vmatprep.subr.mxu0 0.0
      %4291 = vmatpush1.msra.mxu0 0.0
      %4292 = vmatprep.subr.mxu0 0.0
      %4293 = vmatpush1.msra.mxu0 0.0
      %4294 = vmatprep.subr.mxu0 0.0
      %4295 = vmatpush1.msra.mxu0 0.0
      %4296 = vmatprep.subr.mxu0 0.0
      %4297 = vmatpush1.msra.mxu0 0.0
      %4298 = vmatprep.subr.mxu0 0.0
      %4299 = vmatpush1.msra.mxu0 0.0
      %4300 = vmatprep.subr.mxu0 0.0
      %4301 = vmatpush1.msra.mxu0 0.0
      %4302 = vmatprep.subr.mxu0 0.0
      %4303 = vmatpush1.msra.mxu0 0.0
      %4304 = vmatprep.mubr.f32.mxu0 0.0
      %4305 = vmatmul.mubr.f32.gmra.mrb[0].mxu0 %v4155
      %v4306 = vpop.f32.mrb[0].mxu0
      %v4307 = vadd.f32 0.0, %v4306
      %v4308 = vpop.f32.mrb[0].mxu0
      %4309 = vmatprep.mubr.f32.mxu0 0.0
      %4310 = vmatmul.mubr.f32.gmra.mrb[0].mxu0 %v4157
      %v4311 = vpop.f32.mrb[0].mxu0
      %v4312 = vadd.f32 0.0, %v4311
      %v4313 = vpop.f32.mrb[0].mxu0
      %4314 = vmatprep.mubr.f32.mxu0 0.0
      %4315 = vmatmul.mubr.f32.gmra.mrb[0].mxu0 %v4159
      %v4316 = vpop.f32.mrb[0].mxu0
      %v4317 = vadd.f32 0.0, %v4316
      %v4318 = vpop.f32.mrb[0].mxu0
      %4319 = vmatprep.mubr.f32.mxu0 0.0
      %4320 = vmatmul.mubr.f32.gmra.mrb[0].mxu0 %v4161
      %v4321 = vpop.f32.mrb[0].mxu0
      %v4322 = vadd.f32 0.0, %v4321
      %v4323 = vpop.f32.mrb[0].mxu0
      %4324 = vmatprep.mubr.f32.mxu0 0.0
      %4325 = vmatmul.mubr.f32.gmra.mrb[0].mxu0 %v4163
      %v4326 = vpop.f32.mrb[0].mxu0
      %v4327 = vadd.f32 0.0, %v4326
      %v4328 = vpop.f32.mrb[0].mxu0
      %4329 = vmatprep.mubr.f32.mxu0 0.0
      %4330 = vmatmul.mubr.f32.gmra.mrb[0].mxu0 %v4165
      %v4331 = vpop.f32.mrb[0].mxu0
      %v4332 = vadd.f32 0.0, %v4331
      %v4333 = vpop.f32.mrb[0].mxu0
      %4334 = vmatprep.mubr.f32.mxu0 0.0
      %4335 = vmatmul.mubr.f32.gmra.mrb[0].mxu0 %v4167
      %v4336 = vpop.f32.mrb[0].mxu0
      %v4337 = vadd.f32 0.0, %v4336
      %v4338 = vpop.f32.mrb[0].mxu0
      %4339 = vmatprep.mubr.f32.mxu0 0.0
      %4340 = vmatmul.mubr.f32.gmra.mrb[0].mxu0 %v4169
      %v4341 = vpop.f32.mrb[0].mxu0
      %v4342 = vadd.f32 0.0, %v4341
      %v4343 = vpop.f32.mrb[0].mxu0
      %4344 = vmatprep.mubr.f32.mxu0 0.0
      %4345 = vmatmul.mubr.f32.gmra.mrb[0].mxu0 %v4171
      %v4346 = vpop.f32.mrb[0].mxu0
      %v4347 = vadd.f32 0.0, %v4346
      %v4348 = vpop.f32.mrb[0].mxu0
      %4349 = vmatprep.mubr.f32.mxu0 0.0
      %4350 = vmatmul.mubr.f32.gmra.mrb[0].mxu0 %v4173
      %v4351 = vpop.f32.mrb[0].mxu0
      %v4352 = vadd.f32 0.0, %v4351
      %v4353 = vpop.f32.mrb[0].mxu0
      %4354 = vmatprep.mubr.f32.mxu0 0.0
      %4355 = vmatmul.mubr.f32.gmra.mrb[0].mxu0 %v4175
      %v4356 = vpop.f32.mrb[0].mxu0
      %v4357 = vadd.f32 0.0, %v4356
      %v4358 = vpop.f32.mrb[0].mxu0
      %4359 = vmatprep.mubr.f32.mxu0 0.0
      %4360 = vmatmul.mubr.f32.gmra.mrb[0].mxu0 %v4177
      %v4361 = vpop.f32.mrb[0].mxu0
      %v4362 = vadd.f32 0.0, %v4361
      %v4363 = vpop.f32.mrb[0].mxu0
      %4364 = vmatprep.mubr.f32.mxu0 0.0
      %4365 = vmatmul.mubr.f32.gmra.mrb[0].mxu0 %v4179
      %v4366 = vpop.f32.mrb[0].mxu0
      %v4367 = vadd.f32 0.0, %v4366
      %v4368 = vpop.f32.mrb[0].mxu0
      %4369 = vmatprep.mubr.f32.mxu0 0.0
      %4370 = vmatmul.mubr.f32.gmra.mrb[0].mxu0 %v4181
      %v4371 = vpop.f32.mrb[0].mxu0
      %v4372 = vadd.f32 0.0, %v4371
      %v4373 = vpop.f32.mrb[0].mxu0
      %4374 = vmatprep.mubr.f32.mxu0 0.0
      %4375 = vmatmul.mubr.f32.gmra.mrb[0].mxu0 %v4183
      %v4376 = vpop.f32.mrb[0].mxu0
      %v4377 = vadd.f32 0.0, %v4376
      %v4378 = vpop.f32.mrb[0].mxu0
      %4379 = vmatprep.mubr.f32.mxu0 0.0
      %4380 = vmatmul.mubr.f32.gmra.mrb[0].mxu0 %v4185
      %v4381 = vpop.f32.mrb[0].mxu0
      %v4382 = vadd.f32 0.0, %v4381
      %v4383 = vpop.f32.mrb[0].mxu0
      %4384 = vmatprep.mubr.f32.mxu0 0.0
      %4385 = vmatmul.mubr.f32.gmra.mrb[0].mxu0 %v4187
      %v4386 = vpop.f32.mrb[0].mxu0
      %v4387 = vadd.f32 0.0, %v4386
      %v4388 = vpop.f32.mrb[0].mxu0
      %4389 = vmatprep.mubr.f32.mxu0 0.0
      %4390 = vmatmul.mubr.f32.gmra.mrb[0].mxu0 %v4189
      %v4391 = vpop.f32.mrb[0].mxu0
      %v4392 = vadd.f32 0.0, %v4391
      %v4393 = vpop.f32.mrb[0].mxu0
      %4394 = vmatprep.mubr.f32.mxu0 0.0
      %4395 = vmatmul.mubr.f32.gmra.mrb[0].mxu0 %v4191
      %v4396 = vpop.f32.mrb[0].mxu0
      %v4397 = vadd.f32 0.0, %v4396
      %v4398 = vpop.f32.mrb[0].mxu0
      %4399 = vmatprep.mubr.f32.mxu0 0.0
      %4400 = vmatmul.mubr.f32.gmra.mrb[0].mxu0 %v4193
      %v4401 = vpop.f32.mrb[0].mxu0
      %v4402 = vadd.f32 0.0, %v4401
      %v4403 = vpop.f32.mrb[0].mxu0
      %4404 = vmatprep.mubr.f32.mxu0 0.0
      %4405 = vmatmul.mubr.f32.gmra.mrb[0].mxu0 %v4195
      %v4406 = vpop.f32.mrb[0].mxu0
      %v4407 = vadd.f32 0.0, %v4406
      %v4408 = vpop.f32.mrb[0].mxu0
      %4409 = vmatprep.mubr.f32.mxu0 0.0
      %4410 = vmatmul.mubr.f32.gmra.mrb[0].mxu0 %v4197
      %v4411 = vpop.f32.mrb[0].mxu0
      %v4412 = vadd.f32 0.0, %v4411
      %v4413 = vpop.f32.mrb[0].mxu0
      %4414 = vmatprep.mubr.f32.mxu0 0.0
      %4415 = vmatmul.mubr.f32.gmra.mrb[0].mxu0 %v4199
      %v4416 = vpop.f32.mrb[0].mxu0
      %v4417 = vadd.f32 0.0, %v4416
      %v4418 = vpop.f32.mrb[0].mxu0
      %4419 = vmatprep.mubr.f32.mxu0 0.0
      %4420 = vmatmul.mubr.f32.gmra.mrb[0].mxu0 %v4201
      %v4421 = vpop.f32.mrb[0].mxu0
      %v4422 = vadd.f32 0.0, %v4421
      %v4423 = vpop.f32.mrb[0].mxu0
      %4424 = vmatprep.mubr.f32.mxu0 0.0
      %4425 = vmatmul.mubr.f32.gmra.mrb[0].mxu0 %v4203
      %v4426 = vpop.f32.mrb[0].mxu0
      %v4427 = vadd.f32 0.0, %v4426
      %v4428 = vpop.f32.mrb[0].mxu0
      %4429 = vmatprep.mubr.f32.mxu0 0.0
      %4430 = vmatmul.mubr.f32.gmra.mrb[0].mxu0 %v4205
      %v4431 = vpop.f32.mrb[0].mxu0
      %v4432 = vadd.f32 0.0, %v4431
      %v4433 = vpop.f32.mrb[0].mxu0
      %4434 = vmatprep.mubr.f32.mxu0 0.0
      %4435 = vmatmul.mubr.f32.gmra.mrb[0].mxu0 %v4207
      %v4436 = vpop.f32.mrb[0].mxu0
      %v4437 = vadd.f32 0.0, %v4436
      %v4438 = vpop.f32.mrb[0].mxu0
      %4439 = vmatprep.mubr.f32.mxu0 0.0
      %4440 = vmatmul.mubr.f32.gmra.mrb[0].mxu0 %v4209
      %v4441 = vpop.f32.mrb[0].mxu0
      %v4442 = vadd.f32 0.0, %v4441
      %v4443 = vpop.f32.mrb[0].mxu0
      %4444 = vmatprep.mubr.f32.mxu0 0.0
      %4445 = vmatmul.mubr.f32.gmra.mrb[0].mxu0 %v4211
      %v4446 = vpop.f32.mrb[0].mxu0
      %v4447 = vadd.f32 0.0, %v4446
      %v4448 = vpop.f32.mrb[0].mxu0
      %4449 = vmatprep.mubr.f32.mxu0 0.0
      %4450 = vmatmul.mubr.f32.gmra.mrb[0].mxu0 %v4213
      %v4451 = vpop.f32.mrb[0].mxu0
      %v4452 = vadd.f32 0.0, %v4451
      %v4453 = vpop.f32.mrb[0].mxu0
      %4454 = vmatprep.mubr.f32.mxu0 0.0
      %4455 = vmatmul.mubr.f32.gmra.mrb[0].mxu0 %v4215
      %v4456 = vpop.f32.mrb[0].mxu0
      %v4457 = vadd.f32 0.0, %v4456
      %v4458 = vpop.f32.mrb[0].mxu0
      %4459 = vmatprep.mubr.f32.mxu0 0.0
      %4460 = vmatmul.mubr.f32.gmra.mrb[0].mxu0 %v4217
      %v4461 = vpop.f32.mrb[0].mxu0
      %v4462 = vadd.f32 0.0, %v4461
      %v4463 = vpop.f32.mrb[0].mxu0
      %4464 = vmatprep.mubr.f32.mxu0 0.0
      %4465 = vmatmul.mubr.f32.gmra.mrb[0].mxu0 %v4219
      %v4466 = vpop.f32.mrb[0].mxu0
      %v4467 = vadd.f32 0.0, %v4466
      %v4468 = vpop.f32.mrb[0].mxu0
      %4469 = vmatprep.mubr.f32.mxu0 0.0
      %4470 = vmatmul.mubr.f32.gmra.mrb[0].mxu0 %v4221
      %v4471 = vpop.f32.mrb[0].mxu0
      %v4472 = vadd.f32 0.0, %v4471
      %v4473 = vpop.f32.mrb[0].mxu0
      %4474 = vmatprep.mubr.f32.mxu0 0.0
      %4475 = vmatmul.mubr.f32.gmra.mrb[0].mxu0 %v4223
      %v4476 = vpop.f32.mrb[0].mxu0
      %v4477 = vadd.f32 0.0, %v4476
      %v4478 = vpop.f32.mrb[0].mxu0
      %4479 = vmatprep.mubr.f32.mxu0 0.0
      %4480 = vmatmul.mubr.f32.gmra.mrb[0].mxu0 %v4225
      %v4481 = vpop.f32.mrb[0].mxu0
      %v4482 = vadd.f32 0.0, %v4481
      %v4483 = vpop.f32.mrb[0].mxu0
      %4484 = vmatprep.mubr.f32.mxu0 0.0
      %4485 = vmatmul.mubr.f32.gmra.mrb[0].mxu0 %v4227
      %v4486 = vpop.f32.mrb[0].mxu0
      %v4487 = vadd.f32 0.0, %v4486
      %v4488 = vpop.f32.mrb[0].mxu0
      %4489 = vmatprep.mubr.f32.mxu0 0.0
      %4490 = vmatmul.mubr.f32.gmra.mrb[0].mxu0 %v4229
      %v4491 = vpop.f32.mrb[0].mxu0
      %v4492 = vadd.f32 0.0, %v4491
      %v4493 = vpop.f32.mrb[0].mxu0
      %4494 = vmatprep.mubr.f32.mxu0 0.0
      %4495 = vmatmul.mubr.f32.gmra.mrb[0].mxu0 %v4231
      %v4496 = vpop.f32.mrb[0].mxu0
      %v4497 = vadd.f32 0.0, %v4496
      %v4498 = vpop.f32.mrb[0].mxu0
      %4499 = vmatprep.mubr.f32.mxu0 0.0
      %4500 = vmatmul.mubr.f32.gmra.mrb[0].mxu0 %v4233
      %v4501 = vpop.f32.mrb[0].mxu0
      %v4502 = vadd.f32 0.0, %v4501
      %v4503 = vpop.f32.mrb[0].mxu0
      %4504 = vmatprep.mubr.f32.mxu0 0.0
      %4505 = vmatmul.mubr.f32.gmra.mrb[0].mxu0 %v4235
      %v4506 = vpop.f32.mrb[0].mxu0
      %v4507 = vadd.f32 0.0, %v4506
      %v4508 = vpop.f32.mrb[0].mxu0
      %4509 = vdwg.mxu0
      %v4510 = vadd.f32 %v4028, %v4307
      %v4511 = vadd.f32 %v4029, %v4312
      %v4512 = vadd.f32 %v4030, %v4317
      %v4513 = vadd.f32 %v4031, %v4322
      %v4514 = vadd.f32 %v4032, %v4327
      %v4515 = vadd.f32 %v4033, %v4332
      %v4516 = vadd.f32 %v4034, %v4337
      %v4517 = vadd.f32 %v4035, %v4342
      %v4518 = vadd.f32 %v4036, %v4347
      %v4519 = vadd.f32 %v4037, %v4352
      %v4520 = vadd.f32 %v4038, %v4357
      %v4521 = vadd.f32 %v4039, %v4362
      %v4522 = vadd.f32 %v4040, %v4367
      %v4523 = vadd.f32 %v4041, %v4372
      %v4524 = vadd.f32 %v4042, %v4377
      %v4525 = vadd.f32 %v4043, %v4382
      %v4526 = vadd.f32 %v4044, %v4387
      %v4527 = vadd.f32 %v4045, %v4392
      %v4528 = vadd.f32 %v4046, %v4397
      %v4529 = vadd.f32 %v4047, %v4402
      %v4530 = vadd.f32 %v4048, %v4407
      %v4531 = vadd.f32 %v4049, %v4412
      %v4532 = vadd.f32 %v4050, %v4417
      %v4533 = vadd.f32 %v4051, %v4422
      %v4534 = vadd.f32 %v4052, %v4427
      %v4535 = vadd.f32 %v4053, %v4432
      %v4536 = vadd.f32 %v4054, %v4437
      %v4537 = vadd.f32 %v4055, %v4442
      %v4538 = vadd.f32 %v4056, %v4447
      %v4539 = vadd.f32 %v4057, %v4452
      %v4540 = vadd.f32 %v4058, %v4457
      %v4541 = vadd.f32 %v4059, %v4462
      %v4542 = vadd.f32 %v4060, %v4467
      %v4543 = vadd.f32 %v4061, %v4472
      %v4544 = vadd.f32 %v4062, %v4477
      %v4545 = vadd.f32 %v4063, %v4482
      %v4546 = vadd.f32 %v4064, %v4487
      %v4547 = vadd.f32 %v4065, %v4492
      %v4548 = vadd.f32 %v4066, %v4497
      %v4549 = vadd.f32 %v4067, %v4502
      %v4550 = vadd.f32 %v4068, %v4507
      %v4551 = vld [vmem:[%s6] sm:$0x1]
      %v4553 = vlaneseq
      %v4554 = vshrl.u32 %v4553, 7
      %v4555 = vsub.s32 0, %v4554
      %v4556 = vrot.slane %v4551, %v4555
      %v4558 = vadd.f32 %v4510, %v4556
      %v4559 = vadd.f32 %v4511, %v4556
      %v4560 = vadd.f32 %v4512, %v4556
      %v4561 = vadd.f32 %v4513, %v4556
      %v4562 = vadd.f32 %v4514, %v4556
      %v4563 = vadd.f32 %v4515, %v4556
      %v4564 = vadd.f32 %v4516, %v4556
      %v4565 = vadd.f32 %v4517, %v4556
      %v4566 = vadd.f32 %v4518, %v4556
      %v4567 = vadd.f32 %v4519, %v4556
      %v4568 = vadd.f32 %v4520, %v4556
      %v4569 = vadd.f32 %v4521, %v4556
      %v4570 = vadd.f32 %v4522, %v4556
      %v4571 = vadd.f32 %v4523, %v4556
      %v4572 = vadd.f32 %v4524, %v4556
      %v4573 = vadd.f32 %v4525, %v4556
      %v4574 = vadd.f32 %v4526, %v4556
      %v4575 = vadd.f32 %v4527, %v4556
      %v4576 = vadd.f32 %v4528, %v4556
      %v4577 = vadd.f32 %v4529, %v4556
      %v4578 = vadd.f32 %v4530, %v4556
      %v4579 = vadd.f32 %v4531, %v4556
      %v4580 = vadd.f32 %v4532, %v4556
      %v4581 = vadd.f32 %v4533, %v4556
      %v4582 = vadd.f32 %v4534, %v4556
      %v4583 = vadd.f32 %v4535, %v4556
      %v4584 = vadd.f32 %v4536, %v4556
      %v4585 = vadd.f32 %v4537, %v4556
      %v4586 = vadd.f32 %v4538, %v4556
      %v4587 = vadd.f32 %v4539, %v4556
      %v4588 = vadd.f32 %v4540, %v4556
      %v4589 = vadd.f32 %v4541, %v4556
      %v4590 = vadd.f32 %v4542, %v4556
      %v4591 = vadd.f32 %v4543, %v4556
      %v4592 = vadd.f32 %v4544, %v4556
      %v4593 = vadd.f32 %v4545, %v4556
      %v4594 = vadd.f32 %v4546, %v4556
      %v4595 = vadd.f32 %v4547, %v4556
      %v4596 = vadd.f32 %v4548, %v4556
      %v4597 = vadd.f32 %v4549, %v4556
      %v4598 = vadd.f32 %v4550, %v4556
      %v4599 = vld [vmem:[%s7] sm:$0x1]
      %v4600 = vld [vmem:[%s8] sm:$0x1]
      %4602 = vset.pattern.permute.xlu0 0
      %4603 = vperm.xlu0 %4602, %v609
      %v4604 = vpop.permute.xlu0 %4603
      %4607 = vset.pattern.permute.xlu0 0
      %4608 = vperm.xlu0 %4607, %v610
      %v4609 = vpop.permute.xlu0 %4608
      %4612 = vset.pattern.permute.xlu0 0
      %4613 = vperm.xlu0 %4612, %v611
      %v4614 = vpop.permute.xlu0 %4613
      %4617 = vset.pattern.permute.xlu0 0
      %4618 = vperm.xlu0 %4617, %v612
      %v4619 = vpop.permute.xlu0 %4618
      %4622 = vset.pattern.permute.xlu0 0
      %4623 = vperm.xlu0 %4622, %v613
      %v4624 = vpop.permute.xlu0 %4623
      %4627 = vset.pattern.permute.xlu0 0
      %4628 = vperm.xlu0 %4627, %v614
      %v4629 = vpop.permute.xlu0 %4628
      %4632 = vset.pattern.permute.xlu0 0
      %4633 = vperm.xlu0 %4632, %v615
      %v4634 = vpop.permute.xlu0 %4633
      %4637 = vset.pattern.permute.xlu0 0
      %4638 = vperm.xlu0 %4637, %v616
      %v4639 = vpop.permute.xlu0 %4638
      %4642 = vset.pattern.permute.xlu0 0
      %4643 = vperm.xlu0 %4642, %v617
      %v4644 = vpop.permute.xlu0 %4643
      %4647 = vset.pattern.permute.xlu0 0
      %4648 = vperm.xlu0 %4647, %v618
      %v4649 = vpop.permute.xlu0 %4648
      %4652 = vset.pattern.permute.xlu0 0
      %4653 = vperm.xlu0 %4652, %v619
      %v4654 = vpop.permute.xlu0 %4653
      %4657 = vset.pattern.permute.xlu0 0
      %4658 = vperm.xlu0 %4657, %v620
      %v4659 = vpop.permute.xlu0 %4658
      %4662 = vset.pattern.permute.xlu0 0
      %4663 = vperm.xlu0 %4662, %v621
      %v4664 = vpop.permute.xlu0 %4663
      %4667 = vset.pattern.permute.xlu0 0
      %4668 = vperm.xlu0 %4667, %v622
      %v4669 = vpop.permute.xlu0 %4668
      %4672 = vset.pattern.permute.xlu0 0
      %4673 = vperm.xlu0 %4672, %v623
      %v4674 = vpop.permute.xlu0 %4673
      %4677 = vset.pattern.permute.xlu0 0
      %4678 = vperm.xlu0 %4677, %v624
      %v4679 = vpop.permute.xlu0 %4678
      %4682 = vset.pattern.permute.xlu0 0
      %4683 = vperm.xlu0 %4682, %v625
      %v4684 = vpop.permute.xlu0 %4683
      %4687 = vset.pattern.permute.xlu0 0
      %4688 = vperm.xlu0 %4687, %v626
      %v4689 = vpop.permute.xlu0 %4688
      %4692 = vset.pattern.permute.xlu0 0
      %4693 = vperm.xlu0 %4692, %v627
      %v4694 = vpop.permute.xlu0 %4693
      %4697 = vset.pattern.permute.xlu0 0
      %4698 = vperm.xlu0 %4697, %v628
      %v4699 = vpop.permute.xlu0 %4698
      %4702 = vset.pattern.permute.xlu0 0
      %4703 = vperm.xlu0 %4702, %v629
      %v4704 = vpop.permute.xlu0 %4703
      %4707 = vset.pattern.permute.xlu0 0
      %4708 = vperm.xlu0 %4707, %v630
      %v4709 = vpop.permute.xlu0 %4708
      %4712 = vset.pattern.permute.xlu0 0
      %4713 = vperm.xlu0 %4712, %v631
      %v4714 = vpop.permute.xlu0 %4713
      %4717 = vset.pattern.permute.xlu0 0
      %4718 = vperm.xlu0 %4717, %v632
      %v4719 = vpop.permute.xlu0 %4718
      %4722 = vset.pattern.permute.xlu0 0
      %4723 = vperm.xlu0 %4722, %v633
      %v4724 = vpop.permute.xlu0 %4723
      %4727 = vset.pattern.permute.xlu0 0
      %4728 = vperm.xlu0 %4727, %v634
      %v4729 = vpop.permute.xlu0 %4728
      %4732 = vset.pattern.permute.xlu0 0
      %4733 = vperm.xlu0 %4732, %v635
      %v4734 = vpop.permute.xlu0 %4733
      %4737 = vset.pattern.permute.xlu0 0
      %4738 = vperm.xlu0 %4737, %v636
      %v4739 = vpop.permute.xlu0 %4738
      %4742 = vset.pattern.permute.xlu0 0
      %4743 = vperm.xlu0 %4742, %v637
      %v4744 = vpop.permute.xlu0 %4743
      %4747 = vset.pattern.permute.xlu0 0
      %4748 = vperm.xlu0 %4747, %v638
      %v4749 = vpop.permute.xlu0 %4748
      %4752 = vset.pattern.permute.xlu0 0
      %4753 = vperm.xlu0 %4752, %v639
      %v4754 = vpop.permute.xlu0 %4753
      %4757 = vset.pattern.permute.xlu0 0
      %4758 = vperm.xlu0 %4757, %v640
      %v4759 = vpop.permute.xlu0 %4758
      %4762 = vset.pattern.permute.xlu0 0
      %4763 = vperm.xlu0 %4762, %v641
      %v4764 = vpop.permute.xlu0 %4763
      %4767 = vset.pattern.permute.xlu0 0
      %4768 = vperm.xlu0 %4767, %v642
      %v4769 = vpop.permute.xlu0 %4768
      %4772 = vset.pattern.permute.xlu0 0
      %4773 = vperm.xlu0 %4772, %v643
      %v4774 = vpop.permute.xlu0 %4773
      %4777 = vset.pattern.permute.xlu0 0
      %4778 = vperm.xlu0 %4777, %v644
      %v4779 = vpop.permute.xlu0 %4778
      %4782 = vset.pattern.permute.xlu0 0
      %4783 = vperm.xlu0 %4782, %v645
      %v4784 = vpop.permute.xlu0 %4783
      %4787 = vset.pattern.permute.xlu0 0
      %4788 = vperm.xlu0 %4787, %v646
      %v4789 = vpop.permute.xlu0 %4788
      %4792 = vset.pattern.permute.xlu0 0
      %4793 = vperm.xlu0 %4792, %v647
      %v4794 = vpop.permute.xlu0 %4793
      %4797 = vset.pattern.permute.xlu0 0
      %4798 = vperm.xlu0 %4797, %v648
      %v4799 = vpop.permute.xlu0 %4798
      %4802 = vset.pattern.permute.xlu0 0
      %4803 = vperm.xlu0 %4802, %v649
      %v4804 = vpop.permute.xlu0 %4803
      %v4806 = vmul.f32 %v4558, %v4604
      %v4807 = vmul.f32 %v4559, %v4609
      %v4808 = vmul.f32 %v4560, %v4614
      %v4809 = vmul.f32 %v4561, %v4619
      %v4810 = vmul.f32 %v4562, %v4624
      %v4811 = vmul.f32 %v4563, %v4629
      %v4812 = vmul.f32 %v4564, %v4634
      %v4813 = vmul.f32 %v4565, %v4639
      %v4814 = vmul.f32 %v4566, %v4644
      %v4815 = vmul.f32 %v4567, %v4649
      %v4816 = vmul.f32 %v4568, %v4654
      %v4817 = vmul.f32 %v4569, %v4659
      %v4818 = vmul.f32 %v4570, %v4664
      %v4819 = vmul.f32 %v4571, %v4669
      %v4820 = vmul.f32 %v4572, %v4674
      %v4821 = vmul.f32 %v4573, %v4679
      %v4822 = vmul.f32 %v4574, %v4684
      %v4823 = vmul.f32 %v4575, %v4689
      %v4824 = vmul.f32 %v4576, %v4694
      %v4825 = vmul.f32 %v4577, %v4699
      %v4826 = vmul.f32 %v4578, %v4704
      %v4827 = vmul.f32 %v4579, %v4709
      %v4828 = vmul.f32 %v4580, %v4714
      %v4829 = vmul.f32 %v4581, %v4719
      %v4830 = vmul.f32 %v4582, %v4724
      %v4831 = vmul.f32 %v4583, %v4729
      %v4832 = vmul.f32 %v4584, %v4734
      %v4833 = vmul.f32 %v4585, %v4739
      %v4834 = vmul.f32 %v4586, %v4744
      %v4835 = vmul.f32 %v4587, %v4749
      %v4836 = vmul.f32 %v4588, %v4754
      %v4837 = vmul.f32 %v4589, %v4759
      %v4838 = vmul.f32 %v4590, %v4764
      %v4839 = vmul.f32 %v4591, %v4769
      %v4840 = vmul.f32 %v4592, %v4774
      %v4841 = vmul.f32 %v4593, %v4779
      %v4842 = vmul.f32 %v4594, %v4784
      %v4843 = vmul.f32 %v4595, %v4789
      %v4844 = vmul.f32 %v4596, %v4794
      %v4845 = vmul.f32 %v4597, %v4799
      %v4846 = vmul.f32 %v4598, %v4804
      %vm4847 = vcmask 130048
      %v4848 = vsel %vm4847, %v4806, 0.0
      %v4849 = vsel %vm4847, %v4807, 0.0
      %v4850 = vadd.f32 %v4848, %v4849
      %v4851 = vsel %vm4847, %v4808, 0.0
      %v4852 = vadd.f32 %v4850, %v4851
      %v4853 = vsel %vm4847, %v4809, 0.0
      %v4854 = vadd.f32 %v4852, %v4853
      %v4855 = vsel %vm4847, %v4810, 0.0
      %v4856 = vadd.f32 %v4854, %v4855
      %v4857 = vsel %vm4847, %v4811, 0.0
      %v4858 = vadd.f32 %v4856, %v4857
      %v4859 = vsel %vm4847, %v4812, 0.0
      %v4860 = vadd.f32 %v4858, %v4859
      %v4861 = vsel %vm4847, %v4813, 0.0
      %v4862 = vadd.f32 %v4860, %v4861
      %v4863 = vsel %vm4847, %v4814, 0.0
      %v4864 = vadd.f32 %v4862, %v4863
      %v4865 = vsel %vm4847, %v4815, 0.0
      %v4866 = vadd.f32 %v4864, %v4865
      %v4867 = vsel %vm4847, %v4816, 0.0
      %v4868 = vadd.f32 %v4866, %v4867
      %v4869 = vsel %vm4847, %v4817, 0.0
      %v4870 = vadd.f32 %v4868, %v4869
      %v4871 = vsel %vm4847, %v4818, 0.0
      %v4872 = vadd.f32 %v4870, %v4871
      %v4873 = vsel %vm4847, %v4819, 0.0
      %v4874 = vadd.f32 %v4872, %v4873
      %v4875 = vsel %vm4847, %v4820, 0.0
      %v4876 = vadd.f32 %v4874, %v4875
      %v4877 = vsel %vm4847, %v4821, 0.0
      %v4878 = vadd.f32 %v4876, %v4877
      %v4879 = vsel %vm4847, %v4822, 0.0
      %v4880 = vadd.f32 %v4878, %v4879
      %v4881 = vsel %vm4847, %v4823, 0.0
      %v4882 = vadd.f32 %v4880, %v4881
      %v4883 = vsel %vm4847, %v4824, 0.0
      %v4884 = vadd.f32 %v4882, %v4883
      %v4885 = vsel %vm4847, %v4825, 0.0
      %v4886 = vadd.f32 %v4884, %v4885
      %v4887 = vsel %vm4847, %v4826, 0.0
      %v4888 = vadd.f32 %v4886, %v4887
      %v4889 = vsel %vm4847, %v4827, 0.0
      %v4890 = vadd.f32 %v4888, %v4889
      %v4891 = vsel %vm4847, %v4828, 0.0
      %v4892 = vadd.f32 %v4890, %v4891
      %v4893 = vsel %vm4847, %v4829, 0.0
      %v4894 = vadd.f32 %v4892, %v4893
      %v4895 = vsel %vm4847, %v4830, 0.0
      %v4896 = vadd.f32 %v4894, %v4895
      %v4897 = vsel %vm4847, %v4831, 0.0
      %v4898 = vadd.f32 %v4896, %v4897
      %v4899 = vsel %vm4847, %v4832, 0.0
      %v4900 = vadd.f32 %v4898, %v4899
      %v4901 = vsel %vm4847, %v4833, 0.0
      %v4902 = vadd.f32 %v4900, %v4901
      %v4903 = vsel %vm4847, %v4834, 0.0
      %v4904 = vadd.f32 %v4902, %v4903
      %v4905 = vsel %vm4847, %v4835, 0.0
      %v4906 = vadd.f32 %v4904, %v4905
      %v4907 = vsel %vm4847, %v4836, 0.0
      %v4908 = vadd.f32 %v4906, %v4907
      %v4909 = vsel %vm4847, %v4837, 0.0
      %v4910 = vadd.f32 %v4908, %v4909
      %v4911 = vsel %vm4847, %v4838, 0.0
      %v4912 = vadd.f32 %v4910, %v4911
      %v4913 = vsel %vm4847, %v4839, 0.0
      %v4914 = vadd.f32 %v4912, %v4913
      %v4915 = vsel %vm4847, %v4840, 0.0
      %v4916 = vadd.f32 %v4914, %v4915
      %v4917 = vsel %vm4847, %v4841, 0.0
      %v4918 = vadd.f32 %v4916, %v4917
      %v4919 = vsel %vm4847, %v4842, 0.0
      %v4920 = vadd.f32 %v4918, %v4919
      %v4921 = vsel %vm4847, %v4843, 0.0
      %v4922 = vadd.f32 %v4920, %v4921
      %v4923 = vsel %vm4847, %v4844, 0.0
      %v4924 = vadd.f32 %v4922, %v4923
      %v4925 = vsel %vm4847, %v4845, 0.0
      %v4926 = vadd.f32 %v4924, %v4925
      %vm4927 = vcmask 125952
      %v4928 = vsel %vm4927, %v4846, 0.0
      %v4929 = vadd.f32 %v4926, %v4928
      %v4930 = vrot.slane %v4929, 4
      %v4931 = vadd.f32 %v4929, %v4930
      %v4932 = vrot.slane %v4931, 2
      %v4933 = vadd.f32 %v4931, %v4932
      %v4934 = vrot.slane %v4933, 1
      %v4935 = vadd.f32 %v4933, %v4934
      %v4936 = vmul.f32 %v4806, %v4806
      %v4937 = vmul.f32 %v4807, %v4807
      %v4938 = vmul.f32 %v4808, %v4808
      %v4939 = vmul.f32 %v4809, %v4809
      %v4940 = vmul.f32 %v4810, %v4810
      %v4941 = vmul.f32 %v4811, %v4811
      %v4942 = vmul.f32 %v4812, %v4812
      %v4943 = vmul.f32 %v4813, %v4813
      %v4944 = vmul.f32 %v4814, %v4814
      %v4945 = vmul.f32 %v4815, %v4815
      %v4946 = vmul.f32 %v4816, %v4816
      %v4947 = vmul.f32 %v4817, %v4817
      %v4948 = vmul.f32 %v4818, %v4818
      %v4949 = vmul.f32 %v4819, %v4819
      %v4950 = vmul.f32 %v4820, %v4820
      %v4951 = vmul.f32 %v4821, %v4821
      %v4952 = vmul.f32 %v4822, %v4822
      %v4953 = vmul.f32 %v4823, %v4823
      %v4954 = vmul.f32 %v4824, %v4824
      %v4955 = vmul.f32 %v4825, %v4825
      %v4956 = vmul.f32 %v4826, %v4826
      %v4957 = vmul.f32 %v4827, %v4827
      %v4958 = vmul.f32 %v4828, %v4828
      %v4959 = vmul.f32 %v4829, %v4829
      %v4960 = vmul.f32 %v4830, %v4830
      %v4961 = vmul.f32 %v4831, %v4831
      %v4962 = vmul.f32 %v4832, %v4832
      %v4963 = vmul.f32 %v4833, %v4833
      %v4964 = vmul.f32 %v4834, %v4834
      %v4965 = vmul.f32 %v4835, %v4835
      %v4966 = vmul.f32 %v4836, %v4836
      %v4967 = vmul.f32 %v4837, %v4837
      %v4968 = vmul.f32 %v4838, %v4838
      %v4969 = vmul.f32 %v4839, %v4839
      %v4970 = vmul.f32 %v4840, %v4840
      %v4971 = vmul.f32 %v4841, %v4841
      %v4972 = vmul.f32 %v4842, %v4842
      %v4973 = vmul.f32 %v4843, %v4843
      %v4974 = vmul.f32 %v4844, %v4844
      %v4975 = vmul.f32 %v4845, %v4845
      %v4976 = vmul.f32 %v4846, %v4846
      %v4977 = vsel %vm4847, %v4936, 0.0
      %v4978 = vsel %vm4847, %v4937, 0.0
      %v4979 = vadd.f32 %v4977, %v4978
      %v4980 = vsel %vm4847, %v4938, 0.0
      %v4981 = vadd.f32 %v4979, %v4980
      %v4982 = vsel %vm4847, %v4939, 0.0
      %v4983 = vadd.f32 %v4981, %v4982
      %v4984 = vsel %vm4847, %v4940, 0.0
      %v4985 = vadd.f32 %v4983, %v4984
      %v4986 = vsel %vm4847, %v4941, 0.0
      %v4987 = vadd.f32 %v4985, %v4986
      %v4988 = vsel %vm4847, %v4942, 0.0
      %v4989 = vadd.f32 %v4987, %v4988
      %v4990 = vsel %vm4847, %v4943, 0.0
      %v4991 = vadd.f32 %v4989, %v4990
      %v4992 = vsel %vm4847, %v4944, 0.0
      %v4993 = vadd.f32 %v4991, %v4992
      %v4994 = vsel %vm4847, %v4945, 0.0
      %v4995 = vadd.f32 %v4993, %v4994
      %v4996 = vsel %vm4847, %v4946, 0.0
      %v4997 = vadd.f32 %v4995, %v4996
      %v4998 = vsel %vm4847, %v4947, 0.0
      %v4999 = vadd.f32 %v4997, %v4998
      %v5000 = vsel %vm4847, %v4948, 0.0
      %v5001 = vadd.f32 %v4999, %v5000
      %v5002 = vsel %vm4847, %v4949, 0.0
      %v5003 = vadd.f32 %v5001, %v5002
      %v5004 = vsel %vm4847, %v4950, 0.0
      %v5005 = vadd.f32 %v5003, %v5004
      %v5006 = vsel %vm4847, %v4951, 0.0
      %v5007 = vadd.f32 %v5005, %v5006
      %v5008 = vsel %vm4847, %v4952, 0.0
      %v5009 = vadd.f32 %v5007, %v5008
      %v5010 = vsel %vm4847, %v4953, 0.0
      %v5011 = vadd.f32 %v5009, %v5010
      %v5012 = vsel %vm4847, %v4954, 0.0
      %v5013 = vadd.f32 %v5011, %v5012
      %v5014 = vsel %vm4847, %v4955, 0.0
      %v5015 = vadd.f32 %v5013, %v5014
      %v5016 = vsel %vm4847, %v4956, 0.0
      %v5017 = vadd.f32 %v5015, %v5016
      %v5018 = vsel %vm4847, %v4957, 0.0
      %v5019 = vadd.f32 %v5017, %v5018
      %v5020 = vsel %vm4847, %v4958, 0.0
      %v5021 = vadd.f32 %v5019, %v5020
      %v5022 = vsel %vm4847, %v4959, 0.0
      %v5023 = vadd.f32 %v5021, %v5022
      %v5024 = vsel %vm4847, %v4960, 0.0
      %v5025 = vadd.f32 %v5023, %v5024
      %v5026 = vsel %vm4847, %v4961, 0.0
      %v5027 = vadd.f32 %v5025, %v5026
      %v5028 = vsel %vm4847, %v4962, 0.0
      %v5029 = vadd.f32 %v5027, %v5028
      %v5030 = vsel %vm4847, %v4963, 0.0
      %v5031 = vadd.f32 %v5029, %v5030
      %v5032 = vsel %vm4847, %v4964, 0.0
      %v5033 = vadd.f32 %v5031, %v5032
      %v5034 = vsel %vm4847, %v4965, 0.0
      %v5035 = vadd.f32 %v5033, %v5034
      %v5036 = vsel %vm4847, %v4966, 0.0
      %v5037 = vadd.f32 %v5035, %v5036
      %v5038 = vsel %vm4847, %v4967, 0.0
      %v5039 = vadd.f32 %v5037, %v5038
      %v5040 = vsel %vm4847, %v4968, 0.0
      %v5041 = vadd.f32 %v5039, %v5040
      %v5042 = vsel %vm4847, %v4969, 0.0
      %v5043 = vadd.f32 %v5041, %v5042
      %v5044 = vsel %vm4847, %v4970, 0.0
      %v5045 = vadd.f32 %v5043, %v5044
      %v5046 = vsel %vm4847, %v4971, 0.0
      %v5047 = vadd.f32 %v5045, %v5046
      %v5048 = vsel %vm4847, %v4972, 0.0
      %v5049 = vadd.f32 %v5047, %v5048
      %v5050 = vsel %vm4847, %v4973, 0.0
      %v5051 = vadd.f32 %v5049, %v5050
      %v5052 = vsel %vm4847, %v4974, 0.0
      %v5053 = vadd.f32 %v5051, %v5052
      %v5054 = vsel %vm4847, %v4975, 0.0
      %v5055 = vadd.f32 %v5053, %v5054
      %v5056 = vsel %vm4927, %v4976, 0.0
      %v5057 = vadd.f32 %v5055, %v5056
      %v5058 = vrot.slane %v5057, 4
      %v5059 = vadd.f32 %v5057, %v5058
      %v5060 = vrot.slane %v5059, 2
      %v5061 = vadd.f32 %v5059, %v5060
      %v5062 = vrot.slane %v5061, 1
      %v5063 = vadd.f32 %v5061, %v5062
      %v5064 = vlaneseq
      %v5065 = vshrl.u32 %v5064, 7
      %vm5066 = vcmp.eq.s32.totalorder %v5065, 0
      %v5067 = vsel %vm5066, %v4935, %v5063
      %v5069 = vsel %vm4847, %v5067, 0
      %5071 = vmatprep.subr.mxu0 0.0
      %5072 = vmatpush1.msra.mxu0 %v650
      %5073 = vmatprep.subr.mxu0 0.0
      %5074 = vmatpush1.msra.mxu0 %v651
      %5075 = vmatprep.subr.mxu0 0.0
      %5076 = vmatpush1.msra.mxu0 0.0
      %5077 = vmatprep.subr.mxu0 0.0
      %5078 = vmatpush1.msra.mxu0 0.0
      %5079 = vmatprep.subr.mxu0 0.0
      %5080 = vmatpush1.msra.mxu0 0.0
      %5081 = vmatprep.subr.mxu0 0.0
      %5082 = vmatpush1.msra.mxu0 0.0
      %5083 = vmatprep.subr.mxu0 0.0
      %5084 = vmatpush1.msra.mxu0 0.0
      %5085 = vmatprep.subr.mxu0 0.0
      %5086 = vmatpush1.msra.mxu0 0.0
      %5087 = vmatprep.subr.mxu0 0.0
      %5088 = vmatpush1.msra.mxu0 0.0
      %5089 = vmatprep.subr.mxu0 0.0
      %5090 = vmatpush1.msra.mxu0 0.0
      %5091 = vmatprep.subr.mxu0 0.0
      %5092 = vmatpush1.msra.mxu0 0.0
      %5093 = vmatprep.subr.mxu0 0.0
      %5094 = vmatpush1.msra.mxu0 0.0
      %5095 = vmatprep.subr.mxu0 0.0
      %5096 = vmatpush1.msra.mxu0 0.0
      %5097 = vmatprep.subr.mxu0 0.0
      %5098 = vmatpush1.msra.mxu0 0.0
      %5099 = vmatprep.subr.mxu0 0.0
      %5100 = vmatpush1.msra.mxu0 0.0
      %5101 = vmatprep.subr.mxu0 0.0
      %5102 = vmatpush1.msra.mxu0 0.0
      %5103 = vmatprep.subr.mxu0 0.0
      %5104 = vmatpush1.msra.mxu0 0.0
      %5105 = vmatprep.subr.mxu0 0.0
      %5106 = vmatpush1.msra.mxu0 0.0
      %5107 = vmatprep.subr.mxu0 0.0
      %5108 = vmatpush1.msra.mxu0 0.0
      %5109 = vmatprep.subr.mxu0 0.0
      %5110 = vmatpush1.msra.mxu0 0.0
      %5111 = vmatprep.subr.mxu0 0.0
      %5112 = vmatpush1.msra.mxu0 0.0
      %5113 = vmatprep.subr.mxu0 0.0
      %5114 = vmatpush1.msra.mxu0 0.0
      %5115 = vmatprep.subr.mxu0 0.0
      %5116 = vmatpush1.msra.mxu0 0.0
      %5117 = vmatprep.subr.mxu0 0.0
      %5118 = vmatpush1.msra.mxu0 0.0
      %5119 = vmatprep.subr.mxu0 0.0
      %5120 = vmatpush1.msra.mxu0 0.0
      %5121 = vmatprep.subr.mxu0 0.0
      %5122 = vmatpush1.msra.mxu0 0.0
      %5123 = vmatprep.subr.mxu0 0.0
      %5124 = vmatpush1.msra.mxu0 0.0
      %5125 = vmatprep.subr.mxu0 0.0
      %5126 = vmatpush1.msra.mxu0 0.0
      %5127 = vmatprep.subr.mxu0 0.0
      %5128 = vmatpush1.msra.mxu0 0.0
      %5129 = vmatprep.subr.mxu0 0.0
      %5130 = vmatpush1.msra.mxu0 0.0
      %5131 = vmatprep.subr.mxu0 0.0
      %5132 = vmatpush1.msra.mxu0 0.0
      %5133 = vmatprep.subr.mxu0 0.0
      %5134 = vmatpush1.msra.mxu0 0.0
      %5135 = vmatprep.mubr.f32.mxu0 0.0
      %5136 = vmatmul.mubr.f32.gmra.mrb[0].mxu0 %v5069
      %v5137 = vpop.f32.mrb[0].mxu0
      %v5138 = vadd.f32 0.0, %v5137
      %v5139 = vpop.f32.mrb[0].mxu0
      %5140 = vdwg.mxu0
      %v5141 = vmul.f32 %v5138, 0.001953125
      %vm5142 = vcmask 64512
      %v5144 = vsel %vm5142, %v5141, 0
      %5146 = vmatprep.subr.mxu0 0.0
      %5147 = vmatpush1.msra.mxu0 %v652
      %5148 = vmatprep.subr.mxu0 0.0
      %5149 = vmatpush1.msra.mxu0 0.0
      %5150 = vmatprep.subr.mxu0 0.0
      %5151 = vmatpush1.msra.mxu0 0.0
      %5152 = vmatprep.subr.mxu0 0.0
      %5153 = vmatpush1.msra.mxu0 0.0
      %5154 = vmatprep.subr.mxu0 0.0
      %5155 = vmatpush1.msra.mxu0 0.0
      %5156 = vmatprep.subr.mxu0 0.0
      %5157 = vmatpush1.msra.mxu0 0.0
      %5158 = vmatprep.subr.mxu0 0.0
      %5159 = vmatpush1.msra.mxu0 0.0
      %5160 = vmatprep.subr.mxu0 0.0
      %5161 = vmatpush1.msra.mxu0 0.0
      %5162 = vmatprep.subr.mxu0 0.0
      %5163 = vmatpush1.msra.mxu0 0.0
      %5164 = vmatprep.subr.mxu0 0.0
      %5165 = vmatpush1.msra.mxu0 0.0
      %5166 = vmatprep.subr.mxu0 0.0
      %5167 = vmatpush1.msra.mxu0 0.0
      %5168 = vmatprep.subr.mxu0 0.0
      %5169 = vmatpush1.msra.mxu0 0.0
      %5170 = vmatprep.subr.mxu0 0.0
      %5171 = vmatpush1.msra.mxu0 0.0
      %5172 = vmatprep.subr.mxu0 0.0
      %5173 = vmatpush1.msra.mxu0 0.0
      %5174 = vmatprep.subr.mxu0 0.0
      %5175 = vmatpush1.msra.mxu0 0.0
      %5176 = vmatprep.subr.mxu0 0.0
      %5177 = vmatpush1.msra.mxu0 0.0
      %5178 = vmatprep.subr.mxu0 0.0
      %5179 = vmatpush1.msra.mxu0 0.0
      %5180 = vmatprep.subr.mxu0 0.0
      %5181 = vmatpush1.msra.mxu0 0.0
      %5182 = vmatprep.subr.mxu0 0.0
      %5183 = vmatpush1.msra.mxu0 0.0
      %5184 = vmatprep.subr.mxu0 0.0
      %5185 = vmatpush1.msra.mxu0 0.0
      %5186 = vmatprep.subr.mxu0 0.0
      %5187 = vmatpush1.msra.mxu0 0.0
      %5188 = vmatprep.subr.mxu0 0.0
      %5189 = vmatpush1.msra.mxu0 0.0
      %5190 = vmatprep.subr.mxu0 0.0
      %5191 = vmatpush1.msra.mxu0 0.0
      %5192 = vmatprep.subr.mxu0 0.0
      %5193 = vmatpush1.msra.mxu0 0.0
      %5194 = vmatprep.subr.mxu0 0.0
      %5195 = vmatpush1.msra.mxu0 0.0
      %5196 = vmatprep.subr.mxu0 0.0
      %5197 = vmatpush1.msra.mxu0 0.0
      %5198 = vmatprep.subr.mxu0 0.0
      %5199 = vmatpush1.msra.mxu0 0.0
      %5200 = vmatprep.subr.mxu0 0.0
      %5201 = vmatpush1.msra.mxu0 0.0
      %5202 = vmatprep.subr.mxu0 0.0
      %5203 = vmatpush1.msra.mxu0 0.0
      %5204 = vmatprep.subr.mxu0 0.0
      %5205 = vmatpush1.msra.mxu0 0.0
      %5206 = vmatprep.subr.mxu0 0.0
      %5207 = vmatpush1.msra.mxu0 0.0
      %5208 = vmatprep.subr.mxu0 0.0
      %5209 = vmatpush1.msra.mxu0 0.0
      %5210 = vmatprep.mubr.f32.mxu0 0.0
      %5211 = vmatmul.mubr.f32.gmra.mrb[0].mxu0 %v5144
      %v5212 = vpop.f32.mrb[0].mxu0
      %v5213 = vadd.f32 0.0, %v5212
      %v5214 = vpop.f32.mrb[0].mxu0
      %5215 = vdwg.mxu0
      %v5216 = vmul.f32 %v5213, %v5213
      %v5218 = vrot.slane %v5216, 7
      %v5220 = vsub.f32 %v5213, %v5218
      %v5221 = vadd.f32 %v5220, 1e-05
      %v5222 = vrsqrt.pop %v5221
      %v5224 = vlaneseq
      %v5225 = vshrl.u32 %v5224, 7
      %v5226 = vsub.s32 0, %v5225
      %v5227 = vrot.slane %v4599, %v5226
      %v5229 = vmul.f32 %v5222, %v5227
      %v5230 = vlaneseq
      %v5231 = vshrl.u32 %v5230, 7
      %v5232 = vsub.s32 1, %v5231
      %v5233 = vrot.slane %v5229, %v5232
      %v5234 = vmul.f32 %v4558, %v5233
      %v5235 = vmul.f32 %v4559, %v5233
      %v5236 = vmul.f32 %v4560, %v5233
      %v5237 = vmul.f32 %v4561, %v5233
      %v5238 = vmul.f32 %v4562, %v5233
      %v5239 = vmul.f32 %v4563, %v5233
      %v5240 = vmul.f32 %v4564, %v5233
      %v5241 = vmul.f32 %v4565, %v5233
      %v5242 = vmul.f32 %v4566, %v5233
      %v5243 = vmul.f32 %v4567, %v5233
      %v5244 = vmul.f32 %v4568, %v5233
      %v5245 = vmul.f32 %v4569, %v5233
      %v5246 = vmul.f32 %v4570, %v5233
      %v5247 = vmul.f32 %v4571, %v5233
      %v5248 = vmul.f32 %v4572, %v5233
      %v5249 = vmul.f32 %v4573, %v5233
      %v5250 = vmul.f32 %v4574, %v5233
      %v5251 = vmul.f32 %v4575, %v5233
      %v5252 = vmul.f32 %v4576, %v5233
      %v5253 = vmul.f32 %v4577, %v5233
      %v5254 = vmul.f32 %v4578, %v5233
      %v5255 = vmul.f32 %v4579, %v5233
      %v5256 = vmul.f32 %v4580, %v5233
      %v5257 = vmul.f32 %v4581, %v5233
      %v5258 = vmul.f32 %v4582, %v5233
      %v5259 = vmul.f32 %v4583, %v5233
      %v5260 = vmul.f32 %v4584, %v5233
      %v5261 = vmul.f32 %v4585, %v5233
      %v5262 = vmul.f32 %v4586, %v5233
      %v5263 = vmul.f32 %v4587, %v5233
      %v5264 = vmul.f32 %v4588, %v5233
      %v5265 = vmul.f32 %v4589, %v5233
      %v5266 = vmul.f32 %v4590, %v5233
      %v5267 = vmul.f32 %v4591, %v5233
      %v5268 = vmul.f32 %v4592, %v5233
      %v5269 = vmul.f32 %v4593, %v5233
      %v5270 = vmul.f32 %v4594, %v5233
      %v5271 = vmul.f32 %v4595, %v5233
      %v5272 = vmul.f32 %v4596, %v5233
      %v5273 = vmul.f32 %v4597, %v5233
      %v5274 = vmul.f32 %v4598, %v5233
      %v5276 = vrot.slane %v5229, 1
      %v5278 = vmul.f32 %v5213, %v5276
      %v5279 = vsub.f32 %v4600, %v5278
      %v5281 = vlaneseq
      %v5282 = vshrl.u32 %v5281, 7
      %v5283 = vsub.s32 0, %v5282
      %v5284 = vrot.slane %v5279, %v5283
      %v5286 = vadd.f32 %v5234, %v5284
      %v5287 = vadd.f32 %v5235, %v5284
      %v5288 = vadd.f32 %v5236, %v5284
      %v5289 = vadd.f32 %v5237, %v5284
      %v5290 = vadd.f32 %v5238, %v5284
      %v5291 = vadd.f32 %v5239, %v5284
      %v5292 = vadd.f32 %v5240, %v5284
      %v5293 = vadd.f32 %v5241, %v5284
      %v5294 = vadd.f32 %v5242, %v5284
      %v5295 = vadd.f32 %v5243, %v5284
      %v5296 = vadd.f32 %v5244, %v5284
      %v5297 = vadd.f32 %v5245, %v5284
      %v5298 = vadd.f32 %v5246, %v5284
      %v5299 = vadd.f32 %v5247, %v5284
      %v5300 = vadd.f32 %v5248, %v5284
      %v5301 = vadd.f32 %v5249, %v5284
      %v5302 = vadd.f32 %v5250, %v5284
      %v5303 = vadd.f32 %v5251, %v5284
      %v5304 = vadd.f32 %v5252, %v5284
      %v5305 = vadd.f32 %v5253, %v5284
      %v5306 = vadd.f32 %v5254, %v5284
      %v5307 = vadd.f32 %v5255, %v5284
      %v5308 = vadd.f32 %v5256, %v5284
      %v5309 = vadd.f32 %v5257, %v5284
      %v5310 = vadd.f32 %v5258, %v5284
      %v5311 = vadd.f32 %v5259, %v5284
      %v5312 = vadd.f32 %v5260, %v5284
      %v5313 = vadd.f32 %v5261, %v5284
      %v5314 = vadd.f32 %v5262, %v5284
      %v5315 = vadd.f32 %v5263, %v5284
      %v5316 = vadd.f32 %v5264, %v5284
      %v5317 = vadd.f32 %v5265, %v5284
      %v5318 = vadd.f32 %v5266, %v5284
      %v5319 = vadd.f32 %v5267, %v5284
      %v5320 = vadd.f32 %v5268, %v5284
      %v5321 = vadd.f32 %v5269, %v5284
      %v5322 = vadd.f32 %v5270, %v5284
      %v5323 = vadd.f32 %v5271, %v5284
      %v5324 = vadd.f32 %v5272, %v5284
      %v5325 = vadd.f32 %v5273, %v5284
      %v5326 = vadd.f32 %v5274, %v5284
      %v5327 = vsub.f32 0.0, %v5286
      %v5328 = vsub.f32 0.0, %v5287
      %v5329 = vsub.f32 0.0, %v5288
      %v5330 = vsub.f32 0.0, %v5289
      %v5331 = vsub.f32 0.0, %v5290
      %v5332 = vsub.f32 0.0, %v5291
      %v5333 = vsub.f32 0.0, %v5292
      %v5334 = vsub.f32 0.0, %v5293
      %v5335 = vsub.f32 0.0, %v5294
      %v5336 = vsub.f32 0.0, %v5295
      %v5337 = vsub.f32 0.0, %v5296
      %v5338 = vsub.f32 0.0, %v5297
      %v5339 = vsub.f32 0.0, %v5298
      %v5340 = vsub.f32 0.0, %v5299
      %v5341 = vsub.f32 0.0, %v5300
      %v5342 = vsub.f32 0.0, %v5301
      %v5343 = vsub.f32 0.0, %v5302
      %v5344 = vsub.f32 0.0, %v5303
      %v5345 = vsub.f32 0.0, %v5304
      %v5346 = vsub.f32 0.0, %v5305
      %v5347 = vsub.f32 0.0, %v5306
      %v5348 = vsub.f32 0.0, %v5307
      %v5349 = vsub.f32 0.0, %v5308
      %v5350 = vsub.f32 0.0, %v5309
      %v5351 = vsub.f32 0.0, %v5310
      %v5352 = vsub.f32 0.0, %v5311
      %v5353 = vsub.f32 0.0, %v5312
      %v5354 = vsub.f32 0.0, %v5313
      %v5355 = vsub.f32 0.0, %v5314
      %v5356 = vsub.f32 0.0, %v5315
      %v5357 = vsub.f32 0.0, %v5316
      %v5358 = vsub.f32 0.0, %v5317
      %v5359 = vsub.f32 0.0, %v5318
      %v5360 = vsub.f32 0.0, %v5319
      %v5361 = vsub.f32 0.0, %v5320
      %v5362 = vsub.f32 0.0, %v5321
      %v5363 = vsub.f32 0.0, %v5322
      %v5364 = vsub.f32 0.0, %v5323
      %v5365 = vsub.f32 0.0, %v5324
      %v5366 = vsub.f32 0.0, %v5325
      %v5367 = vsub.f32 0.0, %v5326
      %v5368 = vmul.f32 %v5327, 1.442695
      %v5369 = vpow.pop %v5368
      %v5370 = vmul.f32 %v5328, 1.442695
      %v5371 = vpow.pop %v5370
      %v5372 = vmul.f32 %v5329, 1.442695
      %v5373 = vpow.pop %v5372
      %v5374 = vmul.f32 %v5330, 1.442695
      %v5375 = vpow.pop %v5374
      %v5376 = vmul.f32 %v5331, 1.442695
      %v5377 = vpow.pop %v5376
      %v5378 = vmul.f32 %v5332, 1.442695
      %v5379 = vpow.pop %v5378
      %v5380 = vmul.f32 %v5333, 1.442695
      %v5381 = vpow.pop %v5380
      %v5382 = vmul.f32 %v5334, 1.442695
      %v5383 = vpow.pop %v5382
      %v5384 = vmul.f32 %v5335, 1.442695
      %v5385 = vpow.pop %v5384
      %v5386 = vmul.f32 %v5336, 1.442695
      %v5387 = vpow.pop %v5386
      %v5388 = vmul.f32 %v5337, 1.442695
      %v5389 = vpow.pop %v5388
      %v5390 = vmul.f32 %v5338, 1.442695
      %v5391 = vpow.pop %v5390
      %v5392 = vmul.f32 %v5339, 1.442695
      %v5393 = vpow.pop %v5392
      %v5394 = vmul.f32 %v5340, 1.442695
      %v5395 = vpow.pop %v5394
      %v5396 = vmul.f32 %v5341, 1.442695
      %v5397 = vpow.pop %v5396
      %v5398 = vmul.f32 %v5342, 1.442695
      %v5399 = vpow.pop %v5398
      %v5400 = vmul.f32 %v5343, 1.442695
      %v5401 = vpow.pop %v5400
      %v5402 = vmul.f32 %v5344, 1.442695
      %v5403 = vpow.pop %v5402
      %v5404 = vmul.f32 %v5345, 1.442695
      %v5405 = vpow.pop %v5404
      %v5406 = vmul.f32 %v5346, 1.442695
      %v5407 = vpow.pop %v5406
      %v5408 = vmul.f32 %v5347, 1.442695
      %v5409 = vpow.pop %v5408
      %v5410 = vmul.f32 %v5348, 1.442695
      %v5411 = vpow.pop %v5410
      %v5412 = vmul.f32 %v5349, 1.442695
      %v5413 = vpow.pop %v5412
      %v5414 = vmul.f32 %v5350, 1.442695
      %v5415 = vpow.pop %v5414
      %v5416 = vmul.f32 %v5351, 1.442695
      %v5417 = vpow.pop %v5416
      %v5418 = vmul.f32 %v5352, 1.442695
      %v5419 = vpow.pop %v5418
      %v5420 = vmul.f32 %v5353, 1.442695
      %v5421 = vpow.pop %v5420
      %v5422 = vmul.f32 %v5354, 1.442695
      %v5423 = vpow.pop %v5422
      %v5424 = vmul.f32 %v5355, 1.442695
      %v5425 = vpow.pop %v5424
      %v5426 = vmul.f32 %v5356, 1.442695
      %v5427 = vpow.pop %v5426
      %v5428 = vmul.f32 %v5357, 1.442695
      %v5429 = vpow.pop %v5428
      %v5430 = vmul.f32 %v5358, 1.442695
      %v5431 = vpow.pop %v5430
      %v5432 = vmul.f32 %v5359, 1.442695
      %v5433 = vpow.pop %v5432
      %v5434 = vmul.f32 %v5360, 1.442695
      %v5435 = vpow.pop %v5434
      %v5436 = vmul.f32 %v5361, 1.442695
      %v5437 = vpow.pop %v5436
      %v5438 = vmul.f32 %v5362, 1.442695
      %v5439 = vpow.pop %v5438
      %v5440 = vmul.f32 %v5363, 1.442695
      %v5441 = vpow.pop %v5440
      %v5442 = vmul.f32 %v5364, 1.442695
      %v5443 = vpow.pop %v5442
      %v5444 = vmul.f32 %v5365, 1.442695
      %v5445 = vpow.pop %v5444
      %v5446 = vmul.f32 %v5366, 1.442695
      %v5447 = vpow.pop %v5446
      %v5448 = vmul.f32 %v5367, 1.442695
      %v5449 = vpow.pop %v5448
      %v5450 = vadd.f32 %v5369, 1.0
      %v5451 = vadd.f32 %v5371, 1.0
      %v5452 = vadd.f32 %v5373, 1.0
      %v5453 = vadd.f32 %v5375, 1.0
      %v5454 = vadd.f32 %v5377, 1.0
      %v5455 = vadd.f32 %v5379, 1.0
      %v5456 = vadd.f32 %v5381, 1.0
      %v5457 = vadd.f32 %v5383, 1.0
      %v5458 = vadd.f32 %v5385, 1.0
      %v5459 = vadd.f32 %v5387, 1.0
      %v5460 = vadd.f32 %v5389, 1.0
      %v5461 = vadd.f32 %v5391, 1.0
      %v5462 = vadd.f32 %v5393, 1.0
      %v5463 = vadd.f32 %v5395, 1.0
      %v5464 = vadd.f32 %v5397, 1.0
      %v5465 = vadd.f32 %v5399, 1.0
      %v5466 = vadd.f32 %v5401, 1.0
      %v5467 = vadd.f32 %v5403, 1.0
      %v5468 = vadd.f32 %v5405, 1.0
      %v5469 = vadd.f32 %v5407, 1.0
      %v5470 = vadd.f32 %v5409, 1.0
      %v5471 = vadd.f32 %v5411, 1.0
      %v5472 = vadd.f32 %v5413, 1.0
      %v5473 = vadd.f32 %v5415, 1.0
      %v5474 = vadd.f32 %v5417, 1.0
      %v5475 = vadd.f32 %v5419, 1.0
      %v5476 = vadd.f32 %v5421, 1.0
      %v5477 = vadd.f32 %v5423, 1.0
      %v5478 = vadd.f32 %v5425, 1.0
      %v5479 = vadd.f32 %v5427, 1.0
      %v5480 = vadd.f32 %v5429, 1.0
      %v5481 = vadd.f32 %v5431, 1.0
      %v5482 = vadd.f32 %v5433, 1.0
      %v5483 = vadd.f32 %v5435, 1.0
      %v5484 = vadd.f32 %v5437, 1.0
      %v5485 = vadd.f32 %v5439, 1.0
      %v5486 = vadd.f32 %v5441, 1.0
      %v5487 = vadd.f32 %v5443, 1.0
      %v5488 = vadd.f32 %v5445, 1.0
      %v5489 = vadd.f32 %v5447, 1.0
      %v5490 = vadd.f32 %v5449, 1.0
      %v5491 = vrcp.pop %v5450
      %v5492 = vrcp.pop %v5451
      %v5493 = vrcp.pop %v5452
      %v5494 = vrcp.pop %v5453
      %v5495 = vrcp.pop %v5454
      %v5496 = vrcp.pop %v5455
      %v5497 = vrcp.pop %v5456
      %v5498 = vrcp.pop %v5457
      %v5499 = vrcp.pop %v5458
      %v5500 = vrcp.pop %v5459
      %v5501 = vrcp.pop %v5460
      %v5502 = vrcp.pop %v5461
      %v5503 = vrcp.pop %v5462
      %v5504 = vrcp.pop %v5463
      %v5505 = vrcp.pop %v5464
      %v5506 = vrcp.pop %v5465
      %v5507 = vrcp.pop %v5466
      %v5508 = vrcp.pop %v5467
      %v5509 = vrcp.pop %v5468
      %v5510 = vrcp.pop %v5469
      %v5511 = vrcp.pop %v5470
      %v5512 = vrcp.pop %v5471
      %v5513 = vrcp.pop %v5472
      %v5514 = vrcp.pop %v5473
      %v5515 = vrcp.pop %v5474
      %v5516 = vrcp.pop %v5475
      %v5517 = vrcp.pop %v5476
      %v5518 = vrcp.pop %v5477
      %v5519 = vrcp.pop %v5478
      %v5520 = vrcp.pop %v5479
      %v5521 = vrcp.pop %v5480
      %v5522 = vrcp.pop %v5481
      %v5523 = vrcp.pop %v5482
      %v5524 = vrcp.pop %v5483
      %v5525 = vrcp.pop %v5484
      %v5526 = vrcp.pop %v5485
      %v5527 = vrcp.pop %v5486
      %v5528 = vrcp.pop %v5487
      %v5529 = vrcp.pop %v5488
      %v5530 = vrcp.pop %v5489
      %v5531 = vrcp.pop %v5490
      %v5532 = vmul.f32 %v5286, %v5491
      %v5533 = vmul.f32 %v5287, %v5492
      %v5534 = vmul.f32 %v5288, %v5493
      %v5535 = vmul.f32 %v5289, %v5494
      %v5536 = vmul.f32 %v5290, %v5495
      %v5537 = vmul.f32 %v5291, %v5496
      %v5538 = vmul.f32 %v5292, %v5497
      %v5539 = vmul.f32 %v5293, %v5498
      %v5540 = vmul.f32 %v5294, %v5499
      %v5541 = vmul.f32 %v5295, %v5500
      %v5542 = vmul.f32 %v5296, %v5501
      %v5543 = vmul.f32 %v5297, %v5502
      %v5544 = vmul.f32 %v5298, %v5503
      %v5545 = vmul.f32 %v5299, %v5504
      %v5546 = vmul.f32 %v5300, %v5505
      %v5547 = vmul.f32 %v5301, %v5506
      %v5548 = vmul.f32 %v5302, %v5507
      %v5549 = vmul.f32 %v5303, %v5508
      %v5550 = vmul.f32 %v5304, %v5509
      %v5551 = vmul.f32 %v5305, %v5510
      %v5552 = vmul.f32 %v5306, %v5511
      %v5553 = vmul.f32 %v5307, %v5512
      %v5554 = vmul.f32 %v5308, %v5513
      %v5555 = vmul.f32 %v5309, %v5514
      %v5556 = vmul.f32 %v5310, %v5515
      %v5557 = vmul.f32 %v5311, %v5516
      %v5558 = vmul.f32 %v5312, %v5517
      %v5559 = vmul.f32 %v5313, %v5518
      %v5560 = vmul.f32 %v5314, %v5519
      %v5561 = vmul.f32 %v5315, %v5520
      %v5562 = vmul.f32 %v5316, %v5521
      %v5563 = vmul.f32 %v5317, %v5522
      %v5564 = vmul.f32 %v5318, %v5523
      %v5565 = vmul.f32 %v5319, %v5524
      %v5566 = vmul.f32 %v5320, %v5525
      %v5567 = vmul.f32 %v5321, %v5526
      %v5568 = vmul.f32 %v5322, %v5527
      %v5569 = vmul.f32 %v5323, %v5528
      %v5570 = vmul.f32 %v5324, %v5529
      %v5571 = vmul.f32 %v5325, %v5530
      %v5572 = vmul.f32 %v5326, %v5531
      %v5573 = vld [vmem:[%s557] sm:$0x1]
      %v5574 = vsub.f32 0.0, %v5573
      %v5575 = vmul.f32 %v5574, 1.442695
      %v5576 = vpow.pop %v5575
      %v5577 = vadd.f32 %v5576, 1.0
      %v5578 = vrcp.pop %v5577
      %v5579 = vmul.f32 %v5573, %v5578
      %v5580 = vld [vmem:[%s9] sm:$0xff]
      %v5581 = vld [vmem:[%s9 + $0x8] sm:$0xff]
      %v5582 = vld [vmem:[%s9 + $0x10] sm:$0xff]
      %v5583 = vld [vmem:[%s9 + $0x18] sm:$0xff]
      %v5584 = vld [vmem:[%s10] sm:$0x1]
      %vm5585 = vcmask 261120
      %v5587 = vsel %vm5585, %v5579, 0
      %5589 = vmatprep.subr.mxu0 0.0
      %5590 = vmatpush1.msra.mxu0 %v5580
      %5591 = vmatprep.subr.mxu0 0.0
      %5592 = vmatpush1.msra.mxu0 %v5581
      %5593 = vmatprep.subr.mxu0 0.0
      %5594 = vmatpush1.msra.mxu0 %v5582
      %5595 = vmatprep.subr.mxu0 0.0
      %5596 = vmatpush1.msra.mxu0 %v5583
      %5597 = vmatprep.subr.mxu0 0.0
      %5598 = vmatpush1.msra.mxu0 0.0
      %5599 = vmatprep.subr.mxu0 0.0
      %5600 = vmatpush1.msra.mxu0 0.0
      %5601 = vmatprep.subr.mxu0 0.0
      %5602 = vmatpush1.msra.mxu0 0.0
      %5603 = vmatprep.subr.mxu0 0.0
      %5604 = vmatpush1.msra.mxu0 0.0
      %5605 = vmatprep.subr.mxu0 0.0
      %5606 = vmatpush1.msra.mxu0 0.0
      %5607 = vmatprep.subr.mxu0 0.0
      %5608 = vmatpush1.msra.mxu0 0.0
      %5609 = vmatprep.subr.mxu0 0.0
      %5610 = vmatpush1.msra.mxu0 0.0
      %5611 = vmatprep.subr.mxu0 0.0
      %5612 = vmatpush1.msra.mxu0 0.0
      %5613 = vmatprep.subr.mxu0 0.0
      %5614 = vmatpush1.msra.mxu0 0.0
      %5615 = vmatprep.subr.mxu0 0.0
      %5616 = vmatpush1.msra.mxu0 0.0
      %5617 = vmatprep.subr.mxu0 0.0
      %5618 = vmatpush1.msra.mxu0 0.0
      %5619 = vmatprep.subr.mxu0 0.0
      %5620 = vmatpush1.msra.mxu0 0.0
      %5621 = vmatprep.subr.mxu0 0.0
      %5622 = vmatpush1.msra.mxu0 0.0
      %5623 = vmatprep.subr.mxu0 0.0
      %5624 = vmatpush1.msra.mxu0 0.0
      %5625 = vmatprep.subr.mxu0 0.0
      %5626 = vmatpush1.msra.mxu0 0.0
      %5627 = vmatprep.subr.mxu0 0.0
      %5628 = vmatpush1.msra.mxu0 0.0
      %5629 = vmatprep.subr.mxu0 0.0
      %5630 = vmatpush1.msra.mxu0 0.0
      %5631 = vmatprep.subr.mxu0 0.0
      %5632 = vmatpush1.msra.mxu0 0.0
      %5633 = vmatprep.subr.mxu0 0.0
      %5634 = vmatpush1.msra.mxu0 0.0
      %5635 = vmatprep.subr.mxu0 0.0
      %5636 = vmatpush1.msra.mxu0 0.0
      %5637 = vmatprep.subr.mxu0 0.0
      %5638 = vmatpush1.msra.mxu0 0.0
      %5639 = vmatprep.subr.mxu0 0.0
      %5640 = vmatpush1.msra.mxu0 0.0
      %5641 = vmatprep.subr.mxu0 0.0
      %5642 = vmatpush1.msra.mxu0 0.0
      %5643 = vmatprep.subr.mxu0 0.0
      %5644 = vmatpush1.msra.mxu0 0.0
      %5645 = vmatprep.subr.mxu0 0.0
      %5646 = vmatpush1.msra.mxu0 0.0
      %5647 = vmatprep.subr.mxu0 0.0
      %5648 = vmatpush1.msra.mxu0 0.0
      %5649 = vmatprep.subr.mxu0 0.0
      %5650 = vmatpush1.msra.mxu0 0.0
      %5651 = vmatprep.subr.mxu0 0.0
      %5652 = vmatpush1.msra.mxu0 0.0
      %5653 = vmatprep.mubr.f32.mxu0 0.0
      %5654 = vmatmul.mubr.f32.gmra.mrb[0].mxu0 %v5587
      %v5655 = vpop.f32.mrb[0].mxu0
      %v5656 = vadd.f32 %v5584, %v5655
      %v5657 = vpop.f32.mrb[0].mxu0
      %5658 = vdwg.mxu0
      %v5659 = vlaneseq
      %v5660 = vshrl.u32 %v5659, 7
      %v5661 = vsub.s32 0, %v5660
      %v5662 = vrot.slane %v5656, %v5661
      %v5663 = vadd.f32 %v5532, %v5662
      %v5664 = vadd.f32 %v5533, %v5662
      %v5665 = vadd.f32 %v5534, %v5662
      %v5666 = vadd.f32 %v5535, %v5662
      %v5667 = vadd.f32 %v5536, %v5662
      %v5668 = vadd.f32 %v5537, %v5662
      %v5669 = vadd.f32 %v5538, %v5662
      %v5670 = vadd.f32 %v5539, %v5662
      %v5671 = vadd.f32 %v5540, %v5662
      %v5672 = vadd.f32 %v5541, %v5662
      %v5673 = vadd.f32 %v5542, %v5662
      %v5674 = vadd.f32 %v5543, %v5662
      %v5675 = vadd.f32 %v5544, %v5662
      %v5676 = vadd.f32 %v5545, %v5662
      %v5677 = vadd.f32 %v5546, %v5662
      %v5678 = vadd.f32 %v5547, %v5662
      %v5679 = vadd.f32 %v5548, %v5662
      %v5680 = vadd.f32 %v5549, %v5662
      %v5681 = vadd.f32 %v5550, %v5662
      %v5682 = vadd.f32 %v5551, %v5662
      %v5683 = vadd.f32 %v5552, %v5662
      %v5684 = vadd.f32 %v5553, %v5662
      %v5685 = vadd.f32 %v5554, %v5662
      %v5686 = vadd.f32 %v5555, %v5662
      %v5687 = vadd.f32 %v5556, %v5662
      %v5688 = vadd.f32 %v5557, %v5662
      %v5689 = vadd.f32 %v5558, %v5662
      %v5690 = vadd.f32 %v5559, %v5662
      %v5691 = vadd.f32 %v5560, %v5662
      %v5692 = vadd.f32 %v5561, %v5662
      %v5693 = vadd.f32 %v5562, %v5662
      %v5694 = vadd.f32 %v5563, %v5662
      %v5695 = vadd.f32 %v5564, %v5662
      %v5696 = vadd.f32 %v5565, %v5662
      %v5697 = vadd.f32 %v5566, %v5662
      %v5698 = vadd.f32 %v5567, %v5662
      %v5699 = vadd.f32 %v5568, %v5662
      %v5700 = vadd.f32 %v5569, %v5662
      %v5701 = vadd.f32 %v5570, %v5662
      %v5702 = vadd.f32 %v5571, %v5662
      %v5703 = vadd.f32 %v5572, %v5662
      %v5704 = vmul.f32 %v5663, %v4604
      %v5705 = vmul.f32 %v5664, %v4609
      %v5706 = vmul.f32 %v5665, %v4614
      %v5707 = vmul.f32 %v5666, %v4619
      %v5708 = vmul.f32 %v5667, %v4624
      %v5709 = vmul.f32 %v5668, %v4629
      %v5710 = vmul.f32 %v5669, %v4634
      %v5711 = vmul.f32 %v5670, %v4639
      %v5712 = vmul.f32 %v5671, %v4644
      %v5713 = vmul.f32 %v5672, %v4649
      %v5714 = vmul.f32 %v5673, %v4654
      %v5715 = vmul.f32 %v5674, %v4659
      %v5716 = vmul.f32 %v5675, %v4664
      %v5717 = vmul.f32 %v5676, %v4669
      %v5718 = vmul.f32 %v5677, %v4674
      %v5719 = vmul.f32 %v5678, %v4679
      %v5720 = vmul.f32 %v5679, %v4684
      %v5721 = vmul.f32 %v5680, %v4689
      %v5722 = vmul.f32 %v5681, %v4694
      %v5723 = vmul.f32 %v5682, %v4699
      %v5724 = vmul.f32 %v5683, %v4704
      %v5725 = vmul.f32 %v5684, %v4709
      %v5726 = vmul.f32 %v5685, %v4714
      %v5727 = vmul.f32 %v5686, %v4719
      %v5728 = vmul.f32 %v5687, %v4724
      %v5729 = vmul.f32 %v5688, %v4729
      %v5730 = vmul.f32 %v5689, %v4734
      %v5731 = vmul.f32 %v5690, %v4739
      %v5732 = vmul.f32 %v5691, %v4744
      %v5733 = vmul.f32 %v5692, %v4749
      %v5734 = vmul.f32 %v5693, %v4754
      %v5735 = vmul.f32 %v5694, %v4759
      %v5736 = vmul.f32 %v5695, %v4764
      %v5737 = vmul.f32 %v5696, %v4769
      %v5738 = vmul.f32 %v5697, %v4774
      %v5739 = vmul.f32 %v5698, %v4779
      %v5740 = vmul.f32 %v5699, %v4784
      %v5741 = vmul.f32 %v5700, %v4789
      %v5742 = vmul.f32 %v5701, %v4794
      %v5743 = vmul.f32 %v5702, %v4799
      %v5744 = vmul.f32 %v5703, %v4804
      %v5745 = vld [vmem:[%s11] sm:$0xff]
      %v5746 = vld [vmem:[%s11 + $0x8] sm:$0xff]
      %s5747 = scalar_lea.vmem %s11, 16
      %v5748 = vld [vmem:[%s5747] sm:$0xff]
      %v5749 = vld [vmem:[%s5747 + $0x8] sm:$0xff]
      %v5786 = vrot.slane %v5704, 1
      %v5787 = vrot.slane %v5705, 1
      %v5788 = vsel %vm697, %v5786, %v5787
      %v5789 = vrot.slane %v5706, 1
      %v5790 = vsel %vm697, %v5787, %v5789
      %v5791 = vrot.slane %v5707, 1
      %v5792 = vsel %vm697, %v5789, %v5791
      %v5793 = vrot.slane %v5708, 1
      %v5794 = vsel %vm697, %v5791, %v5793
      %v5795 = vrot.slane %v5709, 1
      %v5796 = vsel %vm697, %v5793, %v5795
      %v5797 = vrot.slane %v5710, 1
      %v5798 = vsel %vm697, %v5795, %v5797
      %v5799 = vrot.slane %v5711, 1
      %v5800 = vsel %vm697, %v5797, %v5799
      %v5801 = vrot.slane %v5712, 1
      %v5802 = vsel %vm697, %v5799, %v5801
      %v5803 = vrot.slane %v5713, 1
      %v5804 = vsel %vm697, %v5801, %v5803
      %v5805 = vrot.slane %v5714, 1
      %v5806 = vsel %vm697, %v5803, %v5805
      %v5807 = vrot.slane %v5715, 1
      %v5808 = vsel %vm697, %v5805, %v5807
      %v5809 = vrot.slane %v5716, 1
      %v5810 = vsel %vm697, %v5807, %v5809
      %v5811 = vrot.slane %v5717, 1
      %v5812 = vsel %vm697, %v5809, %v5811
      %v5813 = vrot.slane %v5718, 1
      %v5814 = vsel %vm697, %v5811, %v5813
      %v5815 = vrot.slane %v5719, 1
      %v5816 = vsel %vm697, %v5813, %v5815
      %v5817 = vrot.slane %v5720, 1
      %v5818 = vsel %vm697, %v5815, %v5817
      %v5819 = vrot.slane %v5721, 1
      %v5820 = vsel %vm697, %v5817, %v5819
      %v5821 = vrot.slane %v5722, 1
      %v5822 = vsel %vm697, %v5819, %v5821
      %v5823 = vrot.slane %v5723, 1
      %v5824 = vsel %vm697, %v5821, %v5823
      %v5825 = vrot.slane %v5724, 1
      %v5826 = vsel %vm697, %v5823, %v5825
      %v5827 = vrot.slane %v5725, 1
      %v5828 = vsel %vm697, %v5825, %v5827
      %v5829 = vrot.slane %v5726, 1
      %v5830 = vsel %vm697, %v5827, %v5829
      %v5831 = vrot.slane %v5727, 1
      %v5832 = vsel %vm697, %v5829, %v5831
      %v5833 = vrot.slane %v5728, 1
      %v5834 = vsel %vm697, %v5831, %v5833
      %v5835 = vrot.slane %v5729, 1
      %v5836 = vsel %vm697, %v5833, %v5835
      %v5837 = vrot.slane %v5730, 1
      %v5838 = vsel %vm697, %v5835, %v5837
      %v5839 = vrot.slane %v5731, 1
      %v5840 = vsel %vm697, %v5837, %v5839
      %v5841 = vrot.slane %v5732, 1
      %v5842 = vsel %vm697, %v5839, %v5841
      %v5843 = vrot.slane %v5733, 1
      %v5844 = vsel %vm697, %v5841, %v5843
      %v5845 = vrot.slane %v5734, 1
      %v5846 = vsel %vm697, %v5843, %v5845
      %v5847 = vrot.slane %v5735, 1
      %v5848 = vsel %vm697, %v5845, %v5847
      %v5849 = vrot.slane %v5736, 1
      %v5850 = vsel %vm697, %v5847, %v5849
      %v5851 = vrot.slane %v5737, 1
      %v5852 = vsel %vm697, %v5849, %v5851
      %v5853 = vrot.slane %v5738, 1
      %v5854 = vsel %vm697, %v5851, %v5853
      %v5855 = vrot.slane %v5739, 1
      %v5856 = vsel %vm697, %v5853, %v5855
      %v5857 = vsel %vm4847, %v5788, 0
      %v5859 = vsel %vm4847, %v5790, 0
      %v5861 = vsel %vm4847, %v5792, 0
      %v5863 = vsel %vm4847, %v5794, 0
      %v5865 = vsel %vm4847, %v5796, 0
      %v5867 = vsel %vm4847, %v5798, 0
      %v5869 = vsel %vm4847, %v5800, 0
      %v5871 = vsel %vm4847, %v5802, 0
      %v5873 = vsel %vm4847, %v5804, 0
      %v5875 = vsel %vm4847, %v5806, 0
      %v5877 = vsel %vm4847, %v5808, 0
      %v5879 = vsel %vm4847, %v5810, 0
      %v5881 = vsel %vm4847, %v5812, 0
      %v5883 = vsel %vm4847, %v5814, 0
      %v5885 = vsel %vm4847, %v5816, 0
      %v5887 = vsel %vm4847, %v5818, 0
      %v5889 = vsel %vm4847, %v5820, 0
      %v5891 = vsel %vm4847, %v5822, 0
      %v5893 = vsel %vm4847, %v5824, 0
      %v5895 = vsel %vm4847, %v5826, 0
      %v5897 = vsel %vm4847, %v5828, 0
      %v5899 = vsel %vm4847, %v5830, 0
      %v5901 = vsel %vm4847, %v5832, 0
      %v5903 = vsel %vm4847, %v5834, 0
      %v5905 = vsel %vm4847, %v5836, 0
      %v5907 = vsel %vm4847, %v5838, 0
      %v5909 = vsel %vm4847, %v5840, 0
      %v5911 = vsel %vm4847, %v5842, 0
      %v5913 = vsel %vm4847, %v5844, 0
      %v5915 = vsel %vm4847, %v5846, 0
      %v5917 = vsel %vm4847, %v5848, 0
      %v5919 = vsel %vm4847, %v5850, 0
      %v5921 = vsel %vm4847, %v5852, 0
      %v5923 = vsel %vm4847, %v5854, 0
      %v5925 = vsel %vm4847, %v5856, 0
      %v5927 = vsel %vm4847, %v5855, 0
      %5929 = vmatprep.subr.mxu0 0.0
      %5930 = vmatpush1.msra.mxu0 %v5748
      %5931 = vmatprep.subr.mxu0 0.0
      %5932 = vmatpush1.msra.mxu0 %v5749
      %5933 = vmatprep.subr.mxu0 0.0
      %5934 = vmatpush1.msra.mxu0 0.0
      %5935 = vmatprep.subr.mxu0 0.0
      %5936 = vmatpush1.msra.mxu0 0.0
      %5937 = vmatprep.subr.mxu0 0.0
      %5938 = vmatpush1.msra.mxu0 0.0
      %5939 = vmatprep.subr.mxu0 0.0
      %5940 = vmatpush1.msra.mxu0 0.0
      %5941 = vmatprep.subr.mxu0 0.0
      %5942 = vmatpush1.msra.mxu0 0.0
      %5943 = vmatprep.subr.mxu0 0.0
      %5944 = vmatpush1.msra.mxu0 0.0
      %5945 = vmatprep.subr.mxu0 0.0
      %5946 = vmatpush1.msra.mxu0 0.0
      %5947 = vmatprep.subr.mxu0 0.0
      %5948 = vmatpush1.msra.mxu0 0.0
      %5949 = vmatprep.subr.mxu0 0.0
      %5950 = vmatpush1.msra.mxu0 0.0
      %5951 = vmatprep.subr.mxu0 0.0
      %5952 = vmatpush1.msra.mxu0 0.0
      %5953 = vmatprep.subr.mxu0 0.0
      %5954 = vmatpush1.msra.mxu0 0.0
      %5955 = vmatprep.subr.mxu0 0.0
      %5956 = vmatpush1.msra.mxu0 0.0
      %5957 = vmatprep.subr.mxu0 0.0
      %5958 = vmatpush1.msra.mxu0 0.0
      %5959 = vmatprep.subr.mxu0 0.0
      %5960 = vmatpush1.msra.mxu0 0.0
      %5961 = vmatprep.subr.mxu0 0.0
      %5962 = vmatpush1.msra.mxu0 0.0
      %5963 = vmatprep.subr.mxu0 0.0
      %5964 = vmatpush1.msra.mxu0 0.0
      %5965 = vmatprep.subr.mxu0 0.0
      %5966 = vmatpush1.msra.mxu0 0.0
      %5967 = vmatprep.subr.mxu0 0.0
      %5968 = vmatpush1.msra.mxu0 0.0
      %5969 = vmatprep.subr.mxu0 0.0
      %5970 = vmatpush1.msra.mxu0 0.0
      %5971 = vmatprep.subr.mxu0 0.0
      %5972 = vmatpush1.msra.mxu0 0.0
      %5973 = vmatprep.subr.mxu0 0.0
      %5974 = vmatpush1.msra.mxu0 0.0
      %5975 = vmatprep.subr.mxu0 0.0
      %5976 = vmatpush1.msra.mxu0 0.0
      %5977 = vmatprep.subr.mxu0 0.0
      %5978 = vmatpush1.msra.mxu0 0.0
      %5979 = vmatprep.subr.mxu0 0.0
      %5980 = vmatpush1.msra.mxu0 0.0
      %5981 = vmatprep.subr.mxu0 0.0
      %5982 = vmatpush1.msra.mxu0 0.0
      %5983 = vmatprep.subr.mxu0 0.0
      %5984 = vmatpush1.msra.mxu0 0.0
      %5985 = vmatprep.subr.mxu0 0.0
      %5986 = vmatpush1.msra.mxu0 0.0
      %5987 = vmatprep.subr.mxu0 0.0
      %5988 = vmatpush1.msra.mxu0 0.0
      %5989 = vmatprep.subr.mxu0 0.0
      %5990 = vmatpush1.msra.mxu0 0.0
      %5991 = vmatprep.subr.mxu0 0.0
      %5992 = vmatpush1.msra.mxu0 0.0
      %5993 = vmatprep.mubr.f32.mxu0 0.0
      %5994 = vmatmul.mubr.f32.gmra.mrb[0].mxu0 %v5857
      %v5995 = vpop.f32.mrb[0].mxu0
      %v5996 = vadd.f32 0.0, %v5995
      %v5997 = vpop.f32.mrb[0].mxu0
      %5998 = vmatprep.mubr.f32.mxu0 0.0
      %5999 = vmatmul.mubr.f32.gmra.mrb[0].mxu0 %v5859
      %v6000 = vpop.f32.mrb[0].mxu0
      %v6001 = vadd.f32 0.0, %v6000
      %v6002 = vpop.f32.mrb[0].mxu0
      %6003 = vmatprep.mubr.f32.mxu0 0.0
      %6004 = vmatmul.mubr.f32.gmra.mrb[0].mxu0 %v5861
      %v6005 = vpop.f32.mrb[0].mxu0
      %v6006 = vadd.f32 0.0, %v6005
      %v6007 = vpop.f32.mrb[0].mxu0
      %6008 = vmatprep.mubr.f32.mxu0 0.0
      %6009 = vmatmul.mubr.f32.gmra.mrb[0].mxu0 %v5863
      %v6010 = vpop.f32.mrb[0].mxu0
      %v6011 = vadd.f32 0.0, %v6010
      %v6012 = vpop.f32.mrb[0].mxu0
      %6013 = vmatprep.mubr.f32.mxu0 0.0
      %6014 = vmatmul.mubr.f32.gmra.mrb[0].mxu0 %v5865
      %v6015 = vpop.f32.mrb[0].mxu0
      %v6016 = vadd.f32 0.0, %v6015
      %v6017 = vpop.f32.mrb[0].mxu0
      %6018 = vmatprep.mubr.f32.mxu0 0.0
      %6019 = vmatmul.mubr.f32.gmra.mrb[0].mxu0 %v5867
      %v6020 = vpop.f32.mrb[0].mxu0
      %v6021 = vadd.f32 0.0, %v6020
      %v6022 = vpop.f32.mrb[0].mxu0
      %6023 = vmatprep.mubr.f32.mxu0 0.0
      %6024 = vmatmul.mubr.f32.gmra.mrb[0].mxu0 %v5869
      %v6025 = vpop.f32.mrb[0].mxu0
      %v6026 = vadd.f32 0.0, %v6025
      %v6027 = vpop.f32.mrb[0].mxu0
      %6028 = vmatprep.mubr.f32.mxu0 0.0
      %6029 = vmatmul.mubr.f32.gmra.mrb[0].mxu0 %v5871
      %v6030 = vpop.f32.mrb[0].mxu0
      %v6031 = vadd.f32 0.0, %v6030
      %v6032 = vpop.f32.mrb[0].mxu0
      %6033 = vmatprep.mubr.f32.mxu0 0.0
      %6034 = vmatmul.mubr.f32.gmra.mrb[0].mxu0 %v5873
      %v6035 = vpop.f32.mrb[0].mxu0
      %v6036 = vadd.f32 0.0, %v6035
      %v6037 = vpop.f32.mrb[0].mxu0
      %6038 = vmatprep.mubr.f32.mxu0 0.0
      %6039 = vmatmul.mubr.f32.gmra.mrb[0].mxu0 %v5875
      %v6040 = vpop.f32.mrb[0].mxu0
      %v6041 = vadd.f32 0.0, %v6040
      %v6042 = vpop.f32.mrb[0].mxu0
      %6043 = vmatprep.mubr.f32.mxu0 0.0
      %6044 = vmatmul.mubr.f32.gmra.mrb[0].mxu0 %v5877
      %v6045 = vpop.f32.mrb[0].mxu0
      %v6046 = vadd.f32 0.0, %v6045
      %v6047 = vpop.f32.mrb[0].mxu0
      %6048 = vmatprep.mubr.f32.mxu0 0.0
      %6049 = vmatmul.mubr.f32.gmra.mrb[0].mxu0 %v5879
      %v6050 = vpop.f32.mrb[0].mxu0
      %v6051 = vadd.f32 0.0, %v6050
      %v6052 = vpop.f32.mrb[0].mxu0
      %6053 = vmatprep.mubr.f32.mxu0 0.0
      %6054 = vmatmul.mubr.f32.gmra.mrb[0].mxu0 %v5881
      %v6055 = vpop.f32.mrb[0].mxu0
      %v6056 = vadd.f32 0.0, %v6055
      %v6057 = vpop.f32.mrb[0].mxu0
      %6058 = vmatprep.mubr.f32.mxu0 0.0
      %6059 = vmatmul.mubr.f32.gmra.mrb[0].mxu0 %v5883
      %v6060 = vpop.f32.mrb[0].mxu0
      %v6061 = vadd.f32 0.0, %v6060
      %v6062 = vpop.f32.mrb[0].mxu0
      %6063 = vmatprep.mubr.f32.mxu0 0.0
      %6064 = vmatmul.mubr.f32.gmra.mrb[0].mxu0 %v5885
      %v6065 = vpop.f32.mrb[0].mxu0
      %v6066 = vadd.f32 0.0, %v6065
      %v6067 = vpop.f32.mrb[0].mxu0
      %6068 = vmatprep.mubr.f32.mxu0 0.0
      %6069 = vmatmul.mubr.f32.gmra.mrb[0].mxu0 %v5887
      %v6070 = vpop.f32.mrb[0].mxu0
      %v6071 = vadd.f32 0.0, %v6070
      %v6072 = vpop.f32.mrb[0].mxu0
      %6073 = vmatprep.mubr.f32.mxu0 0.0
      %6074 = vmatmul.mubr.f32.gmra.mrb[0].mxu0 %v5889
      %v6075 = vpop.f32.mrb[0].mxu0
      %v6076 = vadd.f32 0.0, %v6075
      %v6077 = vpop.f32.mrb[0].mxu0
      %6078 = vmatprep.mubr.f32.mxu0 0.0
      %6079 = vmatmul.mubr.f32.gmra.mrb[0].mxu0 %v5891
      %v6080 = vpop.f32.mrb[0].mxu0
      %v6081 = vadd.f32 0.0, %v6080
      %v6082 = vpop.f32.mrb[0].mxu0
      %6083 = vmatprep.mubr.f32.mxu0 0.0
      %6084 = vmatmul.mubr.f32.gmra.mrb[0].mxu0 %v5893
      %v6085 = vpop.f32.mrb[0].mxu0
      %v6086 = vadd.f32 0.0, %v6085
      %v6087 = vpop.f32.mrb[0].mxu0
      %6088 = vmatprep.mubr.f32.mxu0 0.0
      %6089 = vmatmul.mubr.f32.gmra.mrb[0].mxu0 %v5895
      %v6090 = vpop.f32.mrb[0].mxu0
      %v6091 = vadd.f32 0.0, %v6090
      %v6092 = vpop.f32.mrb[0].mxu0
      %6093 = vmatprep.mubr.f32.mxu0 0.0
      %6094 = vmatmul.mubr.f32.gmra.mrb[0].mxu0 %v5897
      %v6095 = vpop.f32.mrb[0].mxu0
      %v6096 = vadd.f32 0.0, %v6095
      %v6097 = vpop.f32.mrb[0].mxu0
      %6098 = vmatprep.mubr.f32.mxu0 0.0
      %6099 = vmatmul.mubr.f32.gmra.mrb[0].mxu0 %v5899
      %v6100 = vpop.f32.mrb[0].mxu0
      %v6101 = vadd.f32 0.0, %v6100
      %v6102 = vpop.f32.mrb[0].mxu0
      %6103 = vmatprep.mubr.f32.mxu0 0.0
      %6104 = vmatmul.mubr.f32.gmra.mrb[0].mxu0 %v5901
      %v6105 = vpop.f32.mrb[0].mxu0
      %v6106 = vadd.f32 0.0, %v6105
      %v6107 = vpop.f32.mrb[0].mxu0
      %6108 = vmatprep.mubr.f32.mxu0 0.0
      %6109 = vmatmul.mubr.f32.gmra.mrb[0].mxu0 %v5903
      %v6110 = vpop.f32.mrb[0].mxu0
      %v6111 = vadd.f32 0.0, %v6110
      %v6112 = vpop.f32.mrb[0].mxu0
      %6113 = vmatprep.mubr.f32.mxu0 0.0
      %6114 = vmatmul.mubr.f32.gmra.mrb[0].mxu0 %v5905
      %v6115 = vpop.f32.mrb[0].mxu0
      %v6116 = vadd.f32 0.0, %v6115
      %v6117 = vpop.f32.mrb[0].mxu0
      %6118 = vmatprep.mubr.f32.mxu0 0.0
      %6119 = vmatmul.mubr.f32.gmra.mrb[0].mxu0 %v5907
      %v6120 = vpop.f32.mrb[0].mxu0
      %v6121 = vadd.f32 0.0, %v6120
      %v6122 = vpop.f32.mrb[0].mxu0
      %6123 = vmatprep.mubr.f32.mxu0 0.0
      %6124 = vmatmul.mubr.f32.gmra.mrb[0].mxu0 %v5909
      %v6125 = vpop.f32.mrb[0].mxu0
      %v6126 = vadd.f32 0.0, %v6125
      %v6127 = vpop.f32.mrb[0].mxu0
      %6128 = vmatprep.mubr.f32.mxu0 0.0
      %6129 = vmatmul.mubr.f32.gmra.mrb[0].mxu0 %v5911
      %v6130 = vpop.f32.mrb[0].mxu0
      %v6131 = vadd.f32 0.0, %v6130
      %v6132 = vpop.f32.mrb[0].mxu0
      %6133 = vmatprep.mubr.f32.mxu0 0.0
      %6134 = vmatmul.mubr.f32.gmra.mrb[0].mxu0 %v5913
      %v6135 = vpop.f32.mrb[0].mxu0
      %v6136 = vadd.f32 0.0, %v6135
      %v6137 = vpop.f32.mrb[0].mxu0
      %6138 = vmatprep.mubr.f32.mxu0 0.0
      %6139 = vmatmul.mubr.f32.gmra.mrb[0].mxu0 %v5915
      %v6140 = vpop.f32.mrb[0].mxu0
      %v6141 = vadd.f32 0.0, %v6140
      %v6142 = vpop.f32.mrb[0].mxu0
      %6143 = vmatprep.mubr.f32.mxu0 0.0
      %6144 = vmatmul.mubr.f32.gmra.mrb[0].mxu0 %v5917
      %v6145 = vpop.f32.mrb[0].mxu0
      %v6146 = vadd.f32 0.0, %v6145
      %v6147 = vpop.f32.mrb[0].mxu0
      %6148 = vmatprep.mubr.f32.mxu0 0.0
      %6149 = vmatmul.mubr.f32.gmra.mrb[0].mxu0 %v5919
      %v6150 = vpop.f32.mrb[0].mxu0
      %v6151 = vadd.f32 0.0, %v6150
      %v6152 = vpop.f32.mrb[0].mxu0
      %6153 = vmatprep.mubr.f32.mxu0 0.0
      %6154 = vmatmul.mubr.f32.gmra.mrb[0].mxu0 %v5921
      %v6155 = vpop.f32.mrb[0].mxu0
      %v6156 = vadd.f32 0.0, %v6155
      %v6157 = vpop.f32.mrb[0].mxu0
      %6158 = vmatprep.mubr.f32.mxu0 0.0
      %6159 = vmatmul.mubr.f32.gmra.mrb[0].mxu0 %v5923
      %v6160 = vpop.f32.mrb[0].mxu0
      %v6161 = vadd.f32 0.0, %v6160
      %v6162 = vpop.f32.mrb[0].mxu0
      %6163 = vmatprep.mubr.f32.mxu0 0.0
      %6164 = vmatmul.mubr.f32.gmra.mrb[0].mxu0 %v5925
      %v6165 = vpop.f32.mrb[0].mxu0
      %v6166 = vadd.f32 0.0, %v6165
      %v6167 = vpop.f32.mrb[0].mxu0
      %6168 = vmatprep.mubr.f32.mxu0 0.0
      %6169 = vmatmul.mubr.f32.gmra.mrb[0].mxu0 %v5927
      %v6170 = vpop.f32.mrb[0].mxu0
      %v6171 = vadd.f32 0.0, %v6170
      %v6172 = vpop.f32.mrb[0].mxu0
      %6173 = vdwg.mxu0
      %v6174 = vsel %vm4847, %v5704, 0
      %v6176 = vsel %vm4847, %v5705, 0
      %v6178 = vsel %vm4847, %v5706, 0
      %v6180 = vsel %vm4847, %v5707, 0
      %v6182 = vsel %vm4847, %v5708, 0
      %v6184 = vsel %vm4847, %v5709, 0
      %v6186 = vsel %vm4847, %v5710, 0
      %v6188 = vsel %vm4847, %v5711, 0
      %v6190 = vsel %vm4847, %v5712, 0
      %v6192 = vsel %vm4847, %v5713, 0
      %v6194 = vsel %vm4847, %v5714, 0
      %v6196 = vsel %vm4847, %v5715, 0
      %v6198 = vsel %vm4847, %v5716, 0
      %v6200 = vsel %vm4847, %v5717, 0
      %v6202 = vsel %vm4847, %v5718, 0
      %v6204 = vsel %vm4847, %v5719, 0
      %v6206 = vsel %vm4847, %v5720, 0
      %v6208 = vsel %vm4847, %v5721, 0
      %v6210 = vsel %vm4847, %v5722, 0
      %v6212 = vsel %vm4847, %v5723, 0
      %v6214 = vsel %vm4847, %v5724, 0
      %v6216 = vsel %vm4847, %v5725, 0
      %v6218 = vsel %vm4847, %v5726, 0
      %v6220 = vsel %vm4847, %v5727, 0
      %v6222 = vsel %vm4847, %v5728, 0
      %v6224 = vsel %vm4847, %v5729, 0
      %v6226 = vsel %vm4847, %v5730, 0
      %v6228 = vsel %vm4847, %v5731, 0
      %v6230 = vsel %vm4847, %v5732, 0
      %v6232 = vsel %vm4847, %v5733, 0
      %v6234 = vsel %vm4847, %v5734, 0
      %v6236 = vsel %vm4847, %v5735, 0
      %v6238 = vsel %vm4847, %v5736, 0
      %v6240 = vsel %vm4847, %v5737, 0
      %v6242 = vsel %vm4847, %v5738, 0
      %v6244 = vsel %vm4847, %v5739, 0
      %6246 = vmatprep.subr.mxu0 0.0
      %6247 = vmatpush1.msra.mxu0 %v5745
      %6248 = vmatprep.subr.mxu0 0.0
      %6249 = vmatpush1.msra.mxu0 %v5746
      %6250 = vmatprep.subr.mxu0 0.0
      %6251 = vmatpush1.msra.mxu0 0.0
      %6252 = vmatprep.subr.mxu0 0.0
      %6253 = vmatpush1.msra.mxu0 0.0
      %6254 = vmatprep.subr.mxu0 0.0
      %6255 = vmatpush1.msra.mxu0 0.0
      %6256 = vmatprep.subr.mxu0 0.0
      %6257 = vmatpush1.msra.mxu0 0.0
      %6258 = vmatprep.subr.mxu0 0.0
      %6259 = vmatpush1.msra.mxu0 0.0
      %6260 = vmatprep.subr.mxu0 0.0
      %6261 = vmatpush1.msra.mxu0 0.0
      %6262 = vmatprep.subr.mxu0 0.0
      %6263 = vmatpush1.msra.mxu0 0.0
      %6264 = vmatprep.subr.mxu0 0.0
      %6265 = vmatpush1.msra.mxu0 0.0
      %6266 = vmatprep.subr.mxu0 0.0
      %6267 = vmatpush1.msra.mxu0 0.0
      %6268 = vmatprep.subr.mxu0 0.0
      %6269 = vmatpush1.msra.mxu0 0.0
      %6270 = vmatprep.subr.mxu0 0.0
      %6271 = vmatpush1.msra.mxu0 0.0
      %6272 = vmatprep.subr.mxu0 0.0
      %6273 = vmatpush1.msra.mxu0 0.0
      %6274 = vmatprep.subr.mxu0 0.0
      %6275 = vmatpush1.msra.mxu0 0.0
      %6276 = vmatprep.subr.mxu0 0.0
      %6277 = vmatpush1.msra.mxu0 0.0
      %6278 = vmatprep.subr.mxu0 0.0
      %6279 = vmatpush1.msra.mxu0 0.0
      %6280 = vmatprep.subr.mxu0 0.0
      %6281 = vmatpush1.msra.mxu0 0.0
      %6282 = vmatprep.subr.mxu0 0.0
      %6283 = vmatpush1.msra.mxu0 0.0
      %6284 = vmatprep.subr.mxu0 0.0
      %6285 = vmatpush1.msra.mxu0 0.0
      %6286 = vmatprep.subr.mxu0 0.0
      %6287 = vmatpush1.msra.mxu0 0.0
      %6288 = vmatprep.subr.mxu0 0.0
      %6289 = vmatpush1.msra.mxu0 0.0
      %6290 = vmatprep.subr.mxu0 0.0
      %6291 = vmatpush1.msra.mxu0 0.0
      %6292 = vmatprep.subr.mxu0 0.0
      %6293 = vmatpush1.msra.mxu0 0.0
      %6294 = vmatprep.subr.mxu0 0.0
      %6295 = vmatpush1.msra.mxu0 0.0
      %6296 = vmatprep.subr.mxu0 0.0
      %6297 = vmatpush1.msra.mxu0 0.0
      %6298 = vmatprep.subr.mxu0 0.0
      %6299 = vmatpush1.msra.mxu0 0.0
      %6300 = vmatprep.subr.mxu0 0.0
      %6301 = vmatpush1.msra.mxu0 0.0
      %6302 = vmatprep.subr.mxu0 0.0
      %6303 = vmatpush1.msra.mxu0 0.0
      %6304 = vmatprep.subr.mxu0 0.0
      %6305 = vmatpush1.msra.mxu0 0.0
      %6306 = vmatprep.subr.mxu0 0.0
      %6307 = vmatpush1.msra.mxu0 0.0
      %6308 = vmatprep.subr.mxu0 0.0
      %6309 = vmatpush1.msra.mxu0 0.0
      %6310 = vmatprep.mubr.f32.mxu0 0.0
      %6311 = vmatmul.mubr.f32.gmra.mrb[0].mxu0 %v6174
      %v6312 = vpop.f32.mrb[0].mxu0
      %v6313 = vadd.f32 %v5996, %v6312
      %v6314 = vpop.f32.mrb[0].mxu0
      %6315 = vmatprep.mubr.f32.mxu0 0.0
      %6316 = vmatmul.mubr.f32.gmra.mrb[0].mxu0 %v6176
      %v6317 = vpop.f32.mrb[0].mxu0
      %v6318 = vadd.f32 %v6001, %v6317
      %v6319 = vpop.f32.mrb[0].mxu0
      %6320 = vmatprep.mubr.f32.mxu0 0.0
      %6321 = vmatmul.mubr.f32.gmra.mrb[0].mxu0 %v6178
      %v6322 = vpop.f32.mrb[0].mxu0
      %v6323 = vadd.f32 %v6006, %v6322
      %v6324 = vpop.f32.mrb[0].mxu0
      %6325 = vmatprep.mubr.f32.mxu0 0.0
      %6326 = vmatmul.mubr.f32.gmra.mrb[0].mxu0 %v6180
      %v6327 = vpop.f32.mrb[0].mxu0
      %v6328 = vadd.f32 %v6011, %v6327
      %v6329 = vpop.f32.mrb[0].mxu0
      %6330 = vmatprep.mubr.f32.mxu0 0.0
      %6331 = vmatmul.mubr.f32.gmra.mrb[0].mxu0 %v6182
      %v6332 = vpop.f32.mrb[0].mxu0
      %v6333 = vadd.f32 %v6016, %v6332
      %v6334 = vpop.f32.mrb[0].mxu0
      %6335 = vmatprep.mubr.f32.mxu0 0.0
      %6336 = vmatmul.mubr.f32.gmra.mrb[0].mxu0 %v6184
      %v6337 = vpop.f32.mrb[0].mxu0
      %v6338 = vadd.f32 %v6021, %v6337
      %v6339 = vpop.f32.mrb[0].mxu0
      %6340 = vmatprep.mubr.f32.mxu0 0.0
      %6341 = vmatmul.mubr.f32.gmra.mrb[0].mxu0 %v6186
      %v6342 = vpop.f32.mrb[0].mxu0
      %v6343 = vadd.f32 %v6026, %v6342
      %v6344 = vpop.f32.mrb[0].mxu0
      %6345 = vmatprep.mubr.f32.mxu0 0.0
      %6346 = vmatmul.mubr.f32.gmra.mrb[0].mxu0 %v6188
      %v6347 = vpop.f32.mrb[0].mxu0
      %v6348 = vadd.f32 %v6031, %v6347
      %v6349 = vpop.f32.mrb[0].mxu0
      %6350 = vmatprep.mubr.f32.mxu0 0.0
      %6351 = vmatmul.mubr.f32.gmra.mrb[0].mxu0 %v6190
      %v6352 = vpop.f32.mrb[0].mxu0
      %v6353 = vadd.f32 %v6036, %v6352
      %v6354 = vpop.f32.mrb[0].mxu0
      %6355 = vmatprep.mubr.f32.mxu0 0.0
      %6356 = vmatmul.mubr.f32.gmra.mrb[0].mxu0 %v6192
      %v6357 = vpop.f32.mrb[0].mxu0
      %v6358 = vadd.f32 %v6041, %v6357
      %v6359 = vpop.f32.mrb[0].mxu0
      %6360 = vmatprep.mubr.f32.mxu0 0.0
      %6361 = vmatmul.mubr.f32.gmra.mrb[0].mxu0 %v6194
      %v6362 = vpop.f32.mrb[0].mxu0
      %v6363 = vadd.f32 %v6046, %v6362
      %v6364 = vpop.f32.mrb[0].mxu0
      %6365 = vmatprep.mubr.f32.mxu0 0.0
      %6366 = vmatmul.mubr.f32.gmra.mrb[0].mxu0 %v6196
      %v6367 = vpop.f32.mrb[0].mxu0
      %v6368 = vadd.f32 %v6051, %v6367
      %v6369 = vpop.f32.mrb[0].mxu0
      %6370 = vmatprep.mubr.f32.mxu0 0.0
      %6371 = vmatmul.mubr.f32.gmra.mrb[0].mxu0 %v6198
      %v6372 = vpop.f32.mrb[0].mxu0
      %v6373 = vadd.f32 %v6056, %v6372
      %v6374 = vpop.f32.mrb[0].mxu0
      %6375 = vmatprep.mubr.f32.mxu0 0.0
      %6376 = vmatmul.mubr.f32.gmra.mrb[0].mxu0 %v6200
      %v6377 = vpop.f32.mrb[0].mxu0
      %v6378 = vadd.f32 %v6061, %v6377
      %v6379 = vpop.f32.mrb[0].mxu0
      %6380 = vmatprep.mubr.f32.mxu0 0.0
      %6381 = vmatmul.mubr.f32.gmra.mrb[0].mxu0 %v6202
      %v6382 = vpop.f32.mrb[0].mxu0
      %v6383 = vadd.f32 %v6066, %v6382
      %v6384 = vpop.f32.mrb[0].mxu0
      %6385 = vmatprep.mubr.f32.mxu0 0.0
      %6386 = vmatmul.mubr.f32.gmra.mrb[0].mxu0 %v6204
      %v6387 = vpop.f32.mrb[0].mxu0
      %v6388 = vadd.f32 %v6071, %v6387
      %v6389 = vpop.f32.mrb[0].mxu0
      %6390 = vmatprep.mubr.f32.mxu0 0.0
      %6391 = vmatmul.mubr.f32.gmra.mrb[0].mxu0 %v6206
      %v6392 = vpop.f32.mrb[0].mxu0
      %v6393 = vadd.f32 %v6076, %v6392
      %v6394 = vpop.f32.mrb[0].mxu0
      %6395 = vmatprep.mubr.f32.mxu0 0.0
      %6396 = vmatmul.mubr.f32.gmra.mrb[0].mxu0 %v6208
      %v6397 = vpop.f32.mrb[0].mxu0
      %v6398 = vadd.f32 %v6081, %v6397
      %v6399 = vpop.f32.mrb[0].mxu0
      %6400 = vmatprep.mubr.f32.mxu0 0.0
      %6401 = vmatmul.mubr.f32.gmra.mrb[0].mxu0 %v6210
      %v6402 = vpop.f32.mrb[0].mxu0
      %v6403 = vadd.f32 %v6086, %v6402
      %v6404 = vpop.f32.mrb[0].mxu0
      %6405 = vmatprep.mubr.f32.mxu0 0.0
      %6406 = vmatmul.mubr.f32.gmra.mrb[0].mxu0 %v6212
      %v6407 = vpop.f32.mrb[0].mxu0
      %v6408 = vadd.f32 %v6091, %v6407
      %v6409 = vpop.f32.mrb[0].mxu0
      %6410 = vmatprep.mubr.f32.mxu0 0.0
      %6411 = vmatmul.mubr.f32.gmra.mrb[0].mxu0 %v6214
      %v6412 = vpop.f32.mrb[0].mxu0
      %v6413 = vadd.f32 %v6096, %v6412
      %v6414 = vpop.f32.mrb[0].mxu0
      %6415 = vmatprep.mubr.f32.mxu0 0.0
      %6416 = vmatmul.mubr.f32.gmra.mrb[0].mxu0 %v6216
      %v6417 = vpop.f32.mrb[0].mxu0
      %v6418 = vadd.f32 %v6101, %v6417
      %v6419 = vpop.f32.mrb[0].mxu0
      %6420 = vmatprep.mubr.f32.mxu0 0.0
      %6421 = vmatmul.mubr.f32.gmra.mrb[0].mxu0 %v6218
      %v6422 = vpop.f32.mrb[0].mxu0
      %v6423 = vadd.f32 %v6106, %v6422
      %v6424 = vpop.f32.mrb[0].mxu0
      %6425 = vmatprep.mubr.f32.mxu0 0.0
      %6426 = vmatmul.mubr.f32.gmra.mrb[0].mxu0 %v6220
      %v6427 = vpop.f32.mrb[0].mxu0
      %v6428 = vadd.f32 %v6111, %v6427
      %v6429 = vpop.f32.mrb[0].mxu0
      %6430 = vmatprep.mubr.f32.mxu0 0.0
      %6431 = vmatmul.mubr.f32.gmra.mrb[0].mxu0 %v6222
      %v6432 = vpop.f32.mrb[0].mxu0
      %v6433 = vadd.f32 %v6116, %v6432
      %v6434 = vpop.f32.mrb[0].mxu0
      %6435 = vmatprep.mubr.f32.mxu0 0.0
      %6436 = vmatmul.mubr.f32.gmra.mrb[0].mxu0 %v6224
      %v6437 = vpop.f32.mrb[0].mxu0
      %v6438 = vadd.f32 %v6121, %v6437
      %v6439 = vpop.f32.mrb[0].mxu0
      %6440 = vmatprep.mubr.f32.mxu0 0.0
      %6441 = vmatmul.mubr.f32.gmra.mrb[0].mxu0 %v6226
      %v6442 = vpop.f32.mrb[0].mxu0
      %v6443 = vadd.f32 %v6126, %v6442
      %v6444 = vpop.f32.mrb[0].mxu0
      %6445 = vmatprep.mubr.f32.mxu0 0.0
      %6446 = vmatmul.mubr.f32.gmra.mrb[0].mxu0 %v6228
      %v6447 = vpop.f32.mrb[0].mxu0
      %v6448 = vadd.f32 %v6131, %v6447
      %v6449 = vpop.f32.mrb[0].mxu0
      %6450 = vmatprep.mubr.f32.mxu0 0.0
      %6451 = vmatmul.mubr.f32.gmra.mrb[0].mxu0 %v6230
      %v6452 = vpop.f32.mrb[0].mxu0
      %v6453 = vadd.f32 %v6136, %v6452
      %v6454 = vpop.f32.mrb[0].mxu0
      %6455 = vmatprep.mubr.f32.mxu0 0.0
      %6456 = vmatmul.mubr.f32.gmra.mrb[0].mxu0 %v6232
      %v6457 = vpop.f32.mrb[0].mxu0
      %v6458 = vadd.f32 %v6141, %v6457
      %v6459 = vpop.f32.mrb[0].mxu0
      %6460 = vmatprep.mubr.f32.mxu0 0.0
      %6461 = vmatmul.mubr.f32.gmra.mrb[0].mxu0 %v6234
      %v6462 = vpop.f32.mrb[0].mxu0
      %v6463 = vadd.f32 %v6146, %v6462
      %v6464 = vpop.f32.mrb[0].mxu0
      %6465 = vmatprep.mubr.f32.mxu0 0.0
      %6466 = vmatmul.mubr.f32.gmra.mrb[0].mxu0 %v6236
      %v6467 = vpop.f32.mrb[0].mxu0
      %v6468 = vadd.f32 %v6151, %v6467
      %v6469 = vpop.f32.mrb[0].mxu0
      %6470 = vmatprep.mubr.f32.mxu0 0.0
      %6471 = vmatmul.mubr.f32.gmra.mrb[0].mxu0 %v6238
      %v6472 = vpop.f32.mrb[0].mxu0
      %v6473 = vadd.f32 %v6156, %v6472
      %v6474 = vpop.f32.mrb[0].mxu0
      %6475 = vmatprep.mubr.f32.mxu0 0.0
      %6476 = vmatmul.mubr.f32.gmra.mrb[0].mxu0 %v6240
      %v6477 = vpop.f32.mrb[0].mxu0
      %v6478 = vadd.f32 %v6161, %v6477
      %v6479 = vpop.f32.mrb[0].mxu0
      %6480 = vmatprep.mubr.f32.mxu0 0.0
      %6481 = vmatmul.mubr.f32.gmra.mrb[0].mxu0 %v6242
      %v6482 = vpop.f32.mrb[0].mxu0
      %v6483 = vadd.f32 %v6166, %v6482
      %v6484 = vpop.f32.mrb[0].mxu0
      %6485 = vmatprep.mubr.f32.mxu0 0.0
      %6486 = vmatmul.mubr.f32.gmra.mrb[0].mxu0 %v6244
      %v6487 = vpop.f32.mrb[0].mxu0
      %v6488 = vadd.f32 %v6171, %v6487
      %v6489 = vpop.f32.mrb[0].mxu0
      %6490 = vdwg.mxu0
      %s6491 = scalar_lea.vmem %s11, 32
      %v6492 = vld [vmem:[%s6491] sm:$0xff]
      %v6493 = vld [vmem:[%s6491 + $0x8] sm:$0xff]
      %v6494 = vrot.slane %v5704, 2
      %v6495 = vrot.slane %v5705, 2
      %v6496 = vsel %vm1493, %v6494, %v6495
      %v6497 = vrot.slane %v5706, 2
      %v6498 = vsel %vm1493, %v6495, %v6497
      %v6499 = vrot.slane %v5707, 2
      %v6500 = vsel %vm1493, %v6497, %v6499
      %v6501 = vrot.slane %v5708, 2
      %v6502 = vsel %vm1493, %v6499, %v6501
      %v6503 = vrot.slane %v5709, 2
      %v6504 = vsel %vm1493, %v6501, %v6503
      %v6505 = vrot.slane %v5710, 2
      %v6506 = vsel %vm1493, %v6503, %v6505
      %v6507 = vrot.slane %v5711, 2
      %v6508 = vsel %vm1493, %v6505, %v6507
      %v6509 = vrot.slane %v5712, 2
      %v6510 = vsel %vm1493, %v6507, %v6509
      %v6511 = vrot.slane %v5713, 2
      %v6512 = vsel %vm1493, %v6509, %v6511
      %v6513 = vrot.slane %v5714, 2
      %v6514 = vsel %vm1493, %v6511, %v6513
      %v6515 = vrot.slane %v5715, 2
      %v6516 = vsel %vm1493, %v6513, %v6515
      %v6517 = vrot.slane %v5716, 2
      %v6518 = vsel %vm1493, %v6515, %v6517
      %v6519 = vrot.slane %v5717, 2
      %v6520 = vsel %vm1493, %v6517, %v6519
      %v6521 = vrot.slane %v5718, 2
      %v6522 = vsel %vm1493, %v6519, %v6521
      %v6523 = vrot.slane %v5719, 2
      %v6524 = vsel %vm1493, %v6521, %v6523
      %v6525 = vrot.slane %v5720, 2
      %v6526 = vsel %vm1493, %v6523, %v6525
      %v6527 = vrot.slane %v5721, 2
      %v6528 = vsel %vm1493, %v6525, %v6527
      %v6529 = vrot.slane %v5722, 2
      %v6530 = vsel %vm1493, %v6527, %v6529
      %v6531 = vrot.slane %v5723, 2
      %v6532 = vsel %vm1493, %v6529, %v6531
      %v6533 = vrot.slane %v5724, 2
      %v6534 = vsel %vm1493, %v6531, %v6533
      %v6535 = vrot.slane %v5725, 2
      %v6536 = vsel %vm1493, %v6533, %v6535
      %v6537 = vrot.slane %v5726, 2
      %v6538 = vsel %vm1493, %v6535, %v6537
      %v6539 = vrot.slane %v5727, 2
      %v6540 = vsel %vm1493, %v6537, %v6539
      %v6541 = vrot.slane %v5728, 2
      %v6542 = vsel %vm1493, %v6539, %v6541
      %v6543 = vrot.slane %v5729, 2
      %v6544 = vsel %vm1493, %v6541, %v6543
      %v6545 = vrot.slane %v5730, 2
      %v6546 = vsel %vm1493, %v6543, %v6545
      %v6547 = vrot.slane %v5731, 2
      %v6548 = vsel %vm1493, %v6545, %v6547
      %v6549 = vrot.slane %v5732, 2
      %v6550 = vsel %vm1493, %v6547, %v6549
      %v6551 = vrot.slane %v5733, 2
      %v6552 = vsel %vm1493, %v6549, %v6551
      %v6553 = vrot.slane %v5734, 2
      %v6554 = vsel %vm1493, %v6551, %v6553
      %v6555 = vrot.slane %v5735, 2
      %v6556 = vsel %vm1493, %v6553, %v6555
      %v6557 = vrot.slane %v5736, 2
      %v6558 = vsel %vm1493, %v6555, %v6557
      %v6559 = vrot.slane %v5737, 2
      %v6560 = vsel %vm1493, %v6557, %v6559
      %v6561 = vrot.slane %v5738, 2
      %v6562 = vsel %vm1493, %v6559, %v6561
      %v6563 = vrot.slane %v5739, 2
      %v6564 = vsel %vm1493, %v6561, %v6563
      %v6565 = vsel %vm4847, %v6496, 0
      %v6567 = vsel %vm4847, %v6498, 0
      %v6569 = vsel %vm4847, %v6500, 0
      %v6571 = vsel %vm4847, %v6502, 0
      %v6573 = vsel %vm4847, %v6504, 0
      %v6575 = vsel %vm4847, %v6506, 0
      %v6577 = vsel %vm4847, %v6508, 0
      %v6579 = vsel %vm4847, %v6510, 0
      %v6581 = vsel %vm4847, %v6512, 0
      %v6583 = vsel %vm4847, %v6514, 0
      %v6585 = vsel %vm4847, %v6516, 0
      %v6587 = vsel %vm4847, %v6518, 0
      %v6589 = vsel %vm4847, %v6520, 0
      %v6591 = vsel %vm4847, %v6522, 0
      %v6593 = vsel %vm4847, %v6524, 0
      %v6595 = vsel %vm4847, %v6526, 0
      %v6597 = vsel %vm4847, %v6528, 0
      %v6599 = vsel %vm4847, %v6530, 0
      %v6601 = vsel %vm4847, %v6532, 0
      %v6603 = vsel %vm4847, %v6534, 0
      %v6605 = vsel %vm4847, %v6536, 0
      %v6607 = vsel %vm4847, %v6538, 0
      %v6609 = vsel %vm4847, %v6540, 0
      %v6611 = vsel %vm4847, %v6542, 0
      %v6613 = vsel %vm4847, %v6544, 0
      %v6615 = vsel %vm4847, %v6546, 0
      %v6617 = vsel %vm4847, %v6548, 0
      %v6619 = vsel %vm4847, %v6550, 0
      %v6621 = vsel %vm4847, %v6552, 0
      %v6623 = vsel %vm4847, %v6554, 0
      %v6625 = vsel %vm4847, %v6556, 0
      %v6627 = vsel %vm4847, %v6558, 0
      %v6629 = vsel %vm4847, %v6560, 0
      %v6631 = vsel %vm4847, %v6562, 0
      %v6633 = vsel %vm4847, %v6564, 0
      %v6635 = vsel %vm4847, %v6563, 0
      %6637 = vmatprep.subr.mxu0 0.0
      %6638 = vmatpush1.msra.mxu0 %v6492
      %6639 = vmatprep.subr.mxu0 0.0
      %6640 = vmatpush1.msra.mxu0 %v6493
      %6641 = vmatprep.subr.mxu0 0.0
      %6642 = vmatpush1.msra.mxu0 0.0
      %6643 = vmatprep.subr.mxu0 0.0
      %6644 = vmatpush1.msra.mxu0 0.0
      %6645 = vmatprep.subr.mxu0 0.0
      %6646 = vmatpush1.msra.mxu0 0.0
      %6647 = vmatprep.subr.mxu0 0.0
      %6648 = vmatpush1.msra.mxu0 0.0
      %6649 = vmatprep.subr.mxu0 0.0
      %6650 = vmatpush1.msra.mxu0 0.0
      %6651 = vmatprep.subr.mxu0 0.0
      %6652 = vmatpush1.msra.mxu0 0.0
      %6653 = vmatprep.subr.mxu0 0.0
      %6654 = vmatpush1.msra.mxu0 0.0
      %6655 = vmatprep.subr.mxu0 0.0
      %6656 = vmatpush1.msra.mxu0 0.0
      %6657 = vmatprep.subr.mxu0 0.0
      %6658 = vmatpush1.msra.mxu0 0.0
      %6659 = vmatprep.subr.mxu0 0.0
      %6660 = vmatpush1.msra.mxu0 0.0
      %6661 = vmatprep.subr.mxu0 0.0
      %6662 = vmatpush1.msra.mxu0 0.0
      %6663 = vmatprep.subr.mxu0 0.0
      %6664 = vmatpush1.msra.mxu0 0.0
      %6665 = vmatprep.subr.mxu0 0.0
      %6666 = vmatpush1.msra.mxu0 0.0
      %6667 = vmatprep.subr.mxu0 0.0
      %6668 = vmatpush1.msra.mxu0 0.0
      %6669 = vmatprep.subr.mxu0 0.0
      %6670 = vmatpush1.msra.mxu0 0.0
      %6671 = vmatprep.subr.mxu0 0.0
      %6672 = vmatpush1.msra.mxu0 0.0
      %6673 = vmatprep.subr.mxu0 0.0
      %6674 = vmatpush1.msra.mxu0 0.0
      %6675 = vmatprep.subr.mxu0 0.0
      %6676 = vmatpush1.msra.mxu0 0.0
      %6677 = vmatprep.subr.mxu0 0.0
      %6678 = vmatpush1.msra.mxu0 0.0
      %6679 = vmatprep.subr.mxu0 0.0
      %6680 = vmatpush1.msra.mxu0 0.0
      %6681 = vmatprep.subr.mxu0 0.0
      %6682 = vmatpush1.msra.mxu0 0.0
      %6683 = vmatprep.subr.mxu0 0.0
      %6684 = vmatpush1.msra.mxu0 0.0
      %6685 = vmatprep.subr.mxu0 0.0
      %6686 = vmatpush1.msra.mxu0 0.0
      %6687 = vmatprep.subr.mxu0 0.0
      %6688 = vmatpush1.msra.mxu0 0.0
      %6689 = vmatprep.subr.mxu0 0.0
      %6690 = vmatpush1.msra.mxu0 0.0
      %6691 = vmatprep.subr.mxu0 0.0
      %6692 = vmatpush1.msra.mxu0 0.0
      %6693 = vmatprep.subr.mxu0 0.0
      %6694 = vmatpush1.msra.mxu0 0.0
      %6695 = vmatprep.subr.mxu0 0.0
      %6696 = vmatpush1.msra.mxu0 0.0
      %6697 = vmatprep.subr.mxu0 0.0
      %6698 = vmatpush1.msra.mxu0 0.0
      %6699 = vmatprep.subr.mxu0 0.0
      %6700 = vmatpush1.msra.mxu0 0.0
      %6701 = vmatprep.mubr.f32.mxu0 0.0
      %6702 = vmatmul.mubr.f32.gmra.mrb[0].mxu0 %v6565
      %v6703 = vpop.f32.mrb[0].mxu0
      %v6704 = vadd.f32 0.0, %v6703
      %v6705 = vpop.f32.mrb[0].mxu0
      %6706 = vmatprep.mubr.f32.mxu0 0.0
      %6707 = vmatmul.mubr.f32.gmra.mrb[0].mxu0 %v6567
      %v6708 = vpop.f32.mrb[0].mxu0
      %v6709 = vadd.f32 0.0, %v6708
      %v6710 = vpop.f32.mrb[0].mxu0
      %6711 = vmatprep.mubr.f32.mxu0 0.0
      %6712 = vmatmul.mubr.f32.gmra.mrb[0].mxu0 %v6569
      %v6713 = vpop.f32.mrb[0].mxu0
      %v6714 = vadd.f32 0.0, %v6713
      %v6715 = vpop.f32.mrb[0].mxu0
      %6716 = vmatprep.mubr.f32.mxu0 0.0
      %6717 = vmatmul.mubr.f32.gmra.mrb[0].mxu0 %v6571
      %v6718 = vpop.f32.mrb[0].mxu0
      %v6719 = vadd.f32 0.0, %v6718
      %v6720 = vpop.f32.mrb[0].mxu0
      %6721 = vmatprep.mubr.f32.mxu0 0.0
      %6722 = vmatmul.mubr.f32.gmra.mrb[0].mxu0 %v6573
      %v6723 = vpop.f32.mrb[0].mxu0
      %v6724 = vadd.f32 0.0, %v6723
      %v6725 = vpop.f32.mrb[0].mxu0
      %6726 = vmatprep.mubr.f32.mxu0 0.0
      %6727 = vmatmul.mubr.f32.gmra.mrb[0].mxu0 %v6575
      %v6728 = vpop.f32.mrb[0].mxu0
      %v6729 = vadd.f32 0.0, %v6728
      %v6730 = vpop.f32.mrb[0].mxu0
      %6731 = vmatprep.mubr.f32.mxu0 0.0
      %6732 = vmatmul.mubr.f32.gmra.mrb[0].mxu0 %v6577
      %v6733 = vpop.f32.mrb[0].mxu0
      %v6734 = vadd.f32 0.0, %v6733
      %v6735 = vpop.f32.mrb[0].mxu0
      %6736 = vmatprep.mubr.f32.mxu0 0.0
      %6737 = vmatmul.mubr.f32.gmra.mrb[0].mxu0 %v6579
      %v6738 = vpop.f32.mrb[0].mxu0
      %v6739 = vadd.f32 0.0, %v6738
      %v6740 = vpop.f32.mrb[0].mxu0
      %6741 = vmatprep.mubr.f32.mxu0 0.0
      %6742 = vmatmul.mubr.f32.gmra.mrb[0].mxu0 %v6581
      %v6743 = vpop.f32.mrb[0].mxu0
      %v6744 = vadd.f32 0.0, %v6743
      %v6745 = vpop.f32.mrb[0].mxu0
      %6746 = vmatprep.mubr.f32.mxu0 0.0
      %6747 = vmatmul.mubr.f32.gmra.mrb[0].mxu0 %v6583
      %v6748 = vpop.f32.mrb[0].mxu0
      %v6749 = vadd.f32 0.0, %v6748
      %v6750 = vpop.f32.mrb[0].mxu0
      %6751 = vmatprep.mubr.f32.mxu0 0.0
      %6752 = vmatmul.mubr.f32.gmra.mrb[0].mxu0 %v6585
      %v6753 = vpop.f32.mrb[0].mxu0
      %v6754 = vadd.f32 0.0, %v6753
      %v6755 = vpop.f32.mrb[0].mxu0
      %6756 = vmatprep.mubr.f32.mxu0 0.0
      %6757 = vmatmul.mubr.f32.gmra.mrb[0].mxu0 %v6587
      %v6758 = vpop.f32.mrb[0].mxu0
      %v6759 = vadd.f32 0.0, %v6758
      %v6760 = vpop.f32.mrb[0].mxu0
      %6761 = vmatprep.mubr.f32.mxu0 0.0
      %6762 = vmatmul.mubr.f32.gmra.mrb[0].mxu0 %v6589
      %v6763 = vpop.f32.mrb[0].mxu0
      %v6764 = vadd.f32 0.0, %v6763
      %v6765 = vpop.f32.mrb[0].mxu0
      %6766 = vmatprep.mubr.f32.mxu0 0.0
      %6767 = vmatmul.mubr.f32.gmra.mrb[0].mxu0 %v6591
      %v6768 = vpop.f32.mrb[0].mxu0
      %v6769 = vadd.f32 0.0, %v6768
      %v6770 = vpop.f32.mrb[0].mxu0
      %6771 = vmatprep.mubr.f32.mxu0 0.0
      %6772 = vmatmul.mubr.f32.gmra.mrb[0].mxu0 %v6593
      %v6773 = vpop.f32.mrb[0].mxu0
      %v6774 = vadd.f32 0.0, %v6773
      %v6775 = vpop.f32.mrb[0].mxu0
      %6776 = vmatprep.mubr.f32.mxu0 0.0
      %6777 = vmatmul.mubr.f32.gmra.mrb[0].mxu0 %v6595
      %v6778 = vpop.f32.mrb[0].mxu0
      %v6779 = vadd.f32 0.0, %v6778
      %v6780 = vpop.f32.mrb[0].mxu0
      %6781 = vmatprep.mubr.f32.mxu0 0.0
      %6782 = vmatmul.mubr.f32.gmra.mrb[0].mxu0 %v6597
      %v6783 = vpop.f32.mrb[0].mxu0
      %v6784 = vadd.f32 0.0, %v6783
      %v6785 = vpop.f32.mrb[0].mxu0
      %6786 = vmatprep.mubr.f32.mxu0 0.0
      %6787 = vmatmul.mubr.f32.gmra.mrb[0].mxu0 %v6599
      %v6788 = vpop.f32.mrb[0].mxu0
      %v6789 = vadd.f32 0.0, %v6788
      %v6790 = vpop.f32.mrb[0].mxu0
      %6791 = vmatprep.mubr.f32.mxu0 0.0
      %6792 = vmatmul.mubr.f32.gmra.mrb[0].mxu0 %v6601
      %v6793 = vpop.f32.mrb[0].mxu0
      %v6794 = vadd.f32 0.0, %v6793
      %v6795 = vpop.f32.mrb[0].mxu0
      %6796 = vmatprep.mubr.f32.mxu0 0.0
      %6797 = vmatmul.mubr.f32.gmra.mrb[0].mxu0 %v6603
      %v6798 = vpop.f32.mrb[0].mxu0
      %v6799 = vadd.f32 0.0, %v6798
      %v6800 = vpop.f32.mrb[0].mxu0
      %6801 = vmatprep.mubr.f32.mxu0 0.0
      %6802 = vmatmul.mubr.f32.gmra.mrb[0].mxu0 %v6605
      %v6803 = vpop.f32.mrb[0].mxu0
      %v6804 = vadd.f32 0.0, %v6803
      %v6805 = vpop.f32.mrb[0].mxu0
      %6806 = vmatprep.mubr.f32.mxu0 0.0
      %6807 = vmatmul.mubr.f32.gmra.mrb[0].mxu0 %v6607
      %v6808 = vpop.f32.mrb[0].mxu0
      %v6809 = vadd.f32 0.0, %v6808
      %v6810 = vpop.f32.mrb[0].mxu0
      %6811 = vmatprep.mubr.f32.mxu0 0.0
      %6812 = vmatmul.mubr.f32.gmra.mrb[0].mxu0 %v6609
      %v6813 = vpop.f32.mrb[0].mxu0
      %v6814 = vadd.f32 0.0, %v6813
      %v6815 = vpop.f32.mrb[0].mxu0
      %6816 = vmatprep.mubr.f32.mxu0 0.0
      %6817 = vmatmul.mubr.f32.gmra.mrb[0].mxu0 %v6611
      %v6818 = vpop.f32.mrb[0].mxu0
      %v6819 = vadd.f32 0.0, %v6818
      %v6820 = vpop.f32.mrb[0].mxu0
      %6821 = vmatprep.mubr.f32.mxu0 0.0
      %6822 = vmatmul.mubr.f32.gmra.mrb[0].mxu0 %v6613
      %v6823 = vpop.f32.mrb[0].mxu0
      %v6824 = vadd.f32 0.0, %v6823
      %v6825 = vpop.f32.mrb[0].mxu0
      %6826 = vmatprep.mubr.f32.mxu0 0.0
      %6827 = vmatmul.mubr.f32.gmra.mrb[0].mxu0 %v6615
      %v6828 = vpop.f32.mrb[0].mxu0
      %v6829 = vadd.f32 0.0, %v6828
      %v6830 = vpop.f32.mrb[0].mxu0
      %6831 = vmatprep.mubr.f32.mxu0 0.0
      %6832 = vmatmul.mubr.f32.gmra.mrb[0].mxu0 %v6617
      %v6833 = vpop.f32.mrb[0].mxu0
      %v6834 = vadd.f32 0.0, %v6833
      %v6835 = vpop.f32.mrb[0].mxu0
      %6836 = vmatprep.mubr.f32.mxu0 0.0
      %6837 = vmatmul.mubr.f32.gmra.mrb[0].mxu0 %v6619
      %v6838 = vpop.f32.mrb[0].mxu0
      %v6839 = vadd.f32 0.0, %v6838
      %v6840 = vpop.f32.mrb[0].mxu0
      %6841 = vmatprep.mubr.f32.mxu0 0.0
      %6842 = vmatmul.mubr.f32.gmra.mrb[0].mxu0 %v6621
      %v6843 = vpop.f32.mrb[0].mxu0
      %v6844 = vadd.f32 0.0, %v6843
      %v6845 = vpop.f32.mrb[0].mxu0
      %6846 = vmatprep.mubr.f32.mxu0 0.0
      %6847 = vmatmul.mubr.f32.gmra.mrb[0].mxu0 %v6623
      %v6848 = vpop.f32.mrb[0].mxu0
      %v6849 = vadd.f32 0.0, %v6848
      %v6850 = vpop.f32.mrb[0].mxu0
      %6851 = vmatprep.mubr.f32.mxu0 0.0
      %6852 = vmatmul.mubr.f32.gmra.mrb[0].mxu0 %v6625
      %v6853 = vpop.f32.mrb[0].mxu0
      %v6854 = vadd.f32 0.0, %v6853
      %v6855 = vpop.f32.mrb[0].mxu0
      %6856 = vmatprep.mubr.f32.mxu0 0.0
      %6857 = vmatmul.mubr.f32.gmra.mrb[0].mxu0 %v6627
      %v6858 = vpop.f32.mrb[0].mxu0
      %v6859 = vadd.f32 0.0, %v6858
      %v6860 = vpop.f32.mrb[0].mxu0
      %6861 = vmatprep.mubr.f32.mxu0 0.0
      %6862 = vmatmul.mubr.f32.gmra.mrb[0].mxu0 %v6629
      %v6863 = vpop.f32.mrb[0].mxu0
      %v6864 = vadd.f32 0.0, %v6863
      %v6865 = vpop.f32.mrb[0].mxu0
      %6866 = vmatprep.mubr.f32.mxu0 0.0
      %6867 = vmatmul.mubr.f32.gmra.mrb[0].mxu0 %v6631
      %v6868 = vpop.f32.mrb[0].mxu0
      %v6869 = vadd.f32 0.0, %v6868
      %v6870 = vpop.f32.mrb[0].mxu0
      %6871 = vmatprep.mubr.f32.mxu0 0.0
      %6872 = vmatmul.mubr.f32.gmra.mrb[0].mxu0 %v6633
      %v6873 = vpop.f32.mrb[0].mxu0
      %v6874 = vadd.f32 0.0, %v6873
      %v6875 = vpop.f32.mrb[0].mxu0
      %6876 = vmatprep.mubr.f32.mxu0 0.0
      %6877 = vmatmul.mubr.f32.gmra.mrb[0].mxu0 %v6635
      %v6878 = vpop.f32.mrb[0].mxu0
      %v6879 = vadd.f32 0.0, %v6878
      %v6880 = vpop.f32.mrb[0].mxu0
      %6881 = vdwg.mxu0
      %v6882 = vadd.f32 %v6313, %v6704
      %v6883 = vadd.f32 %v6318, %v6709
      %v6884 = vadd.f32 %v6323, %v6714
      %v6885 = vadd.f32 %v6328, %v6719
      %v6886 = vadd.f32 %v6333, %v6724
      %v6887 = vadd.f32 %v6338, %v6729
      %v6888 = vadd.f32 %v6343, %v6734
      %v6889 = vadd.f32 %v6348, %v6739
      %v6890 = vadd.f32 %v6353, %v6744
      %v6891 = vadd.f32 %v6358, %v6749
      %v6892 = vadd.f32 %v6363, %v6754
      %v6893 = vadd.f32 %v6368, %v6759
      %v6894 = vadd.f32 %v6373, %v6764
      %v6895 = vadd.f32 %v6378, %v6769
      %v6896 = vadd.f32 %v6383, %v6774
      %v6897 = vadd.f32 %v6388, %v6779
      %v6898 = vadd.f32 %v6393, %v6784
      %v6899 = vadd.f32 %v6398, %v6789
      %v6900 = vadd.f32 %v6403, %v6794
      %v6901 = vadd.f32 %v6408, %v6799
      %v6902 = vadd.f32 %v6413, %v6804
      %v6903 = vadd.f32 %v6418, %v6809
      %v6904 = vadd.f32 %v6423, %v6814
      %v6905 = vadd.f32 %v6428, %v6819
      %v6906 = vadd.f32 %v6433, %v6824
      %v6907 = vadd.f32 %v6438, %v6829
      %v6908 = vadd.f32 %v6443, %v6834
      %v6909 = vadd.f32 %v6448, %v6839
      %v6910 = vadd.f32 %v6453, %v6844
      %v6911 = vadd.f32 %v6458, %v6849
      %v6912 = vadd.f32 %v6463, %v6854
      %v6913 = vadd.f32 %v6468, %v6859
      %v6914 = vadd.f32 %v6473, %v6864
      %v6915 = vadd.f32 %v6478, %v6869
      %v6916 = vadd.f32 %v6483, %v6874
      %v6917 = vadd.f32 %v6488, %v6879
      %s6918 = scalar_lea.vmem %s11, 48
      %v6919 = vld [vmem:[%s6918] sm:$0xff]
      %v6920 = vld [vmem:[%s6918 + $0x8] sm:$0xff]
      %v6923 = vrot.slane %v5740, 2
      %v6924 = vsel %vm1493, %v6563, %v6923
      %v6925 = vrot.slane %v5741, 2
      %v6926 = vsel %vm1493, %v6923, %v6925
      %v6927 = vsel %vm4847, %v6924, 0
      %v6929 = vsel %vm4847, %v6926, 0
      %v6931 = vsel %vm4847, %v6925, 0
      %6933 = vmatprep.subr.mxu0 0.0
      %6934 = vmatpush1.msra.mxu0 %v6919
      %6935 = vmatprep.subr.mxu0 0.0
      %6936 = vmatpush1.msra.mxu0 %v6920
      %6937 = vmatprep.subr.mxu0 0.0
      %6938 = vmatpush1.msra.mxu0 0.0
      %6939 = vmatprep.subr.mxu0 0.0
      %6940 = vmatpush1.msra.mxu0 0.0
      %6941 = vmatprep.subr.mxu0 0.0
      %6942 = vmatpush1.msra.mxu0 0.0
      %6943 = vmatprep.subr.mxu0 0.0
      %6944 = vmatpush1.msra.mxu0 0.0
      %6945 = vmatprep.subr.mxu0 0.0
      %6946 = vmatpush1.msra.mxu0 0.0
      %6947 = vmatprep.subr.mxu0 0.0
      %6948 = vmatpush1.msra.mxu0 0.0
      %6949 = vmatprep.subr.mxu0 0.0
      %6950 = vmatpush1.msra.mxu0 0.0
      %6951 = vmatprep.subr.mxu0 0.0
      %6952 = vmatpush1.msra.mxu0 0.0
      %6953 = vmatprep.subr.mxu0 0.0
      %6954 = vmatpush1.msra.mxu0 0.0
      %6955 = vmatprep.subr.mxu0 0.0
      %6956 = vmatpush1.msra.mxu0 0.0
      %6957 = vmatprep.subr.mxu0 0.0
      %6958 = vmatpush1.msra.mxu0 0.0
      %6959 = vmatprep.subr.mxu0 0.0
      %6960 = vmatpush1.msra.mxu0 0.0
      %6961 = vmatprep.subr.mxu0 0.0
      %6962 = vmatpush1.msra.mxu0 0.0
      %6963 = vmatprep.subr.mxu0 0.0
      %6964 = vmatpush1.msra.mxu0 0.0
      %6965 = vmatprep.subr.mxu0 0.0
      %6966 = vmatpush1.msra.mxu0 0.0
      %6967 = vmatprep.subr.mxu0 0.0
      %6968 = vmatpush1.msra.mxu0 0.0
      %6969 = vmatprep.subr.mxu0 0.0
      %6970 = vmatpush1.msra.mxu0 0.0
      %6971 = vmatprep.subr.mxu0 0.0
      %6972 = vmatpush1.msra.mxu0 0.0
      %6973 = vmatprep.subr.mxu0 0.0
      %6974 = vmatpush1.msra.mxu0 0.0
      %6975 = vmatprep.subr.mxu0 0.0
      %6976 = vmatpush1.msra.mxu0 0.0
      %6977 = vmatprep.subr.mxu0 0.0
      %6978 = vmatpush1.msra.mxu0 0.0
      %6979 = vmatprep.subr.mxu0 0.0
      %6980 = vmatpush1.msra.mxu0 0.0
      %6981 = vmatprep.subr.mxu0 0.0
      %6982 = vmatpush1.msra.mxu0 0.0
      %6983 = vmatprep.subr.mxu0 0.0
      %6984 = vmatpush1.msra.mxu0 0.0
      %6985 = vmatprep.subr.mxu0 0.0
      %6986 = vmatpush1.msra.mxu0 0.0
      %6987 = vmatprep.subr.mxu0 0.0
      %6988 = vmatpush1.msra.mxu0 0.0
      %6989 = vmatprep.subr.mxu0 0.0
      %6990 = vmatpush1.msra.mxu0 0.0
      %6991 = vmatprep.subr.mxu0 0.0
      %6992 = vmatpush1.msra.mxu0 0.0
      %6993 = vmatprep.subr.mxu0 0.0
      %6994 = vmatpush1.msra.mxu0 0.0
      %6995 = vmatprep.subr.mxu0 0.0
      %6996 = vmatpush1.msra.mxu0 0.0
      %6997 = vmatprep.mubr.f32.mxu0 0.0
      %6998 = vmatmul.mubr.f32.gmra.mrb[0].mxu0 %v6569
      %v6999 = vpop.f32.mrb[0].mxu0
      %v7000 = vadd.f32 0.0, %v6999
      %v7001 = vpop.f32.mrb[0].mxu0
      %7002 = vmatprep.mubr.f32.mxu0 0.0
      %7003 = vmatmul.mubr.f32.gmra.mrb[0].mxu0 %v6571
      %v7004 = vpop.f32.mrb[0].mxu0
      %v7005 = vadd.f32 0.0, %v7004
      %v7006 = vpop.f32.mrb[0].mxu0
      %7007 = vmatprep.mubr.f32.mxu0 0.0
      %7008 = vmatmul.mubr.f32.gmra.mrb[0].mxu0 %v6573
      %v7009 = vpop.f32.mrb[0].mxu0
      %v7010 = vadd.f32 0.0, %v7009
      %v7011 = vpop.f32.mrb[0].mxu0
      %7012 = vmatprep.mubr.f32.mxu0 0.0
      %7013 = vmatmul.mubr.f32.gmra.mrb[0].mxu0 %v6575
      %v7014 = vpop.f32.mrb[0].mxu0
      %v7015 = vadd.f32 0.0, %v7014
      %v7016 = vpop.f32.mrb[0].mxu0
      %7017 = vmatprep.mubr.f32.mxu0 0.0
      %7018 = vmatmul.mubr.f32.gmra.mrb[0].mxu0 %v6577
      %v7019 = vpop.f32.mrb[0].mxu0
      %v7020 = vadd.f32 0.0, %v7019
      %v7021 = vpop.f32.mrb[0].mxu0
      %7022 = vmatprep.mubr.f32.mxu0 0.0
      %7023 = vmatmul.mubr.f32.gmra.mrb[0].mxu0 %v6579
      %v7024 = vpop.f32.mrb[0].mxu0
      %v7025 = vadd.f32 0.0, %v7024
      %v7026 = vpop.f32.mrb[0].mxu0
      %7027 = vmatprep.mubr.f32.mxu0 0.0
      %7028 = vmatmul.mubr.f32.gmra.mrb[0].mxu0 %v6581
      %v7029 = vpop.f32.mrb[0].mxu0
      %v7030 = vadd.f32 0.0, %v7029
      %v7031 = vpop.f32.mrb[0].mxu0
      %7032 = vmatprep.mubr.f32.mxu0 0.0
      %7033 = vmatmul.mubr.f32.gmra.mrb[0].mxu0 %v6583
      %v7034 = vpop.f32.mrb[0].mxu0
      %v7035 = vadd.f32 0.0, %v7034
      %v7036 = vpop.f32.mrb[0].mxu0
      %7037 = vmatprep.mubr.f32.mxu0 0.0
      %7038 = vmatmul.mubr.f32.gmra.mrb[0].mxu0 %v6585
      %v7039 = vpop.f32.mrb[0].mxu0
      %v7040 = vadd.f32 0.0, %v7039
      %v7041 = vpop.f32.mrb[0].mxu0
      %7042 = vmatprep.mubr.f32.mxu0 0.0
      %7043 = vmatmul.mubr.f32.gmra.mrb[0].mxu0 %v6587
      %v7044 = vpop.f32.mrb[0].mxu0
      %v7045 = vadd.f32 0.0, %v7044
      %v7046 = vpop.f32.mrb[0].mxu0
      %7047 = vmatprep.mubr.f32.mxu0 0.0
      %7048 = vmatmul.mubr.f32.gmra.mrb[0].mxu0 %v6589
      %v7049 = vpop.f32.mrb[0].mxu0
      %v7050 = vadd.f32 0.0, %v7049
      %v7051 = vpop.f32.mrb[0].mxu0
      %7052 = vmatprep.mubr.f32.mxu0 0.0
      %7053 = vmatmul.mubr.f32.gmra.mrb[0].mxu0 %v6591
      %v7054 = vpop.f32.mrb[0].mxu0
      %v7055 = vadd.f32 0.0, %v7054
      %v7056 = vpop.f32.mrb[0].mxu0
      %7057 = vmatprep.mubr.f32.mxu0 0.0
      %7058 = vmatmul.mubr.f32.gmra.mrb[0].mxu0 %v6593
      %v7059 = vpop.f32.mrb[0].mxu0
      %v7060 = vadd.f32 0.0, %v7059
      %v7061 = vpop.f32.mrb[0].mxu0
      %7062 = vmatprep.mubr.f32.mxu0 0.0
      %7063 = vmatmul.mubr.f32.gmra.mrb[0].mxu0 %v6595
      %v7064 = vpop.f32.mrb[0].mxu0
      %v7065 = vadd.f32 0.0, %v7064
      %v7066 = vpop.f32.mrb[0].mxu0
      %7067 = vmatprep.mubr.f32.mxu0 0.0
      %7068 = vmatmul.mubr.f32.gmra.mrb[0].mxu0 %v6597
      %v7069 = vpop.f32.mrb[0].mxu0
      %v7070 = vadd.f32 0.0, %v7069
      %v7071 = vpop.f32.mrb[0].mxu0
      %7072 = vmatprep.mubr.f32.mxu0 0.0
      %7073 = vmatmul.mubr.f32.gmra.mrb[0].mxu0 %v6599
      %v7074 = vpop.f32.mrb[0].mxu0
      %v7075 = vadd.f32 0.0, %v7074
      %v7076 = vpop.f32.mrb[0].mxu0
      %7077 = vmatprep.mubr.f32.mxu0 0.0
      %7078 = vmatmul.mubr.f32.gmra.mrb[0].mxu0 %v6601
      %v7079 = vpop.f32.mrb[0].mxu0
      %v7080 = vadd.f32 0.0, %v7079
      %v7081 = vpop.f32.mrb[0].mxu0
      %7082 = vmatprep.mubr.f32.mxu0 0.0
      %7083 = vmatmul.mubr.f32.gmra.mrb[0].mxu0 %v6603
      %v7084 = vpop.f32.mrb[0].mxu0
      %v7085 = vadd.f32 0.0, %v7084
      %v7086 = vpop.f32.mrb[0].mxu0
      %7087 = vmatprep.mubr.f32.mxu0 0.0
      %7088 = vmatmul.mubr.f32.gmra.mrb[0].mxu0 %v6605
      %v7089 = vpop.f32.mrb[0].mxu0
      %v7090 = vadd.f32 0.0, %v7089
      %v7091 = vpop.f32.mrb[0].mxu0
      %7092 = vmatprep.mubr.f32.mxu0 0.0
      %7093 = vmatmul.mubr.f32.gmra.mrb[0].mxu0 %v6607
      %v7094 = vpop.f32.mrb[0].mxu0
      %v7095 = vadd.f32 0.0, %v7094
      %v7096 = vpop.f32.mrb[0].mxu0
      %7097 = vmatprep.mubr.f32.mxu0 0.0
      %7098 = vmatmul.mubr.f32.gmra.mrb[0].mxu0 %v6609
      %v7099 = vpop.f32.mrb[0].mxu0
      %v7100 = vadd.f32 0.0, %v7099
      %v7101 = vpop.f32.mrb[0].mxu0
      %7102 = vmatprep.mubr.f32.mxu0 0.0
      %7103 = vmatmul.mubr.f32.gmra.mrb[0].mxu0 %v6611
      %v7104 = vpop.f32.mrb[0].mxu0
      %v7105 = vadd.f32 0.0, %v7104
      %v7106 = vpop.f32.mrb[0].mxu0
      %7107 = vmatprep.mubr.f32.mxu0 0.0
      %7108 = vmatmul.mubr.f32.gmra.mrb[0].mxu0 %v6613
      %v7109 = vpop.f32.mrb[0].mxu0
      %v7110 = vadd.f32 0.0, %v7109
      %v7111 = vpop.f32.mrb[0].mxu0
      %7112 = vmatprep.mubr.f32.mxu0 0.0
      %7113 = vmatmul.mubr.f32.gmra.mrb[0].mxu0 %v6615
      %v7114 = vpop.f32.mrb[0].mxu0
      %v7115 = vadd.f32 0.0, %v7114
      %v7116 = vpop.f32.mrb[0].mxu0
      %7117 = vmatprep.mubr.f32.mxu0 0.0
      %7118 = vmatmul.mubr.f32.gmra.mrb[0].mxu0 %v6617
      %v7119 = vpop.f32.mrb[0].mxu0
      %v7120 = vadd.f32 0.0, %v7119
      %v7121 = vpop.f32.mrb[0].mxu0
      %7122 = vmatprep.mubr.f32.mxu0 0.0
      %7123 = vmatmul.mubr.f32.gmra.mrb[0].mxu0 %v6619
      %v7124 = vpop.f32.mrb[0].mxu0
      %v7125 = vadd.f32 0.0, %v7124
      %v7126 = vpop.f32.mrb[0].mxu0
      %7127 = vmatprep.mubr.f32.mxu0 0.0
      %7128 = vmatmul.mubr.f32.gmra.mrb[0].mxu0 %v6621
      %v7129 = vpop.f32.mrb[0].mxu0
      %v7130 = vadd.f32 0.0, %v7129
      %v7131 = vpop.f32.mrb[0].mxu0
      %7132 = vmatprep.mubr.f32.mxu0 0.0
      %7133 = vmatmul.mubr.f32.gmra.mrb[0].mxu0 %v6623
      %v7134 = vpop.f32.mrb[0].mxu0
      %v7135 = vadd.f32 0.0, %v7134
      %v7136 = vpop.f32.mrb[0].mxu0
      %7137 = vmatprep.mubr.f32.mxu0 0.0
      %7138 = vmatmul.mubr.f32.gmra.mrb[0].mxu0 %v6625
      %v7139 = vpop.f32.mrb[0].mxu0
      %v7140 = vadd.f32 0.0, %v7139
      %v7141 = vpop.f32.mrb[0].mxu0
      %7142 = vmatprep.mubr.f32.mxu0 0.0
      %7143 = vmatmul.mubr.f32.gmra.mrb[0].mxu0 %v6627
      %v7144 = vpop.f32.mrb[0].mxu0
      %v7145 = vadd.f32 0.0, %v7144
      %v7146 = vpop.f32.mrb[0].mxu0
      %7147 = vmatprep.mubr.f32.mxu0 0.0
      %7148 = vmatmul.mubr.f32.gmra.mrb[0].mxu0 %v6629
      %v7149 = vpop.f32.mrb[0].mxu0
      %v7150 = vadd.f32 0.0, %v7149
      %v7151 = vpop.f32.mrb[0].mxu0
      %7152 = vmatprep.mubr.f32.mxu0 0.0
      %7153 = vmatmul.mubr.f32.gmra.mrb[0].mxu0 %v6631
      %v7154 = vpop.f32.mrb[0].mxu0
      %v7155 = vadd.f32 0.0, %v7154
      %v7156 = vpop.f32.mrb[0].mxu0
      %7157 = vmatprep.mubr.f32.mxu0 0.0
      %7158 = vmatmul.mubr.f32.gmra.mrb[0].mxu0 %v6633
      %v7159 = vpop.f32.mrb[0].mxu0
      %v7160 = vadd.f32 0.0, %v7159
      %v7161 = vpop.f32.mrb[0].mxu0
      %7162 = vmatprep.mubr.f32.mxu0 0.0
      %7163 = vmatmul.mubr.f32.gmra.mrb[0].mxu0 %v6927
      %v7164 = vpop.f32.mrb[0].mxu0
      %v7165 = vadd.f32 0.0, %v7164
      %v7166 = vpop.f32.mrb[0].mxu0
      %7167 = vmatprep.mubr.f32.mxu0 0.0
      %7168 = vmatmul.mubr.f32.gmra.mrb[0].mxu0 %v6929
      %v7169 = vpop.f32.mrb[0].mxu0
      %v7170 = vadd.f32 0.0, %v7169
      %v7171 = vpop.f32.mrb[0].mxu0
      %7172 = vmatprep.mubr.f32.mxu0 0.0
      %7173 = vmatmul.mubr.f32.gmra.mrb[0].mxu0 %v6931
      %v7174 = vpop.f32.mrb[0].mxu0
      %v7175 = vadd.f32 0.0, %v7174
      %v7176 = vpop.f32.mrb[0].mxu0
      %7177 = vdwg.mxu0
      %v7178 = vadd.f32 %v6882, %v7000
      %v7179 = vadd.f32 %v6883, %v7005
      %v7180 = vadd.f32 %v6884, %v7010
      %v7181 = vadd.f32 %v6885, %v7015
      %v7182 = vadd.f32 %v6886, %v7020
      %v7183 = vadd.f32 %v6887, %v7025
      %v7184 = vadd.f32 %v6888, %v7030
      %v7185 = vadd.f32 %v6889, %v7035
      %v7186 = vadd.f32 %v6890, %v7040
      %v7187 = vadd.f32 %v6891, %v7045
      %v7188 = vadd.f32 %v6892, %v7050
      %v7189 = vadd.f32 %v6893, %v7055
      %v7190 = vadd.f32 %v6894, %v7060
      %v7191 = vadd.f32 %v6895, %v7065
      %v7192 = vadd.f32 %v6896, %v7070
      %v7193 = vadd.f32 %v6897, %v7075
      %v7194 = vadd.f32 %v6898, %v7080
      %v7195 = vadd.f32 %v6899, %v7085
      %v7196 = vadd.f32 %v6900, %v7090
      %v7197 = vadd.f32 %v6901, %v7095
      %v7198 = vadd.f32 %v6902, %v7100
      %v7199 = vadd.f32 %v6903, %v7105
      %v7200 = vadd.f32 %v6904, %v7110
      %v7201 = vadd.f32 %v6905, %v7115
      %v7202 = vadd.f32 %v6906, %v7120
      %v7203 = vadd.f32 %v6907, %v7125
      %v7204 = vadd.f32 %v6908, %v7130
      %v7205 = vadd.f32 %v6909, %v7135
      %v7206 = vadd.f32 %v6910, %v7140
      %v7207 = vadd.f32 %v6911, %v7145
      %v7208 = vadd.f32 %v6912, %v7150
      %v7209 = vadd.f32 %v6913, %v7155
      %v7210 = vadd.f32 %v6914, %v7160
      %v7211 = vadd.f32 %v6915, %v7165
      %v7212 = vadd.f32 %v6916, %v7170
      %v7213 = vadd.f32 %v6917, %v7175
      %s7214 = scalar_lea.vmem %s11, 64
      %v7215 = vld [vmem:[%s7214] sm:$0xff]
      %v7216 = vld [vmem:[%s7214 + $0x8] sm:$0xff]
      %v7218 = vrot.slane %v5706, 3
      %v7219 = vrot.slane %v5707, 3
      %v7220 = vsel %vm2301, %v7218, %v7219
      %v7221 = vrot.slane %v5708, 3
      %v7222 = vsel %vm2301, %v7219, %v7221
      %v7223 = vrot.slane %v5709, 3
      %v7224 = vsel %vm2301, %v7221, %v7223
      %v7225 = vrot.slane %v5710, 3
      %v7226 = vsel %vm2301, %v7223, %v7225
      %v7227 = vrot.slane %v5711, 3
      %v7228 = vsel %vm2301, %v7225, %v7227
      %v7229 = vrot.slane %v5712, 3
      %v7230 = vsel %vm2301, %v7227, %v7229
      %v7231 = vrot.slane %v5713, 3
      %v7232 = vsel %vm2301, %v7229, %v7231
      %v7233 = vrot.slane %v5714, 3
      %v7234 = vsel %vm2301, %v7231, %v7233
      %v7235 = vrot.slane %v5715, 3
      %v7236 = vsel %vm2301, %v7233, %v7235
      %v7237 = vrot.slane %v5716, 3
      %v7238 = vsel %vm2301, %v7235, %v7237
      %v7239 = vrot.slane %v5717, 3
      %v7240 = vsel %vm2301, %v7237, %v7239
      %v7241 = vrot.slane %v5718, 3
      %v7242 = vsel %vm2301, %v7239, %v7241
      %v7243 = vrot.slane %v5719, 3
      %v7244 = vsel %vm2301, %v7241, %v7243
      %v7245 = vrot.slane %v5720, 3
      %v7246 = vsel %vm2301, %v7243, %v7245
      %v7247 = vrot.slane %v5721, 3
      %v7248 = vsel %vm2301, %v7245, %v7247
      %v7249 = vrot.slane %v5722, 3
      %v7250 = vsel %vm2301, %v7247, %v7249
      %v7251 = vrot.slane %v5723, 3
      %v7252 = vsel %vm2301, %v7249, %v7251
      %v7253 = vrot.slane %v5724, 3
      %v7254 = vsel %vm2301, %v7251, %v7253
      %v7255 = vrot.slane %v5725, 3
      %v7256 = vsel %vm2301, %v7253, %v7255
      %v7257 = vrot.slane %v5726, 3
      %v7258 = vsel %vm2301, %v7255, %v7257
      %v7259 = vrot.slane %v5727, 3
      %v7260 = vsel %vm2301, %v7257, %v7259
      %v7261 = vrot.slane %v5728, 3
      %v7262 = vsel %vm2301, %v7259, %v7261
      %v7263 = vrot.slane %v5729, 3
      %v7264 = vsel %vm2301, %v7261, %v7263
      %v7265 = vrot.slane %v5730, 3
      %v7266 = vsel %vm2301, %v7263, %v7265
      %v7267 = vrot.slane %v5731, 3
      %v7268 = vsel %vm2301, %v7265, %v7267
      %v7269 = vrot.slane %v5732, 3
      %v7270 = vsel %vm2301, %v7267, %v7269
      %v7271 = vrot.slane %v5733, 3
      %v7272 = vsel %vm2301, %v7269, %v7271
      %v7273 = vrot.slane %v5734, 3
      %v7274 = vsel %vm2301, %v7271, %v7273
      %v7275 = vrot.slane %v5735, 3
      %v7276 = vsel %vm2301, %v7273, %v7275
      %v7277 = vrot.slane %v5736, 3
      %v7278 = vsel %vm2301, %v7275, %v7277
      %v7279 = vrot.slane %v5737, 3
      %v7280 = vsel %vm2301, %v7277, %v7279
      %v7281 = vrot.slane %v5738, 3
      %v7282 = vsel %vm2301, %v7279, %v7281
      %v7283 = vrot.slane %v5739, 3
      %v7284 = vsel %vm2301, %v7281, %v7283
      %v7285 = vrot.slane %v5740, 3
      %v7286 = vsel %vm2301, %v7283, %v7285
      %v7287 = vrot.slane %v5741, 3
      %v7288 = vsel %vm2301, %v7285, %v7287
      %v7289 = vrot.slane %v5742, 3
      %v7290 = vsel %vm2301, %v7287, %v7289
      %v7291 = vsel %vm4847, %v7220, 0
      %v7293 = vsel %vm4847, %v7222, 0
      %v7295 = vsel %vm4847, %v7224, 0
      %v7297 = vsel %vm4847, %v7226, 0
      %v7299 = vsel %vm4847, %v7228, 0
      %v7301 = vsel %vm4847, %v7230, 0
      %v7303 = vsel %vm4847, %v7232, 0
      %v7305 = vsel %vm4847, %v7234, 0
      %v7307 = vsel %vm4847, %v7236, 0
      %v7309 = vsel %vm4847, %v7238, 0
      %v7311 = vsel %vm4847, %v7240, 0
      %v7313 = vsel %vm4847, %v7242, 0
      %v7315 = vsel %vm4847, %v7244, 0
      %v7317 = vsel %vm4847, %v7246, 0
      %v7319 = vsel %vm4847, %v7248, 0
      %v7321 = vsel %vm4847, %v7250, 0
      %v7323 = vsel %vm4847, %v7252, 0
      %v7325 = vsel %vm4847, %v7254, 0
      %v7327 = vsel %vm4847, %v7256, 0
      %v7329 = vsel %vm4847, %v7258, 0
      %v7331 = vsel %vm4847, %v7260, 0
      %v7333 = vsel %vm4847, %v7262, 0
      %v7335 = vsel %vm4847, %v7264, 0
      %v7337 = vsel %vm4847, %v7266, 0
      %v7339 = vsel %vm4847, %v7268, 0
      %v7341 = vsel %vm4847, %v7270, 0
      %v7343 = vsel %vm4847, %v7272, 0
      %v7345 = vsel %vm4847, %v7274, 0
      %v7347 = vsel %vm4847, %v7276, 0
      %v7349 = vsel %vm4847, %v7278, 0
      %v7351 = vsel %vm4847, %v7280, 0
      %v7353 = vsel %vm4847, %v7282, 0
      %v7355 = vsel %vm4847, %v7284, 0
      %v7357 = vsel %vm4847, %v7286, 0
      %v7359 = vsel %vm4847, %v7288, 0
      %v7361 = vsel %vm4847, %v7290, 0
      %7363 = vmatprep.subr.mxu0 0.0
      %7364 = vmatpush1.msra.mxu0 %v7215
      %7365 = vmatprep.subr.mxu0 0.0
      %7366 = vmatpush1.msra.mxu0 %v7216
      %7367 = vmatprep.subr.mxu0 0.0
      %7368 = vmatpush1.msra.mxu0 0.0
      %7369 = vmatprep.subr.mxu0 0.0
      %7370 = vmatpush1.msra.mxu0 0.0
      %7371 = vmatprep.subr.mxu0 0.0
      %7372 = vmatpush1.msra.mxu0 0.0
      %7373 = vmatprep.subr.mxu0 0.0
      %7374 = vmatpush1.msra.mxu0 0.0
      %7375 = vmatprep.subr.mxu0 0.0
      %7376 = vmatpush1.msra.mxu0 0.0
      %7377 = vmatprep.subr.mxu0 0.0
      %7378 = vmatpush1.msra.mxu0 0.0
      %7379 = vmatprep.subr.mxu0 0.0
      %7380 = vmatpush1.msra.mxu0 0.0
      %7381 = vmatprep.subr.mxu0 0.0
      %7382 = vmatpush1.msra.mxu0 0.0
      %7383 = vmatprep.subr.mxu0 0.0
      %7384 = vmatpush1.msra.mxu0 0.0
      %7385 = vmatprep.subr.mxu0 0.0
      %7386 = vmatpush1.msra.mxu0 0.0
      %7387 = vmatprep.subr.mxu0 0.0
      %7388 = vmatpush1.msra.mxu0 0.0
      %7389 = vmatprep.subr.mxu0 0.0
      %7390 = vmatpush1.msra.mxu0 0.0
      %7391 = vmatprep.subr.mxu0 0.0
      %7392 = vmatpush1.msra.mxu0 0.0
      %7393 = vmatprep.subr.mxu0 0.0
      %7394 = vmatpush1.msra.mxu0 0.0
      %7395 = vmatprep.subr.mxu0 0.0
      %7396 = vmatpush1.msra.mxu0 0.0
      %7397 = vmatprep.subr.mxu0 0.0
      %7398 = vmatpush1.msra.mxu0 0.0
      %7399 = vmatprep.subr.mxu0 0.0
      %7400 = vmatpush1.msra.mxu0 0.0
      %7401 = vmatprep.subr.mxu0 0.0
      %7402 = vmatpush1.msra.mxu0 0.0
      %7403 = vmatprep.subr.mxu0 0.0
      %7404 = vmatpush1.msra.mxu0 0.0
      %7405 = vmatprep.subr.mxu0 0.0
      %7406 = vmatpush1.msra.mxu0 0.0
      %7407 = vmatprep.subr.mxu0 0.0
      %7408 = vmatpush1.msra.mxu0 0.0
      %7409 = vmatprep.subr.mxu0 0.0
      %7410 = vmatpush1.msra.mxu0 0.0
      %7411 = vmatprep.subr.mxu0 0.0
      %7412 = vmatpush1.msra.mxu0 0.0
      %7413 = vmatprep.subr.mxu0 0.0
      %7414 = vmatpush1.msra.mxu0 0.0
      %7415 = vmatprep.subr.mxu0 0.0
      %7416 = vmatpush1.msra.mxu0 0.0
      %7417 = vmatprep.subr.mxu0 0.0
      %7418 = vmatpush1.msra.mxu0 0.0
      %7419 = vmatprep.subr.mxu0 0.0
      %7420 = vmatpush1.msra.mxu0 0.0
      %7421 = vmatprep.subr.mxu0 0.0
      %7422 = vmatpush1.msra.mxu0 0.0
      %7423 = vmatprep.subr.mxu0 0.0
      %7424 = vmatpush1.msra.mxu0 0.0
      %7425 = vmatprep.subr.mxu0 0.0
      %7426 = vmatpush1.msra.mxu0 0.0
      %7427 = vmatprep.mubr.f32.mxu0 0.0
      %7428 = vmatmul.mubr.f32.gmra.mrb[0].mxu0 %v7291
      %v7429 = vpop.f32.mrb[0].mxu0
      %v7430 = vadd.f32 0.0, %v7429
      %v7431 = vpop.f32.mrb[0].mxu0
      %7432 = vmatprep.mubr.f32.mxu0 0.0
      %7433 = vmatmul.mubr.f32.gmra.mrb[0].mxu0 %v7293
      %v7434 = vpop.f32.mrb[0].mxu0
      %v7435 = vadd.f32 0.0, %v7434
      %v7436 = vpop.f32.mrb[0].mxu0
      %7437 = vmatprep.mubr.f32.mxu0 0.0
      %7438 = vmatmul.mubr.f32.gmra.mrb[0].mxu0 %v7295
      %v7439 = vpop.f32.mrb[0].mxu0
      %v7440 = vadd.f32 0.0, %v7439
      %v7441 = vpop.f32.mrb[0].mxu0
      %7442 = vmatprep.mubr.f32.mxu0 0.0
      %7443 = vmatmul.mubr.f32.gmra.mrb[0].mxu0 %v7297
      %v7444 = vpop.f32.mrb[0].mxu0
      %v7445 = vadd.f32 0.0, %v7444
      %v7446 = vpop.f32.mrb[0].mxu0
      %7447 = vmatprep.mubr.f32.mxu0 0.0
      %7448 = vmatmul.mubr.f32.gmra.mrb[0].mxu0 %v7299
      %v7449 = vpop.f32.mrb[0].mxu0
      %v7450 = vadd.f32 0.0, %v7449
      %v7451 = vpop.f32.mrb[0].mxu0
      %7452 = vmatprep.mubr.f32.mxu0 0.0
      %7453 = vmatmul.mubr.f32.gmra.mrb[0].mxu0 %v7301
      %v7454 = vpop.f32.mrb[0].mxu0
      %v7455 = vadd.f32 0.0, %v7454
      %v7456 = vpop.f32.mrb[0].mxu0
      %7457 = vmatprep.mubr.f32.mxu0 0.0
      %7458 = vmatmul.mubr.f32.gmra.mrb[0].mxu0 %v7303
      %v7459 = vpop.f32.mrb[0].mxu0
      %v7460 = vadd.f32 0.0, %v7459
      %v7461 = vpop.f32.mrb[0].mxu0
      %7462 = vmatprep.mubr.f32.mxu0 0.0
      %7463 = vmatmul.mubr.f32.gmra.mrb[0].mxu0 %v7305
      %v7464 = vpop.f32.mrb[0].mxu0
      %v7465 = vadd.f32 0.0, %v7464
      %v7466 = vpop.f32.mrb[0].mxu0
      %7467 = vmatprep.mubr.f32.mxu0 0.0
      %7468 = vmatmul.mubr.f32.gmra.mrb[0].mxu0 %v7307
      %v7469 = vpop.f32.mrb[0].mxu0
      %v7470 = vadd.f32 0.0, %v7469
      %v7471 = vpop.f32.mrb[0].mxu0
      %7472 = vmatprep.mubr.f32.mxu0 0.0
      %7473 = vmatmul.mubr.f32.gmra.mrb[0].mxu0 %v7309
      %v7474 = vpop.f32.mrb[0].mxu0
      %v7475 = vadd.f32 0.0, %v7474
      %v7476 = vpop.f32.mrb[0].mxu0
      %7477 = vmatprep.mubr.f32.mxu0 0.0
      %7478 = vmatmul.mubr.f32.gmra.mrb[0].mxu0 %v7311
      %v7479 = vpop.f32.mrb[0].mxu0
      %v7480 = vadd.f32 0.0, %v7479
      %v7481 = vpop.f32.mrb[0].mxu0
      %7482 = vmatprep.mubr.f32.mxu0 0.0
      %7483 = vmatmul.mubr.f32.gmra.mrb[0].mxu0 %v7313
      %v7484 = vpop.f32.mrb[0].mxu0
      %v7485 = vadd.f32 0.0, %v7484
      %v7486 = vpop.f32.mrb[0].mxu0
      %7487 = vmatprep.mubr.f32.mxu0 0.0
      %7488 = vmatmul.mubr.f32.gmra.mrb[0].mxu0 %v7315
      %v7489 = vpop.f32.mrb[0].mxu0
      %v7490 = vadd.f32 0.0, %v7489
      %v7491 = vpop.f32.mrb[0].mxu0
      %7492 = vmatprep.mubr.f32.mxu0 0.0
      %7493 = vmatmul.mubr.f32.gmra.mrb[0].mxu0 %v7317
      %v7494 = vpop.f32.mrb[0].mxu0
      %v7495 = vadd.f32 0.0, %v7494
      %v7496 = vpop.f32.mrb[0].mxu0
      %7497 = vmatprep.mubr.f32.mxu0 0.0
      %7498 = vmatmul.mubr.f32.gmra.mrb[0].mxu0 %v7319
      %v7499 = vpop.f32.mrb[0].mxu0
      %v7500 = vadd.f32 0.0, %v7499
      %v7501 = vpop.f32.mrb[0].mxu0
      %7502 = vmatprep.mubr.f32.mxu0 0.0
      %7503 = vmatmul.mubr.f32.gmra.mrb[0].mxu0 %v7321
      %v7504 = vpop.f32.mrb[0].mxu0
      %v7505 = vadd.f32 0.0, %v7504
      %v7506 = vpop.f32.mrb[0].mxu0
      %7507 = vmatprep.mubr.f32.mxu0 0.0
      %7508 = vmatmul.mubr.f32.gmra.mrb[0].mxu0 %v7323
      %v7509 = vpop.f32.mrb[0].mxu0
      %v7510 = vadd.f32 0.0, %v7509
      %v7511 = vpop.f32.mrb[0].mxu0
      %7512 = vmatprep.mubr.f32.mxu0 0.0
      %7513 = vmatmul.mubr.f32.gmra.mrb[0].mxu0 %v7325
      %v7514 = vpop.f32.mrb[0].mxu0
      %v7515 = vadd.f32 0.0, %v7514
      %v7516 = vpop.f32.mrb[0].mxu0
      %7517 = vmatprep.mubr.f32.mxu0 0.0
      %7518 = vmatmul.mubr.f32.gmra.mrb[0].mxu0 %v7327
      %v7519 = vpop.f32.mrb[0].mxu0
      %v7520 = vadd.f32 0.0, %v7519
      %v7521 = vpop.f32.mrb[0].mxu0
      %7522 = vmatprep.mubr.f32.mxu0 0.0
      %7523 = vmatmul.mubr.f32.gmra.mrb[0].mxu0 %v7329
      %v7524 = vpop.f32.mrb[0].mxu0
      %v7525 = vadd.f32 0.0, %v7524
      %v7526 = vpop.f32.mrb[0].mxu0
      %7527 = vmatprep.mubr.f32.mxu0 0.0
      %7528 = vmatmul.mubr.f32.gmra.mrb[0].mxu0 %v7331
      %v7529 = vpop.f32.mrb[0].mxu0
      %v7530 = vadd.f32 0.0, %v7529
      %v7531 = vpop.f32.mrb[0].mxu0
      %7532 = vmatprep.mubr.f32.mxu0 0.0
      %7533 = vmatmul.mubr.f32.gmra.mrb[0].mxu0 %v7333
      %v7534 = vpop.f32.mrb[0].mxu0
      %v7535 = vadd.f32 0.0, %v7534
      %v7536 = vpop.f32.mrb[0].mxu0
      %7537 = vmatprep.mubr.f32.mxu0 0.0
      %7538 = vmatmul.mubr.f32.gmra.mrb[0].mxu0 %v7335
      %v7539 = vpop.f32.mrb[0].mxu0
      %v7540 = vadd.f32 0.0, %v7539
      %v7541 = vpop.f32.mrb[0].mxu0
      %7542 = vmatprep.mubr.f32.mxu0 0.0
      %7543 = vmatmul.mubr.f32.gmra.mrb[0].mxu0 %v7337
      %v7544 = vpop.f32.mrb[0].mxu0
      %v7545 = vadd.f32 0.0, %v7544
      %v7546 = vpop.f32.mrb[0].mxu0
      %7547 = vmatprep.mubr.f32.mxu0 0.0
      %7548 = vmatmul.mubr.f32.gmra.mrb[0].mxu0 %v7339
      %v7549 = vpop.f32.mrb[0].mxu0
      %v7550 = vadd.f32 0.0, %v7549
      %v7551 = vpop.f32.mrb[0].mxu0
      %7552 = vmatprep.mubr.f32.mxu0 0.0
      %7553 = vmatmul.mubr.f32.gmra.mrb[0].mxu0 %v7341
      %v7554 = vpop.f32.mrb[0].mxu0
      %v7555 = vadd.f32 0.0, %v7554
      %v7556 = vpop.f32.mrb[0].mxu0
      %7557 = vmatprep.mubr.f32.mxu0 0.0
      %7558 = vmatmul.mubr.f32.gmra.mrb[0].mxu0 %v7343
      %v7559 = vpop.f32.mrb[0].mxu0
      %v7560 = vadd.f32 0.0, %v7559
      %v7561 = vpop.f32.mrb[0].mxu0
      %7562 = vmatprep.mubr.f32.mxu0 0.0
      %7563 = vmatmul.mubr.f32.gmra.mrb[0].mxu0 %v7345
      %v7564 = vpop.f32.mrb[0].mxu0
      %v7565 = vadd.f32 0.0, %v7564
      %v7566 = vpop.f32.mrb[0].mxu0
      %7567 = vmatprep.mubr.f32.mxu0 0.0
      %7568 = vmatmul.mubr.f32.gmra.mrb[0].mxu0 %v7347
      %v7569 = vpop.f32.mrb[0].mxu0
      %v7570 = vadd.f32 0.0, %v7569
      %v7571 = vpop.f32.mrb[0].mxu0
      %7572 = vmatprep.mubr.f32.mxu0 0.0
      %7573 = vmatmul.mubr.f32.gmra.mrb[0].mxu0 %v7349
      %v7574 = vpop.f32.mrb[0].mxu0
      %v7575 = vadd.f32 0.0, %v7574
      %v7576 = vpop.f32.mrb[0].mxu0
      %7577 = vmatprep.mubr.f32.mxu0 0.0
      %7578 = vmatmul.mubr.f32.gmra.mrb[0].mxu0 %v7351
      %v7579 = vpop.f32.mrb[0].mxu0
      %v7580 = vadd.f32 0.0, %v7579
      %v7581 = vpop.f32.mrb[0].mxu0
      %7582 = vmatprep.mubr.f32.mxu0 0.0
      %7583 = vmatmul.mubr.f32.gmra.mrb[0].mxu0 %v7353
      %v7584 = vpop.f32.mrb[0].mxu0
      %v7585 = vadd.f32 0.0, %v7584
      %v7586 = vpop.f32.mrb[0].mxu0
      %7587 = vmatprep.mubr.f32.mxu0 0.0
      %7588 = vmatmul.mubr.f32.gmra.mrb[0].mxu0 %v7355
      %v7589 = vpop.f32.mrb[0].mxu0
      %v7590 = vadd.f32 0.0, %v7589
      %v7591 = vpop.f32.mrb[0].mxu0
      %7592 = vmatprep.mubr.f32.mxu0 0.0
      %7593 = vmatmul.mubr.f32.gmra.mrb[0].mxu0 %v7357
      %v7594 = vpop.f32.mrb[0].mxu0
      %v7595 = vadd.f32 0.0, %v7594
      %v7596 = vpop.f32.mrb[0].mxu0
      %7597 = vmatprep.mubr.f32.mxu0 0.0
      %7598 = vmatmul.mubr.f32.gmra.mrb[0].mxu0 %v7359
      %v7599 = vpop.f32.mrb[0].mxu0
      %v7600 = vadd.f32 0.0, %v7599
      %v7601 = vpop.f32.mrb[0].mxu0
      %7602 = vmatprep.mubr.f32.mxu0 0.0
      %7603 = vmatmul.mubr.f32.gmra.mrb[0].mxu0 %v7361
      %v7604 = vpop.f32.mrb[0].mxu0
      %v7605 = vadd.f32 0.0, %v7604
      %v7606 = vpop.f32.mrb[0].mxu0
      %7607 = vdwg.mxu0
      %v7608 = vadd.f32 %v7178, %v7430
      %v7609 = vadd.f32 %v7179, %v7435
      %v7610 = vadd.f32 %v7180, %v7440
      %v7611 = vadd.f32 %v7181, %v7445
      %v7612 = vadd.f32 %v7182, %v7450
      %v7613 = vadd.f32 %v7183, %v7455
      %v7614 = vadd.f32 %v7184, %v7460
      %v7615 = vadd.f32 %v7185, %v7465
      %v7616 = vadd.f32 %v7186, %v7470
      %v7617 = vadd.f32 %v7187, %v7475
      %v7618 = vadd.f32 %v7188, %v7480
      %v7619 = vadd.f32 %v7189, %v7485
      %v7620 = vadd.f32 %v7190, %v7490
      %v7621 = vadd.f32 %v7191, %v7495
      %v7622 = vadd.f32 %v7192, %v7500
      %v7623 = vadd.f32 %v7193, %v7505
      %v7624 = vadd.f32 %v7194, %v7510
      %v7625 = vadd.f32 %v7195, %v7515
      %v7626 = vadd.f32 %v7196, %v7520
      %v7627 = vadd.f32 %v7197, %v7525
      %v7628 = vadd.f32 %v7198, %v7530
      %v7629 = vadd.f32 %v7199, %v7535
      %v7630 = vadd.f32 %v7200, %v7540
      %v7631 = vadd.f32 %v7201, %v7545
      %v7632 = vadd.f32 %v7202, %v7550
      %v7633 = vadd.f32 %v7203, %v7555
      %v7634 = vadd.f32 %v7204, %v7560
      %v7635 = vadd.f32 %v7205, %v7565
      %v7636 = vadd.f32 %v7206, %v7570
      %v7637 = vadd.f32 %v7207, %v7575
      %v7638 = vadd.f32 %v7208, %v7580
      %v7639 = vadd.f32 %v7209, %v7585
      %v7640 = vadd.f32 %v7210, %v7590
      %v7641 = vadd.f32 %v7211, %v7595
      %v7642 = vadd.f32 %v7212, %v7600
      %v7643 = vadd.f32 %v7213, %v7605
      %s7644 = scalar_lea.vmem %s11, 80
      %v7645 = vld [vmem:[%s7644] sm:$0xff]
      %v7646 = vld [vmem:[%s7644 + $0x8] sm:$0xff]
      %v7647 = vrot.slane %v5706, 4
      %v7648 = vrot.slane %v5707, 4
      %v7649 = vsel %vm862, %v7647, %v7648
      %v7650 = vrot.slane %v5708, 4
      %v7651 = vsel %vm862, %v7648, %v7650
      %v7652 = vrot.slane %v5709, 4
      %v7653 = vsel %vm862, %v7650, %v7652
      %v7654 = vrot.slane %v5710, 4
      %v7655 = vsel %vm862, %v7652, %v7654
      %v7656 = vrot.slane %v5711, 4
      %v7657 = vsel %vm862, %v7654, %v7656
      %v7658 = vrot.slane %v5712, 4
      %v7659 = vsel %vm862, %v7656, %v7658
      %v7660 = vrot.slane %v5713, 4
      %v7661 = vsel %vm862, %v7658, %v7660
      %v7662 = vrot.slane %v5714, 4
      %v7663 = vsel %vm862, %v7660, %v7662
      %v7664 = vrot.slane %v5715, 4
      %v7665 = vsel %vm862, %v7662, %v7664
      %v7666 = vrot.slane %v5716, 4
      %v7667 = vsel %vm862, %v7664, %v7666
      %v7668 = vrot.slane %v5717, 4
      %v7669 = vsel %vm862, %v7666, %v7668
      %v7670 = vrot.slane %v5718, 4
      %v7671 = vsel %vm862, %v7668, %v7670
      %v7672 = vrot.slane %v5719, 4
      %v7673 = vsel %vm862, %v7670, %v7672
      %v7674 = vrot.slane %v5720, 4
      %v7675 = vsel %vm862, %v7672, %v7674
      %v7676 = vrot.slane %v5721, 4
      %v7677 = vsel %vm862, %v7674, %v7676
      %v7678 = vrot.slane %v5722, 4
      %v7679 = vsel %vm862, %v7676, %v7678
      %v7680 = vrot.slane %v5723, 4
      %v7681 = vsel %vm862, %v7678, %v7680
      %v7682 = vrot.slane %v5724, 4
      %v7683 = vsel %vm862, %v7680, %v7682
      %v7684 = vrot.slane %v5725, 4
      %v7685 = vsel %vm862, %v7682, %v7684
      %v7686 = vrot.slane %v5726, 4
      %v7687 = vsel %vm862, %v7684, %v7686
      %v7688 = vrot.slane %v5727, 4
      %v7689 = vsel %vm862, %v7686, %v7688
      %v7690 = vrot.slane %v5728, 4
      %v7691 = vsel %vm862, %v7688, %v7690
      %v7692 = vrot.slane %v5729, 4
      %v7693 = vsel %vm862, %v7690, %v7692
      %v7694 = vrot.slane %v5730, 4
      %v7695 = vsel %vm862, %v7692, %v7694
      %v7696 = vrot.slane %v5731, 4
      %v7697 = vsel %vm862, %v7694, %v7696
      %v7698 = vrot.slane %v5732, 4
      %v7699 = vsel %vm862, %v7696, %v7698
      %v7700 = vrot.slane %v5733, 4
      %v7701 = vsel %vm862, %v7698, %v7700
      %v7702 = vrot.slane %v5734, 4
      %v7703 = vsel %vm862, %v7700, %v7702
      %v7704 = vrot.slane %v5735, 4
      %v7705 = vsel %vm862, %v7702, %v7704
      %v7706 = vrot.slane %v5736, 4
      %v7707 = vsel %vm862, %v7704, %v7706
      %v7708 = vrot.slane %v5737, 4
      %v7709 = vsel %vm862, %v7706, %v7708
      %v7710 = vrot.slane %v5738, 4
      %v7711 = vsel %vm862, %v7708, %v7710
      %v7712 = vrot.slane %v5739, 4
      %v7713 = vsel %vm862, %v7710, %v7712
      %v7714 = vrot.slane %v5740, 4
      %v7715 = vsel %vm862, %v7712, %v7714
      %v7716 = vrot.slane %v5741, 4
      %v7717 = vsel %vm862, %v7714, %v7716
      %v7718 = vrot.slane %v5742, 4
      %v7719 = vsel %vm862, %v7716, %v7718
      %v7720 = vsel %vm4847, %v7649, 0
      %v7722 = vsel %vm4847, %v7651, 0
      %v7724 = vsel %vm4847, %v7653, 0
      %v7726 = vsel %vm4847, %v7655, 0
      %v7728 = vsel %vm4847, %v7657, 0
      %v7730 = vsel %vm4847, %v7659, 0
      %v7732 = vsel %vm4847, %v7661, 0
      %v7734 = vsel %vm4847, %v7663, 0
      %v7736 = vsel %vm4847, %v7665, 0
      %v7738 = vsel %vm4847, %v7667, 0
      %v7740 = vsel %vm4847, %v7669, 0
      %v7742 = vsel %vm4847, %v7671, 0
      %v7744 = vsel %vm4847, %v7673, 0
      %v7746 = vsel %vm4847, %v7675, 0
      %v7748 = vsel %vm4847, %v7677, 0
      %v7750 = vsel %vm4847, %v7679, 0
      %v7752 = vsel %vm4847, %v7681, 0
      %v7754 = vsel %vm4847, %v7683, 0
      %v7756 = vsel %vm4847, %v7685, 0
      %v7758 = vsel %vm4847, %v7687, 0
      %v7760 = vsel %vm4847, %v7689, 0
      %v7762 = vsel %vm4847, %v7691, 0
      %v7764 = vsel %vm4847, %v7693, 0
      %v7766 = vsel %vm4847, %v7695, 0
      %v7768 = vsel %vm4847, %v7697, 0
      %v7770 = vsel %vm4847, %v7699, 0
      %v7772 = vsel %vm4847, %v7701, 0
      %v7774 = vsel %vm4847, %v7703, 0
      %v7776 = vsel %vm4847, %v7705, 0
      %v7778 = vsel %vm4847, %v7707, 0
      %v7780 = vsel %vm4847, %v7709, 0
      %v7782 = vsel %vm4847, %v7711, 0
      %v7784 = vsel %vm4847, %v7713, 0
      %v7786 = vsel %vm4847, %v7715, 0
      %v7788 = vsel %vm4847, %v7717, 0
      %v7790 = vsel %vm4847, %v7719, 0
      %7792 = vmatprep.subr.mxu0 0.0
      %7793 = vmatpush1.msra.mxu0 %v7645
      %7794 = vmatprep.subr.mxu0 0.0
      %7795 = vmatpush1.msra.mxu0 %v7646
      %7796 = vmatprep.subr.mxu0 0.0
      %7797 = vmatpush1.msra.mxu0 0.0
      %7798 = vmatprep.subr.mxu0 0.0
      %7799 = vmatpush1.msra.mxu0 0.0
      %7800 = vmatprep.subr.mxu0 0.0
      %7801 = vmatpush1.msra.mxu0 0.0
      %7802 = vmatprep.subr.mxu0 0.0
      %7803 = vmatpush1.msra.mxu0 0.0
      %7804 = vmatprep.subr.mxu0 0.0
      %7805 = vmatpush1.msra.mxu0 0.0
      %7806 = vmatprep.subr.mxu0 0.0
      %7807 = vmatpush1.msra.mxu0 0.0
      %7808 = vmatprep.subr.mxu0 0.0
      %7809 = vmatpush1.msra.mxu0 0.0
      %7810 = vmatprep.subr.mxu0 0.0
      %7811 = vmatpush1.msra.mxu0 0.0
      %7812 = vmatprep.subr.mxu0 0.0
      %7813 = vmatpush1.msra.mxu0 0.0
      %7814 = vmatprep.subr.mxu0 0.0
      %7815 = vmatpush1.msra.mxu0 0.0
      %7816 = vmatprep.subr.mxu0 0.0
      %7817 = vmatpush1.msra.mxu0 0.0
      %7818 = vmatprep.subr.mxu0 0.0
      %7819 = vmatpush1.msra.mxu0 0.0
      %7820 = vmatprep.subr.mxu0 0.0
      %7821 = vmatpush1.msra.mxu0 0.0
      %7822 = vmatprep.subr.mxu0 0.0
      %7823 = vmatpush1.msra.mxu0 0.0
      %7824 = vmatprep.subr.mxu0 0.0
      %7825 = vmatpush1.msra.mxu0 0.0
      %7826 = vmatprep.subr.mxu0 0.0
      %7827 = vmatpush1.msra.mxu0 0.0
      %7828 = vmatprep.subr.mxu0 0.0
      %7829 = vmatpush1.msra.mxu0 0.0
      %7830 = vmatprep.subr.mxu0 0.0
      %7831 = vmatpush1.msra.mxu0 0.0
      %7832 = vmatprep.subr.mxu0 0.0
      %7833 = vmatpush1.msra.mxu0 0.0
      %7834 = vmatprep.subr.mxu0 0.0
      %7835 = vmatpush1.msra.mxu0 0.0
      %7836 = vmatprep.subr.mxu0 0.0
      %7837 = vmatpush1.msra.mxu0 0.0
      %7838 = vmatprep.subr.mxu0 0.0
      %7839 = vmatpush1.msra.mxu0 0.0
      %7840 = vmatprep.subr.mxu0 0.0
      %7841 = vmatpush1.msra.mxu0 0.0
      %7842 = vmatprep.subr.mxu0 0.0
      %7843 = vmatpush1.msra.mxu0 0.0
      %7844 = vmatprep.subr.mxu0 0.0
      %7845 = vmatpush1.msra.mxu0 0.0
      %7846 = vmatprep.subr.mxu0 0.0
      %7847 = vmatpush1.msra.mxu0 0.0
      %7848 = vmatprep.subr.mxu0 0.0
      %7849 = vmatpush1.msra.mxu0 0.0
      %7850 = vmatprep.subr.mxu0 0.0
      %7851 = vmatpush1.msra.mxu0 0.0
      %7852 = vmatprep.subr.mxu0 0.0
      %7853 = vmatpush1.msra.mxu0 0.0
      %7854 = vmatprep.subr.mxu0 0.0
      %7855 = vmatpush1.msra.mxu0 0.0
      %7856 = vmatprep.mubr.f32.mxu0 0.0
      %7857 = vmatmul.mubr.f32.gmra.mrb[0].mxu0 %v7720
      %v7858 = vpop.f32.mrb[0].mxu0
      %v7859 = vadd.f32 0.0, %v7858
      %v7860 = vpop.f32.mrb[0].mxu0
      %7861 = vmatprep.mubr.f32.mxu0 0.0
      %7862 = vmatmul.mubr.f32.gmra.mrb[0].mxu0 %v7722
      %v7863 = vpop.f32.mrb[0].mxu0
      %v7864 = vadd.f32 0.0, %v7863
      %v7865 = vpop.f32.mrb[0].mxu0
      %7866 = vmatprep.mubr.f32.mxu0 0.0
      %7867 = vmatmul.mubr.f32.gmra.mrb[0].mxu0 %v7724
      %v7868 = vpop.f32.mrb[0].mxu0
      %v7869 = vadd.f32 0.0, %v7868
      %v7870 = vpop.f32.mrb[0].mxu0
      %7871 = vmatprep.mubr.f32.mxu0 0.0
      %7872 = vmatmul.mubr.f32.gmra.mrb[0].mxu0 %v7726
      %v7873 = vpop.f32.mrb[0].mxu0
      %v7874 = vadd.f32 0.0, %v7873
      %v7875 = vpop.f32.mrb[0].mxu0
      %7876 = vmatprep.mubr.f32.mxu0 0.0
      %7877 = vmatmul.mubr.f32.gmra.mrb[0].mxu0 %v7728
      %v7878 = vpop.f32.mrb[0].mxu0
      %v7879 = vadd.f32 0.0, %v7878
      %v7880 = vpop.f32.mrb[0].mxu0
      %7881 = vmatprep.mubr.f32.mxu0 0.0
      %7882 = vmatmul.mubr.f32.gmra.mrb[0].mxu0 %v7730
      %v7883 = vpop.f32.mrb[0].mxu0
      %v7884 = vadd.f32 0.0, %v7883
      %v7885 = vpop.f32.mrb[0].mxu0
      %7886 = vmatprep.mubr.f32.mxu0 0.0
      %7887 = vmatmul.mubr.f32.gmra.mrb[0].mxu0 %v7732
      %v7888 = vpop.f32.mrb[0].mxu0
      %v7889 = vadd.f32 0.0, %v7888
      %v7890 = vpop.f32.mrb[0].mxu0
      %7891 = vmatprep.mubr.f32.mxu0 0.0
      %7892 = vmatmul.mubr.f32.gmra.mrb[0].mxu0 %v7734
      %v7893 = vpop.f32.mrb[0].mxu0
      %v7894 = vadd.f32 0.0, %v7893
      %v7895 = vpop.f32.mrb[0].mxu0
      %7896 = vmatprep.mubr.f32.mxu0 0.0
      %7897 = vmatmul.mubr.f32.gmra.mrb[0].mxu0 %v7736
      %v7898 = vpop.f32.mrb[0].mxu0
      %v7899 = vadd.f32 0.0, %v7898
      %v7900 = vpop.f32.mrb[0].mxu0
      %7901 = vmatprep.mubr.f32.mxu0 0.0
      %7902 = vmatmul.mubr.f32.gmra.mrb[0].mxu0 %v7738
      %v7903 = vpop.f32.mrb[0].mxu0
      %v7904 = vadd.f32 0.0, %v7903
      %v7905 = vpop.f32.mrb[0].mxu0
      %7906 = vmatprep.mubr.f32.mxu0 0.0
      %7907 = vmatmul.mubr.f32.gmra.mrb[0].mxu0 %v7740
      %v7908 = vpop.f32.mrb[0].mxu0
      %v7909 = vadd.f32 0.0, %v7908
      %v7910 = vpop.f32.mrb[0].mxu0
      %7911 = vmatprep.mubr.f32.mxu0 0.0
      %7912 = vmatmul.mubr.f32.gmra.mrb[0].mxu0 %v7742
      %v7913 = vpop.f32.mrb[0].mxu0
      %v7914 = vadd.f32 0.0, %v7913
      %v7915 = vpop.f32.mrb[0].mxu0
      %7916 = vmatprep.mubr.f32.mxu0 0.0
      %7917 = vmatmul.mubr.f32.gmra.mrb[0].mxu0 %v7744
      %v7918 = vpop.f32.mrb[0].mxu0
      %v7919 = vadd.f32 0.0, %v7918
      %v7920 = vpop.f32.mrb[0].mxu0
      %7921 = vmatprep.mubr.f32.mxu0 0.0
      %7922 = vmatmul.mubr.f32.gmra.mrb[0].mxu0 %v7746
      %v7923 = vpop.f32.mrb[0].mxu0
      %v7924 = vadd.f32 0.0, %v7923
      %v7925 = vpop.f32.mrb[0].mxu0
      %7926 = vmatprep.mubr.f32.mxu0 0.0
      %7927 = vmatmul.mubr.f32.gmra.mrb[0].mxu0 %v7748
      %v7928 = vpop.f32.mrb[0].mxu0
      %v7929 = vadd.f32 0.0, %v7928
      %v7930 = vpop.f32.mrb[0].mxu0
      %7931 = vmatprep.mubr.f32.mxu0 0.0
      %7932 = vmatmul.mubr.f32.gmra.mrb[0].mxu0 %v7750
      %v7933 = vpop.f32.mrb[0].mxu0
      %v7934 = vadd.f32 0.0, %v7933
      %v7935 = vpop.f32.mrb[0].mxu0
      %7936 = vmatprep.mubr.f32.mxu0 0.0
      %7937 = vmatmul.mubr.f32.gmra.mrb[0].mxu0 %v7752
      %v7938 = vpop.f32.mrb[0].mxu0
      %v7939 = vadd.f32 0.0, %v7938
      %v7940 = vpop.f32.mrb[0].mxu0
      %7941 = vmatprep.mubr.f32.mxu0 0.0
      %7942 = vmatmul.mubr.f32.gmra.mrb[0].mxu0 %v7754
      %v7943 = vpop.f32.mrb[0].mxu0
      %v7944 = vadd.f32 0.0, %v7943
      %v7945 = vpop.f32.mrb[0].mxu0
      %7946 = vmatprep.mubr.f32.mxu0 0.0
      %7947 = vmatmul.mubr.f32.gmra.mrb[0].mxu0 %v7756
      %v7948 = vpop.f32.mrb[0].mxu0
      %v7949 = vadd.f32 0.0, %v7948
      %v7950 = vpop.f32.mrb[0].mxu0
      %7951 = vmatprep.mubr.f32.mxu0 0.0
      %7952 = vmatmul.mubr.f32.gmra.mrb[0].mxu0 %v7758
      %v7953 = vpop.f32.mrb[0].mxu0
      %v7954 = vadd.f32 0.0, %v7953
      %v7955 = vpop.f32.mrb[0].mxu0
      %7956 = vmatprep.mubr.f32.mxu0 0.0
      %7957 = vmatmul.mubr.f32.gmra.mrb[0].mxu0 %v7760
      %v7958 = vpop.f32.mrb[0].mxu0
      %v7959 = vadd.f32 0.0, %v7958
      %v7960 = vpop.f32.mrb[0].mxu0
      %7961 = vmatprep.mubr.f32.mxu0 0.0
      %7962 = vmatmul.mubr.f32.gmra.mrb[0].mxu0 %v7762
      %v7963 = vpop.f32.mrb[0].mxu0
      %v7964 = vadd.f32 0.0, %v7963
      %v7965 = vpop.f32.mrb[0].mxu0
      %7966 = vmatprep.mubr.f32.mxu0 0.0
      %7967 = vmatmul.mubr.f32.gmra.mrb[0].mxu0 %v7764
      %v7968 = vpop.f32.mrb[0].mxu0
      %v7969 = vadd.f32 0.0, %v7968
      %v7970 = vpop.f32.mrb[0].mxu0
      %7971 = vmatprep.mubr.f32.mxu0 0.0
      %7972 = vmatmul.mubr.f32.gmra.mrb[0].mxu0 %v7766
      %v7973 = vpop.f32.mrb[0].mxu0
      %v7974 = vadd.f32 0.0, %v7973
      %v7975 = vpop.f32.mrb[0].mxu0
      %7976 = vmatprep.mubr.f32.mxu0 0.0
      %7977 = vmatmul.mubr.f32.gmra.mrb[0].mxu0 %v7768
      %v7978 = vpop.f32.mrb[0].mxu0
      %v7979 = vadd.f32 0.0, %v7978
      %v7980 = vpop.f32.mrb[0].mxu0
      %7981 = vmatprep.mubr.f32.mxu0 0.0
      %7982 = vmatmul.mubr.f32.gmra.mrb[0].mxu0 %v7770
      %v7983 = vpop.f32.mrb[0].mxu0
      %v7984 = vadd.f32 0.0, %v7983
      %v7985 = vpop.f32.mrb[0].mxu0
      %7986 = vmatprep.mubr.f32.mxu0 0.0
      %7987 = vmatmul.mubr.f32.gmra.mrb[0].mxu0 %v7772
      %v7988 = vpop.f32.mrb[0].mxu0
      %v7989 = vadd.f32 0.0, %v7988
      %v7990 = vpop.f32.mrb[0].mxu0
      %7991 = vmatprep.mubr.f32.mxu0 0.0
      %7992 = vmatmul.mubr.f32.gmra.mrb[0].mxu0 %v7774
      %v7993 = vpop.f32.mrb[0].mxu0
      %v7994 = vadd.f32 0.0, %v7993
      %v7995 = vpop.f32.mrb[0].mxu0
      %7996 = vmatprep.mubr.f32.mxu0 0.0
      %7997 = vmatmul.mubr.f32.gmra.mrb[0].mxu0 %v7776
      %v7998 = vpop.f32.mrb[0].mxu0
      %v7999 = vadd.f32 0.0, %v7998
      %v8000 = vpop.f32.mrb[0].mxu0
      %8001 = vmatprep.mubr.f32.mxu0 0.0
      %8002 = vmatmul.mubr.f32.gmra.mrb[0].mxu0 %v7778
      %v8003 = vpop.f32.mrb[0].mxu0
      %v8004 = vadd.f32 0.0, %v8003
      %v8005 = vpop.f32.mrb[0].mxu0
      %8006 = vmatprep.mubr.f32.mxu0 0.0
      %8007 = vmatmul.mubr.f32.gmra.mrb[0].mxu0 %v7780
      %v8008 = vpop.f32.mrb[0].mxu0
      %v8009 = vadd.f32 0.0, %v8008
      %v8010 = vpop.f32.mrb[0].mxu0
      %8011 = vmatprep.mubr.f32.mxu0 0.0
      %8012 = vmatmul.mubr.f32.gmra.mrb[0].mxu0 %v7782
      %v8013 = vpop.f32.mrb[0].mxu0
      %v8014 = vadd.f32 0.0, %v8013
      %v8015 = vpop.f32.mrb[0].mxu0
      %8016 = vmatprep.mubr.f32.mxu0 0.0
      %8017 = vmatmul.mubr.f32.gmra.mrb[0].mxu0 %v7784
      %v8018 = vpop.f32.mrb[0].mxu0
      %v8019 = vadd.f32 0.0, %v8018
      %v8020 = vpop.f32.mrb[0].mxu0
      %8021 = vmatprep.mubr.f32.mxu0 0.0
      %8022 = vmatmul.mubr.f32.gmra.mrb[0].mxu0 %v7786
      %v8023 = vpop.f32.mrb[0].mxu0
      %v8024 = vadd.f32 0.0, %v8023
      %v8025 = vpop.f32.mrb[0].mxu0
      %8026 = vmatprep.mubr.f32.mxu0 0.0
      %8027 = vmatmul.mubr.f32.gmra.mrb[0].mxu0 %v7788
      %v8028 = vpop.f32.mrb[0].mxu0
      %v8029 = vadd.f32 0.0, %v8028
      %v8030 = vpop.f32.mrb[0].mxu0
      %8031 = vmatprep.mubr.f32.mxu0 0.0
      %8032 = vmatmul.mubr.f32.gmra.mrb[0].mxu0 %v7790
      %v8033 = vpop.f32.mrb[0].mxu0
      %v8034 = vadd.f32 0.0, %v8033
      %v8035 = vpop.f32.mrb[0].mxu0
      %8036 = vdwg.mxu0
      %v8037 = vadd.f32 %v7608, %v7859
      %v8038 = vadd.f32 %v7609, %v7864
      %v8039 = vadd.f32 %v7610, %v7869
      %v8040 = vadd.f32 %v7611, %v7874
      %v8041 = vadd.f32 %v7612, %v7879
      %v8042 = vadd.f32 %v7613, %v7884
      %v8043 = vadd.f32 %v7614, %v7889
      %v8044 = vadd.f32 %v7615, %v7894
      %v8045 = vadd.f32 %v7616, %v7899
      %v8046 = vadd.f32 %v7617, %v7904
      %v8047 = vadd.f32 %v7618, %v7909
      %v8048 = vadd.f32 %v7619, %v7914
      %v8049 = vadd.f32 %v7620, %v7919
      %v8050 = vadd.f32 %v7621, %v7924
      %v8051 = vadd.f32 %v7622, %v7929
      %v8052 = vadd.f32 %v7623, %v7934
      %v8053 = vadd.f32 %v7624, %v7939
      %v8054 = vadd.f32 %v7625, %v7944
      %v8055 = vadd.f32 %v7626, %v7949
      %v8056 = vadd.f32 %v7627, %v7954
      %v8057 = vadd.f32 %v7628, %v7959
      %v8058 = vadd.f32 %v7629, %v7964
      %v8059 = vadd.f32 %v7630, %v7969
      %v8060 = vadd.f32 %v7631, %v7974
      %v8061 = vadd.f32 %v7632, %v7979
      %v8062 = vadd.f32 %v7633, %v7984
      %v8063 = vadd.f32 %v7634, %v7989
      %v8064 = vadd.f32 %v7635, %v7994
      %v8065 = vadd.f32 %v7636, %v7999
      %v8066 = vadd.f32 %v7637, %v8004
      %v8067 = vadd.f32 %v7638, %v8009
      %v8068 = vadd.f32 %v7639, %v8014
      %v8069 = vadd.f32 %v7640, %v8019
      %v8070 = vadd.f32 %v7641, %v8024
      %v8071 = vadd.f32 %v7642, %v8029
      %v8072 = vadd.f32 %v7643, %v8034
      %s8073 = scalar_lea.vmem %s11, 96
      %v8074 = vld [vmem:[%s8073] sm:$0xff]
      %v8075 = vld [vmem:[%s8073 + $0x8] sm:$0xff]
      %v8078 = vrot.slane %v5743, 4
      %v8079 = vsel %vm862, %v7718, %v8078
      %v8080 = vrot.slane %v5744, 4
      %v8081 = vsel %vm862, %v8078, %v8080
      %v8082 = vsel %vm4847, %v8079, 0
      %v8084 = vsel %vm4847, %v8081, 0
      %8086 = vmatprep.subr.mxu0 0.0
      %8087 = vmatpush1.msra.mxu0 %v8074
      %8088 = vmatprep.subr.mxu0 0.0
      %8089 = vmatpush1.msra.mxu0 %v8075
      %8090 = vmatprep.subr.mxu0 0.0
      %8091 = vmatpush1.msra.mxu0 0.0
      %8092 = vmatprep.subr.mxu0 0.0
      %8093 = vmatpush1.msra.mxu0 0.0
      %8094 = vmatprep.subr.mxu0 0.0
      %8095 = vmatpush1.msra.mxu0 0.0
      %8096 = vmatprep.subr.mxu0 0.0
      %8097 = vmatpush1.msra.mxu0 0.0
      %8098 = vmatprep.subr.mxu0 0.0
      %8099 = vmatpush1.msra.mxu0 0.0
      %8100 = vmatprep.subr.mxu0 0.0
      %8101 = vmatpush1.msra.mxu0 0.0
      %8102 = vmatprep.subr.mxu0 0.0
      %8103 = vmatpush1.msra.mxu0 0.0
      %8104 = vmatprep.subr.mxu0 0.0
      %8105 = vmatpush1.msra.mxu0 0.0
      %8106 = vmatprep.subr.mxu0 0.0
      %8107 = vmatpush1.msra.mxu0 0.0
      %8108 = vmatprep.subr.mxu0 0.0
      %8109 = vmatpush1.msra.mxu0 0.0
      %8110 = vmatprep.subr.mxu0 0.0
      %8111 = vmatpush1.msra.mxu0 0.0
      %8112 = vmatprep.subr.mxu0 0.0
      %8113 = vmatpush1.msra.mxu0 0.0
      %8114 = vmatprep.subr.mxu0 0.0
      %8115 = vmatpush1.msra.mxu0 0.0
      %8116 = vmatprep.subr.mxu0 0.0
      %8117 = vmatpush1.msra.mxu0 0.0
      %8118 = vmatprep.subr.mxu0 0.0
      %8119 = vmatpush1.msra.mxu0 0.0
      %8120 = vmatprep.subr.mxu0 0.0
      %8121 = vmatpush1.msra.mxu0 0.0
      %8122 = vmatprep.subr.mxu0 0.0
      %8123 = vmatpush1.msra.mxu0 0.0
      %8124 = vmatprep.subr.mxu0 0.0
      %8125 = vmatpush1.msra.mxu0 0.0
      %8126 = vmatprep.subr.mxu0 0.0
      %8127 = vmatpush1.msra.mxu0 0.0
      %8128 = vmatprep.subr.mxu0 0.0
      %8129 = vmatpush1.msra.mxu0 0.0
      %8130 = vmatprep.subr.mxu0 0.0
      %8131 = vmatpush1.msra.mxu0 0.0
      %8132 = vmatprep.subr.mxu0 0.0
      %8133 = vmatpush1.msra.mxu0 0.0
      %8134 = vmatprep.subr.mxu0 0.0
      %8135 = vmatpush1.msra.mxu0 0.0
      %8136 = vmatprep.subr.mxu0 0.0
      %8137 = vmatpush1.msra.mxu0 0.0
      %8138 = vmatprep.subr.mxu0 0.0
      %8139 = vmatpush1.msra.mxu0 0.0
      %8140 = vmatprep.subr.mxu0 0.0
      %8141 = vmatpush1.msra.mxu0 0.0
      %8142 = vmatprep.subr.mxu0 0.0
      %8143 = vmatpush1.msra.mxu0 0.0
      %8144 = vmatprep.subr.mxu0 0.0
      %8145 = vmatpush1.msra.mxu0 0.0
      %8146 = vmatprep.subr.mxu0 0.0
      %8147 = vmatpush1.msra.mxu0 0.0
      %8148 = vmatprep.subr.mxu0 0.0
      %8149 = vmatpush1.msra.mxu0 0.0
      %8150 = vmatprep.mubr.f32.mxu0 0.0
      %8151 = vmatmul.mubr.f32.gmra.mrb[0].mxu0 %v7724
      %v8152 = vpop.f32.mrb[0].mxu0
      %v8153 = vadd.f32 0.0, %v8152
      %v8154 = vpop.f32.mrb[0].mxu0
      %8155 = vmatprep.mubr.f32.mxu0 0.0
      %8156 = vmatmul.mubr.f32.gmra.mrb[0].mxu0 %v7726
      %v8157 = vpop.f32.mrb[0].mxu0
      %v8158 = vadd.f32 0.0, %v8157
      %v8159 = vpop.f32.mrb[0].mxu0
      %8160 = vmatprep.mubr.f32.mxu0 0.0
      %8161 = vmatmul.mubr.f32.gmra.mrb[0].mxu0 %v7728
      %v8162 = vpop.f32.mrb[0].mxu0
      %v8163 = vadd.f32 0.0, %v8162
      %v8164 = vpop.f32.mrb[0].mxu0
      %8165 = vmatprep.mubr.f32.mxu0 0.0
      %8166 = vmatmul.mubr.f32.gmra.mrb[0].mxu0 %v7730
      %v8167 = vpop.f32.mrb[0].mxu0
      %v8168 = vadd.f32 0.0, %v8167
      %v8169 = vpop.f32.mrb[0].mxu0
      %8170 = vmatprep.mubr.f32.mxu0 0.0
      %8171 = vmatmul.mubr.f32.gmra.mrb[0].mxu0 %v7732
      %v8172 = vpop.f32.mrb[0].mxu0
      %v8173 = vadd.f32 0.0, %v8172
      %v8174 = vpop.f32.mrb[0].mxu0
      %8175 = vmatprep.mubr.f32.mxu0 0.0
      %8176 = vmatmul.mubr.f32.gmra.mrb[0].mxu0 %v7734
      %v8177 = vpop.f32.mrb[0].mxu0
      %v8178 = vadd.f32 0.0, %v8177
      %v8179 = vpop.f32.mrb[0].mxu0
      %8180 = vmatprep.mubr.f32.mxu0 0.0
      %8181 = vmatmul.mubr.f32.gmra.mrb[0].mxu0 %v7736
      %v8182 = vpop.f32.mrb[0].mxu0
      %v8183 = vadd.f32 0.0, %v8182
      %v8184 = vpop.f32.mrb[0].mxu0
      %8185 = vmatprep.mubr.f32.mxu0 0.0
      %8186 = vmatmul.mubr.f32.gmra.mrb[0].mxu0 %v7738
      %v8187 = vpop.f32.mrb[0].mxu0
      %v8188 = vadd.f32 0.0, %v8187
      %v8189 = vpop.f32.mrb[0].mxu0
      %8190 = vmatprep.mubr.f32.mxu0 0.0
      %8191 = vmatmul.mubr.f32.gmra.mrb[0].mxu0 %v7740
      %v8192 = vpop.f32.mrb[0].mxu0
      %v8193 = vadd.f32 0.0, %v8192
      %v8194 = vpop.f32.mrb[0].mxu0
      %8195 = vmatprep.mubr.f32.mxu0 0.0
      %8196 = vmatmul.mubr.f32.gmra.mrb[0].mxu0 %v7742
      %v8197 = vpop.f32.mrb[0].mxu0
      %v8198 = vadd.f32 0.0, %v8197
      %v8199 = vpop.f32.mrb[0].mxu0
      %8200 = vmatprep.mubr.f32.mxu0 0.0
      %8201 = vmatmul.mubr.f32.gmra.mrb[0].mxu0 %v7744
      %v8202 = vpop.f32.mrb[0].mxu0
      %v8203 = vadd.f32 0.0, %v8202
      %v8204 = vpop.f32.mrb[0].mxu0
      %8205 = vmatprep.mubr.f32.mxu0 0.0
      %8206 = vmatmul.mubr.f32.gmra.mrb[0].mxu0 %v7746
      %v8207 = vpop.f32.mrb[0].mxu0
      %v8208 = vadd.f32 0.0, %v8207
      %v8209 = vpop.f32.mrb[0].mxu0
      %8210 = vmatprep.mubr.f32.mxu0 0.0
      %8211 = vmatmul.mubr.f32.gmra.mrb[0].mxu0 %v7748
      %v8212 = vpop.f32.mrb[0].mxu0
      %v8213 = vadd.f32 0.0, %v8212
      %v8214 = vpop.f32.mrb[0].mxu0
      %8215 = vmatprep.mubr.f32.mxu0 0.0
      %8216 = vmatmul.mubr.f32.gmra.mrb[0].mxu0 %v7750
      %v8217 = vpop.f32.mrb[0].mxu0
      %v8218 = vadd.f32 0.0, %v8217
      %v8219 = vpop.f32.mrb[0].mxu0
      %8220 = vmatprep.mubr.f32.mxu0 0.0
      %8221 = vmatmul.mubr.f32.gmra.mrb[0].mxu0 %v7752
      %v8222 = vpop.f32.mrb[0].mxu0
      %v8223 = vadd.f32 0.0, %v8222
      %v8224 = vpop.f32.mrb[0].mxu0
      %8225 = vmatprep.mubr.f32.mxu0 0.0
      %8226 = vmatmul.mubr.f32.gmra.mrb[0].mxu0 %v7754
      %v8227 = vpop.f32.mrb[0].mxu0
      %v8228 = vadd.f32 0.0, %v8227
      %v8229 = vpop.f32.mrb[0].mxu0
      %8230 = vmatprep.mubr.f32.mxu0 0.0
      %8231 = vmatmul.mubr.f32.gmra.mrb[0].mxu0 %v7756
      %v8232 = vpop.f32.mrb[0].mxu0
      %v8233 = vadd.f32 0.0, %v8232
      %v8234 = vpop.f32.mrb[0].mxu0
      %8235 = vmatprep.mubr.f32.mxu0 0.0
      %8236 = vmatmul.mubr.f32.gmra.mrb[0].mxu0 %v7758
      %v8237 = vpop.f32.mrb[0].mxu0
      %v8238 = vadd.f32 0.0, %v8237
      %v8239 = vpop.f32.mrb[0].mxu0
      %8240 = vmatprep.mubr.f32.mxu0 0.0
      %8241 = vmatmul.mubr.f32.gmra.mrb[0].mxu0 %v7760
      %v8242 = vpop.f32.mrb[0].mxu0
      %v8243 = vadd.f32 0.0, %v8242
      %v8244 = vpop.f32.mrb[0].mxu0
      %8245 = vmatprep.mubr.f32.mxu0 0.0
      %8246 = vmatmul.mubr.f32.gmra.mrb[0].mxu0 %v7762
      %v8247 = vpop.f32.mrb[0].mxu0
      %v8248 = vadd.f32 0.0, %v8247
      %v8249 = vpop.f32.mrb[0].mxu0
      %8250 = vmatprep.mubr.f32.mxu0 0.0
      %8251 = vmatmul.mubr.f32.gmra.mrb[0].mxu0 %v7764
      %v8252 = vpop.f32.mrb[0].mxu0
      %v8253 = vadd.f32 0.0, %v8252
      %v8254 = vpop.f32.mrb[0].mxu0
      %8255 = vmatprep.mubr.f32.mxu0 0.0
      %8256 = vmatmul.mubr.f32.gmra.mrb[0].mxu0 %v7766
      %v8257 = vpop.f32.mrb[0].mxu0
      %v8258 = vadd.f32 0.0, %v8257
      %v8259 = vpop.f32.mrb[0].mxu0
      %8260 = vmatprep.mubr.f32.mxu0 0.0
      %8261 = vmatmul.mubr.f32.gmra.mrb[0].mxu0 %v7768
      %v8262 = vpop.f32.mrb[0].mxu0
      %v8263 = vadd.f32 0.0, %v8262
      %v8264 = vpop.f32.mrb[0].mxu0
      %8265 = vmatprep.mubr.f32.mxu0 0.0
      %8266 = vmatmul.mubr.f32.gmra.mrb[0].mxu0 %v7770
      %v8267 = vpop.f32.mrb[0].mxu0
      %v8268 = vadd.f32 0.0, %v8267
      %v8269 = vpop.f32.mrb[0].mxu0
      %8270 = vmatprep.mubr.f32.mxu0 0.0
      %8271 = vmatmul.mubr.f32.gmra.mrb[0].mxu0 %v7772
      %v8272 = vpop.f32.mrb[0].mxu0
      %v8273 = vadd.f32 0.0, %v8272
      %v8274 = vpop.f32.mrb[0].mxu0
      %8275 = vmatprep.mubr.f32.mxu0 0.0
      %8276 = vmatmul.mubr.f32.gmra.mrb[0].mxu0 %v7774
      %v8277 = vpop.f32.mrb[0].mxu0
      %v8278 = vadd.f32 0.0, %v8277
      %v8279 = vpop.f32.mrb[0].mxu0
      %8280 = vmatprep.mubr.f32.mxu0 0.0
      %8281 = vmatmul.mubr.f32.gmra.mrb[0].mxu0 %v7776
      %v8282 = vpop.f32.mrb[0].mxu0
      %v8283 = vadd.f32 0.0, %v8282
      %v8284 = vpop.f32.mrb[0].mxu0
      %8285 = vmatprep.mubr.f32.mxu0 0.0
      %8286 = vmatmul.mubr.f32.gmra.mrb[0].mxu0 %v7778
      %v8287 = vpop.f32.mrb[0].mxu0
      %v8288 = vadd.f32 0.0, %v8287
      %v8289 = vpop.f32.mrb[0].mxu0
      %8290 = vmatprep.mubr.f32.mxu0 0.0
      %8291 = vmatmul.mubr.f32.gmra.mrb[0].mxu0 %v7780
      %v8292 = vpop.f32.mrb[0].mxu0
      %v8293 = vadd.f32 0.0, %v8292
      %v8294 = vpop.f32.mrb[0].mxu0
      %8295 = vmatprep.mubr.f32.mxu0 0.0
      %8296 = vmatmul.mubr.f32.gmra.mrb[0].mxu0 %v7782
      %v8297 = vpop.f32.mrb[0].mxu0
      %v8298 = vadd.f32 0.0, %v8297
      %v8299 = vpop.f32.mrb[0].mxu0
      %8300 = vmatprep.mubr.f32.mxu0 0.0
      %8301 = vmatmul.mubr.f32.gmra.mrb[0].mxu0 %v7784
      %v8302 = vpop.f32.mrb[0].mxu0
      %v8303 = vadd.f32 0.0, %v8302
      %v8304 = vpop.f32.mrb[0].mxu0
      %8305 = vmatprep.mubr.f32.mxu0 0.0
      %8306 = vmatmul.mubr.f32.gmra.mrb[0].mxu0 %v7786
      %v8307 = vpop.f32.mrb[0].mxu0
      %v8308 = vadd.f32 0.0, %v8307
      %v8309 = vpop.f32.mrb[0].mxu0
      %8310 = vmatprep.mubr.f32.mxu0 0.0
      %8311 = vmatmul.mubr.f32.gmra.mrb[0].mxu0 %v7788
      %v8312 = vpop.f32.mrb[0].mxu0
      %v8313 = vadd.f32 0.0, %v8312
      %v8314 = vpop.f32.mrb[0].mxu0
      %8315 = vmatprep.mubr.f32.mxu0 0.0
      %8316 = vmatmul.mubr.f32.gmra.mrb[0].mxu0 %v7790
      %v8317 = vpop.f32.mrb[0].mxu0
      %v8318 = vadd.f32 0.0, %v8317
      %v8319 = vpop.f32.mrb[0].mxu0
      %8320 = vmatprep.mubr.f32.mxu0 0.0
      %8321 = vmatmul.mubr.f32.gmra.mrb[0].mxu0 %v8082
      %v8322 = vpop.f32.mrb[0].mxu0
      %v8323 = vadd.f32 0.0, %v8322
      %v8324 = vpop.f32.mrb[0].mxu0
      %8325 = vmatprep.mubr.f32.mxu0 0.0
      %8326 = vmatmul.mubr.f32.gmra.mrb[0].mxu0 %v8084
      %v8327 = vpop.f32.mrb[0].mxu0
      %v8328 = vadd.f32 0.0, %v8327
      %v8329 = vpop.f32.mrb[0].mxu0
      %8330 = vdwg.mxu0
      %v8331 = vadd.f32 %v8037, %v8153
      %v8332 = vadd.f32 %v8038, %v8158
      %v8333 = vadd.f32 %v8039, %v8163
      %v8334 = vadd.f32 %v8040, %v8168
      %v8335 = vadd.f32 %v8041, %v8173
      %v8336 = vadd.f32 %v8042, %v8178
      %v8337 = vadd.f32 %v8043, %v8183
      %v8338 = vadd.f32 %v8044, %v8188
      %v8339 = vadd.f32 %v8045, %v8193
      %v8340 = vadd.f32 %v8046, %v8198
      %v8341 = vadd.f32 %v8047, %v8203
      %v8342 = vadd.f32 %v8048, %v8208
      %v8343 = vadd.f32 %v8049, %v8213
      %v8344 = vadd.f32 %v8050, %v8218
      %v8345 = vadd.f32 %v8051, %v8223
      %v8346 = vadd.f32 %v8052, %v8228
      %v8347 = vadd.f32 %v8053, %v8233
      %v8348 = vadd.f32 %v8054, %v8238
      %v8349 = vadd.f32 %v8055, %v8243
      %v8350 = vadd.f32 %v8056, %v8248
      %v8351 = vadd.f32 %v8057, %v8253
      %v8352 = vadd.f32 %v8058, %v8258
      %v8353 = vadd.f32 %v8059, %v8263
      %v8354 = vadd.f32 %v8060, %v8268
      %v8355 = vadd.f32 %v8061, %v8273
      %v8356 = vadd.f32 %v8062, %v8278
      %v8357 = vadd.f32 %v8063, %v8283
      %v8358 = vadd.f32 %v8064, %v8288
      %v8359 = vadd.f32 %v8065, %v8293
      %v8360 = vadd.f32 %v8066, %v8298
      %v8361 = vadd.f32 %v8067, %v8303
      %v8362 = vadd.f32 %v8068, %v8308
      %v8363 = vadd.f32 %v8069, %v8313
      %v8364 = vadd.f32 %v8070, %v8318
      %v8365 = vadd.f32 %v8071, %v8323
      %v8366 = vadd.f32 %v8072, %v8328
      %s8367 = scalar_lea.vmem %s11, 112
      %v8368 = vld [vmem:[%s8367] sm:$0xff]
      %v8369 = vld [vmem:[%s8367 + $0x8] sm:$0xff]
      %v8370 = vrot.slane %v5708, 5
      %v8371 = vrot.slane %v5709, 5
      %v8372 = vsel %vm3589, %v8370, %v8371
      %v8373 = vrot.slane %v5710, 5
      %v8374 = vsel %vm3589, %v8371, %v8373
      %v8375 = vrot.slane %v5711, 5
      %v8376 = vsel %vm3589, %v8373, %v8375
      %v8377 = vrot.slane %v5712, 5
      %v8378 = vsel %vm3589, %v8375, %v8377
      %v8379 = vrot.slane %v5713, 5
      %v8380 = vsel %vm3589, %v8377, %v8379
      %v8381 = vrot.slane %v5714, 5
      %v8382 = vsel %vm3589, %v8379, %v8381
      %v8383 = vrot.slane %v5715, 5
      %v8384 = vsel %vm3589, %v8381, %v8383
      %v8385 = vrot.slane %v5716, 5
      %v8386 = vsel %vm3589, %v8383, %v8385
      %v8387 = vrot.slane %v5717, 5
      %v8388 = vsel %vm3589, %v8385, %v8387
      %v8389 = vrot.slane %v5718, 5
      %v8390 = vsel %vm3589, %v8387, %v8389
      %v8391 = vrot.slane %v5719, 5
      %v8392 = vsel %vm3589, %v8389, %v8391
      %v8393 = vrot.slane %v5720, 5
      %v8394 = vsel %vm3589, %v8391, %v8393
      %v8395 = vrot.slane %v5721, 5
      %v8396 = vsel %vm3589, %v8393, %v8395
      %v8397 = vrot.slane %v5722, 5
      %v8398 = vsel %vm3589, %v8395, %v8397
      %v8399 = vrot.slane %v5723, 5
      %v8400 = vsel %vm3589, %v8397, %v8399
      %v8401 = vrot.slane %v5724, 5
      %v8402 = vsel %vm3589, %v8399, %v8401
      %v8403 = vrot.slane %v5725, 5
      %v8404 = vsel %vm3589, %v8401, %v8403
      %v8405 = vrot.slane %v5726, 5
      %v8406 = vsel %vm3589, %v8403, %v8405
      %v8407 = vrot.slane %v5727, 5
      %v8408 = vsel %vm3589, %v8405, %v8407
      %v8409 = vrot.slane %v5728, 5
      %v8410 = vsel %vm3589, %v8407, %v8409
      %v8411 = vrot.slane %v5729, 5
      %v8412 = vsel %vm3589, %v8409, %v8411
      %v8413 = vrot.slane %v5730, 5
      %v8414 = vsel %vm3589, %v8411, %v8413
      %v8415 = vrot.slane %v5731, 5
      %v8416 = vsel %vm3589, %v8413, %v8415
      %v8417 = vrot.slane %v5732, 5
      %v8418 = vsel %vm3589, %v8415, %v8417
      %v8419 = vrot.slane %v5733, 5
      %v8420 = vsel %vm3589, %v8417, %v8419
      %v8421 = vrot.slane %v5734, 5
      %v8422 = vsel %vm3589, %v8419, %v8421
      %v8423 = vrot.slane %v5735, 5
      %v8424 = vsel %vm3589, %v8421, %v8423
      %v8425 = vrot.slane %v5736, 5
      %v8426 = vsel %vm3589, %v8423, %v8425
      %v8427 = vrot.slane %v5737, 5
      %v8428 = vsel %vm3589, %v8425, %v8427
      %v8429 = vrot.slane %v5738, 5
      %v8430 = vsel %vm3589, %v8427, %v8429
      %v8431 = vrot.slane %v5739, 5
      %v8432 = vsel %vm3589, %v8429, %v8431
      %v8433 = vrot.slane %v5740, 5
      %v8434 = vsel %vm3589, %v8431, %v8433
      %v8435 = vrot.slane %v5741, 5
      %v8436 = vsel %vm3589, %v8433, %v8435
      %v8437 = vrot.slane %v5742, 5
      %v8438 = vsel %vm3589, %v8435, %v8437
      %v8439 = vrot.slane %v5743, 5
      %v8440 = vsel %vm3589, %v8437, %v8439
      %v8441 = vrot.slane %v5744, 5
      %v8442 = vsel %vm3589, %v8439, %v8441
      %v8443 = vsel %vm4847, %v8372, 0
      %v8445 = vsel %vm4847, %v8374, 0
      %v8447 = vsel %vm4847, %v8376, 0
      %v8449 = vsel %vm4847, %v8378, 0
      %v8451 = vsel %vm4847, %v8380, 0
      %v8453 = vsel %vm4847, %v8382, 0
      %v8455 = vsel %vm4847, %v8384, 0
      %v8457 = vsel %vm4847, %v8386, 0
      %v8459 = vsel %vm4847, %v8388, 0
      %v8461 = vsel %vm4847, %v8390, 0
      %v8463 = vsel %vm4847, %v8392, 0
      %v8465 = vsel %vm4847, %v8394, 0
      %v8467 = vsel %vm4847, %v8396, 0
      %v8469 = vsel %vm4847, %v8398, 0
      %v8471 = vsel %vm4847, %v8400, 0
      %v8473 = vsel %vm4847, %v8402, 0
      %v8475 = vsel %vm4847, %v8404, 0
      %v8477 = vsel %vm4847, %v8406, 0
      %v8479 = vsel %vm4847, %v8408, 0
      %v8481 = vsel %vm4847, %v8410, 0
      %v8483 = vsel %vm4847, %v8412, 0
      %v8485 = vsel %vm4847, %v8414, 0
      %v8487 = vsel %vm4847, %v8416, 0
      %v8489 = vsel %vm4847, %v8418, 0
      %v8491 = vsel %vm4847, %v8420, 0
      %v8493 = vsel %vm4847, %v8422, 0
      %v8495 = vsel %vm4847, %v8424, 0
      %v8497 = vsel %vm4847, %v8426, 0
      %v8499 = vsel %vm4847, %v8428, 0
      %v8501 = vsel %vm4847, %v8430, 0
      %v8503 = vsel %vm4847, %v8432, 0
      %v8505 = vsel %vm4847, %v8434, 0
      %v8507 = vsel %vm4847, %v8436, 0
      %v8509 = vsel %vm4847, %v8438, 0
      %v8511 = vsel %vm4847, %v8440, 0
      %v8513 = vsel %vm4847, %v8442, 0
      %8515 = vmatprep.subr.mxu0 0.0
      %8516 = vmatpush1.msra.mxu0 %v8368
      %8517 = vmatprep.subr.mxu0 0.0
      %8518 = vmatpush1.msra.mxu0 %v8369
      %8519 = vmatprep.subr.mxu0 0.0
      %8520 = vmatpush1.msra.mxu0 0.0
      %8521 = vmatprep.subr.mxu0 0.0
      %8522 = vmatpush1.msra.mxu0 0.0
      %8523 = vmatprep.subr.mxu0 0.0
      %8524 = vmatpush1.msra.mxu0 0.0
      %8525 = vmatprep.subr.mxu0 0.0
      %8526 = vmatpush1.msra.mxu0 0.0
      %8527 = vmatprep.subr.mxu0 0.0
      %8528 = vmatpush1.msra.mxu0 0.0
      %8529 = vmatprep.subr.mxu0 0.0
      %8530 = vmatpush1.msra.mxu0 0.0
      %8531 = vmatprep.subr.mxu0 0.0
      %8532 = vmatpush1.msra.mxu0 0.0
      %8533 = vmatprep.subr.mxu0 0.0
      %8534 = vmatpush1.msra.mxu0 0.0
      %8535 = vmatprep.subr.mxu0 0.0
      %8536 = vmatpush1.msra.mxu0 0.0
      %8537 = vmatprep.subr.mxu0 0.0
      %8538 = vmatpush1.msra.mxu0 0.0
      %8539 = vmatprep.subr.mxu0 0.0
      %8540 = vmatpush1.msra.mxu0 0.0
      %8541 = vmatprep.subr.mxu0 0.0
      %8542 = vmatpush1.msra.mxu0 0.0
      %8543 = vmatprep.subr.mxu0 0.0
      %8544 = vmatpush1.msra.mxu0 0.0
      %8545 = vmatprep.subr.mxu0 0.0
      %8546 = vmatpush1.msra.mxu0 0.0
      %8547 = vmatprep.subr.mxu0 0.0
      %8548 = vmatpush1.msra.mxu0 0.0
      %8549 = vmatprep.subr.mxu0 0.0
      %8550 = vmatpush1.msra.mxu0 0.0
      %8551 = vmatprep.subr.mxu0 0.0
      %8552 = vmatpush1.msra.mxu0 0.0
      %8553 = vmatprep.subr.mxu0 0.0
      %8554 = vmatpush1.msra.mxu0 0.0
      %8555 = vmatprep.subr.mxu0 0.0
      %8556 = vmatpush1.msra.mxu0 0.0
      %8557 = vmatprep.subr.mxu0 0.0
      %8558 = vmatpush1.msra.mxu0 0.0
      %8559 = vmatprep.subr.mxu0 0.0
      %8560 = vmatpush1.msra.mxu0 0.0
      %8561 = vmatprep.subr.mxu0 0.0
      %8562 = vmatpush1.msra.mxu0 0.0
      %8563 = vmatprep.subr.mxu0 0.0
      %8564 = vmatpush1.msra.mxu0 0.0
      %8565 = vmatprep.subr.mxu0 0.0
      %8566 = vmatpush1.msra.mxu0 0.0
      %8567 = vmatprep.subr.mxu0 0.0
      %8568 = vmatpush1.msra.mxu0 0.0
      %8569 = vmatprep.subr.mxu0 0.0
      %8570 = vmatpush1.msra.mxu0 0.0
      %8571 = vmatprep.subr.mxu0 0.0
      %8572 = vmatpush1.msra.mxu0 0.0
      %8573 = vmatprep.subr.mxu0 0.0
      %8574 = vmatpush1.msra.mxu0 0.0
      %8575 = vmatprep.subr.mxu0 0.0
      %8576 = vmatpush1.msra.mxu0 0.0
      %8577 = vmatprep.subr.mxu0 0.0
      %8578 = vmatpush1.msra.mxu0 0.0
      %8579 = vmatprep.mubr.f32.mxu0 0.0
      %8580 = vmatmul.mubr.f32.gmra.mrb[0].mxu0 %v8443
      %v8581 = vpop.f32.mrb[0].mxu0
      %v8582 = vadd.f32 0.0, %v8581
      %v8583 = vpop.f32.mrb[0].mxu0
      %8584 = vmatprep.mubr.f32.mxu0 0.0
      %8585 = vmatmul.mubr.f32.gmra.mrb[0].mxu0 %v8445
      %v8586 = vpop.f32.mrb[0].mxu0
      %v8587 = vadd.f32 0.0, %v8586
      %v8588 = vpop.f32.mrb[0].mxu0
      %8589 = vmatprep.mubr.f32.mxu0 0.0
      %8590 = vmatmul.mubr.f32.gmra.mrb[0].mxu0 %v8447
      %v8591 = vpop.f32.mrb[0].mxu0
      %v8592 = vadd.f32 0.0, %v8591
      %v8593 = vpop.f32.mrb[0].mxu0
      %8594 = vmatprep.mubr.f32.mxu0 0.0
      %8595 = vmatmul.mubr.f32.gmra.mrb[0].mxu0 %v8449
      %v8596 = vpop.f32.mrb[0].mxu0
      %v8597 = vadd.f32 0.0, %v8596
      %v8598 = vpop.f32.mrb[0].mxu0
      %8599 = vmatprep.mubr.f32.mxu0 0.0
      %8600 = vmatmul.mubr.f32.gmra.mrb[0].mxu0 %v8451
      %v8601 = vpop.f32.mrb[0].mxu0
      %v8602 = vadd.f32 0.0, %v8601
      %v8603 = vpop.f32.mrb[0].mxu0
      %8604 = vmatprep.mubr.f32.mxu0 0.0
      %8605 = vmatmul.mubr.f32.gmra.mrb[0].mxu0 %v8453
      %v8606 = vpop.f32.mrb[0].mxu0
      %v8607 = vadd.f32 0.0, %v8606
      %v8608 = vpop.f32.mrb[0].mxu0
      %8609 = vmatprep.mubr.f32.mxu0 0.0
      %8610 = vmatmul.mubr.f32.gmra.mrb[0].mxu0 %v8455
      %v8611 = vpop.f32.mrb[0].mxu0
      %v8612 = vadd.f32 0.0, %v8611
      %v8613 = vpop.f32.mrb[0].mxu0
      %8614 = vmatprep.mubr.f32.mxu0 0.0
      %8615 = vmatmul.mubr.f32.gmra.mrb[0].mxu0 %v8457
      %v8616 = vpop.f32.mrb[0].mxu0
      %v8617 = vadd.f32 0.0, %v8616
      %v8618 = vpop.f32.mrb[0].mxu0
      %8619 = vmatprep.mubr.f32.mxu0 0.0
      %8620 = vmatmul.mubr.f32.gmra.mrb[0].mxu0 %v8459
      %v8621 = vpop.f32.mrb[0].mxu0
      %v8622 = vadd.f32 0.0, %v8621
      %v8623 = vpop.f32.mrb[0].mxu0
      %8624 = vmatprep.mubr.f32.mxu0 0.0
      %8625 = vmatmul.mubr.f32.gmra.mrb[0].mxu0 %v8461
      %v8626 = vpop.f32.mrb[0].mxu0
      %v8627 = vadd.f32 0.0, %v8626
      %v8628 = vpop.f32.mrb[0].mxu0
      %8629 = vmatprep.mubr.f32.mxu0 0.0
      %8630 = vmatmul.mubr.f32.gmra.mrb[0].mxu0 %v8463
      %v8631 = vpop.f32.mrb[0].mxu0
      %v8632 = vadd.f32 0.0, %v8631
      %v8633 = vpop.f32.mrb[0].mxu0
      %8634 = vmatprep.mubr.f32.mxu0 0.0
      %8635 = vmatmul.mubr.f32.gmra.mrb[0].mxu0 %v8465
      %v8636 = vpop.f32.mrb[0].mxu0
      %v8637 = vadd.f32 0.0, %v8636
      %v8638 = vpop.f32.mrb[0].mxu0
      %8639 = vmatprep.mubr.f32.mxu0 0.0
      %8640 = vmatmul.mubr.f32.gmra.mrb[0].mxu0 %v8467
      %v8641 = vpop.f32.mrb[0].mxu0
      %v8642 = vadd.f32 0.0, %v8641
      %v8643 = vpop.f32.mrb[0].mxu0
      %8644 = vmatprep.mubr.f32.mxu0 0.0
      %8645 = vmatmul.mubr.f32.gmra.mrb[0].mxu0 %v8469
      %v8646 = vpop.f32.mrb[0].mxu0
      %v8647 = vadd.f32 0.0, %v8646
      %v8648 = vpop.f32.mrb[0].mxu0
      %8649 = vmatprep.mubr.f32.mxu0 0.0
      %8650 = vmatmul.mubr.f32.gmra.mrb[0].mxu0 %v8471
      %v8651 = vpop.f32.mrb[0].mxu0
      %v8652 = vadd.f32 0.0, %v8651
      %v8653 = vpop.f32.mrb[0].mxu0
      %8654 = vmatprep.mubr.f32.mxu0 0.0
      %8655 = vmatmul.mubr.f32.gmra.mrb[0].mxu0 %v8473
      %v8656 = vpop.f32.mrb[0].mxu0
      %v8657 = vadd.f32 0.0, %v8656
      %v8658 = vpop.f32.mrb[0].mxu0
      %8659 = vmatprep.mubr.f32.mxu0 0.0
      %8660 = vmatmul.mubr.f32.gmra.mrb[0].mxu0 %v8475
      %v8661 = vpop.f32.mrb[0].mxu0
      %v8662 = vadd.f32 0.0, %v8661
      %v8663 = vpop.f32.mrb[0].mxu0
      %8664 = vmatprep.mubr.f32.mxu0 0.0
      %8665 = vmatmul.mubr.f32.gmra.mrb[0].mxu0 %v8477
      %v8666 = vpop.f32.mrb[0].mxu0
      %v8667 = vadd.f32 0.0, %v8666
      %v8668 = vpop.f32.mrb[0].mxu0
      %8669 = vmatprep.mubr.f32.mxu0 0.0
      %8670 = vmatmul.mubr.f32.gmra.mrb[0].mxu0 %v8479
      %v8671 = vpop.f32.mrb[0].mxu0
      %v8672 = vadd.f32 0.0, %v8671
      %v8673 = vpop.f32.mrb[0].mxu0
      %8674 = vmatprep.mubr.f32.mxu0 0.0
      %8675 = vmatmul.mubr.f32.gmra.mrb[0].mxu0 %v8481
      %v8676 = vpop.f32.mrb[0].mxu0
      %v8677 = vadd.f32 0.0, %v8676
      %v8678 = vpop.f32.mrb[0].mxu0
      %8679 = vmatprep.mubr.f32.mxu0 0.0
      %8680 = vmatmul.mubr.f32.gmra.mrb[0].mxu0 %v8483
      %v8681 = vpop.f32.mrb[0].mxu0
      %v8682 = vadd.f32 0.0, %v8681
      %v8683 = vpop.f32.mrb[0].mxu0
      %8684 = vmatprep.mubr.f32.mxu0 0.0
      %8685 = vmatmul.mubr.f32.gmra.mrb[0].mxu0 %v8485
      %v8686 = vpop.f32.mrb[0].mxu0
      %v8687 = vadd.f32 0.0, %v8686
      %v8688 = vpop.f32.mrb[0].mxu0
      %8689 = vmatprep.mubr.f32.mxu0 0.0
      %8690 = vmatmul.mubr.f32.gmra.mrb[0].mxu0 %v8487
      %v8691 = vpop.f32.mrb[0].mxu0
      %v8692 = vadd.f32 0.0, %v8691
      %v8693 = vpop.f32.mrb[0].mxu0
      %8694 = vmatprep.mubr.f32.mxu0 0.0
      %8695 = vmatmul.mubr.f32.gmra.mrb[0].mxu0 %v8489
      %v8696 = vpop.f32.mrb[0].mxu0
      %v8697 = vadd.f32 0.0, %v8696
      %v8698 = vpop.f32.mrb[0].mxu0
      %8699 = vmatprep.mubr.f32.mxu0 0.0
      %8700 = vmatmul.mubr.f32.gmra.mrb[0].mxu0 %v8491
      %v8701 = vpop.f32.mrb[0].mxu0
      %v8702 = vadd.f32 0.0, %v8701
      %v8703 = vpop.f32.mrb[0].mxu0
      %8704 = vmatprep.mubr.f32.mxu0 0.0
      %8705 = vmatmul.mubr.f32.gmra.mrb[0].mxu0 %v8493
      %v8706 = vpop.f32.mrb[0].mxu0
      %v8707 = vadd.f32 0.0, %v8706
      %v8708 = vpop.f32.mrb[0].mxu0
      %8709 = vmatprep.mubr.f32.mxu0 0.0
      %8710 = vmatmul.mubr.f32.gmra.mrb[0].mxu0 %v8495
      %v8711 = vpop.f32.mrb[0].mxu0
      %v8712 = vadd.f32 0.0, %v8711
      %v8713 = vpop.f32.mrb[0].mxu0
      %8714 = vmatprep.mubr.f32.mxu0 0.0
      %8715 = vmatmul.mubr.f32.gmra.mrb[0].mxu0 %v8497
      %v8716 = vpop.f32.mrb[0].mxu0
      %v8717 = vadd.f32 0.0, %v8716
      %v8718 = vpop.f32.mrb[0].mxu0
      %8719 = vmatprep.mubr.f32.mxu0 0.0
      %8720 = vmatmul.mubr.f32.gmra.mrb[0].mxu0 %v8499
      %v8721 = vpop.f32.mrb[0].mxu0
      %v8722 = vadd.f32 0.0, %v8721
      %v8723 = vpop.f32.mrb[0].mxu0
      %8724 = vmatprep.mubr.f32.mxu0 0.0
      %8725 = vmatmul.mubr.f32.gmra.mrb[0].mxu0 %v8501
      %v8726 = vpop.f32.mrb[0].mxu0
      %v8727 = vadd.f32 0.0, %v8726
      %v8728 = vpop.f32.mrb[0].mxu0
      %8729 = vmatprep.mubr.f32.mxu0 0.0
      %8730 = vmatmul.mubr.f32.gmra.mrb[0].mxu0 %v8503
      %v8731 = vpop.f32.mrb[0].mxu0
      %v8732 = vadd.f32 0.0, %v8731
      %v8733 = vpop.f32.mrb[0].mxu0
      %8734 = vmatprep.mubr.f32.mxu0 0.0
      %8735 = vmatmul.mubr.f32.gmra.mrb[0].mxu0 %v8505
      %v8736 = vpop.f32.mrb[0].mxu0
      %v8737 = vadd.f32 0.0, %v8736
      %v8738 = vpop.f32.mrb[0].mxu0
      %8739 = vmatprep.mubr.f32.mxu0 0.0
      %8740 = vmatmul.mubr.f32.gmra.mrb[0].mxu0 %v8507
      %v8741 = vpop.f32.mrb[0].mxu0
      %v8742 = vadd.f32 0.0, %v8741
      %v8743 = vpop.f32.mrb[0].mxu0
      %8744 = vmatprep.mubr.f32.mxu0 0.0
      %8745 = vmatmul.mubr.f32.gmra.mrb[0].mxu0 %v8509
      %v8746 = vpop.f32.mrb[0].mxu0
      %v8747 = vadd.f32 0.0, %v8746
      %v8748 = vpop.f32.mrb[0].mxu0
      %8749 = vmatprep.mubr.f32.mxu0 0.0
      %8750 = vmatmul.mubr.f32.gmra.mrb[0].mxu0 %v8511
      %v8751 = vpop.f32.mrb[0].mxu0
      %v8752 = vadd.f32 0.0, %v8751
      %v8753 = vpop.f32.mrb[0].mxu0
      %8754 = vmatprep.mubr.f32.mxu0 0.0
      %8755 = vmatmul.mubr.f32.gmra.mrb[0].mxu0 %v8513
      %v8756 = vpop.f32.mrb[0].mxu0
      %v8757 = vadd.f32 0.0, %v8756
      %v8758 = vpop.f32.mrb[0].mxu0
      %8759 = vdwg.mxu0
      %v8760 = vadd.f32 %v8331, %v8582
      %v8761 = vadd.f32 %v8332, %v8587
      %v8762 = vadd.f32 %v8333, %v8592
      %v8763 = vadd.f32 %v8334, %v8597
      %v8764 = vadd.f32 %v8335, %v8602
      %v8765 = vadd.f32 %v8336, %v8607
      %v8766 = vadd.f32 %v8337, %v8612
      %v8767 = vadd.f32 %v8338, %v8617
      %v8768 = vadd.f32 %v8339, %v8622
      %v8769 = vadd.f32 %v8340, %v8627
      %v8770 = vadd.f32 %v8341, %v8632
      %v8771 = vadd.f32 %v8342, %v8637
      %v8772 = vadd.f32 %v8343, %v8642
      %v8773 = vadd.f32 %v8344, %v8647
      %v8774 = vadd.f32 %v8345, %v8652
      %v8775 = vadd.f32 %v8346, %v8657
      %v8776 = vadd.f32 %v8347, %v8662
      %v8777 = vadd.f32 %v8348, %v8667
      %v8778 = vadd.f32 %v8349, %v8672
      %v8779 = vadd.f32 %v8350, %v8677
      %v8780 = vadd.f32 %v8351, %v8682
      %v8781 = vadd.f32 %v8352, %v8687
      %v8782 = vadd.f32 %v8353, %v8692
      %v8783 = vadd.f32 %v8354, %v8697
      %v8784 = vadd.f32 %v8355, %v8702
      %v8785 = vadd.f32 %v8356, %v8707
      %v8786 = vadd.f32 %v8357, %v8712
      %v8787 = vadd.f32 %v8358, %v8717
      %v8788 = vadd.f32 %v8359, %v8722
      %v8789 = vadd.f32 %v8360, %v8727
      %v8790 = vadd.f32 %v8361, %v8732
      %v8791 = vadd.f32 %v8362, %v8737
      %v8792 = vadd.f32 %v8363, %v8742
      %v8793 = vadd.f32 %v8364, %v8747
      %v8794 = vadd.f32 %v8365, %v8752
      %v8795 = vadd.f32 %v8366, %v8757
      %s8796 = scalar_lea.vmem %s11, 128
      %v8797 = vld [vmem:[%s8796] sm:$0xff]
      %v8798 = vld [vmem:[%s8796 + $0x8] sm:$0xff]
      %v8799 = vrot.slane %v5708, 6
      %v8800 = vrot.slane %v5709, 6
      %v8801 = vsel %vm4071, %v8799, %v8800
      %v8802 = vrot.slane %v5710, 6
      %v8803 = vsel %vm4071, %v8800, %v8802
      %v8804 = vrot.slane %v5711, 6
      %v8805 = vsel %vm4071, %v8802, %v8804
      %v8806 = vrot.slane %v5712, 6
      %v8807 = vsel %vm4071, %v8804, %v8806
      %v8808 = vrot.slane %v5713, 6
      %v8809 = vsel %vm4071, %v8806, %v8808
      %v8810 = vrot.slane %v5714, 6
      %v8811 = vsel %vm4071, %v8808, %v8810
      %v8812 = vrot.slane %v5715, 6
      %v8813 = vsel %vm4071, %v8810, %v8812
      %v8814 = vrot.slane %v5716, 6
      %v8815 = vsel %vm4071, %v8812, %v8814
      %v8816 = vrot.slane %v5717, 6
      %v8817 = vsel %vm4071, %v8814, %v8816
      %v8818 = vrot.slane %v5718, 6
      %v8819 = vsel %vm4071, %v8816, %v8818
      %v8820 = vrot.slane %v5719, 6
      %v8821 = vsel %vm4071, %v8818, %v8820
      %v8822 = vrot.slane %v5720, 6
      %v8823 = vsel %vm4071, %v8820, %v8822
      %v8824 = vrot.slane %v5721, 6
      %v8825 = vsel %vm4071, %v8822, %v8824
      %v8826 = vrot.slane %v5722, 6
      %v8827 = vsel %vm4071, %v8824, %v8826
      %v8828 = vrot.slane %v5723, 6
      %v8829 = vsel %vm4071, %v8826, %v8828
      %v8830 = vrot.slane %v5724, 6
      %v8831 = vsel %vm4071, %v8828, %v8830
      %v8832 = vrot.slane %v5725, 6
      %v8833 = vsel %vm4071, %v8830, %v8832
      %v8834 = vrot.slane %v5726, 6
      %v8835 = vsel %vm4071, %v8832, %v8834
      %v8836 = vrot.slane %v5727, 6
      %v8837 = vsel %vm4071, %v8834, %v8836
      %v8838 = vrot.slane %v5728, 6
      %v8839 = vsel %vm4071, %v8836, %v8838
      %v8840 = vrot.slane %v5729, 6
      %v8841 = vsel %vm4071, %v8838, %v8840
      %v8842 = vrot.slane %v5730, 6
      %v8843 = vsel %vm4071, %v8840, %v8842
      %v8844 = vrot.slane %v5731, 6
      %v8845 = vsel %vm4071, %v8842, %v8844
      %v8846 = vrot.slane %v5732, 6
      %v8847 = vsel %vm4071, %v8844, %v8846
      %v8848 = vrot.slane %v5733, 6
      %v8849 = vsel %vm4071, %v8846, %v8848
      %v8850 = vrot.slane %v5734, 6
      %v8851 = vsel %vm4071, %v8848, %v8850
      %v8852 = vrot.slane %v5735, 6
      %v8853 = vsel %vm4071, %v8850, %v8852
      %v8854 = vrot.slane %v5736, 6
      %v8855 = vsel %vm4071, %v8852, %v8854
      %v8856 = vrot.slane %v5737, 6
      %v8857 = vsel %vm4071, %v8854, %v8856
      %v8858 = vrot.slane %v5738, 6
      %v8859 = vsel %vm4071, %v8856, %v8858
      %v8860 = vrot.slane %v5739, 6
      %v8861 = vsel %vm4071, %v8858, %v8860
      %v8862 = vrot.slane %v5740, 6
      %v8863 = vsel %vm4071, %v8860, %v8862
      %v8864 = vrot.slane %v5741, 6
      %v8865 = vsel %vm4071, %v8862, %v8864
      %v8866 = vrot.slane %v5742, 6
      %v8867 = vsel %vm4071, %v8864, %v8866
      %v8868 = vrot.slane %v5743, 6
      %v8869 = vsel %vm4071, %v8866, %v8868
      %v8870 = vrot.slane %v5744, 6
      %v8871 = vsel %vm4071, %v8868, %v8870
      %v8872 = vsel %vm4847, %v8801, 0
      %v8874 = vsel %vm4847, %v8803, 0
      %v8876 = vsel %vm4847, %v8805, 0
      %v8878 = vsel %vm4847, %v8807, 0
      %v8880 = vsel %vm4847, %v8809, 0
      %v8882 = vsel %vm4847, %v8811, 0
      %v8884 = vsel %vm4847, %v8813, 0
      %v8886 = vsel %vm4847, %v8815, 0
      %v8888 = vsel %vm4847, %v8817, 0
      %v8890 = vsel %vm4847, %v8819, 0
      %v8892 = vsel %vm4847, %v8821, 0
      %v8894 = vsel %vm4847, %v8823, 0
      %v8896 = vsel %vm4847, %v8825, 0
      %v8898 = vsel %vm4847, %v8827, 0
      %v8900 = vsel %vm4847, %v8829, 0
      %v8902 = vsel %vm4847, %v8831, 0
      %v8904 = vsel %vm4847, %v8833, 0
      %v8906 = vsel %vm4847, %v8835, 0
      %v8908 = vsel %vm4847, %v8837, 0
      %v8910 = vsel %vm4847, %v8839, 0
      %v8912 = vsel %vm4847, %v8841, 0
      %v8914 = vsel %vm4847, %v8843, 0
      %v8916 = vsel %vm4847, %v8845, 0
      %v8918 = vsel %vm4847, %v8847, 0
      %v8920 = vsel %vm4847, %v8849, 0
      %v8922 = vsel %vm4847, %v8851, 0
      %v8924 = vsel %vm4847, %v8853, 0
      %v8926 = vsel %vm4847, %v8855, 0
      %v8928 = vsel %vm4847, %v8857, 0
      %v8930 = vsel %vm4847, %v8859, 0
      %v8932 = vsel %vm4847, %v8861, 0
      %v8934 = vsel %vm4847, %v8863, 0
      %v8936 = vsel %vm4847, %v8865, 0
      %v8938 = vsel %vm4847, %v8867, 0
      %v8940 = vsel %vm4847, %v8869, 0
      %v8942 = vsel %vm4847, %v8871, 0
      %8944 = vmatprep.subr.mxu0 0.0
      %8945 = vmatpush1.msra.mxu0 %v8797
      %8946 = vmatprep.subr.mxu0 0.0
      %8947 = vmatpush1.msra.mxu0 %v8798
      %8948 = vmatprep.subr.mxu0 0.0
      %8949 = vmatpush1.msra.mxu0 0.0
      %8950 = vmatprep.subr.mxu0 0.0
      %8951 = vmatpush1.msra.mxu0 0.0
      %8952 = vmatprep.subr.mxu0 0.0
      %8953 = vmatpush1.msra.mxu0 0.0
      %8954 = vmatprep.subr.mxu0 0.0
      %8955 = vmatpush1.msra.mxu0 0.0
      %8956 = vmatprep.subr.mxu0 0.0
      %8957 = vmatpush1.msra.mxu0 0.0
      %8958 = vmatprep.subr.mxu0 0.0
      %8959 = vmatpush1.msra.mxu0 0.0
      %8960 = vmatprep.subr.mxu0 0.0
      %8961 = vmatpush1.msra.mxu0 0.0
      %8962 = vmatprep.subr.mxu0 0.0
      %8963 = vmatpush1.msra.mxu0 0.0
      %8964 = vmatprep.subr.mxu0 0.0
      %8965 = vmatpush1.msra.mxu0 0.0
      %8966 = vmatprep.subr.mxu0 0.0
      %8967 = vmatpush1.msra.mxu0 0.0
      %8968 = vmatprep.subr.mxu0 0.0
      %8969 = vmatpush1.msra.mxu0 0.0
      %8970 = vmatprep.subr.mxu0 0.0
      %8971 = vmatpush1.msra.mxu0 0.0
      %8972 = vmatprep.subr.mxu0 0.0
      %8973 = vmatpush1.msra.mxu0 0.0
      %8974 = vmatprep.subr.mxu0 0.0
      %8975 = vmatpush1.msra.mxu0 0.0
      %8976 = vmatprep.subr.mxu0 0.0
      %8977 = vmatpush1.msra.mxu0 0.0
      %8978 = vmatprep.subr.mxu0 0.0
      %8979 = vmatpush1.msra.mxu0 0.0
      %8980 = vmatprep.subr.mxu0 0.0
      %8981 = vmatpush1.msra.mxu0 0.0
      %8982 = vmatprep.subr.mxu0 0.0
      %8983 = vmatpush1.msra.mxu0 0.0
      %8984 = vmatprep.subr.mxu0 0.0
      %8985 = vmatpush1.msra.mxu0 0.0
      %8986 = vmatprep.subr.mxu0 0.0
      %8987 = vmatpush1.msra.mxu0 0.0
      %8988 = vmatprep.subr.mxu0 0.0
      %8989 = vmatpush1.msra.mxu0 0.0
      %8990 = vmatprep.subr.mxu0 0.0
      %8991 = vmatpush1.msra.mxu0 0.0
      %8992 = vmatprep.subr.mxu0 0.0
      %8993 = vmatpush1.msra.mxu0 0.0
      %8994 = vmatprep.subr.mxu0 0.0
      %8995 = vmatpush1.msra.mxu0 0.0
      %8996 = vmatprep.subr.mxu0 0.0
      %8997 = vmatpush1.msra.mxu0 0.0
      %8998 = vmatprep.subr.mxu0 0.0
      %8999 = vmatpush1.msra.mxu0 0.0
      %9000 = vmatprep.subr.mxu0 0.0
      %9001 = vmatpush1.msra.mxu0 0.0
      %9002 = vmatprep.subr.mxu0 0.0
      %9003 = vmatpush1.msra.mxu0 0.0
      %9004 = vmatprep.subr.mxu0 0.0
      %9005 = vmatpush1.msra.mxu0 0.0
      %9006 = vmatprep.subr.mxu0 0.0
      %9007 = vmatpush1.msra.mxu0 0.0
      %9008 = vmatprep.mubr.f32.mxu0 0.0
      %9009 = vmatmul.mubr.f32.gmra.mrb[0].mxu0 %v8872
      %v9010 = vpop.f32.mrb[0].mxu0
      %v9011 = vadd.f32 0.0, %v9010
      %v9012 = vpop.f32.mrb[0].mxu0
      %9013 = vmatprep.mubr.f32.mxu0 0.0
      %9014 = vmatmul.mubr.f32.gmra.mrb[0].mxu0 %v8874
      %v9015 = vpop.f32.mrb[0].mxu0
      %v9016 = vadd.f32 0.0, %v9015
      %v9017 = vpop.f32.mrb[0].mxu0
      %9018 = vmatprep.mubr.f32.mxu0 0.0
      %9019 = vmatmul.mubr.f32.gmra.mrb[0].mxu0 %v8876
      %v9020 = vpop.f32.mrb[0].mxu0
      %v9021 = vadd.f32 0.0, %v9020
      %v9022 = vpop.f32.mrb[0].mxu0
      %9023 = vmatprep.mubr.f32.mxu0 0.0
      %9024 = vmatmul.mubr.f32.gmra.mrb[0].mxu0 %v8878
      %v9025 = vpop.f32.mrb[0].mxu0
      %v9026 = vadd.f32 0.0, %v9025
      %v9027 = vpop.f32.mrb[0].mxu0
      %9028 = vmatprep.mubr.f32.mxu0 0.0
      %9029 = vmatmul.mubr.f32.gmra.mrb[0].mxu0 %v8880
      %v9030 = vpop.f32.mrb[0].mxu0
      %v9031 = vadd.f32 0.0, %v9030
      %v9032 = vpop.f32.mrb[0].mxu0
      %9033 = vmatprep.mubr.f32.mxu0 0.0
      %9034 = vmatmul.mubr.f32.gmra.mrb[0].mxu0 %v8882
      %v9035 = vpop.f32.mrb[0].mxu0
      %v9036 = vadd.f32 0.0, %v9035
      %v9037 = vpop.f32.mrb[0].mxu0
      %9038 = vmatprep.mubr.f32.mxu0 0.0
      %9039 = vmatmul.mubr.f32.gmra.mrb[0].mxu0 %v8884
      %v9040 = vpop.f32.mrb[0].mxu0
      %v9041 = vadd.f32 0.0, %v9040
      %v9042 = vpop.f32.mrb[0].mxu0
      %9043 = vmatprep.mubr.f32.mxu0 0.0
      %9044 = vmatmul.mubr.f32.gmra.mrb[0].mxu0 %v8886
      %v9045 = vpop.f32.mrb[0].mxu0
      %v9046 = vadd.f32 0.0, %v9045
      %v9047 = vpop.f32.mrb[0].mxu0
      %9048 = vmatprep.mubr.f32.mxu0 0.0
      %9049 = vmatmul.mubr.f32.gmra.mrb[0].mxu0 %v8888
      %v9050 = vpop.f32.mrb[0].mxu0
      %v9051 = vadd.f32 0.0, %v9050
      %v9052 = vpop.f32.mrb[0].mxu0
      %9053 = vmatprep.mubr.f32.mxu0 0.0
      %9054 = vmatmul.mubr.f32.gmra.mrb[0].mxu0 %v8890
      %v9055 = vpop.f32.mrb[0].mxu0
      %v9056 = vadd.f32 0.0, %v9055
      %v9057 = vpop.f32.mrb[0].mxu0
      %9058 = vmatprep.mubr.f32.mxu0 0.0
      %9059 = vmatmul.mubr.f32.gmra.mrb[0].mxu0 %v8892
      %v9060 = vpop.f32.mrb[0].mxu0
      %v9061 = vadd.f32 0.0, %v9060
      %v9062 = vpop.f32.mrb[0].mxu0
      %9063 = vmatprep.mubr.f32.mxu0 0.0
      %9064 = vmatmul.mubr.f32.gmra.mrb[0].mxu0 %v8894
      %v9065 = vpop.f32.mrb[0].mxu0
      %v9066 = vadd.f32 0.0, %v9065
      %v9067 = vpop.f32.mrb[0].mxu0
      %9068 = vmatprep.mubr.f32.mxu0 0.0
      %9069 = vmatmul.mubr.f32.gmra.mrb[0].mxu0 %v8896
      %v9070 = vpop.f32.mrb[0].mxu0
      %v9071 = vadd.f32 0.0, %v9070
      %v9072 = vpop.f32.mrb[0].mxu0
      %9073 = vmatprep.mubr.f32.mxu0 0.0
      %9074 = vmatmul.mubr.f32.gmra.mrb[0].mxu0 %v8898
      %v9075 = vpop.f32.mrb[0].mxu0
      %v9076 = vadd.f32 0.0, %v9075
      %v9077 = vpop.f32.mrb[0].mxu0
      %9078 = vmatprep.mubr.f32.mxu0 0.0
      %9079 = vmatmul.mubr.f32.gmra.mrb[0].mxu0 %v8900
      %v9080 = vpop.f32.mrb[0].mxu0
      %v9081 = vadd.f32 0.0, %v9080
      %v9082 = vpop.f32.mrb[0].mxu0
      %9083 = vmatprep.mubr.f32.mxu0 0.0
      %9084 = vmatmul.mubr.f32.gmra.mrb[0].mxu0 %v8902
      %v9085 = vpop.f32.mrb[0].mxu0
      %v9086 = vadd.f32 0.0, %v9085
      %v9087 = vpop.f32.mrb[0].mxu0
      %9088 = vmatprep.mubr.f32.mxu0 0.0
      %9089 = vmatmul.mubr.f32.gmra.mrb[0].mxu0 %v8904
      %v9090 = vpop.f32.mrb[0].mxu0
      %v9091 = vadd.f32 0.0, %v9090
      %v9092 = vpop.f32.mrb[0].mxu0
      %9093 = vmatprep.mubr.f32.mxu0 0.0
      %9094 = vmatmul.mubr.f32.gmra.mrb[0].mxu0 %v8906
      %v9095 = vpop.f32.mrb[0].mxu0
      %v9096 = vadd.f32 0.0, %v9095
      %v9097 = vpop.f32.mrb[0].mxu0
      %9098 = vmatprep.mubr.f32.mxu0 0.0
      %9099 = vmatmul.mubr.f32.gmra.mrb[0].mxu0 %v8908
      %v9100 = vpop.f32.mrb[0].mxu0
      %v9101 = vadd.f32 0.0, %v9100
      %v9102 = vpop.f32.mrb[0].mxu0
      %9103 = vmatprep.mubr.f32.mxu0 0.0
      %9104 = vmatmul.mubr.f32.gmra.mrb[0].mxu0 %v8910
      %v9105 = vpop.f32.mrb[0].mxu0
      %v9106 = vadd.f32 0.0, %v9105
      %v9107 = vpop.f32.mrb[0].mxu0
      %9108 = vmatprep.mubr.f32.mxu0 0.0
      %9109 = vmatmul.mubr.f32.gmra.mrb[0].mxu0 %v8912
      %v9110 = vpop.f32.mrb[0].mxu0
      %v9111 = vadd.f32 0.0, %v9110
      %v9112 = vpop.f32.mrb[0].mxu0
      %9113 = vmatprep.mubr.f32.mxu0 0.0
      %9114 = vmatmul.mubr.f32.gmra.mrb[0].mxu0 %v8914
      %v9115 = vpop.f32.mrb[0].mxu0
      %v9116 = vadd.f32 0.0, %v9115
      %v9117 = vpop.f32.mrb[0].mxu0
      %9118 = vmatprep.mubr.f32.mxu0 0.0
      %9119 = vmatmul.mubr.f32.gmra.mrb[0].mxu0 %v8916
      %v9120 = vpop.f32.mrb[0].mxu0
      %v9121 = vadd.f32 0.0, %v9120
      %v9122 = vpop.f32.mrb[0].mxu0
      %9123 = vmatprep.mubr.f32.mxu0 0.0
      %9124 = vmatmul.mubr.f32.gmra.mrb[0].mxu0 %v8918
      %v9125 = vpop.f32.mrb[0].mxu0
      %v9126 = vadd.f32 0.0, %v9125
      %v9127 = vpop.f32.mrb[0].mxu0
      %9128 = vmatprep.mubr.f32.mxu0 0.0
      %9129 = vmatmul.mubr.f32.gmra.mrb[0].mxu0 %v8920
      %v9130 = vpop.f32.mrb[0].mxu0
      %v9131 = vadd.f32 0.0, %v9130
      %v9132 = vpop.f32.mrb[0].mxu0
      %9133 = vmatprep.mubr.f32.mxu0 0.0
      %9134 = vmatmul.mubr.f32.gmra.mrb[0].mxu0 %v8922
      %v9135 = vpop.f32.mrb[0].mxu0
      %v9136 = vadd.f32 0.0, %v9135
      %v9137 = vpop.f32.mrb[0].mxu0
      %9138 = vmatprep.mubr.f32.mxu0 0.0
      %9139 = vmatmul.mubr.f32.gmra.mrb[0].mxu0 %v8924
      %v9140 = vpop.f32.mrb[0].mxu0
      %v9141 = vadd.f32 0.0, %v9140
      %v9142 = vpop.f32.mrb[0].mxu0
      %9143 = vmatprep.mubr.f32.mxu0 0.0
      %9144 = vmatmul.mubr.f32.gmra.mrb[0].mxu0 %v8926
      %v9145 = vpop.f32.mrb[0].mxu0
      %v9146 = vadd.f32 0.0, %v9145
      %v9147 = vpop.f32.mrb[0].mxu0
      %9148 = vmatprep.mubr.f32.mxu0 0.0
      %9149 = vmatmul.mubr.f32.gmra.mrb[0].mxu0 %v8928
      %v9150 = vpop.f32.mrb[0].mxu0
      %v9151 = vadd.f32 0.0, %v9150
      %v9152 = vpop.f32.mrb[0].mxu0
      %9153 = vmatprep.mubr.f32.mxu0 0.0
      %9154 = vmatmul.mubr.f32.gmra.mrb[0].mxu0 %v8930
      %v9155 = vpop.f32.mrb[0].mxu0
      %v9156 = vadd.f32 0.0, %v9155
      %v9157 = vpop.f32.mrb[0].mxu0
      %9158 = vmatprep.mubr.f32.mxu0 0.0
      %9159 = vmatmul.mubr.f32.gmra.mrb[0].mxu0 %v8932
      %v9160 = vpop.f32.mrb[0].mxu0
      %v9161 = vadd.f32 0.0, %v9160
      %v9162 = vpop.f32.mrb[0].mxu0
      %9163 = vmatprep.mubr.f32.mxu0 0.0
      %9164 = vmatmul.mubr.f32.gmra.mrb[0].mxu0 %v8934
      %v9165 = vpop.f32.mrb[0].mxu0
      %v9166 = vadd.f32 0.0, %v9165
      %v9167 = vpop.f32.mrb[0].mxu0
      %9168 = vmatprep.mubr.f32.mxu0 0.0
      %9169 = vmatmul.mubr.f32.gmra.mrb[0].mxu0 %v8936
      %v9170 = vpop.f32.mrb[0].mxu0
      %v9171 = vadd.f32 0.0, %v9170
      %v9172 = vpop.f32.mrb[0].mxu0
      %9173 = vmatprep.mubr.f32.mxu0 0.0
      %9174 = vmatmul.mubr.f32.gmra.mrb[0].mxu0 %v8938
      %v9175 = vpop.f32.mrb[0].mxu0
      %v9176 = vadd.f32 0.0, %v9175
      %v9177 = vpop.f32.mrb[0].mxu0
      %9178 = vmatprep.mubr.f32.mxu0 0.0
      %9179 = vmatmul.mubr.f32.gmra.mrb[0].mxu0 %v8940
      %v9180 = vpop.f32.mrb[0].mxu0
      %v9181 = vadd.f32 0.0, %v9180
      %v9182 = vpop.f32.mrb[0].mxu0
      %9183 = vmatprep.mubr.f32.mxu0 0.0
      %9184 = vmatmul.mubr.f32.gmra.mrb[0].mxu0 %v8942
      %v9185 = vpop.f32.mrb[0].mxu0
      %v9186 = vadd.f32 0.0, %v9185
      %v9187 = vpop.f32.mrb[0].mxu0
      %9188 = vdwg.mxu0
      %v9189 = vadd.f32 %v8760, %v9011
      %v9190 = vadd.f32 %v8761, %v9016
      %v9191 = vadd.f32 %v8762, %v9021
      %v9192 = vadd.f32 %v8763, %v9026
      %v9193 = vadd.f32 %v8764, %v9031
      %v9194 = vadd.f32 %v8765, %v9036
      %v9195 = vadd.f32 %v8766, %v9041
      %v9196 = vadd.f32 %v8767, %v9046
      %v9197 = vadd.f32 %v8768, %v9051
      %v9198 = vadd.f32 %v8769, %v9056
      %v9199 = vadd.f32 %v8770, %v9061
      %v9200 = vadd.f32 %v8771, %v9066
      %v9201 = vadd.f32 %v8772, %v9071
      %v9202 = vadd.f32 %v8773, %v9076
      %v9203 = vadd.f32 %v8774, %v9081
      %v9204 = vadd.f32 %v8775, %v9086
      %v9205 = vadd.f32 %v8776, %v9091
      %v9206 = vadd.f32 %v8777, %v9096
      %v9207 = vadd.f32 %v8778, %v9101
      %v9208 = vadd.f32 %v8779, %v9106
      %v9209 = vadd.f32 %v8780, %v9111
      %v9210 = vadd.f32 %v8781, %v9116
      %v9211 = vadd.f32 %v8782, %v9121
      %v9212 = vadd.f32 %v8783, %v9126
      %v9213 = vadd.f32 %v8784, %v9131
      %v9214 = vadd.f32 %v8785, %v9136
      %v9215 = vadd.f32 %v8786, %v9141
      %v9216 = vadd.f32 %v8787, %v9146
      %v9217 = vadd.f32 %v8788, %v9151
      %v9218 = vadd.f32 %v8789, %v9156
      %v9219 = vadd.f32 %v8790, %v9161
      %v9220 = vadd.f32 %v8791, %v9166
      %v9221 = vadd.f32 %v8792, %v9171
      %v9222 = vadd.f32 %v8793, %v9176
      %v9223 = vadd.f32 %v8794, %v9181
      %v9224 = vadd.f32 %v8795, %v9186
      %v9225 = vld [vmem:[%s12] sm:$0x1]
      %v9227 = vlaneseq
      %v9228 = vshrl.u32 %v9227, 7
      %v9229 = vsub.s32 0, %v9228
      %v9230 = vrot.slane %v9225, %v9229
      %v9232 = vadd.f32 %v9189, %v9230
      %v9233 = vadd.f32 %v9190, %v9230
      %v9234 = vadd.f32 %v9191, %v9230
      %v9235 = vadd.f32 %v9192, %v9230
      %v9236 = vadd.f32 %v9193, %v9230
      %v9237 = vadd.f32 %v9194, %v9230
      %v9238 = vadd.f32 %v9195, %v9230
      %v9239 = vadd.f32 %v9196, %v9230
      %v9240 = vadd.f32 %v9197, %v9230
      %v9241 = vadd.f32 %v9198, %v9230
      %v9242 = vadd.f32 %v9199, %v9230
      %v9243 = vadd.f32 %v9200, %v9230
      %v9244 = vadd.f32 %v9201, %v9230
      %v9245 = vadd.f32 %v9202, %v9230
      %v9246 = vadd.f32 %v9203, %v9230
      %v9247 = vadd.f32 %v9204, %v9230
      %v9248 = vadd.f32 %v9205, %v9230
      %v9249 = vadd.f32 %v9206, %v9230
      %v9250 = vadd.f32 %v9207, %v9230
      %v9251 = vadd.f32 %v9208, %v9230
      %v9252 = vadd.f32 %v9209, %v9230
      %v9253 = vadd.f32 %v9210, %v9230
      %v9254 = vadd.f32 %v9211, %v9230
      %v9255 = vadd.f32 %v9212, %v9230
      %v9256 = vadd.f32 %v9213, %v9230
      %v9257 = vadd.f32 %v9214, %v9230
      %v9258 = vadd.f32 %v9215, %v9230
      %v9259 = vadd.f32 %v9216, %v9230
      %v9260 = vadd.f32 %v9217, %v9230
      %v9261 = vadd.f32 %v9218, %v9230
      %v9262 = vadd.f32 %v9219, %v9230
      %v9263 = vadd.f32 %v9220, %v9230
      %v9264 = vadd.f32 %v9221, %v9230
      %v9265 = vadd.f32 %v9222, %v9230
      %v9266 = vadd.f32 %v9223, %v9230
      %v9267 = vadd.f32 %v9224, %v9230
      %v9268 = vld [vmem:[%s13] sm:$0x1]
      %v9269 = vld [vmem:[%s14] sm:$0x1]
      %v9270 = vrot.slane %v4614, 3
      %v9271 = vrot.slane %v4619, 3
      %v9272 = vsel %vm2301, %v9270, %v9271
      %v9273 = vrot.slane %v4624, 3
      %v9274 = vsel %vm2301, %v9271, %v9273
      %v9275 = vrot.slane %v4629, 3
      %v9276 = vsel %vm2301, %v9273, %v9275
      %v9277 = vrot.slane %v4634, 3
      %v9278 = vsel %vm2301, %v9275, %v9277
      %v9279 = vrot.slane %v4639, 3
      %v9280 = vsel %vm2301, %v9277, %v9279
      %v9281 = vrot.slane %v4644, 3
      %v9282 = vsel %vm2301, %v9279, %v9281
      %v9283 = vrot.slane %v4649, 3
      %v9284 = vsel %vm2301, %v9281, %v9283
      %v9285 = vrot.slane %v4654, 3
      %v9286 = vsel %vm2301, %v9283, %v9285
      %v9287 = vrot.slane %v4659, 3
      %v9288 = vsel %vm2301, %v9285, %v9287
      %v9289 = vrot.slane %v4664, 3
      %v9290 = vsel %vm2301, %v9287, %v9289
      %v9291 = vrot.slane %v4669, 3
      %v9292 = vsel %vm2301, %v9289, %v9291
      %v9293 = vrot.slane %v4674, 3
      %v9294 = vsel %vm2301, %v9291, %v9293
      %v9295 = vrot.slane %v4679, 3
      %v9296 = vsel %vm2301, %v9293, %v9295
      %v9297 = vrot.slane %v4684, 3
      %v9298 = vsel %vm2301, %v9295, %v9297
      %v9299 = vrot.slane %v4689, 3
      %v9300 = vsel %vm2301, %v9297, %v9299
      %v9301 = vrot.slane %v4694, 3
      %v9302 = vsel %vm2301, %v9299, %v9301
      %v9303 = vrot.slane %v4699, 3
      %v9304 = vsel %vm2301, %v9301, %v9303
      %v9305 = vrot.slane %v4704, 3
      %v9306 = vsel %vm2301, %v9303, %v9305
      %v9307 = vrot.slane %v4709, 3
      %v9308 = vsel %vm2301, %v9305, %v9307
      %v9309 = vrot.slane %v4714, 3
      %v9310 = vsel %vm2301, %v9307, %v9309
      %v9311 = vrot.slane %v4719, 3
      %v9312 = vsel %vm2301, %v9309, %v9311
      %v9313 = vrot.slane %v4724, 3
      %v9314 = vsel %vm2301, %v9311, %v9313
      %v9315 = vrot.slane %v4729, 3
      %v9316 = vsel %vm2301, %v9313, %v9315
      %v9317 = vrot.slane %v4734, 3
      %v9318 = vsel %vm2301, %v9315, %v9317
      %v9319 = vrot.slane %v4739, 3
      %v9320 = vsel %vm2301, %v9317, %v9319
      %v9321 = vrot.slane %v4744, 3
      %v9322 = vsel %vm2301, %v9319, %v9321
      %v9323 = vrot.slane %v4749, 3
      %v9324 = vsel %vm2301, %v9321, %v9323
      %v9325 = vrot.slane %v4754, 3
      %v9326 = vsel %vm2301, %v9323, %v9325
      %v9327 = vrot.slane %v4759, 3
      %v9328 = vsel %vm2301, %v9325, %v9327
      %v9329 = vrot.slane %v4764, 3
      %v9330 = vsel %vm2301, %v9327, %v9329
      %v9331 = vrot.slane %v4769, 3
      %v9332 = vsel %vm2301, %v9329, %v9331
      %v9333 = vrot.slane %v4774, 3
      %v9334 = vsel %vm2301, %v9331, %v9333
      %v9335 = vrot.slane %v4779, 3
      %v9336 = vsel %vm2301, %v9333, %v9335
      %v9337 = vrot.slane %v4784, 3
      %v9338 = vsel %vm2301, %v9335, %v9337
      %v9339 = vrot.slane %v4789, 3
      %v9340 = vsel %vm2301, %v9337, %v9339
      %v9341 = vrot.slane %v4794, 3
      %v9342 = vsel %vm2301, %v9339, %v9341
      %v9379 = vmul.f32 %v9232, %v9272
      %v9380 = vmul.f32 %v9233, %v9274
      %v9381 = vmul.f32 %v9234, %v9276
      %v9382 = vmul.f32 %v9235, %v9278
      %v9383 = vmul.f32 %v9236, %v9280
      %v9384 = vmul.f32 %v9237, %v9282
      %v9385 = vmul.f32 %v9238, %v9284
      %v9386 = vmul.f32 %v9239, %v9286
      %v9387 = vmul.f32 %v9240, %v9288
      %v9388 = vmul.f32 %v9241, %v9290
      %v9389 = vmul.f32 %v9242, %v9292
      %v9390 = vmul.f32 %v9243, %v9294
      %v9391 = vmul.f32 %v9244, %v9296
      %v9392 = vmul.f32 %v9245, %v9298
      %v9393 = vmul.f32 %v9246, %v9300
      %v9394 = vmul.f32 %v9247, %v9302
      %v9395 = vmul.f32 %v9248, %v9304
      %v9396 = vmul.f32 %v9249, %v9306
      %v9397 = vmul.f32 %v9250, %v9308
      %v9398 = vmul.f32 %v9251, %v9310
      %v9399 = vmul.f32 %v9252, %v9312
      %v9400 = vmul.f32 %v9253, %v9314
      %v9401 = vmul.f32 %v9254, %v9316
      %v9402 = vmul.f32 %v9255, %v9318
      %v9403 = vmul.f32 %v9256, %v9320
      %v9404 = vmul.f32 %v9257, %v9322
      %v9405 = vmul.f32 %v9258, %v9324
      %v9406 = vmul.f32 %v9259, %v9326
      %v9407 = vmul.f32 %v9260, %v9328
      %v9408 = vmul.f32 %v9261, %v9330
      %v9409 = vmul.f32 %v9262, %v9332
      %v9410 = vmul.f32 %v9263, %v9334
      %v9411 = vmul.f32 %v9264, %v9336
      %v9412 = vmul.f32 %v9265, %v9338
      %v9413 = vmul.f32 %v9266, %v9340
      %v9414 = vmul.f32 %v9267, %v9342
      %v9415 = vsel %vm4847, %v9379, 0.0
      %v9416 = vsel %vm4847, %v9380, 0.0
      %v9417 = vadd.f32 %v9415, %v9416
      %v9418 = vsel %vm4847, %v9381, 0.0
      %v9419 = vadd.f32 %v9417, %v9418
      %v9420 = vsel %vm4847, %v9382, 0.0
      %v9421 = vadd.f32 %v9419, %v9420
      %v9422 = vsel %vm4847, %v9383, 0.0
      %v9423 = vadd.f32 %v9421, %v9422
      %v9424 = vsel %vm4847, %v9384, 0.0
      %v9425 = vadd.f32 %v9423, %v9424
      %v9426 = vsel %vm4847, %v9385, 0.0
      %v9427 = vadd.f32 %v9425, %v9426
      %v9428 = vsel %vm4847, %v9386, 0.0
      %v9429 = vadd.f32 %v9427, %v9428
      %v9430 = vsel %vm4847, %v9387, 0.0
      %v9431 = vadd.f32 %v9429, %v9430
      %v9432 = vsel %vm4847, %v9388, 0.0
      %v9433 = vadd.f32 %v9431, %v9432
      %v9434 = vsel %vm4847, %v9389, 0.0
      %v9435 = vadd.f32 %v9433, %v9434
      %v9436 = vsel %vm4847, %v9390, 0.0
      %v9437 = vadd.f32 %v9435, %v9436
      %v9438 = vsel %vm4847, %v9391, 0.0
      %v9439 = vadd.f32 %v9437, %v9438
      %v9440 = vsel %vm4847, %v9392, 0.0
      %v9441 = vadd.f32 %v9439, %v9440
      %v9442 = vsel %vm4847, %v9393, 0.0
      %v9443 = vadd.f32 %v9441, %v9442
      %v9444 = vsel %vm4847, %v9394, 0.0
      %v9445 = vadd.f32 %v9443, %v9444
      %v9446 = vsel %vm4847, %v9395, 0.0
      %v9447 = vadd.f32 %v9445, %v9446
      %v9448 = vsel %vm4847, %v9396, 0.0
      %v9449 = vadd.f32 %v9447, %v9448
      %v9450 = vsel %vm4847, %v9397, 0.0
      %v9451 = vadd.f32 %v9449, %v9450
      %v9452 = vsel %vm4847, %v9398, 0.0
      %v9453 = vadd.f32 %v9451, %v9452
      %v9454 = vsel %vm4847, %v9399, 0.0
      %v9455 = vadd.f32 %v9453, %v9454
      %v9456 = vsel %vm4847, %v9400, 0.0
      %v9457 = vadd.f32 %v9455, %v9456
      %v9458 = vsel %vm4847, %v9401, 0.0
      %v9459 = vadd.f32 %v9457, %v9458
      %v9460 = vsel %vm4847, %v9402, 0.0
      %v9461 = vadd.f32 %v9459, %v9460
      %v9462 = vsel %vm4847, %v9403, 0.0
      %v9463 = vadd.f32 %v9461, %v9462
      %v9464 = vsel %vm4847, %v9404, 0.0
      %v9465 = vadd.f32 %v9463, %v9464
      %v9466 = vsel %vm4847, %v9405, 0.0
      %v9467 = vadd.f32 %v9465, %v9466
      %v9468 = vsel %vm4847, %v9406, 0.0
      %v9469 = vadd.f32 %v9467, %v9468
      %v9470 = vsel %vm4847, %v9407, 0.0
      %v9471 = vadd.f32 %v9469, %v9470
      %v9472 = vsel %vm4847, %v9408, 0.0
      %v9473 = vadd.f32 %v9471, %v9472
      %v9474 = vsel %vm4847, %v9409, 0.0
      %v9475 = vadd.f32 %v9473, %v9474
      %v9476 = vsel %vm4847, %v9410, 0.0
      %v9477 = vadd.f32 %v9475, %v9476
      %v9478 = vsel %vm4847, %v9411, 0.0
      %v9479 = vadd.f32 %v9477, %v9478
      %v9480 = vsel %vm4847, %v9412, 0.0
      %v9481 = vadd.f32 %v9479, %v9480
      %v9482 = vsel %vm4847, %v9413, 0.0
      %v9483 = vadd.f32 %v9481, %v9482
      %vm9484 = vcmask 128000
      %v9485 = vsel %vm9484, %v9414, 0.0
      %v9486 = vadd.f32 %v9483, %v9485
      %v9487 = vrot.slane %v9486, 4
      %v9488 = vadd.f32 %v9486, %v9487
      %v9489 = vrot.slane %v9488, 2
      %v9490 = vadd.f32 %v9488, %v9489
      %v9491 = vrot.slane %v9490, 1
      %v9492 = vadd.f32 %v9490, %v9491
      %v9493 = vmul.f32 %v9379, %v9379
      %v9494 = vmul.f32 %v9380, %v9380
      %v9495 = vmul.f32 %v9381, %v9381
      %v9496 = vmul.f32 %v9382, %v9382
      %v9497 = vmul.f32 %v9383, %v9383
      %v9498 = vmul.f32 %v9384, %v9384
      %v9499 = vmul.f32 %v9385, %v9385
      %v9500 = vmul.f32 %v9386, %v9386
      %v9501 = vmul.f32 %v9387, %v9387
      %v9502 = vmul.f32 %v9388, %v9388
      %v9503 = vmul.f32 %v9389, %v9389
      %v9504 = vmul.f32 %v9390, %v9390
      %v9505 = vmul.f32 %v9391, %v9391
      %v9506 = vmul.f32 %v9392, %v9392
      %v9507 = vmul.f32 %v9393, %v9393
      %v9508 = vmul.f32 %v9394, %v9394
      %v9509 = vmul.f32 %v9395, %v9395
      %v9510 = vmul.f32 %v9396, %v9396
      %v9511 = vmul.f32 %v9397, %v9397
      %v9512 = vmul.f32 %v9398, %v9398
      %v9513 = vmul.f32 %v9399, %v9399
      %v9514 = vmul.f32 %v9400, %v9400
      %v9515 = vmul.f32 %v9401, %v9401
      %v9516 = vmul.f32 %v9402, %v9402
      %v9517 = vmul.f32 %v9403, %v9403
      %v9518 = vmul.f32 %v9404, %v9404
      %v9519 = vmul.f32 %v9405, %v9405
      %v9520 = vmul.f32 %v9406, %v9406
      %v9521 = vmul.f32 %v9407, %v9407
      %v9522 = vmul.f32 %v9408, %v9408
      %v9523 = vmul.f32 %v9409, %v9409
      %v9524 = vmul.f32 %v9410, %v9410
      %v9525 = vmul.f32 %v9411, %v9411
      %v9526 = vmul.f32 %v9412, %v9412
      %v9527 = vmul.f32 %v9413, %v9413
      %v9528 = vmul.f32 %v9414, %v9414
      %v9529 = vsel %vm4847, %v9493, 0.0
      %v9530 = vsel %vm4847, %v9494, 0.0
      %v9531 = vadd.f32 %v9529, %v9530
      %v9532 = vsel %vm4847, %v9495, 0.0
      %v9533 = vadd.f32 %v9531, %v9532
      %v9534 = vsel %vm4847, %v9496, 0.0
      %v9535 = vadd.f32 %v9533, %v9534
      %v9536 = vsel %vm4847, %v9497, 0.0
      %v9537 = vadd.f32 %v9535, %v9536
      %v9538 = vsel %vm4847, %v9498, 0.0
      %v9539 = vadd.f32 %v9537, %v9538
      %v9540 = vsel %vm4847, %v9499, 0.0
      %v9541 = vadd.f32 %v9539, %v9540
      %v9542 = vsel %vm4847, %v9500, 0.0
      %v9543 = vadd.f32 %v9541, %v9542
      %v9544 = vsel %vm4847, %v9501, 0.0
      %v9545 = vadd.f32 %v9543, %v9544
      %v9546 = vsel %vm4847, %v9502, 0.0
      %v9547 = vadd.f32 %v9545, %v9546
      %v9548 = vsel %vm4847, %v9503, 0.0
      %v9549 = vadd.f32 %v9547, %v9548
      %v9550 = vsel %vm4847, %v9504, 0.0
      %v9551 = vadd.f32 %v9549, %v9550
      %v9552 = vsel %vm4847, %v9505, 0.0
      %v9553 = vadd.f32 %v9551, %v9552
      %v9554 = vsel %vm4847, %v9506, 0.0
      %v9555 = vadd.f32 %v9553, %v9554
      %v9556 = vsel %vm4847, %v9507, 0.0
      %v9557 = vadd.f32 %v9555, %v9556
      %v9558 = vsel %vm4847, %v9508, 0.0
      %v9559 = vadd.f32 %v9557, %v9558
      %v9560 = vsel %vm4847, %v9509, 0.0
      %v9561 = vadd.f32 %v9559, %v9560
      %v9562 = vsel %vm4847, %v9510, 0.0
      %v9563 = vadd.f32 %v9561, %v9562
      %v9564 = vsel %vm4847, %v9511, 0.0
      %v9565 = vadd.f32 %v9563, %v9564
      %v9566 = vsel %vm4847, %v9512, 0.0
      %v9567 = vadd.f32 %v9565, %v9566
      %v9568 = vsel %vm4847, %v9513, 0.0
      %v9569 = vadd.f32 %v9567, %v9568
      %v9570 = vsel %vm4847, %v9514, 0.0
      %v9571 = vadd.f32 %v9569, %v9570
      %v9572 = vsel %vm4847, %v9515, 0.0
      %v9573 = vadd.f32 %v9571, %v9572
      %v9574 = vsel %vm4847, %v9516, 0.0
      %v9575 = vadd.f32 %v9573, %v9574
      %v9576 = vsel %vm4847, %v9517, 0.0
      %v9577 = vadd.f32 %v9575, %v9576
      %v9578 = vsel %vm4847, %v9518, 0.0
      %v9579 = vadd.f32 %v9577, %v9578
      %v9580 = vsel %vm4847, %v9519, 0.0
      %v9581 = vadd.f32 %v9579, %v9580
      %v9582 = vsel %vm4847, %v9520, 0.0
      %v9583 = vadd.f32 %v9581, %v9582
      %v9584 = vsel %vm4847, %v9521, 0.0
      %v9585 = vadd.f32 %v9583, %v9584
      %v9586 = vsel %vm4847, %v9522, 0.0
      %v9587 = vadd.f32 %v9585, %v9586
      %v9588 = vsel %vm4847, %v9523, 0.0
      %v9589 = vadd.f32 %v9587, %v9588
      %v9590 = vsel %vm4847, %v9524, 0.0
      %v9591 = vadd.f32 %v9589, %v9590
      %v9592 = vsel %vm4847, %v9525, 0.0
      %v9593 = vadd.f32 %v9591, %v9592
      %v9594 = vsel %vm4847, %v9526, 0.0
      %v9595 = vadd.f32 %v9593, %v9594
      %v9596 = vsel %vm4847, %v9527, 0.0
      %v9597 = vadd.f32 %v9595, %v9596
      %v9598 = vsel %vm9484, %v9528, 0.0
      %v9599 = vadd.f32 %v9597, %v9598
      %v9600 = vrot.slane %v9599, 4
      %v9601 = vadd.f32 %v9599, %v9600
      %v9602 = vrot.slane %v9601, 2
      %v9603 = vadd.f32 %v9601, %v9602
      %v9604 = vrot.slane %v9603, 1
      %v9605 = vadd.f32 %v9603, %v9604
      %v9606 = vsel %vm5066, %v9492, %v9605
      %v9608 = vsel %vm4847, %v9606, 0
      %9610 = vmatprep.subr.mxu0 0.0
      %9611 = vmatpush1.msra.mxu0 %v650
      %9612 = vmatprep.subr.mxu0 0.0
      %9613 = vmatpush1.msra.mxu0 %v651
      %9614 = vmatprep.subr.mxu0 0.0
      %9615 = vmatpush1.msra.mxu0 0.0
      %9616 = vmatprep.subr.mxu0 0.0
      %9617 = vmatpush1.msra.mxu0 0.0
      %9618 = vmatprep.subr.mxu0 0.0
      %9619 = vmatpush1.msra.mxu0 0.0
      %9620 = vmatprep.subr.mxu0 0.0
      %9621 = vmatpush1.msra.mxu0 0.0
      %9622 = vmatprep.subr.mxu0 0.0
      %9623 = vmatpush1.msra.mxu0 0.0
      %9624 = vmatprep.subr.mxu0 0.0
      %9625 = vmatpush1.msra.mxu0 0.0
      %9626 = vmatprep.subr.mxu0 0.0
      %9627 = vmatpush1.msra.mxu0 0.0
      %9628 = vmatprep.subr.mxu0 0.0
      %9629 = vmatpush1.msra.mxu0 0.0
      %9630 = vmatprep.subr.mxu0 0.0
      %9631 = vmatpush1.msra.mxu0 0.0
      %9632 = vmatprep.subr.mxu0 0.0
      %9633 = vmatpush1.msra.mxu0 0.0
      %9634 = vmatprep.subr.mxu0 0.0
      %9635 = vmatpush1.msra.mxu0 0.0
      %9636 = vmatprep.subr.mxu0 0.0
      %9637 = vmatpush1.msra.mxu0 0.0
      %9638 = vmatprep.subr.mxu0 0.0
      %9639 = vmatpush1.msra.mxu0 0.0
      %9640 = vmatprep.subr.mxu0 0.0
      %9641 = vmatpush1.msra.mxu0 0.0
      %9642 = vmatprep.subr.mxu0 0.0
      %9643 = vmatpush1.msra.mxu0 0.0
      %9644 = vmatprep.subr.mxu0 0.0
      %9645 = vmatpush1.msra.mxu0 0.0
      %9646 = vmatprep.subr.mxu0 0.0
      %9647 = vmatpush1.msra.mxu0 0.0
      %9648 = vmatprep.subr.mxu0 0.0
      %9649 = vmatpush1.msra.mxu0 0.0
      %9650 = vmatprep.subr.mxu0 0.0
      %9651 = vmatpush1.msra.mxu0 0.0
      %9652 = vmatprep.subr.mxu0 0.0
      %9653 = vmatpush1.msra.mxu0 0.0
      %9654 = vmatprep.subr.mxu0 0.0
      %9655 = vmatpush1.msra.mxu0 0.0
      %9656 = vmatprep.subr.mxu0 0.0
      %9657 = vmatpush1.msra.mxu0 0.0
      %9658 = vmatprep.subr.mxu0 0.0
      %9659 = vmatpush1.msra.mxu0 0.0
      %9660 = vmatprep.subr.mxu0 0.0
      %9661 = vmatpush1.msra.mxu0 0.0
      %9662 = vmatprep.subr.mxu0 0.0
      %9663 = vmatpush1.msra.mxu0 0.0
      %9664 = vmatprep.subr.mxu0 0.0
      %9665 = vmatpush1.msra.mxu0 0.0
      %9666 = vmatprep.subr.mxu0 0.0
      %9667 = vmatpush1.msra.mxu0 0.0
      %9668 = vmatprep.subr.mxu0 0.0
      %9669 = vmatpush1.msra.mxu0 0.0
      %9670 = vmatprep.subr.mxu0 0.0
      %9671 = vmatpush1.msra.mxu0 0.0
      %9672 = vmatprep.subr.mxu0 0.0
      %9673 = vmatpush1.msra.mxu0 0.0
      %9674 = vmatprep.mubr.f32.mxu0 0.0
      %9675 = vmatmul.mubr.f32.gmra.mrb[0].mxu0 %v9608
      %v9676 = vpop.f32.mrb[0].mxu0
      %v9677 = vadd.f32 0.0, %v9676
      %v9678 = vpop.f32.mrb[0].mxu0
      %9679 = vdwg.mxu0
      %v9680 = vmul.f32 %v9677, 0.001953125
      %v9682 = vsel %vm5142, %v9680, 0
      %9684 = vmatprep.subr.mxu0 0.0
      %9685 = vmatpush1.msra.mxu0 %v652
      %9686 = vmatprep.subr.mxu0 0.0
      %9687 = vmatpush1.msra.mxu0 0.0
      %9688 = vmatprep.subr.mxu0 0.0
      %9689 = vmatpush1.msra.mxu0 0.0
      %9690 = vmatprep.subr.mxu0 0.0
      %9691 = vmatpush1.msra.mxu0 0.0
      %9692 = vmatprep.subr.mxu0 0.0
      %9693 = vmatpush1.msra.mxu0 0.0
      %9694 = vmatprep.subr.mxu0 0.0
      %9695 = vmatpush1.msra.mxu0 0.0
      %9696 = vmatprep.subr.mxu0 0.0
      %9697 = vmatpush1.msra.mxu0 0.0
      %9698 = vmatprep.subr.mxu0 0.0
      %9699 = vmatpush1.msra.mxu0 0.0
      %9700 = vmatprep.subr.mxu0 0.0
      %9701 = vmatpush1.msra.mxu0 0.0
      %9702 = vmatprep.subr.mxu0 0.0
      %9703 = vmatpush1.msra.mxu0 0.0
      %9704 = vmatprep.subr.mxu0 0.0
      %9705 = vmatpush1.msra.mxu0 0.0
      %9706 = vmatprep.subr.mxu0 0.0
      %9707 = vmatpush1.msra.mxu0 0.0
      %9708 = vmatprep.subr.mxu0 0.0
      %9709 = vmatpush1.msra.mxu0 0.0
      %9710 = vmatprep.subr.mxu0 0.0
      %9711 = vmatpush1.msra.mxu0 0.0
      %9712 = vmatprep.subr.mxu0 0.0
      %9713 = vmatpush1.msra.mxu0 0.0
      %9714 = vmatprep.subr.mxu0 0.0
      %9715 = vmatpush1.msra.mxu0 0.0
      %9716 = vmatprep.subr.mxu0 0.0
      %9717 = vmatpush1.msra.mxu0 0.0
      %9718 = vmatprep.subr.mxu0 0.0
      %9719 = vmatpush1.msra.mxu0 0.0
      %9720 = vmatprep.subr.mxu0 0.0
      %9721 = vmatpush1.msra.mxu0 0.0
      %9722 = vmatprep.subr.mxu0 0.0
      %9723 = vmatpush1.msra.mxu0 0.0
      %9724 = vmatprep.subr.mxu0 0.0
      %9725 = vmatpush1.msra.mxu0 0.0
      %9726 = vmatprep.subr.mxu0 0.0
      %9727 = vmatpush1.msra.mxu0 0.0
      %9728 = vmatprep.subr.mxu0 0.0
      %9729 = vmatpush1.msra.mxu0 0.0
      %9730 = vmatprep.subr.mxu0 0.0
      %9731 = vmatpush1.msra.mxu0 0.0
      %9732 = vmatprep.subr.mxu0 0.0
      %9733 = vmatpush1.msra.mxu0 0.0
      %9734 = vmatprep.subr.mxu0 0.0
      %9735 = vmatpush1.msra.mxu0 0.0
      %9736 = vmatprep.subr.mxu0 0.0
      %9737 = vmatpush1.msra.mxu0 0.0
      %9738 = vmatprep.subr.mxu0 0.0
      %9739 = vmatpush1.msra.mxu0 0.0
      %9740 = vmatprep.subr.mxu0 0.0
      %9741 = vmatpush1.msra.mxu0 0.0
      %9742 = vmatprep.subr.mxu0 0.0
      %9743 = vmatpush1.msra.mxu0 0.0
      %9744 = vmatprep.subr.mxu0 0.0
      %9745 = vmatpush1.msra.mxu0 0.0
      %9746 = vmatprep.subr.mxu0 0.0
      %9747 = vmatpush1.msra.mxu0 0.0
      %9748 = vmatprep.mubr.f32.mxu0 0.0
      %9749 = vmatmul.mubr.f32.gmra.mrb[0].mxu0 %v9682
      %v9750 = vpop.f32.mrb[0].mxu0
      %v9751 = vadd.f32 0.0, %v9750
      %v9752 = vpop.f32.mrb[0].mxu0
      %9753 = vdwg.mxu0
      %v9754 = vmul.f32 %v9751, %v9751
      %v9756 = vrot.slane %v9754, 7
      %v9758 = vsub.f32 %v9751, %v9756
      %v9759 = vadd.f32 %v9758, 1e-05
      %v9760 = vrsqrt.pop %v9759
      %v9762 = vlaneseq
      %v9763 = vshrl.u32 %v9762, 7
      %v9764 = vsub.s32 0, %v9763
      %v9765 = vrot.slane %v9268, %v9764
      %v9767 = vmul.f32 %v9760, %v9765
      %v9768 = vlaneseq
      %v9769 = vshrl.u32 %v9768, 7
      %v9770 = vsub.s32 1, %v9769
      %v9771 = vrot.slane %v9767, %v9770
      %v9772 = vmul.f32 %v9232, %v9771
      %v9773 = vmul.f32 %v9233, %v9771
      %v9774 = vmul.f32 %v9234, %v9771
      %v9775 = vmul.f32 %v9235, %v9771
      %v9776 = vmul.f32 %v9236, %v9771
      %v9777 = vmul.f32 %v9237, %v9771
      %v9778 = vmul.f32 %v9238, %v9771
      %v9779 = vmul.f32 %v9239, %v9771
      %v9780 = vmul.f32 %v9240, %v9771
      %v9781 = vmul.f32 %v9241, %v9771
      %v9782 = vmul.f32 %v9242, %v9771
      %v9783 = vmul.f32 %v9243, %v9771
      %v9784 = vmul.f32 %v9244, %v9771
      %v9785 = vmul.f32 %v9245, %v9771
      %v9786 = vmul.f32 %v9246, %v9771
      %v9787 = vmul.f32 %v9247, %v9771
      %v9788 = vmul.f32 %v9248, %v9771
      %v9789 = vmul.f32 %v9249, %v9771
      %v9790 = vmul.f32 %v9250, %v9771
      %v9791 = vmul.f32 %v9251, %v9771
      %v9792 = vmul.f32 %v9252, %v9771
      %v9793 = vmul.f32 %v9253, %v9771
      %v9794 = vmul.f32 %v9254, %v9771
      %v9795 = vmul.f32 %v9255, %v9771
      %v9796 = vmul.f32 %v9256, %v9771
      %v9797 = vmul.f32 %v9257, %v9771
      %v9798 = vmul.f32 %v9258, %v9771
      %v9799 = vmul.f32 %v9259, %v9771
      %v9800 = vmul.f32 %v9260, %v9771
      %v9801 = vmul.f32 %v9261, %v9771
      %v9802 = vmul.f32 %v9262, %v9771
      %v9803 = vmul.f32 %v9263, %v9771
      %v9804 = vmul.f32 %v9264, %v9771
      %v9805 = vmul.f32 %v9265, %v9771
      %v9806 = vmul.f32 %v9266, %v9771
      %v9807 = vmul.f32 %v9267, %v9771
      %v9809 = vrot.slane %v9767, 1
      %v9811 = vmul.f32 %v9751, %v9809
      %v9812 = vsub.f32 %v9269, %v9811
      %v9814 = vlaneseq
      %v9815 = vshrl.u32 %v9814, 7
      %v9816 = vsub.s32 0, %v9815
      %v9817 = vrot.slane %v9812, %v9816
      %v9819 = vadd.f32 %v9772, %v9817
      %v9820 = vadd.f32 %v9773, %v9817
      %v9821 = vadd.f32 %v9774, %v9817
      %v9822 = vadd.f32 %v9775, %v9817
      %v9823 = vadd.f32 %v9776, %v9817
      %v9824 = vadd.f32 %v9777, %v9817
      %v9825 = vadd.f32 %v9778, %v9817
      %v9826 = vadd.f32 %v9779, %v9817
      %v9827 = vadd.f32 %v9780, %v9817
      %v9828 = vadd.f32 %v9781, %v9817
      %v9829 = vadd.f32 %v9782, %v9817
      %v9830 = vadd.f32 %v9783, %v9817
      %v9831 = vadd.f32 %v9784, %v9817
      %v9832 = vadd.f32 %v9785, %v9817
      %v9833 = vadd.f32 %v9786, %v9817
      %v9834 = vadd.f32 %v9787, %v9817
      %v9835 = vadd.f32 %v9788, %v9817
      %v9836 = vadd.f32 %v9789, %v9817
      %v9837 = vadd.f32 %v9790, %v9817
      %v9838 = vadd.f32 %v9791, %v9817
      %v9839 = vadd.f32 %v9792, %v9817
      %v9840 = vadd.f32 %v9793, %v9817
      %v9841 = vadd.f32 %v9794, %v9817
      %v9842 = vadd.f32 %v9795, %v9817
      %v9843 = vadd.f32 %v9796, %v9817
      %v9844 = vadd.f32 %v9797, %v9817
      %v9845 = vadd.f32 %v9798, %v9817
      %v9846 = vadd.f32 %v9799, %v9817
      %v9847 = vadd.f32 %v9800, %v9817
      %v9848 = vadd.f32 %v9801, %v9817
      %v9849 = vadd.f32 %v9802, %v9817
      %v9850 = vadd.f32 %v9803, %v9817
      %v9851 = vadd.f32 %v9804, %v9817
      %v9852 = vadd.f32 %v9805, %v9817
      %v9853 = vadd.f32 %v9806, %v9817
      %v9854 = vadd.f32 %v9807, %v9817
      %v9855 = vsub.f32 0.0, %v9819
      %v9856 = vsub.f32 0.0, %v9820
      %v9857 = vsub.f32 0.0, %v9821
      %v9858 = vsub.f32 0.0, %v9822
      %v9859 = vsub.f32 0.0, %v9823
      %v9860 = vsub.f32 0.0, %v9824
      %v9861 = vsub.f32 0.0, %v9825
      %v9862 = vsub.f32 0.0, %v9826
      %v9863 = vsub.f32 0.0, %v9827
      %v9864 = vsub.f32 0.0, %v9828
      %v9865 = vsub.f32 0.0, %v9829
      %v9866 = vsub.f32 0.0, %v9830
      %v9867 = vsub.f32 0.0, %v9831
      %v9868 = vsub.f32 0.0, %v9832
      %v9869 = vsub.f32 0.0, %v9833
      %v9870 = vsub.f32 0.0, %v9834
      %v9871 = vsub.f32 0.0, %v9835
      %v9872 = vsub.f32 0.0, %v9836
      %v9873 = vsub.f32 0.0, %v9837
      %v9874 = vsub.f32 0.0, %v9838
      %v9875 = vsub.f32 0.0, %v9839
      %v9876 = vsub.f32 0.0, %v9840
      %v9877 = vsub.f32 0.0, %v9841
      %v9878 = vsub.f32 0.0, %v9842
      %v9879 = vsub.f32 0.0, %v9843
      %v9880 = vsub.f32 0.0, %v9844
      %v9881 = vsub.f32 0.0, %v9845
      %v9882 = vsub.f32 0.0, %v9846
      %v9883 = vsub.f32 0.0, %v9847
      %v9884 = vsub.f32 0.0, %v9848
      %v9885 = vsub.f32 0.0, %v9849
      %v9886 = vsub.f32 0.0, %v9850
      %v9887 = vsub.f32 0.0, %v9851
      %v9888 = vsub.f32 0.0, %v9852
      %v9889 = vsub.f32 0.0, %v9853
      %v9890 = vsub.f32 0.0, %v9854
      %v9891 = vmul.f32 %v9855, 1.442695
      %v9892 = vpow.pop %v9891
      %v9893 = vmul.f32 %v9856, 1.442695
      %v9894 = vpow.pop %v9893
      %v9895 = vmul.f32 %v9857, 1.442695
      %v9896 = vpow.pop %v9895
      %v9897 = vmul.f32 %v9858, 1.442695
      %v9898 = vpow.pop %v9897
      %v9899 = vmul.f32 %v9859, 1.442695
      %v9900 = vpow.pop %v9899
      %v9901 = vmul.f32 %v9860, 1.442695
      %v9902 = vpow.pop %v9901
      %v9903 = vmul.f32 %v9861, 1.442695
      %v9904 = vpow.pop %v9903
      %v9905 = vmul.f32 %v9862, 1.442695
      %v9906 = vpow.pop %v9905
      %v9907 = vmul.f32 %v9863, 1.442695
      %v9908 = vpow.pop %v9907
      %v9909 = vmul.f32 %v9864, 1.442695
      %v9910 = vpow.pop %v9909
      %v9911 = vmul.f32 %v9865, 1.442695
      %v9912 = vpow.pop %v9911
      %v9913 = vmul.f32 %v9866, 1.442695
      %v9914 = vpow.pop %v9913
      %v9915 = vmul.f32 %v9867, 1.442695
      %v9916 = vpow.pop %v9915
      %v9917 = vmul.f32 %v9868, 1.442695
      %v9918 = vpow.pop %v9917
      %v9919 = vmul.f32 %v9869, 1.442695
      %v9920 = vpow.pop %v9919
      %v9921 = vmul.f32 %v9870, 1.442695
      %v9922 = vpow.pop %v9921
      %v9923 = vmul.f32 %v9871, 1.442695
      %v9924 = vpow.pop %v9923
      %v9925 = vmul.f32 %v9872, 1.442695
      %v9926 = vpow.pop %v9925
      %v9927 = vmul.f32 %v9873, 1.442695
      %v9928 = vpow.pop %v9927
      %v9929 = vmul.f32 %v9874, 1.442695
      %v9930 = vpow.pop %v9929
      %v9931 = vmul.f32 %v9875, 1.442695
      %v9932 = vpow.pop %v9931
      %v9933 = vmul.f32 %v9876, 1.442695
      %v9934 = vpow.pop %v9933
      %v9935 = vmul.f32 %v9877, 1.442695
      %v9936 = vpow.pop %v9935
      %v9937 = vmul.f32 %v9878, 1.442695
      %v9938 = vpow.pop %v9937
      %v9939 = vmul.f32 %v9879, 1.442695
      %v9940 = vpow.pop %v9939
      %v9941 = vmul.f32 %v9880, 1.442695
      %v9942 = vpow.pop %v9941
      %v9943 = vmul.f32 %v9881, 1.442695
      %v9944 = vpow.pop %v9943
      %v9945 = vmul.f32 %v9882, 1.442695
      %v9946 = vpow.pop %v9945
      %v9947 = vmul.f32 %v9883, 1.442695
      %v9948 = vpow.pop %v9947
      %v9949 = vmul.f32 %v9884, 1.442695
      %v9950 = vpow.pop %v9949
      %v9951 = vmul.f32 %v9885, 1.442695
      %v9952 = vpow.pop %v9951
      %v9953 = vmul.f32 %v9886, 1.442695
      %v9954 = vpow.pop %v9953
      %v9955 = vmul.f32 %v9887, 1.442695
      %v9956 = vpow.pop %v9955
      %v9957 = vmul.f32 %v9888, 1.442695
      %v9958 = vpow.pop %v9957
      %v9959 = vmul.f32 %v9889, 1.442695
      %v9960 = vpow.pop %v9959
      %v9961 = vmul.f32 %v9890, 1.442695
      %v9962 = vpow.pop %v9961
      %v9963 = vadd.f32 %v9892, 1.0
      %v9964 = vadd.f32 %v9894, 1.0
      %v9965 = vadd.f32 %v9896, 1.0
      %v9966 = vadd.f32 %v9898, 1.0
      %v9967 = vadd.f32 %v9900, 1.0
      %v9968 = vadd.f32 %v9902, 1.0
      %v9969 = vadd.f32 %v9904, 1.0
      %v9970 = vadd.f32 %v9906, 1.0
      %v9971 = vadd.f32 %v9908, 1.0
      %v9972 = vadd.f32 %v9910, 1.0
      %v9973 = vadd.f32 %v9912, 1.0
      %v9974 = vadd.f32 %v9914, 1.0
      %v9975 = vadd.f32 %v9916, 1.0
      %v9976 = vadd.f32 %v9918, 1.0
      %v9977 = vadd.f32 %v9920, 1.0
      %v9978 = vadd.f32 %v9922, 1.0
      %v9979 = vadd.f32 %v9924, 1.0
      %v9980 = vadd.f32 %v9926, 1.0
      %v9981 = vadd.f32 %v9928, 1.0
      %v9982 = vadd.f32 %v9930, 1.0
      %v9983 = vadd.f32 %v9932, 1.0
      %v9984 = vadd.f32 %v9934, 1.0
      %v9985 = vadd.f32 %v9936, 1.0
      %v9986 = vadd.f32 %v9938, 1.0
      %v9987 = vadd.f32 %v9940, 1.0
      %v9988 = vadd.f32 %v9942, 1.0
      %v9989 = vadd.f32 %v9944, 1.0
      %v9990 = vadd.f32 %v9946, 1.0
      %v9991 = vadd.f32 %v9948, 1.0
      %v9992 = vadd.f32 %v9950, 1.0
      %v9993 = vadd.f32 %v9952, 1.0
      %v9994 = vadd.f32 %v9954, 1.0
      %v9995 = vadd.f32 %v9956, 1.0
      %v9996 = vadd.f32 %v9958, 1.0
      %v9997 = vadd.f32 %v9960, 1.0
      %v9998 = vadd.f32 %v9962, 1.0
      %v9999 = vrcp.pop %v9963
      %v10000 = vrcp.pop %v9964
      %v10001 = vrcp.pop %v9965
      %v10002 = vrcp.pop %v9966
      %v10003 = vrcp.pop %v9967
      %v10004 = vrcp.pop %v9968
      %v10005 = vrcp.pop %v9969
      %v10006 = vrcp.pop %v9970
      %v10007 = vrcp.pop %v9971
      %v10008 = vrcp.pop %v9972
      %v10009 = vrcp.pop %v9973
      %v10010 = vrcp.pop %v9974
      %v10011 = vrcp.pop %v9975
      %v10012 = vrcp.pop %v9976
      %v10013 = vrcp.pop %v9977
      %v10014 = vrcp.pop %v9978
      %v10015 = vrcp.pop %v9979
      %v10016 = vrcp.pop %v9980
      %v10017 = vrcp.pop %v9981
      %v10018 = vrcp.pop %v9982
      %v10019 = vrcp.pop %v9983
      %v10020 = vrcp.pop %v9984
      %v10021 = vrcp.pop %v9985
      %v10022 = vrcp.pop %v9986
      %v10023 = vrcp.pop %v9987
      %v10024 = vrcp.pop %v9988
      %v10025 = vrcp.pop %v9989
      %v10026 = vrcp.pop %v9990
      %v10027 = vrcp.pop %v9991
      %v10028 = vrcp.pop %v9992
      %v10029 = vrcp.pop %v9993
      %v10030 = vrcp.pop %v9994
      %v10031 = vrcp.pop %v9995
      %v10032 = vrcp.pop %v9996
      %v10033 = vrcp.pop %v9997
      %v10034 = vrcp.pop %v9998
      %v10035 = vmul.f32 %v9819, %v9999
      %v10036 = vmul.f32 %v9820, %v10000
      %v10037 = vmul.f32 %v9821, %v10001
      %v10038 = vmul.f32 %v9822, %v10002
      %v10039 = vmul.f32 %v9823, %v10003
      %v10040 = vmul.f32 %v9824, %v10004
      %v10041 = vmul.f32 %v9825, %v10005
      %v10042 = vmul.f32 %v9826, %v10006
      %v10043 = vmul.f32 %v9827, %v10007
      %v10044 = vmul.f32 %v9828, %v10008
      %v10045 = vmul.f32 %v9829, %v10009
      %v10046 = vmul.f32 %v9830, %v10010
      %v10047 = vmul.f32 %v9831, %v10011
      %v10048 = vmul.f32 %v9832, %v10012
      %v10049 = vmul.f32 %v9833, %v10013
      %v10050 = vmul.f32 %v9834, %v10014
      %v10051 = vmul.f32 %v9835, %v10015
      %v10052 = vmul.f32 %v9836, %v10016
      %v10053 = vmul.f32 %v9837, %v10017
      %v10054 = vmul.f32 %v9838, %v10018
      %v10055 = vmul.f32 %v9839, %v10019
      %v10056 = vmul.f32 %v9840, %v10020
      %v10057 = vmul.f32 %v9841, %v10021
      %v10058 = vmul.f32 %v9842, %v10022
      %v10059 = vmul.f32 %v9843, %v10023
      %v10060 = vmul.f32 %v9844, %v10024
      %v10061 = vmul.f32 %v9845, %v10025
      %v10062 = vmul.f32 %v9846, %v10026
      %v10063 = vmul.f32 %v9847, %v10027
      %v10064 = vmul.f32 %v9848, %v10028
      %v10065 = vmul.f32 %v9849, %v10029
      %v10066 = vmul.f32 %v9850, %v10030
      %v10067 = vmul.f32 %v9851, %v10031
      %v10068 = vmul.f32 %v9852, %v10032
      %v10069 = vmul.f32 %v9853, %v10033
      %v10070 = vmul.f32 %v9854, %v10034
      %v10071 = vld [vmem:[%s15] sm:$0xf]
      %v10072 = vld [vmem:[%s16] sm:$0x1]
      %v10074 = vlaneseq
      %v10075 = vshrl.u32 %v10074, 7
      %v10076 = vsub.s32 0, %v10075
      %v10077 = vrot.slane %v10072, %v10076
      %v10080 = vsel %vm862, %v10071, 0
      %10082 = vmatprep.subr.mxu0 0.0
      %10083 = vmatpush1.msra.mxu0 %v10080
      %10084 = vmatprep.subr.mxu0 0.0
      %10085 = vmatpush1.msra.mxu0 0.0
      %10086 = vmatprep.subr.mxu0 0.0
      %10087 = vmatpush1.msra.mxu0 0.0
      %10088 = vmatprep.subr.mxu0 0.0
      %10089 = vmatpush1.msra.mxu0 0.0
      %10090 = vmatprep.subr.mxu0 0.0
      %10091 = vmatpush1.msra.mxu0 0.0
      %10092 = vmatprep.subr.mxu0 0.0
      %10093 = vmatpush1.msra.mxu0 0.0
      %10094 = vmatprep.subr.mxu0 0.0
      %10095 = vmatpush1.msra.mxu0 0.0
      %10096 = vmatprep.subr.mxu0 0.0
      %10097 = vmatpush1.msra.mxu0 0.0
      %10098 = vmatprep.subr.mxu0 0.0
      %10099 = vmatpush1.msra.mxu0 0.0
      %10100 = vmatprep.subr.mxu0 0.0
      %10101 = vmatpush1.msra.mxu0 0.0
      %10102 = vmatprep.subr.mxu0 0.0
      %10103 = vmatpush1.msra.mxu0 0.0
      %10104 = vmatprep.subr.mxu0 0.0
      %10105 = vmatpush1.msra.mxu0 0.0
      %10106 = vmatprep.subr.mxu0 0.0
      %10107 = vmatpush1.msra.mxu0 0.0
      %10108 = vmatprep.subr.mxu0 0.0
      %10109 = vmatpush1.msra.mxu0 0.0
      %10110 = vmatprep.subr.mxu0 0.0
      %10111 = vmatpush1.msra.mxu0 0.0
      %10112 = vmatprep.subr.mxu0 0.0
      %10113 = vmatpush1.msra.mxu0 0.0
      %10114 = vmatprep.subr.mxu0 0.0
      %10115 = vmatpush1.msra.mxu0 0.0
      %10116 = vmatprep.subr.mxu0 0.0
      %10117 = vmatpush1.msra.mxu0 0.0
      %10118 = vmatprep.subr.mxu0 0.0
      %10119 = vmatpush1.msra.mxu0 0.0
      %10120 = vmatprep.subr.mxu0 0.0
      %10121 = vmatpush1.msra.mxu0 0.0
      %10122 = vmatprep.subr.mxu0 0.0
      %10123 = vmatpush1.msra.mxu0 0.0
      %10124 = vmatprep.subr.mxu0 0.0
      %10125 = vmatpush1.msra.mxu0 0.0
      %10126 = vmatprep.subr.mxu0 0.0
      %10127 = vmatpush1.msra.mxu0 0.0
      %10128 = vmatprep.subr.mxu0 0.0
      %10129 = vmatpush1.msra.mxu0 0.0
      %10130 = vmatprep.subr.mxu0 0.0
      %10131 = vmatpush1.msra.mxu0 0.0
      %10132 = vmatprep.subr.mxu0 0.0
      %10133 = vmatpush1.msra.mxu0 0.0
      %10134 = vmatprep.subr.mxu0 0.0
      %10135 = vmatpush1.msra.mxu0 0.0
      %10136 = vmatprep.subr.mxu0 0.0
      %10137 = vmatpush1.msra.mxu0 0.0
      %10138 = vmatprep.subr.mxu0 0.0
      %10139 = vmatpush1.msra.mxu0 0.0
      %10140 = vmatprep.subr.mxu0 0.0
      %10141 = vmatpush1.msra.mxu0 0.0
      %10142 = vmatprep.subr.mxu0 0.0
      %10143 = vmatpush1.msra.mxu0 0.0
      %10144 = vmatprep.subr.mxu0 0.0
      %10145 = vmatpush1.msra.mxu0 0.0
      %10146 = vmatprep.mubr.f32.mxu0 0.0
      %10147 = vmatmul.mubr.f32.gmra.mrb[0].mxu0 %v4155
      %v10148 = vpop.f32.mrb[0].mxu0
      %v10149 = vadd.f32 %v10077, %v10148
      %v10150 = vpop.f32.mrb[0].mxu0
      %10151 = vmatprep.mubr.f32.mxu0 0.0
      %10152 = vmatmul.mubr.f32.gmra.mrb[0].mxu0 %v4157
      %v10153 = vpop.f32.mrb[0].mxu0
      %v10154 = vadd.f32 %v10077, %v10153
      %v10155 = vpop.f32.mrb[0].mxu0
      %10156 = vmatprep.mubr.f32.mxu0 0.0
      %10157 = vmatmul.mubr.f32.gmra.mrb[0].mxu0 %v4159
      %v10158 = vpop.f32.mrb[0].mxu0
      %v10159 = vadd.f32 %v10077, %v10158
      %v10160 = vpop.f32.mrb[0].mxu0
      %10161 = vmatprep.mubr.f32.mxu0 0.0
      %10162 = vmatmul.mubr.f32.gmra.mrb[0].mxu0 %v4161
      %v10163 = vpop.f32.mrb[0].mxu0
      %v10164 = vadd.f32 %v10077, %v10163
      %v10165 = vpop.f32.mrb[0].mxu0
      %10166 = vmatprep.mubr.f32.mxu0 0.0
      %10167 = vmatmul.mubr.f32.gmra.mrb[0].mxu0 %v4163
      %v10168 = vpop.f32.mrb[0].mxu0
      %v10169 = vadd.f32 %v10077, %v10168
      %v10170 = vpop.f32.mrb[0].mxu0
      %10171 = vmatprep.mubr.f32.mxu0 0.0
      %10172 = vmatmul.mubr.f32.gmra.mrb[0].mxu0 %v4165
      %v10173 = vpop.f32.mrb[0].mxu0
      %v10174 = vadd.f32 %v10077, %v10173
      %v10175 = vpop.f32.mrb[0].mxu0
      %10176 = vmatprep.mubr.f32.mxu0 0.0
      %10177 = vmatmul.mubr.f32.gmra.mrb[0].mxu0 %v4167
      %v10178 = vpop.f32.mrb[0].mxu0
      %v10179 = vadd.f32 %v10077, %v10178
      %v10180 = vpop.f32.mrb[0].mxu0
      %10181 = vmatprep.mubr.f32.mxu0 0.0
      %10182 = vmatmul.mubr.f32.gmra.mrb[0].mxu0 %v4169
      %v10183 = vpop.f32.mrb[0].mxu0
      %v10184 = vadd.f32 %v10077, %v10183
      %v10185 = vpop.f32.mrb[0].mxu0
      %10186 = vmatprep.mubr.f32.mxu0 0.0
      %10187 = vmatmul.mubr.f32.gmra.mrb[0].mxu0 %v4171
      %v10188 = vpop.f32.mrb[0].mxu0
      %v10189 = vadd.f32 %v10077, %v10188
      %v10190 = vpop.f32.mrb[0].mxu0
      %10191 = vmatprep.mubr.f32.mxu0 0.0
      %10192 = vmatmul.mubr.f32.gmra.mrb[0].mxu0 %v4173
      %v10193 = vpop.f32.mrb[0].mxu0
      %v10194 = vadd.f32 %v10077, %v10193
      %v10195 = vpop.f32.mrb[0].mxu0
      %10196 = vmatprep.mubr.f32.mxu0 0.0
      %10197 = vmatmul.mubr.f32.gmra.mrb[0].mxu0 %v4175
      %v10198 = vpop.f32.mrb[0].mxu0
      %v10199 = vadd.f32 %v10077, %v10198
      %v10200 = vpop.f32.mrb[0].mxu0
      %10201 = vmatprep.mubr.f32.mxu0 0.0
      %10202 = vmatmul.mubr.f32.gmra.mrb[0].mxu0 %v4177
      %v10203 = vpop.f32.mrb[0].mxu0
      %v10204 = vadd.f32 %v10077, %v10203
      %v10205 = vpop.f32.mrb[0].mxu0
      %10206 = vmatprep.mubr.f32.mxu0 0.0
      %10207 = vmatmul.mubr.f32.gmra.mrb[0].mxu0 %v4179
      %v10208 = vpop.f32.mrb[0].mxu0
      %v10209 = vadd.f32 %v10077, %v10208
      %v10210 = vpop.f32.mrb[0].mxu0
      %10211 = vmatprep.mubr.f32.mxu0 0.0
      %10212 = vmatmul.mubr.f32.gmra.mrb[0].mxu0 %v4181
      %v10213 = vpop.f32.mrb[0].mxu0
      %v10214 = vadd.f32 %v10077, %v10213
      %v10215 = vpop.f32.mrb[0].mxu0
      %10216 = vmatprep.mubr.f32.mxu0 0.0
      %10217 = vmatmul.mubr.f32.gmra.mrb[0].mxu0 %v4183
      %v10218 = vpop.f32.mrb[0].mxu0
      %v10219 = vadd.f32 %v10077, %v10218
      %v10220 = vpop.f32.mrb[0].mxu0
      %10221 = vmatprep.mubr.f32.mxu0 0.0
      %10222 = vmatmul.mubr.f32.gmra.mrb[0].mxu0 %v4185
      %v10223 = vpop.f32.mrb[0].mxu0
      %v10224 = vadd.f32 %v10077, %v10223
      %v10225 = vpop.f32.mrb[0].mxu0
      %10226 = vmatprep.mubr.f32.mxu0 0.0
      %10227 = vmatmul.mubr.f32.gmra.mrb[0].mxu0 %v4187
      %v10228 = vpop.f32.mrb[0].mxu0
      %v10229 = vadd.f32 %v10077, %v10228
      %v10230 = vpop.f32.mrb[0].mxu0
      %10231 = vmatprep.mubr.f32.mxu0 0.0
      %10232 = vmatmul.mubr.f32.gmra.mrb[0].mxu0 %v4189
      %v10233 = vpop.f32.mrb[0].mxu0
      %v10234 = vadd.f32 %v10077, %v10233
      %v10235 = vpop.f32.mrb[0].mxu0
      %10236 = vmatprep.mubr.f32.mxu0 0.0
      %10237 = vmatmul.mubr.f32.gmra.mrb[0].mxu0 %v4191
      %v10238 = vpop.f32.mrb[0].mxu0
      %v10239 = vadd.f32 %v10077, %v10238
      %v10240 = vpop.f32.mrb[0].mxu0
      %10241 = vmatprep.mubr.f32.mxu0 0.0
      %10242 = vmatmul.mubr.f32.gmra.mrb[0].mxu0 %v4193
      %v10243 = vpop.f32.mrb[0].mxu0
      %v10244 = vadd.f32 %v10077, %v10243
      %v10245 = vpop.f32.mrb[0].mxu0
      %10246 = vmatprep.mubr.f32.mxu0 0.0
      %10247 = vmatmul.mubr.f32.gmra.mrb[0].mxu0 %v4195
      %v10248 = vpop.f32.mrb[0].mxu0
      %v10249 = vadd.f32 %v10077, %v10248
      %v10250 = vpop.f32.mrb[0].mxu0
      %10251 = vmatprep.mubr.f32.mxu0 0.0
      %10252 = vmatmul.mubr.f32.gmra.mrb[0].mxu0 %v4197
      %v10253 = vpop.f32.mrb[0].mxu0
      %v10254 = vadd.f32 %v10077, %v10253
      %v10255 = vpop.f32.mrb[0].mxu0
      %10256 = vmatprep.mubr.f32.mxu0 0.0
      %10257 = vmatmul.mubr.f32.gmra.mrb[0].mxu0 %v4199
      %v10258 = vpop.f32.mrb[0].mxu0
      %v10259 = vadd.f32 %v10077, %v10258
      %v10260 = vpop.f32.mrb[0].mxu0
      %10261 = vmatprep.mubr.f32.mxu0 0.0
      %10262 = vmatmul.mubr.f32.gmra.mrb[0].mxu0 %v4201
      %v10263 = vpop.f32.mrb[0].mxu0
      %v10264 = vadd.f32 %v10077, %v10263
      %v10265 = vpop.f32.mrb[0].mxu0
      %10266 = vmatprep.mubr.f32.mxu0 0.0
      %10267 = vmatmul.mubr.f32.gmra.mrb[0].mxu0 %v4203
      %v10268 = vpop.f32.mrb[0].mxu0
      %v10269 = vadd.f32 %v10077, %v10268
      %v10270 = vpop.f32.mrb[0].mxu0
      %10271 = vmatprep.mubr.f32.mxu0 0.0
      %10272 = vmatmul.mubr.f32.gmra.mrb[0].mxu0 %v4205
      %v10273 = vpop.f32.mrb[0].mxu0
      %v10274 = vadd.f32 %v10077, %v10273
      %v10275 = vpop.f32.mrb[0].mxu0
      %10276 = vmatprep.mubr.f32.mxu0 0.0
      %10277 = vmatmul.mubr.f32.gmra.mrb[0].mxu0 %v4207
      %v10278 = vpop.f32.mrb[0].mxu0
      %v10279 = vadd.f32 %v10077, %v10278
      %v10280 = vpop.f32.mrb[0].mxu0
      %10281 = vmatprep.mubr.f32.mxu0 0.0
      %10282 = vmatmul.mubr.f32.gmra.mrb[0].mxu0 %v4209
      %v10283 = vpop.f32.mrb[0].mxu0
      %v10284 = vadd.f32 %v10077, %v10283
      %v10285 = vpop.f32.mrb[0].mxu0
      %10286 = vmatprep.mubr.f32.mxu0 0.0
      %10287 = vmatmul.mubr.f32.gmra.mrb[0].mxu0 %v4211
      %v10288 = vpop.f32.mrb[0].mxu0
      %v10289 = vadd.f32 %v10077, %v10288
      %v10290 = vpop.f32.mrb[0].mxu0
      %10291 = vmatprep.mubr.f32.mxu0 0.0
      %10292 = vmatmul.mubr.f32.gmra.mrb[0].mxu0 %v4213
      %v10293 = vpop.f32.mrb[0].mxu0
      %v10294 = vadd.f32 %v10077, %v10293
      %v10295 = vpop.f32.mrb[0].mxu0
      %10296 = vmatprep.mubr.f32.mxu0 0.0
      %10297 = vmatmul.mubr.f32.gmra.mrb[0].mxu0 %v4215
      %v10298 = vpop.f32.mrb[0].mxu0
      %v10299 = vadd.f32 %v10077, %v10298
      %v10300 = vpop.f32.mrb[0].mxu0
      %10301 = vmatprep.mubr.f32.mxu0 0.0
      %10302 = vmatmul.mubr.f32.gmra.mrb[0].mxu0 %v4217
      %v10303 = vpop.f32.mrb[0].mxu0
      %v10304 = vadd.f32 %v10077, %v10303
      %v10305 = vpop.f32.mrb[0].mxu0
      %10306 = vmatprep.mubr.f32.mxu0 0.0
      %10307 = vmatmul.mubr.f32.gmra.mrb[0].mxu0 %v4219
      %v10308 = vpop.f32.mrb[0].mxu0
      %v10309 = vadd.f32 %v10077, %v10308
      %v10310 = vpop.f32.mrb[0].mxu0
      %10311 = vmatprep.mubr.f32.mxu0 0.0
      %10312 = vmatmul.mubr.f32.gmra.mrb[0].mxu0 %v4221
      %v10313 = vpop.f32.mrb[0].mxu0
      %v10314 = vadd.f32 %v10077, %v10313
      %v10315 = vpop.f32.mrb[0].mxu0
      %10316 = vmatprep.mubr.f32.mxu0 0.0
      %10317 = vmatmul.mubr.f32.gmra.mrb[0].mxu0 %v4223
      %v10318 = vpop.f32.mrb[0].mxu0
      %v10319 = vadd.f32 %v10077, %v10318
      %v10320 = vpop.f32.mrb[0].mxu0
      %10321 = vmatprep.mubr.f32.mxu0 0.0
      %10322 = vmatmul.mubr.f32.gmra.mrb[0].mxu0 %v4225
      %v10323 = vpop.f32.mrb[0].mxu0
      %v10324 = vadd.f32 %v10077, %v10323
      %v10325 = vpop.f32.mrb[0].mxu0
      %10326 = vdwg.mxu0
      %v10327 = vadd.f32 %v10035, %v10149
      %v10328 = vadd.f32 %v10036, %v10154
      %v10329 = vadd.f32 %v10037, %v10159
      %v10330 = vadd.f32 %v10038, %v10164
      %v10331 = vadd.f32 %v10039, %v10169
      %v10332 = vadd.f32 %v10040, %v10174
      %v10333 = vadd.f32 %v10041, %v10179
      %v10334 = vadd.f32 %v10042, %v10184
      %v10335 = vadd.f32 %v10043, %v10189
      %v10336 = vadd.f32 %v10044, %v10194
      %v10337 = vadd.f32 %v10045, %v10199
      %v10338 = vadd.f32 %v10046, %v10204
      %v10339 = vadd.f32 %v10047, %v10209
      %v10340 = vadd.f32 %v10048, %v10214
      %v10341 = vadd.f32 %v10049, %v10219
      %v10342 = vadd.f32 %v10050, %v10224
      %v10343 = vadd.f32 %v10051, %v10229
      %v10344 = vadd.f32 %v10052, %v10234
      %v10345 = vadd.f32 %v10053, %v10239
      %v10346 = vadd.f32 %v10054, %v10244
      %v10347 = vadd.f32 %v10055, %v10249
      %v10348 = vadd.f32 %v10056, %v10254
      %v10349 = vadd.f32 %v10057, %v10259
      %v10350 = vadd.f32 %v10058, %v10264
      %v10351 = vadd.f32 %v10059, %v10269
      %v10352 = vadd.f32 %v10060, %v10274
      %v10353 = vadd.f32 %v10061, %v10279
      %v10354 = vadd.f32 %v10062, %v10284
      %v10355 = vadd.f32 %v10063, %v10289
      %v10356 = vadd.f32 %v10064, %v10294
      %v10357 = vadd.f32 %v10065, %v10299
      %v10358 = vadd.f32 %v10066, %v10304
      %v10359 = vadd.f32 %v10067, %v10309
      %v10360 = vadd.f32 %v10068, %v10314
      %v10361 = vadd.f32 %v10069, %v10319
      %v10362 = vadd.f32 %v10070, %v10324
      %10363 = vst.msk [vmem:[%s562] sm:$0xff] %vm4847, %v10327
      %10364 = vst.msk [vmem:[%s562 + $0x8] sm:$0xff] %vm4847, %v10328
      %10365 = vst.msk [vmem:[%s562 + $0x10] sm:$0xff] %vm4847, %v10329
      %10366 = vst.msk [vmem:[%s562 + $0x18] sm:$0xff] %vm4847, %v10330
      %10367 = vst.msk [vmem:[%s562 + $0x20] sm:$0xff] %vm4847, %v10331
      %10368 = vst.msk [vmem:[%s562 + $0x28] sm:$0xff] %vm4847, %v10332
      %10369 = vst.msk [vmem:[%s562 + $0x30] sm:$0xff] %vm4847, %v10333
      %10370 = vst.msk [vmem:[%s562 + $0x38] sm:$0xff] %vm4847, %v10334
      %10371 = vst.msk [vmem:[%s562 + $0x40] sm:$0xff] %vm4847, %v10335
      %10372 = vst.msk [vmem:[%s562 + $0x48] sm:$0xff] %vm4847, %v10336
      %10373 = vst.msk [vmem:[%s562 + $0x50] sm:$0xff] %vm4847, %v10337
      %10374 = vst.msk [vmem:[%s562 + $0x58] sm:$0xff] %vm4847, %v10338
      %10375 = vst.msk [vmem:[%s562 + $0x60] sm:$0xff] %vm4847, %v10339
      %10376 = vst.msk [vmem:[%s562 + $0x68] sm:$0xff] %vm4847, %v10340
      %10377 = vst.msk [vmem:[%s562 + $0x70] sm:$0xff] %vm4847, %v10341
      %10378 = vst.msk [vmem:[%s562 + $0x78] sm:$0xff] %vm4847, %v10342
      %10379 = vst.msk [vmem:[%s562 + $0x80] sm:$0xff] %vm4847, %v10343
      %10380 = vst.msk [vmem:[%s562 + $0x88] sm:$0xff] %vm4847, %v10344
      %10381 = vst.msk [vmem:[%s562 + $0x90] sm:$0xff] %vm4847, %v10345
      %10382 = vst.msk [vmem:[%s562 + $0x98] sm:$0xff] %vm4847, %v10346
      %10383 = vst.msk [vmem:[%s562 + $0xa0] sm:$0xff] %vm4847, %v10347
      %10384 = vst.msk [vmem:[%s562 + $0xa8] sm:$0xff] %vm4847, %v10348
      %10385 = vst.msk [vmem:[%s562 + $0xb0] sm:$0xff] %vm4847, %v10349
      %10386 = vst.msk [vmem:[%s562 + $0xb8] sm:$0xff] %vm4847, %v10350
      %10387 = vst.msk [vmem:[%s562 + $0xc0] sm:$0xff] %vm4847, %v10351
      %10388 = vst.msk [vmem:[%s562 + $0xc8] sm:$0xff] %vm4847, %v10352
      %10389 = vst.msk [vmem:[%s562 + $0xd0] sm:$0xff] %vm4847, %v10353
      %10390 = vst.msk [vmem:[%s562 + $0xd8] sm:$0xff] %vm4847, %v10354
      %10391 = vst.msk [vmem:[%s562 + $0xe0] sm:$0xff] %vm4847, %v10355
      %10392 = vst.msk [vmem:[%s562 + $0xe8] sm:$0xff] %vm4847, %v10356
      %10393 = vst.msk [vmem:[%s562 + $0xf0] sm:$0xff] %vm4847, %v10357
      %10394 = vst.msk [vmem:[%s562 + $0xf8] sm:$0xff] %vm4847, %v10358
      %10395 = vst.msk [vmem:[%s562 + $0x100] sm:$0xff] %vm4847, %v10359
      %10396 = vst.msk [vmem:[%s562 + $0x108] sm:$0xff] %vm4847, %v10360
      %10397 = vst.msk [vmem:[%s562 + $0x110] sm:$0xff] %vm4847, %v10361
      %10398 = vst.msk [vmem:[%s562 + $0x118] sm:$0x3f] %vm9484, %v10362
      %p10399 = scmp.lt.s32.totalorder %s28, 1
      %s10400 = scalar_select %p10399, %s28, 1
      %s10401 = smul.addr %s10400, 36
      %s10402 = smul.addr %s10401, 8
      %s10403 = scalar_lea.vmem %s17, %s10402
      // Predicated region
      $region89: #{tpu_custom_call.1} parent=87 // pred_check
        %p10404 = pneg %p413
      $region90: #{tpu_custom_call.1} parent=87 // pred_check_branch
        %10406 = sbr.rel (%p10404) target = $region92
      $region91: #{tpu_custom_call.1} parent=87 // pred_region
        _
      $region92: #{tpu_custom_call.1} parent=87 // pred_fallthru
        _
    $region88: #{tpu_custom_call.1} parent=5 // pred_fallthru
      _
    %p10407 = scmp.le.s32.totalorder 2, %s23
    // Predicated region
    $region93: #{tpu_custom_call.1} parent=5 // pred_check
      %p10408 = pneg %p10407
    $region94: #{tpu_custom_call.1} parent=5 // pred_check_branch
      %10410 = sbr.rel (%p10408) target = $region96
    $region95: #{tpu_custom_call.1} parent=5 // pred_region
      %s10411 = ssub.s32 %s23, 2
      // Predicated region
      $region97: #{tpu_custom_call.1} parent=95 // pred_check
        %p10412 = pneg %p419
      $region98: #{tpu_custom_call.1} parent=95 // pred_check_branch
        %10414 = sbr.rel (%p10412) target = $region100
      $region99: #{tpu_custom_call.1} parent=95 // pred_region
        %p10415 = scmp.lt.s32.totalorder %s29, 1
        %s10416 = scalar_select %p10415, %s29, 1
        %s10417 = smul.addr %s10416, 36
        %s10418 = smul.addr %s10417, 8
        %s10419 = scalar_lea.vmem %s17, %s10418
      $region100: #{tpu_custom_call.1} parent=95 // pred_fallthru
        _
    $region96: #{tpu_custom_call.1} parent=5 // pred_fallthru
      _
  $region6: #{tpu_custom_call.1} parent=0 // loop_footer
    %s27 = sadd.s32 1, %s23
  $region7: #{tpu_custom_call.1} parent=0 // loop_footer_branch
    %22 = sbr.rel target = $region3
  $region8: #{tpu_custom_call.1} parent=0 // loop_exit
    _

</llo_original>
